<compile_context>
chip_gen: v7x
topology: tpu7x:2x2x1
jax: 0.10.0
libtpu: 0.0.40
codegen_flags: <defaults>
</compile_context>

<pallas_src>
import numpy as np
import jax
import jax.numpy as jnp
from jax import lax
from jax.experimental import pallas as pl
from jax.experimental.pallas import tpu as pltpu


KH = KW = 5        # conv kernel size
_BT_CAP = 4        # max images per conv grid step (VMEM-safe on v5e/v6e/v7x)
_WPAD_L = 8        # left halo columns in the padded-input scratches: the interior is
                   # stored at a sublane-aligned column offset (unmasked store); the
                   # conv windows read from column (_WPAD_L - 2 + kx).


def _pick_tile(n, cap):
    """Largest divisor of n that is <= cap and leaves >= 2 grid steps (so both
    TensorCores get work on megacore parts); fall back to the largest divisor."""
    divisors = [t for t in range(1, min(cap, n) + 1) if n % t == 0]
    two_step = [t for t in divisors if n // t >= 2]
    return max(two_step) if two_step else max(divisors)


def _pick_rows(n, cap=256):
    """Row tile for the dense head: whole batch if small, else a multiple-of-8 tile."""
    if n <= cap:
        return n
    best = None
    for t in range(8, cap + 1, 8):
        if n % t == 0:
            best = t
    return best if best is not None else n


# --------------------------------------------------------------------------- fused conv stack
def _conv_stack_kernel(xpat_ref, w1_ref, b1_ref, w2_ref, b2_ref, w3_ref, b3_ref,
                       o_ref, pool1_ref, xp2_ref, pool2_ref, xp3_ref, pool3_ref):
    """Conv(3->32)+pool -> Conv(32->32)+pool -> Conv(32->64)+pool for Bt images.

    xpat_ref : (Bt, 1024, 75)   layer-1 im2col (prebuilt, lane-dense)
    w*_ref   : (25*Cin, Cout)   im2col conv weights;   b*_ref : (1, Cout)
    o_ref    : (Bt*4, 4, 64)    pooled layer-3 output (NHWC row-major)
    pool*_ref: VMEM scratch holding the H-pooled conv output (strided W-pool reads)
    xp2/xp3  : VMEM scratch holding the zero-halo padded inputs of layers 2/3
    """
    Bt = xpat_ref.shape[0]
    f32 = jnp.float32

    # In-kernel halo padding: zero the padded-input scratches; the interiors are
    # overwritten below.  (Unconditional so it is correct however the "parallel"
    # grid axis is sharded across cores.)
    xp2_ref[...] = jnp.zeros_like(xp2_ref)
    xp3_ref[...] = jnp.zeros_like(xp3_ref)

    def conv_matmul(patches2d, w_ref, b_ref):
        return jnp.dot(patches2d, w_ref[...], preferred_element_type=f32) + b_ref[...]

    def pool2x2(y2d, H, W, C, pool_ref):
        """2x2/stride-2 max pool of a (Bt*H*W, C) conv result -> (Bt*H//2, W//2, C)."""
        Ho, Wo = H // 2, W // 2
        y = y2d.reshape(Bt * Ho, 2, W, C)                 # row split (W % 8 == 0 -> layout-free)
        pool_ref[...] = jnp.maximum(y[:, 0], y[:, 1])     # H-pool on a non-tiled dim, park in VMEM
        left = pool_ref[:, pl.ds(0, Wo, 2), :]            # strided W-pool reads (VMEM)
        right = pool_ref[:, pl.ds(1, Wo, 2), :]
        return jnp.maximum(left, right)                   # (Bt*Ho, Wo, C)

    def conv5x5_from_padded(xpad_ref, H, W, Cin, w_ref, b_ref):
        """'same' 5x5 conv as ONE matmul (K = 25*Cin); im2col built once in VMEM."""
        c0 = _WPAD_L - 2
        # 5 W-shifted slabs (the only sublane-offset reads), folded onto the lane dim.
        xw = jnp.concatenate(
            [xpad_ref[:, :, pl.ds(c0 + kx, W), :] for kx in range(KW)], axis=-1
        )                                                 # (Bt, H+4, W, 5*Cin)
        # The 5 H-shifts are slices on a non-tiled dim (free).
        patches = jnp.concatenate(
            [xw[:, ky:ky + H, :, :] for ky in range(KH)], axis=-1
        )                                                 # (Bt, H, W, 25*Cin)
        return conv_matmul(patches.reshape(Bt * H * W, KH * KW * Cin), w_ref, b_ref)

    # ---- layer 1: conv(3->32) is a single matmul on the prebuilt im2col (K = 75)
    y1 = conv_matmul(xpat_ref[...].reshape(Bt * 32 * 32, 75), w1_ref, b1_ref)   # (Bt*1024, 32)
    p1 = pool2x2(y1, 32, 32, 32, pool1_ref)                                     # (Bt*16, 16, 32)
    xp2_ref[:, pl.ds(2, 16), pl.ds(_WPAD_L, 16), :] = p1.reshape(Bt, 16, 16, 32)

    # ---- layer 2: conv(32->32), one matmul with K = 800
    y2 = conv5x5_from_padded(xp2_ref, 16, 16, 32, w2_ref, b2_ref)               # (Bt*256, 32)
    p2 = pool2x2(y2, 16, 16, 32, pool2_ref)                                     # (Bt*8, 8, 32)
    xp3_ref[:, pl.ds(2, 8), pl.ds(_WPAD_L, 8), :] = p2.reshape(Bt, 8, 8, 32)

    # ---- layer 3: conv(32->64), one matmul with K = 800
    y3 = conv5x5_from_padded(xp3_ref, 8, 8, 32, w3_ref, b3_ref)                 # (Bt*64, 64)
    o_ref[...] = pool2x2(y3, 8, 8, 64, pool3_ref).astype(o_ref.dtype)           # (Bt*4, 4, 64)


def conv_stack(x_pat, params):
    """One fused pallas_call for the whole conv/pool stack.

    x_pat : (B, 1024, 75) layer-1 im2col.  Returns (B*4, 4, 64) pooled features whose
    metadata-only HBM reshape to (B, 1024) is the NHWC flatten order.
    """
    B = x_pat.shape[0]
    Bt = _pick_tile(B, _BT_CAP)
    f32 = jnp.float32
    const = lambda i: (0, 0)

    return pl.pallas_call(
        _conv_stack_kernel,
        out_shape=jax.ShapeDtypeStruct((B * 4, 4, 64), f32),
        grid=(B // Bt,),
        in_specs=[
            pl.BlockSpec((Bt, 1024, 75), lambda i: (i, 0, 0)),   # streamed per batch tile
            pl.BlockSpec((75, 32), const),                       # weights: constant index_map
            pl.BlockSpec((1, 32), const),                        #   -> DMA'd once, VMEM-resident
            pl.BlockSpec((800, 32), const),
            pl.BlockSpec((1, 32), const),
            pl.BlockSpec((800, 64), const),
            pl.BlockSpec((1, 64), const),
        ],
        out_specs=pl.BlockSpec((Bt * 4, 4, 64), lambda i: (i, 0, 0)),
        scratch_shapes=[
            pltpu.VMEM((Bt * 16, 32, 32), f32),                    # pool1: H-pooled conv1
            pltpu.VMEM((Bt, 20, _WPAD_L + 16 + 2, 32), f32),       # xp2  : padded layer-2 input
            pltpu.VMEM((Bt * 8, 16, 32), f32),                     # pool2: H-pooled conv2
            pltpu.VMEM((Bt, 12, _WPAD_L + 8 + 2, 32), f32),        # xp3  : padded layer-3 input
            pltpu.VMEM((Bt * 4, 8, 64), f32),                      # pool3: H-pooled conv3
        ],
        compiler_params=pltpu.CompilerParams(
            dimension_semantics=("parallel",),
            vmem_limit_bytes=32 * 1024 * 1024,
        ),
    )(
        x_pat,
        params["w1i"], params["b1"].reshape(1, 32),
        params["w2i"], params["b2"].reshape(1, 32),
        params["w3i"], params["b3"].reshape(1, 64),
    )


# --------------------------------------------------------------------------- dense head
def _dense_head_kernel(x_ref, w1_ref, b1_ref, w2_ref, b2_ref, o_ref):
    """Fused Linear(1024,64) -> Linear(64,128-padded); the hidden stays on chip."""
    h = jnp.dot(x_ref[...], w1_ref[...], preferred_element_type=jnp.float32) + b1_ref[...]
    o_ref[...] = (
        jnp.dot(h, w2_ref[...], preferred_element_type=jnp.float32) + b2_ref[...]
    ).astype(o_ref.dtype)


def dense_head(x, w1, b1, w2, b2):
    """fc1 + fc2 in one pallas_call, blocked over the batch dim.  w2/b2 are
    lane-padded to 128 output columns so the logits store is lane-dense."""
    B, K = x.shape
    N1 = w1.shape[1]
    N2 = w2.shape[1]
    bm = _pick_rows(B)
    const = lambda i: (0, 0)
    return pl.pallas_call(
        _dense_head_kernel,
        out_shape=jax.ShapeDtypeStruct((B, N2), jnp.float32),
        grid=(B // bm,),
        in_specs=[
            pl.BlockSpec((bm, K), lambda i: (i, 0)),
            pl.BlockSpec((K, N1), const),
            pl.BlockSpec((1, N1), const),
            pl.BlockSpec((N1, N2), const),
            pl.BlockSpec((1, N2), const),
        ],
        out_specs=pl.BlockSpec((bm, N2), lambda i: (i, 0)),
        compiler_params=pltpu.CompilerParams(dimension_semantics=("parallel",)),
    )(x, w1, b1.reshape(1, N1), w2, b2.reshape(1, N2))


# --------------------------------------------------------------------------- model
def init_params(key):
    ks = jax.random.split(key, 10)
    s = 0.05
    f32 = jnp.float32
    return {
        # conv weights in HWIO layout (== torch weight.transpose(2,3,1,0))
        "w1": jax.random.normal(ks[0], (5, 5, 3, 32), f32) * s,
        "b1": jax.random.normal(ks[1], (32,), f32) * s,
        "w2": jax.random.normal(ks[2], (5, 5, 32, 32), f32) * s,
        "b2": jax.random.normal(ks[3], (32,), f32) * s,
        "w3": jax.random.normal(ks[4], (5, 5, 32, 64), f32) * s,
        "b3": jax.random.normal(ks[5], (64,), f32) * s,
        # linear weights stored (in, out) (== torch weight.T); fc1 rows in torch (C,H,W) order
        "fc1_w": jax.random.normal(ks[6], (1024, 64), f32) * s,
        "fc1_b": jax.random.normal(ks[7], (64,), f32) * s,
        "fc2_w": jax.random.normal(ks[8], (64, 10), f32) * s,
        "fc2_b": jax.random.normal(ks[9], (10,), f32) * s,
    }


def prepare_params(params):
    """One-time (outside jit) weight re-layouts:
      * conv weights HWIO -> (25*Cin, Cout) rows in the im2col feature order,
      * fc1 rows permuted from torch (C,H,W)-flatten order to NHWC-flatten order so the
        runtime NHWC->NCHW transpose can be dropped,
      * fc2 lane-padded to 128 output columns for a lane-dense logits store."""
    p = dict(params)
    p["w1i"] = params["w1"].reshape(KH * KW * 3, 32)
    p["w2i"] = params["w2"].reshape(KH * KW * 32, 32)
    p["w3i"] = params["w3"].reshape(KH * KW * 32, 64)
    w = params["fc1_w"]                                   # rows indexed by c*16 + h*4 + w
    p["fc1_w_nhwc"] = (
        w.reshape(64, 4, 4, 64).transpose(1, 2, 0, 3).reshape(1024, 64)
    )                                                     # rows indexed by h*256 + w*64 + c
    p["fc2_w_pad"] = jnp.pad(params["fc2_w"], ((0, 0), (0, 128 - 10)))
    p["fc2_b_pad"] = jnp.pad(params["fc2_b"], ((0, 128 - 10),))
    return p


@jax.jit
def tudui_forward(x_nchw, params):
    B = x_nchw.shape[0]
    x = jnp.transpose(x_nchw, (0, 2, 3, 1))               # NCHW -> NHWC (one-time glue)
    # Layer-1 im2col is built by XLA so the kernel's layer-1 operand is lane-dense
    # (trailing dim 5*5*3 = 75 instead of Cin = 3 lane-padded to 128).
    xp = jnp.pad(x, ((0, 0), (2, 2), (2, 2), (0, 0)))
    pat = jnp.concatenate(
        [xp[:, ky:ky + 32, kx:kx + 32, :] for ky in range(KH) for kx in range(KW)],
        axis=-1,
    ).reshape(B, 32 * 32, KH * KW * 3)
    feats = conv_stack(pat, params)                       # (B*4, 4, 64), all 3 convs fused
    feats = feats.reshape(B, 1024)                        # metadata-only HBM reshape (NHWC order)
    logits = dense_head(feats, params["fc1_w_nhwc"], params["fc1_b"],
                        params["fc2_w_pad"], params["fc2_b_pad"])   # (B, 128) lane-dense
    return logits[:, :10]


# --------------------------------------------------------------------------- pure-JAX reference
def tudui_reference(x_nchw, p):
    dn = ("NHWC", "HWIO", "NHWC")

    def conv(x, w, b):
        return lax.conv_general_dilated(
            x, w, (1, 1), [(2, 2), (2, 2)], dimension_numbers=dn
        ) + b

    def pool(x):
        return lax.reduce_window(
            x, -jnp.inf, lax.max, (1, 2, 2, 1), (1, 2, 2, 1), "VALID"
        )

    x = jnp.transpose(x_nchw, (0, 2, 3, 1))
    x = pool(conv(x, p["w1"], p["b1"]))
    x = pool(conv(x, p["w2"], p["b2"]))
    x = pool(conv(x, p["w3"], p["b3"]))
    # PyTorch Flatten order: NHWC -> NCHW -> flatten (uses the ORIGINAL torch-layout fc1_w)
    x = jnp.transpose(x, (0, 3, 1, 2)).reshape(x.shape[0], 1024)
    x = x @ p["fc1_w"] + p["fc1_b"]
    x = x @ p["fc2_w"] + p["fc2_b"]
    return x


# --------------------------------------------------------------------------- main
if __name__ == "__main__":
    key = jax.random.PRNGKey(0)
    k_in, k_params = jax.random.split(key)

    # Spatial size is pinned to 32x32 by Linear(1024,64) after three 2x pools (64*4*4 = 1024).
    x = jax.random.normal(k_in, (2, 3, 32, 32), jnp.float32)   # NCHW, like PyTorch
    params = init_params(k_params)
    run_params = prepare_params(params)                        # one-time weight re-layout

    out = jax.block_until_ready(tudui_forward(x, run_params))
    assert out.shape == (2, 10), out.shape
    assert bool(jnp.all(jnp.isfinite(out)))

    ref = jax.block_until_ready(tudui_reference(x, params))
    np.testing.assert_allclose(np.asarray(out), np.asarray(ref), rtol=1e-3, atol=1e-3)

    print("KERNEL_OK")
</pallas_src>

<mosaic_0001>
module attributes {stable_mosaic.version = 11 : i64} {
  func.func @_conv_stack_kernel(%arg0: i32, %arg1: memref<1x1024x75xf32, #tpu.memory_space<vmem>>, %arg2: memref<75x32xf32, #tpu.memory_space<vmem>>, %arg3: memref<1x32xf32, #tpu.memory_space<vmem>>, %arg4: memref<800x32xf32, #tpu.memory_space<vmem>>, %arg5: memref<1x32xf32, #tpu.memory_space<vmem>>, %arg6: memref<800x64xf32, #tpu.memory_space<vmem>>, %arg7: memref<1x64xf32, #tpu.memory_space<vmem>>, %arg8: memref<4x4x64xf32, #tpu.memory_space<vmem>>, %arg9: memref<16x32x32xf32, #tpu.memory_space<vmem>>, %arg10: memref<1x20x26x32xf32, #tpu.memory_space<vmem>>, %arg11: memref<8x16x32xf32, #tpu.memory_space<vmem>>, %arg12: memref<1x12x18x32xf32, #tpu.memory_space<vmem>>, %arg13: memref<4x8x64xf32, #tpu.memory_space<vmem>>) attributes {dimension_semantics = [#tpu.dimension_semantics<parallel>], iteration_bounds = array<i64: 2>, scalar_prefetch = 0 : i64, scratch_operands = 5 : i64, tpu.core_type = #tpu.core_type<tc>, window_params = [{transform_indices = @transform_0, window_bounds = array<i64: 1, 1024, 75>}, {pipeline_mode = #tpu.pipeline_mode<synchronous>, transform_indices = @transform_1, window_bounds = array<i64: 75, 32>}, {pipeline_mode = #tpu.pipeline_mode<synchronous>, transform_indices = @transform_2, window_bounds = array<i64: 1, 32>}, {pipeline_mode = #tpu.pipeline_mode<synchronous>, transform_indices = @transform_3, window_bounds = array<i64: 800, 32>}, {pipeline_mode = #tpu.pipeline_mode<synchronous>, transform_indices = @transform_4, window_bounds = array<i64: 1, 32>}, {pipeline_mode = #tpu.pipeline_mode<synchronous>, transform_indices = @transform_5, window_bounds = array<i64: 800, 64>}, {pipeline_mode = #tpu.pipeline_mode<synchronous>, transform_indices = @transform_6, window_bounds = array<i64: 1, 64>}, {transform_indices = @transform_7, window_bounds = array<i64: 4, 4, 64>}]} {
    %cst = arith.constant 0.000000e+00 : f32
    %0 = vector.broadcast %cst : f32 to vector<1x20x26x32xf32>
    %c0 = arith.constant 0 : index
    %c0_0 = arith.constant 0 : index
    %c0_1 = arith.constant 0 : index
    %c0_2 = arith.constant 0 : index
    %1 = vector.load %arg10[%c0, %c0_0, %c0_1, %c0_2] : memref<1x20x26x32xf32, #tpu.memory_space<vmem>>, vector<1x20x26x32xf32>
    tpu.vector_store %arg10[%c0, %c0_0, %c0_1, %c0_2], %0 {strides = array<i32>} : memref<1x20x26x32xf32, #tpu.memory_space<vmem>>, vector<1x20x26x32xf32>,
    %cst_3 = arith.constant 0.000000e+00 : f32
    %2 = vector.broadcast %cst_3 : f32 to vector<1x12x18x32xf32>
    %c0_4 = arith.constant 0 : index
    %c0_5 = arith.constant 0 : index
    %c0_6 = arith.constant 0 : index
    %c0_7 = arith.constant 0 : index
    %3 = vector.load %arg12[%c0_4, %c0_5, %c0_6, %c0_7] : memref<1x12x18x32xf32, #tpu.memory_space<vmem>>, vector<1x12x18x32xf32>
    tpu.vector_store %arg12[%c0_4, %c0_5, %c0_6, %c0_7], %2 {strides = array<i32>} : memref<1x12x18x32xf32, #tpu.memory_space<vmem>>, vector<1x12x18x32xf32>,
    %c0_8 = arith.constant 0 : index
    %c0_9 = arith.constant 0 : index
    %c0_10 = arith.constant 0 : index
    %4 = vector.load %arg1[%c0_8, %c0_9, %c0_10] : memref<1x1024x75xf32, #tpu.memory_space<vmem>>, vector<1x1024x75xf32>
    %5 = vector.shape_cast %4 : vector<1x1024x75xf32> to vector<1024x75xf32>
    %c0_11 = arith.constant 0 : index
    %c0_12 = arith.constant 0 : index
    %6 = vector.load %arg2[%c0_11, %c0_12] : memref<75x32xf32, #tpu.memory_space<vmem>>, vector<75x32xf32>
    %cst_13 = arith.constant dense<0.000000e+00> : vector<1024x32xf32>
    %7 = tpu.matmul %5, %6, %cst_13 {dimension_numbers = #tpu.dot_dimension_numbers<[1], [0], [0], [1], [0, 0, 1, 1], [], []>} : vector<1024x75xf32>, vector<75x32xf32>, vector<1024x32xf32> -> vector<1024x32xf32>
    %c0_14 = arith.constant 0 : index
    %c0_15 = arith.constant 0 : index
    %8 = vector.load %arg3[%c0_14, %c0_15] : memref<1x32xf32, #tpu.memory_space<vmem>>, vector<1x32xf32>
    %9 = vector.broadcast %8 : vector<1x32xf32> to vector<1024x32xf32>
    %10 = arith.addf %7, %9 : vector<1024x32xf32>
    %11 = vector.shape_cast %10 : vector<1024x32xf32> to vector<16x2x32x32xf32>
    %12 = vector.extract_strided_slice %11 {offsets = [0, 0, 0, 0], sizes = [16, 1, 32, 32], strides = [1, 1, 1, 1]} : vector<16x2x32x32xf32> to vector<16x1x32x32xf32>
    %13 = vector.shape_cast %12 : vector<16x1x32x32xf32> to vector<16x32x32xf32>
    %14 = vector.extract_strided_slice %11 {offsets = [0, 1, 0, 0], sizes = [16, 1, 32, 32], strides = [1, 1, 1, 1]} : vector<16x2x32x32xf32> to vector<16x1x32x32xf32>
    %15 = vector.shape_cast %14 : vector<16x1x32x32xf32> to vector<16x32x32xf32>
    %16 = arith.maximumf %13, %15 : vector<16x32x32xf32>
    %c0_16 = arith.constant 0 : index
    %c0_17 = arith.constant 0 : index
    %c0_18 = arith.constant 0 : index
    %17 = vector.load %arg9[%c0_16, %c0_17, %c0_18] : memref<16x32x32xf32, #tpu.memory_space<vmem>>, vector<16x32x32xf32>
    tpu.vector_store %arg9[%c0_16, %c0_17, %c0_18], %16 {strides = array<i32>} : memref<16x32x32xf32, #tpu.memory_space<vmem>>, vector<16x32x32xf32>,
    %c0_19 = arith.constant 0 : index
    %c0_20 = arith.constant 0 : index
    %c0_21 = arith.constant 0 : index
    %18 = tpu.strided_load %arg9[%c0_19, %c0_20, %c0_21] {strides = array<i32: 1, 2, 1>} : memref<16x32x32xf32, #tpu.memory_space<vmem>>, vector<16x16x32xf32>
    %c0_22 = arith.constant 0 : index
    %c1 = arith.constant 1 : index
    %c0_23 = arith.constant 0 : index
    %19 = tpu.strided_load %arg9[%c0_22, %c1, %c0_23] {strides = array<i32: 1, 2, 1>} : memref<16x32x32xf32, #tpu.memory_space<vmem>>, vector<16x16x32xf32>
    %20 = arith.maximumf %18, %19 : vector<16x16x32xf32>
    %21 = vector.shape_cast %20 : vector<16x16x32xf32> to vector<1x16x16x32xf32>
    %c0_24 = arith.constant 0 : index
    %c2 = arith.constant 2 : index
    %c8 = arith.constant 8 : index
    %c0_25 = arith.constant 0 : index
    %22 = vector.load %arg10[%c0_24, %c2, %c8, %c0_25] : memref<1x20x26x32xf32, #tpu.memory_space<vmem>>, vector<1x16x16x32xf32>
    tpu.vector_store %arg10[%c0_24, %c2, %c8, %c0_25], %21 {strides = array<i32>} : memref<1x20x26x32xf32, #tpu.memory_space<vmem>>, vector<1x16x16x32xf32>,
    %c0_26 = arith.constant 0 : index
    %c0_27 = arith.constant 0 : index
    %c6 = arith.constant 6 : index
    %c0_28 = arith.constant 0 : index
    %23 = vector.load %arg10[%c0_26, %c0_27, %c6, %c0_28] : memref<1x20x26x32xf32, #tpu.memory_space<vmem>>, vector<1x20x16x32xf32>
    %c0_29 = arith.constant 0 : index
    %c0_30 = arith.constant 0 : index
    %c7 = arith.constant 7 : index
    %c0_31 = arith.constant 0 : index
    %24 = vector.load %arg10[%c0_29, %c0_30, %c7, %c0_31] : memref<1x20x26x32xf32, #tpu.memory_space<vmem>>, vector<1x20x16x32xf32>
    %c0_32 = arith.constant 0 : index
    %c0_33 = arith.constant 0 : index
    %c8_34 = arith.constant 8 : index
    %c0_35 = arith.constant 0 : index
    %25 = vector.load %arg10[%c0_32, %c0_33, %c8_34, %c0_35] : memref<1x20x26x32xf32, #tpu.memory_space<vmem>>, vector<1x20x16x32xf32>
    %c0_36 = arith.constant 0 : index
    %c0_37 = arith.constant 0 : index
    %c9 = arith.constant 9 : index
    %c0_38 = arith.constant 0 : index
    %26 = vector.load %arg10[%c0_36, %c0_37, %c9, %c0_38] : memref<1x20x26x32xf32, #tpu.memory_space<vmem>>, vector<1x20x16x32xf32>
    %c0_39 = arith.constant 0 : index
    %c0_40 = arith.constant 0 : index
    %c10 = arith.constant 10 : index
    %c0_41 = arith.constant 0 : index
    %27 = vector.load %arg10[%c0_39, %c0_40, %c10, %c0_41] : memref<1x20x26x32xf32, #tpu.memory_space<vmem>>, vector<1x20x16x32xf32>
    %28 = tpu.concatenate %23, %24, %25, %26, %27 in 3 : vector<1x20x16x32xf32>, vector<1x20x16x32xf32>, vector<1x20x16x32xf32>, vector<1x20x16x32xf32>, vector<1x20x16x32xf32> -> vector<1x20x16x160xf32>
    %29 = vector.extract_strided_slice %28 {offsets = [0, 0, 0, 0], sizes = [1, 16, 16, 160], strides = [1, 1, 1, 1]} : vector<1x20x16x160xf32> to vector<1x16x16x160xf32>
    %30 = vector.extract_strided_slice %28 {offsets = [0, 1, 0, 0], sizes = [1, 16, 16, 160], strides = [1, 1, 1, 1]} : vector<1x20x16x160xf32> to vector<1x16x16x160xf32>
    %31 = vector.extract_strided_slice %28 {offsets = [0, 2, 0, 0], sizes = [1, 16, 16, 160], strides = [1, 1, 1, 1]} : vector<1x20x16x160xf32> to vector<1x16x16x160xf32>
    %32 = vector.extract_strided_slice %28 {offsets = [0, 3, 0, 0], sizes = [1, 16, 16, 160], strides = [1, 1, 1, 1]} : vector<1x20x16x160xf32> to vector<1x16x16x160xf32>
    %33 = vector.extract_strided_slice %28 {offsets = [0, 4, 0, 0], sizes = [1, 16, 16, 160], strides = [1, 1, 1, 1]} : vector<1x20x16x160xf32> to vector<1x16x16x160xf32>
    %34 = tpu.concatenate %29, %30, %31, %32, %33 in 3 : vector<1x16x16x160xf32>, vector<1x16x16x160xf32>, vector<1x16x16x160xf32>, vector<1x16x16x160xf32>, vector<1x16x16x160xf32> -> vector<1x16x16x800xf32>
    %35 = vector.shape_cast %34 : vector<1x16x16x800xf32> to vector<256x800xf32>
    %c0_42 = arith.constant 0 : index
    %c0_43 = arith.constant 0 : index
    %36 = vector.load %arg4[%c0_42, %c0_43] : memref<800x32xf32, #tpu.memory_space<vmem>>, vector<800x32xf32>
    %cst_44 = arith.constant dense<0.000000e+00> : vector<256x32xf32>
    %37 = tpu.matmul %35, %36, %cst_44 {dimension_numbers = #tpu.dot_dimension_numbers<[1], [0], [0], [1], [0, 0, 1, 1], [], []>} : vector<256x800xf32>, vector<800x32xf32>, vector<256x32xf32> -> vector<256x32xf32>
    %c0_45 = arith.constant 0 : index
    %c0_46 = arith.constant 0 : index
    %38 = vector.load %arg5[%c0_45, %c0_46] : memref<1x32xf32, #tpu.memory_space<vmem>>, vector<1x32xf32>
    %39 = vector.broadcast %38 : vector<1x32xf32> to vector<256x32xf32>
    %40 = arith.addf %37, %39 : vector<256x32xf32>
    %41 = vector.shape_cast %40 : vector<256x32xf32> to vector<8x2x16x32xf32>
    %42 = vector.extract_strided_slice %41 {offsets = [0, 0, 0, 0], sizes = [8, 1, 16, 32], strides = [1, 1, 1, 1]} : vector<8x2x16x32xf32> to vector<8x1x16x32xf32>
    %43 = vector.shape_cast %42 : vector<8x1x16x32xf32> to vector<8x16x32xf32>
    %44 = vector.extract_strided_slice %41 {offsets = [0, 1, 0, 0], sizes = [8, 1, 16, 32], strides = [1, 1, 1, 1]} : vector<8x2x16x32xf32> to vector<8x1x16x32xf32>
    %45 = vector.shape_cast %44 : vector<8x1x16x32xf32> to vector<8x16x32xf32>
    %46 = arith.maximumf %43, %45 : vector<8x16x32xf32>
    %c0_47 = arith.constant 0 : index
    %c0_48 = arith.constant 0 : index
    %c0_49 = arith.constant 0 : index
    %47 = vector.load %arg11[%c0_47, %c0_48, %c0_49] : memref<8x16x32xf32, #tpu.memory_space<vmem>>, vector<8x16x32xf32>
    tpu.vector_store %arg11[%c0_47, %c0_48, %c0_49], %46 {strides = array<i32>} : memref<8x16x32xf32, #tpu.memory_space<vmem>>, vector<8x16x32xf32>,
    %c0_50 = arith.constant 0 : index
    %c0_51 = arith.constant 0 : index
    %c0_52 = arith.constant 0 : index
    %48 = tpu.strided_load %arg11[%c0_50, %c0_51, %c0_52] {strides = array<i32: 1, 2, 1>} : memref<8x16x32xf32, #tpu.memory_space<vmem>>, vector<8x8x32xf32>
    %c0_53 = arith.constant 0 : index
    %c1_54 = arith.constant 1 : index
    %c0_55 = arith.constant 0 : index
    %49 = tpu.strided_load %arg11[%c0_53, %c1_54, %c0_55] {strides = array<i32: 1, 2, 1>} : memref<8x16x32xf32, #tpu.memory_space<vmem>>, vector<8x8x32xf32>
    %50 = arith.maximumf %48, %49 : vector<8x8x32xf32>
    %51 = vector.shape_cast %50 : vector<8x8x32xf32> to vector<1x8x8x32xf32>
    %c0_56 = arith.constant 0 : index
    %c2_57 = arith.constant 2 : index
    %c8_58 = arith.constant 8 : index
    %c0_59 = arith.constant 0 : index
    %52 = vector.load %arg12[%c0_56, %c2_57, %c8_58, %c0_59] : memref<1x12x18x32xf32, #tpu.memory_space<vmem>>, vector<1x8x8x32xf32>
    tpu.vector_store %arg12[%c0_56, %c2_57, %c8_58, %c0_59], %51 {strides = array<i32>} : memref<1x12x18x32xf32, #tpu.memory_space<vmem>>, vector<1x8x8x32xf32>,
    %c0_60 = arith.constant 0 : index
    %c0_61 = arith.constant 0 : index
    %c6_62 = arith.constant 6 : index
    %c0_63 = arith.constant 0 : index
    %53 = vector.load %arg12[%c0_60, %c0_61, %c6_62, %c0_63] : memref<1x12x18x32xf32, #tpu.memory_space<vmem>>, vector<1x12x8x32xf32>
    %c0_64 = arith.constant 0 : index
    %c0_65 = arith.constant 0 : index
    %c7_66 = arith.constant 7 : index
    %c0_67 = arith.constant 0 : index
    %54 = vector.load %arg12[%c0_64, %c0_65, %c7_66, %c0_67] : memref<1x12x18x32xf32, #tpu.memory_space<vmem>>, vector<1x12x8x32xf32>
    %c0_68 = arith.constant 0 : index
    %c0_69 = arith.constant 0 : index
    %c8_70 = arith.constant 8 : index
    %c0_71 = arith.constant 0 : index
    %55 = vector.load %arg12[%c0_68, %c0_69, %c8_70, %c0_71] : memref<1x12x18x32xf32, #tpu.memory_space<vmem>>, vector<1x12x8x32xf32>
    %c0_72 = arith.constant 0 : index
    %c0_73 = arith.constant 0 : index
    %c9_74 = arith.constant 9 : index
    %c0_75 = arith.constant 0 : index
    %56 = vector.load %arg12[%c0_72, %c0_73, %c9_74, %c0_75] : memref<1x12x18x32xf32, #tpu.memory_space<vmem>>, vector<1x12x8x32xf32>
    %c0_76 = arith.constant 0 : index
    %c0_77 = arith.constant 0 : index
    %c10_78 = arith.constant 10 : index
    %c0_79 = arith.constant 0 : index
    %57 = vector.load %arg12[%c0_76, %c0_77, %c10_78, %c0_79] : memref<1x12x18x32xf32, #tpu.memory_space<vmem>>, vector<1x12x8x32xf32>
    %58 = tpu.concatenate %53, %54, %55, %56, %57 in 3 : vector<1x12x8x32xf32>, vector<1x12x8x32xf32>, vector<1x12x8x32xf32>, vector<1x12x8x32xf32>, vector<1x12x8x32xf32> -> vector<1x12x8x160xf32>
    %59 = vector.extract_strided_slice %58 {offsets = [0, 0, 0, 0], sizes = [1, 8, 8, 160], strides = [1, 1, 1, 1]} : vector<1x12x8x160xf32> to vector<1x8x8x160xf32>
    %60 = vector.extract_strided_slice %58 {offsets = [0, 1, 0, 0], sizes = [1, 8, 8, 160], strides = [1, 1, 1, 1]} : vector<1x12x8x160xf32> to vector<1x8x8x160xf32>
    %61 = vector.extract_strided_slice %58 {offsets = [0, 2, 0, 0], sizes = [1, 8, 8, 160], strides = [1, 1, 1, 1]} : vector<1x12x8x160xf32> to vector<1x8x8x160xf32>
    %62 = vector.extract_strided_slice %58 {offsets = [0, 3, 0, 0], sizes = [1, 8, 8, 160], strides = [1, 1, 1, 1]} : vector<1x12x8x160xf32> to vector<1x8x8x160xf32>
    %63 = vector.extract_strided_slice %58 {offsets = [0, 4, 0, 0], sizes = [1, 8, 8, 160], strides = [1, 1, 1, 1]} : vector<1x12x8x160xf32> to vector<1x8x8x160xf32>
    %64 = tpu.concatenate %59, %60, %61, %62, %63 in 3 : vector<1x8x8x160xf32>, vector<1x8x8x160xf32>, vector<1x8x8x160xf32>, vector<1x8x8x160xf32>, vector<1x8x8x160xf32> -> vector<1x8x8x800xf32>
    %65 = vector.shape_cast %64 : vector<1x8x8x800xf32> to vector<64x800xf32>
    %c0_80 = arith.constant 0 : index
    %c0_81 = arith.constant 0 : index
    %66 = vector.load %arg6[%c0_80, %c0_81] : memref<800x64xf32, #tpu.memory_space<vmem>>, vector<800x64xf32>
    %cst_82 = arith.constant dense<0.000000e+00> : vector<64x64xf32>
    %67 = tpu.matmul %65, %66, %cst_82 {dimension_numbers = #tpu.dot_dimension_numbers<[1], [0], [0], [1], [0, 0, 1, 1], [], []>} : vector<64x800xf32>, vector<800x64xf32>, vector<64x64xf32> -> vector<64x64xf32>
    %c0_83 = arith.constant 0 : index
    %c0_84 = arith.constant 0 : index
    %68 = vector.load %arg7[%c0_83, %c0_84] : memref<1x64xf32, #tpu.memory_space<vmem>>, vector<1x64xf32>
    %69 = vector.broadcast %68 : vector<1x64xf32> to vector<64x64xf32>
    %70 = arith.addf %67, %69 : vector<64x64xf32>
    %71 = vector.shape_cast %70 : vector<64x64xf32> to vector<4x2x8x64xf32>
    %72 = vector.extract_strided_slice %71 {offsets = [0, 0, 0, 0], sizes = [4, 1, 8, 64], strides = [1, 1, 1, 1]} : vector<4x2x8x64xf32> to vector<4x1x8x64xf32>
    %73 = vector.shape_cast %72 : vector<4x1x8x64xf32> to vector<4x8x64xf32>
    %74 = vector.extract_strided_slice %71 {offsets = [0, 1, 0, 0], sizes = [4, 1, 8, 64], strides = [1, 1, 1, 1]} : vector<4x2x8x64xf32> to vector<4x1x8x64xf32>
    %75 = vector.shape_cast %74 : vector<4x1x8x64xf32> to vector<4x8x64xf32>
    %76 = arith.maximumf %73, %75 : vector<4x8x64xf32>
    %c0_85 = arith.constant 0 : index
    %c0_86 = arith.constant 0 : index
    %c0_87 = arith.constant 0 : index
    %77 = vector.load %arg13[%c0_85, %c0_86, %c0_87] : memref<4x8x64xf32, #tpu.memory_space<vmem>>, vector<4x8x64xf32>
    tpu.vector_store %arg13[%c0_85, %c0_86, %c0_87], %76 {strides = array<i32>} : memref<4x8x64xf32, #tpu.memory_space<vmem>>, vector<4x8x64xf32>,
    %c0_88 = arith.constant 0 : index
    %c0_89 = arith.constant 0 : index
    %c0_90 = arith.constant 0 : index
    %78 = tpu.strided_load %arg13[%c0_88, %c0_89, %c0_90] {strides = array<i32: 1, 2, 1>} : memref<4x8x64xf32, #tpu.memory_space<vmem>>, vector<4x4x64xf32>
    %c0_91 = arith.constant 0 : index
    %c1_92 = arith.constant 1 : index
    %c0_93 = arith.constant 0 : index
    %79 = tpu.strided_load %arg13[%c0_91, %c1_92, %c0_93] {strides = array<i32: 1, 2, 1>} : memref<4x8x64xf32, #tpu.memory_space<vmem>>, vector<4x4x64xf32>
    %80 = arith.maximumf %78, %79 : vector<4x4x64xf32>
    %c0_94 = arith.constant 0 : index
    %c0_95 = arith.constant 0 : index
    %c0_96 = arith.constant 0 : index
    %81 = vector.load %arg8[%c0_94, %c0_95, %c0_96] : memref<4x4x64xf32, #tpu.memory_space<vmem>>, vector<4x4x64xf32>
    tpu.vector_store %arg8[%c0_94, %c0_95, %c0_96], %80 {strides = array<i32>} : memref<4x4x64xf32, #tpu.memory_space<vmem>>, vector<4x4x64xf32>,
    return
  }
  func.func @transform_0(%arg0: i32) -> (i32, i32, i32) {
    %c0_i32 = arith.constant 0 : i32
    %c0_i32_0 = arith.constant 0 : i32
    %c0_i32_1 = arith.constant 0 : i32
    return %arg0, %c0_i32, %c0_i32_0 : i32, i32, i32
  }
  func.func @transform_1(%arg0: i32) -> (i32, i32) {
    %c0_i32 = arith.constant 0 : i32
    %c0_i32_0 = arith.constant 0 : i32
    %c0_i32_1 = arith.constant 0 : i32
    return %c0_i32, %c0_i32_0 : i32, i32
  }
  func.func @transform_2(%arg0: i32) -> (i32, i32) {
    %c0_i32 = arith.constant 0 : i32
    %c0_i32_0 = arith.constant 0 : i32
    %c0_i32_1 = arith.constant 0 : i32
    return %c0_i32, %c0_i32_0 : i32, i32
  }
  func.func @transform_3(%arg0: i32) -> (i32, i32) {
    %c0_i32 = arith.constant 0 : i32
    %c0_i32_0 = arith.constant 0 : i32
    %c0_i32_1 = arith.constant 0 : i32
    return %c0_i32, %c0_i32_0 : i32, i32
  }
  func.func @transform_4(%arg0: i32) -> (i32, i32) {
    %c0_i32 = arith.constant 0 : i32
    %c0_i32_0 = arith.constant 0 : i32
    %c0_i32_1 = arith.constant 0 : i32
    return %c0_i32, %c0_i32_0 : i32, i32
  }
  func.func @transform_5(%arg0: i32) -> (i32, i32) {
    %c0_i32 = arith.constant 0 : i32
    %c0_i32_0 = arith.constant 0 : i32
    %c0_i32_1 = arith.constant 0 : i32
    return %c0_i32, %c0_i32_0 : i32, i32
  }
  func.func @transform_6(%arg0: i32) -> (i32, i32) {
    %c0_i32 = arith.constant 0 : i32
    %c0_i32_0 = arith.constant 0 : i32
    %c0_i32_1 = arith.constant 0 : i32
    return %c0_i32, %c0_i32_0 : i32, i32
  }
  func.func @transform_7(%arg0: i32) -> (i32, i32, i32) {
    %c0_i32 = arith.constant 0 : i32
    %c0_i32_0 = arith.constant 0 : i32
    %c0_i32_1 = arith.constant 0 : i32
    return %arg0, %c0_i32, %c0_i32_0 : i32, i32, i32
  }
}

module attributes {stable_mosaic.version = 11 : i64} {
  func.func @_dense_head_kernel(%arg0: i32, %arg1: memref<2x1024xf32, #tpu.memory_space<vmem>>, %arg2: memref<1024x64xf32, #tpu.memory_space<vmem>>, %arg3: memref<1x64xf32, #tpu.memory_space<vmem>>, %arg4: memref<64x128xf32, #tpu.memory_space<vmem>>, %arg5: memref<1x128xf32, #tpu.memory_space<vmem>>, %arg6: memref<2x128xf32, #tpu.memory_space<vmem>>) attributes {dimension_semantics = [#tpu.dimension_semantics<parallel>], iteration_bounds = array<i64: 1>, scalar_prefetch = 0 : i64, scratch_operands = 0 : i64, tpu.core_type = #tpu.core_type<tc>, window_params = [{transform_indices = @transform_0, window_bounds = array<i64: 2, 1024>}, {pipeline_mode = #tpu.pipeline_mode<synchronous>, transform_indices = @transform_1, window_bounds = array<i64: 1024, 64>}, {pipeline_mode = #tpu.pipeline_mode<synchronous>, transform_indices = @transform_2, window_bounds = array<i64: 1, 64>}, {pipeline_mode = #tpu.pipeline_mode<synchronous>, transform_indices = @transform_3, window_bounds = array<i64: 64, 128>}, {pipeline_mode = #tpu.pipeline_mode<synchronous>, transform_indices = @transform_4, window_bounds = array<i64: 1, 128>}, {transform_indices = @transform_5, window_bounds = array<i64: 2, 128>}]} {
    %c0 = arith.constant 0 : index
    %c0_0 = arith.constant 0 : index
    %0 = vector.load %arg1[%c0, %c0_0] : memref<2x1024xf32, #tpu.memory_space<vmem>>, vector<2x1024xf32>
    %c0_1 = arith.constant 0 : index
    %c0_2 = arith.constant 0 : index
    %1 = vector.load %arg2[%c0_1, %c0_2] : memref<1024x64xf32, #tpu.memory_space<vmem>>, vector<1024x64xf32>
    %cst = arith.constant dense<0.000000e+00> : vector<2x64xf32>
    %2 = tpu.matmul %0, %1, %cst {dimension_numbers = #tpu.dot_dimension_numbers<[1], [0], [0], [1], [0, 0, 1, 1], [], []>} : vector<2x1024xf32>, vector<1024x64xf32>, vector<2x64xf32> -> vector<2x64xf32>
    %c0_3 = arith.constant 0 : index
    %c0_4 = arith.constant 0 : index
    %3 = vector.load %arg3[%c0_3, %c0_4] : memref<1x64xf32, #tpu.memory_space<vmem>>, vector<1x64xf32>
    %4 = vector.broadcast %3 : vector<1x64xf32> to vector<2x64xf32>
    %5 = arith.addf %2, %4 : vector<2x64xf32>
    %c0_5 = arith.constant 0 : index
    %c0_6 = arith.constant 0 : index
    %6 = vector.load %arg4[%c0_5, %c0_6] : memref<64x128xf32, #tpu.memory_space<vmem>>, vector<64x128xf32>
    %cst_7 = arith.constant dense<0.000000e+00> : vector<2x128xf32>
    %7 = tpu.matmul %5, %6, %cst_7 {dimension_numbers = #tpu.dot_dimension_numbers<[1], [0], [0], [1], [0, 0, 1, 1], [], []>} : vector<2x64xf32>, vector<64x128xf32>, vector<2x128xf32> -> vector<2x128xf32>
    %c0_8 = arith.constant 0 : index
    %c0_9 = arith.constant 0 : index
    %8 = vector.load %arg5[%c0_8, %c0_9] : memref<1x128xf32, #tpu.memory_space<vmem>>, vector<1x128xf32>
    %9 = vector.broadcast %8 : vector<1x128xf32> to vector<2x128xf32>
    %10 = arith.addf %7, %9 : vector<2x128xf32>
    %c0_10 = arith.constant 0 : index
    %c0_11 = arith.constant 0 : index
    %11 = vector.load %arg6[%c0_10, %c0_11] : memref<2x128xf32, #tpu.memory_space<vmem>>, vector<2x128xf32>
    tpu.vector_store %arg6[%c0_10, %c0_11], %10 {strides = array<i32>} : memref<2x128xf32, #tpu.memory_space<vmem>>, vector<2x128xf32>,
    return
  }
  func.func @transform_0(%arg0: i32) -> (i32, i32) {
    %c0_i32 = arith.constant 0 : i32
    %c0_i32_0 = arith.constant 0 : i32
    return %arg0, %c0_i32 : i32, i32
  }
  func.func @transform_1(%arg0: i32) -> (i32, i32) {
    %c0_i32 = arith.constant 0 : i32
    %c0_i32_0 = arith.constant 0 : i32
    %c0_i32_1 = arith.constant 0 : i32
    return %c0_i32, %c0_i32_0 : i32, i32
  }
  func.func @transform_2(%arg0: i32) -> (i32, i32) {
    %c0_i32 = arith.constant 0 : i32
    %c0_i32_0 = arith.constant 0 : i32
    %c0_i32_1 = arith.constant 0 : i32
    return %c0_i32, %c0_i32_0 : i32, i32
  }
  func.func @transform_3(%arg0: i32) -> (i32, i32) {
    %c0_i32 = arith.constant 0 : i32
    %c0_i32_0 = arith.constant 0 : i32
    %c0_i32_1 = arith.constant 0 : i32
    return %c0_i32, %c0_i32_0 : i32, i32
  }
  func.func @transform_4(%arg0: i32) -> (i32, i32) {
    %c0_i32 = arith.constant 0 : i32
    %c0_i32_0 = arith.constant 0 : i32
    %c0_i32_1 = arith.constant 0 : i32
    return %c0_i32, %c0_i32_0 : i32, i32
  }
  func.func @transform_5(%arg0: i32) -> (i32, i32) {
    %c0_i32 = arith.constant 0 : i32
    %c0_i32_0 = arith.constant 0 : i32
    return %arg0, %c0_i32 : i32, i32
  }
}

</mosaic_0001>

<llo_original>
// kernel: tudui_forward.3
$region0: #{tudui_forward.3}
  #allocation0 [shape = 'u32[]', space=smem, size = 0x4, offset = 0x4, fixed_abs, tag = 'smem constant byte address 0x4 - core index']
  #allocation1 [shape = 'u32[144,128]{1,0:T(1,128)}', space=vmem, size = 0x12000, scoped, tag = 'internal scratch']
  %s0 = inlined_call_operand.vmem [shape: f32[2,1024], index: 0, kind: input, shape index: {}]
  %s1 = inlined_call_operand.vmem [shape: f32[1024,64], index: 1, kind: input, shape index: {}]
  %s2 = inlined_call_operand.vmem [shape: f32[1,64], index: 2, kind: input, shape index: {}]
  %s3 = inlined_call_operand.vmem [shape: f32[64,128], index: 3, kind: input, shape index: {}]
  %s4 = inlined_call_operand.vmem [shape: f32[1,128], index: 4, kind: input, shape index: {}]
  %s5 = inlined_call_operand.hbm [shape: f32[2,128], index: 5, kind: output, shape index: {}]
  %s6 = sld [smem:[#allocation0]]
  $region30: #{tudui_forward.3} parent=0
    _
  %s8 = ssub.s32 1, %s6
  %s9 = scalar_select 0, %s8, %s6
  $region1: #{tudui_forward.3} parent=0
    #allocation2 [shape = 'u8[1024]{0}', space=vmem, size = 0x400, scoped, tag = 'output window, operand 0, single buffered']
    #allocation3 [shape = 's32[1]{0}', space=sflag, size = 0x4, scoped, tag = 'scoped memory for tudui_forward.3']
    %10 = vsyncpa [#allocation3], 0
    // Predicated region
    $region2: #{tudui_forward.3} parent=1 // pred_check
      _
    $region3: #{tudui_forward.3} parent=1 // pred_check_branch
      %12 = sbr.rel (0) target = $region5
    $region4: #{tudui_forward.3} parent=1 // pred_region
      _
    $region5: #{tudui_forward.3} parent=1 // pred_fallthru
      _
    // Predicated region
    $region6: #{tudui_forward.3} parent=1 // pred_check
      _
    $region7: #{tudui_forward.3} parent=1 // pred_check_branch
      %14 = sbr.rel (0) target = $region9
    $region8: #{tudui_forward.3} parent=1 // pred_region
      _
    $region9: #{tudui_forward.3} parent=1 // pred_fallthru
      _
    // Predicated region
    $region10: #{tudui_forward.3} parent=1 // pred_check
      _
    $region11: #{tudui_forward.3} parent=1 // pred_check_branch
      %16 = sbr.rel (0) target = $region13
    $region12: #{tudui_forward.3} parent=1 // pred_region
      _
    $region13: #{tudui_forward.3} parent=1 // pred_fallthru
      _
    // Predicated region
    $region14: #{tudui_forward.3} parent=1 // pred_check
      _
    $region15: #{tudui_forward.3} parent=1 // pred_check_branch
      %18 = sbr.rel (0) target = $region17
    $region16: #{tudui_forward.3} parent=1 // pred_region
      _
    $region17: #{tudui_forward.3} parent=1 // pred_fallthru
      _
    // Predicated region
    $region18: #{tudui_forward.3} parent=1 // pred_check
      _
    $region19: #{tudui_forward.3} parent=1 // pred_check_branch
      %20 = sbr.rel (0) target = $region21
    $region20: #{tudui_forward.3} parent=1 // pred_region
      _
    $region21: #{tudui_forward.3} parent=1 // pred_fallthru
      _
    %v21 = vld [vmem:[%s0] sm:$0xff]
    %v22 = vld [vmem:[%s0 + $0x8] sm:$0xff]
    %v23 = vld [vmem:[%s1] sm:$0xff]
    %v24 = vld [vmem:[%s1 + $0x8] sm:$0xff]
    %v25 = vld [vmem:[%s1 + $0x10] sm:$0xff]
    %v26 = vld [vmem:[%s1 + $0x18] sm:$0xff]
    %v27 = vld [vmem:[%s1 + $0x20] sm:$0xff]
    %v28 = vld [vmem:[%s1 + $0x28] sm:$0xff]
    %v29 = vld [vmem:[%s1 + $0x30] sm:$0xff]
    %v30 = vld [vmem:[%s1 + $0x38] sm:$0xff]
    %v31 = vld [vmem:[%s1 + $0x40] sm:$0xff]
    %v32 = vld [vmem:[%s1 + $0x48] sm:$0xff]
    %v33 = vld [vmem:[%s1 + $0x50] sm:$0xff]
    %v34 = vld [vmem:[%s1 + $0x58] sm:$0xff]
    %v35 = vld [vmem:[%s1 + $0x60] sm:$0xff]
    %v36 = vld [vmem:[%s1 + $0x68] sm:$0xff]
    %v37 = vld [vmem:[%s1 + $0x70] sm:$0xff]
    %v38 = vld [vmem:[%s1 + $0x78] sm:$0xff]
    %v39 = vld [vmem:[%s1 + $0x80] sm:$0xff]
    %v40 = vld [vmem:[%s1 + $0x88] sm:$0xff]
    %v41 = vld [vmem:[%s1 + $0x90] sm:$0xff]
    %v42 = vld [vmem:[%s1 + $0x98] sm:$0xff]
    %v43 = vld [vmem:[%s1 + $0xa0] sm:$0xff]
    %v44 = vld [vmem:[%s1 + $0xa8] sm:$0xff]
    %v45 = vld [vmem:[%s1 + $0xb0] sm:$0xff]
    %v46 = vld [vmem:[%s1 + $0xb8] sm:$0xff]
    %v47 = vld [vmem:[%s1 + $0xc0] sm:$0xff]
    %v48 = vld [vmem:[%s1 + $0xc8] sm:$0xff]
    %v49 = vld [vmem:[%s1 + $0xd0] sm:$0xff]
    %v50 = vld [vmem:[%s1 + $0xd8] sm:$0xff]
    %v51 = vld [vmem:[%s1 + $0xe0] sm:$0xff]
    %v52 = vld [vmem:[%s1 + $0xe8] sm:$0xff]
    %v53 = vld [vmem:[%s1 + $0xf0] sm:$0xff]
    %v54 = vld [vmem:[%s1 + $0xf8] sm:$0xff]
    %v55 = vld [vmem:[%s1 + $0x100] sm:$0xff]
    %v56 = vld [vmem:[%s1 + $0x108] sm:$0xff]
    %v57 = vld [vmem:[%s1 + $0x110] sm:$0xff]
    %v58 = vld [vmem:[%s1 + $0x118] sm:$0xff]
    %v59 = vld [vmem:[%s1 + $0x120] sm:$0xff]
    %v60 = vld [vmem:[%s1 + $0x128] sm:$0xff]
    %v61 = vld [vmem:[%s1 + $0x130] sm:$0xff]
    %v62 = vld [vmem:[%s1 + $0x138] sm:$0xff]
    %v63 = vld [vmem:[%s1 + $0x140] sm:$0xff]
    %v64 = vld [vmem:[%s1 + $0x148] sm:$0xff]
    %v65 = vld [vmem:[%s1 + $0x150] sm:$0xff]
    %v66 = vld [vmem:[%s1 + $0x158] sm:$0xff]
    %v67 = vld [vmem:[%s1 + $0x160] sm:$0xff]
    %v68 = vld [vmem:[%s1 + $0x168] sm:$0xff]
    %v69 = vld [vmem:[%s1 + $0x170] sm:$0xff]
    %v70 = vld [vmem:[%s1 + $0x178] sm:$0xff]
    %v71 = vld [vmem:[%s1 + $0x180] sm:$0xff]
    %v72 = vld [vmem:[%s1 + $0x188] sm:$0xff]
    %v73 = vld [vmem:[%s1 + $0x190] sm:$0xff]
    %v74 = vld [vmem:[%s1 + $0x198] sm:$0xff]
    %v75 = vld [vmem:[%s1 + $0x1a0] sm:$0xff]
    %v76 = vld [vmem:[%s1 + $0x1a8] sm:$0xff]
    %v77 = vld [vmem:[%s1 + $0x1b0] sm:$0xff]
    %v78 = vld [vmem:[%s1 + $0x1b8] sm:$0xff]
    %v79 = vld [vmem:[%s1 + $0x1c0] sm:$0xff]
    %v80 = vld [vmem:[%s1 + $0x1c8] sm:$0xff]
    %v81 = vld [vmem:[%s1 + $0x1d0] sm:$0xff]
    %v82 = vld [vmem:[%s1 + $0x1d8] sm:$0xff]
    %v83 = vld [vmem:[%s1 + $0x1e0] sm:$0xff]
    %v84 = vld [vmem:[%s1 + $0x1e8] sm:$0xff]
    %v85 = vld [vmem:[%s1 + $0x1f0] sm:$0xff]
    %v86 = vld [vmem:[%s1 + $0x1f8] sm:$0xff]
    %v87 = vld [vmem:[%s1 + $0x200] sm:$0xff]
    %v88 = vld [vmem:[%s1 + $0x208] sm:$0xff]
    %v89 = vld [vmem:[%s1 + $0x210] sm:$0xff]
    %v90 = vld [vmem:[%s1 + $0x218] sm:$0xff]
    %v91 = vld [vmem:[%s1 + $0x220] sm:$0xff]
    %v92 = vld [vmem:[%s1 + $0x228] sm:$0xff]
    %v93 = vld [vmem:[%s1 + $0x230] sm:$0xff]
    %v94 = vld [vmem:[%s1 + $0x238] sm:$0xff]
    %v95 = vld [vmem:[%s1 + $0x240] sm:$0xff]
    %v96 = vld [vmem:[%s1 + $0x248] sm:$0xff]
    %v97 = vld [vmem:[%s1 + $0x250] sm:$0xff]
    %v98 = vld [vmem:[%s1 + $0x258] sm:$0xff]
    %v99 = vld [vmem:[%s1 + $0x260] sm:$0xff]
    %v100 = vld [vmem:[%s1 + $0x268] sm:$0xff]
    %v101 = vld [vmem:[%s1 + $0x270] sm:$0xff]
    %v102 = vld [vmem:[%s1 + $0x278] sm:$0xff]
    %v103 = vld [vmem:[%s1 + $0x280] sm:$0xff]
    %v104 = vld [vmem:[%s1 + $0x288] sm:$0xff]
    %v105 = vld [vmem:[%s1 + $0x290] sm:$0xff]
    %v106 = vld [vmem:[%s1 + $0x298] sm:$0xff]
    %v107 = vld [vmem:[%s1 + $0x2a0] sm:$0xff]
    %v108 = vld [vmem:[%s1 + $0x2a8] sm:$0xff]
    %v109 = vld [vmem:[%s1 + $0x2b0] sm:$0xff]
    %v110 = vld [vmem:[%s1 + $0x2b8] sm:$0xff]
    %v111 = vld [vmem:[%s1 + $0x2c0] sm:$0xff]
    %v112 = vld [vmem:[%s1 + $0x2c8] sm:$0xff]
    %v113 = vld [vmem:[%s1 + $0x2d0] sm:$0xff]
    %v114 = vld [vmem:[%s1 + $0x2d8] sm:$0xff]
    %v115 = vld [vmem:[%s1 + $0x2e0] sm:$0xff]
    %v116 = vld [vmem:[%s1 + $0x2e8] sm:$0xff]
    %v117 = vld [vmem:[%s1 + $0x2f0] sm:$0xff]
    %v118 = vld [vmem:[%s1 + $0x2f8] sm:$0xff]
    %v119 = vld [vmem:[%s1 + $0x300] sm:$0xff]
    %v120 = vld [vmem:[%s1 + $0x308] sm:$0xff]
    %v121 = vld [vmem:[%s1 + $0x310] sm:$0xff]
    %v122 = vld [vmem:[%s1 + $0x318] sm:$0xff]
    %v123 = vld [vmem:[%s1 + $0x320] sm:$0xff]
    %v124 = vld [vmem:[%s1 + $0x328] sm:$0xff]
    %v125 = vld [vmem:[%s1 + $0x330] sm:$0xff]
    %v126 = vld [vmem:[%s1 + $0x338] sm:$0xff]
    %v127 = vld [vmem:[%s1 + $0x340] sm:$0xff]
    %v128 = vld [vmem:[%s1 + $0x348] sm:$0xff]
    %v129 = vld [vmem:[%s1 + $0x350] sm:$0xff]
    %v130 = vld [vmem:[%s1 + $0x358] sm:$0xff]
    %v131 = vld [vmem:[%s1 + $0x360] sm:$0xff]
    %v132 = vld [vmem:[%s1 + $0x368] sm:$0xff]
    %v133 = vld [vmem:[%s1 + $0x370] sm:$0xff]
    %v134 = vld [vmem:[%s1 + $0x378] sm:$0xff]
    %v135 = vld [vmem:[%s1 + $0x380] sm:$0xff]
    %v136 = vld [vmem:[%s1 + $0x388] sm:$0xff]
    %v137 = vld [vmem:[%s1 + $0x390] sm:$0xff]
    %v138 = vld [vmem:[%s1 + $0x398] sm:$0xff]
    %v139 = vld [vmem:[%s1 + $0x3a0] sm:$0xff]
    %v140 = vld [vmem:[%s1 + $0x3a8] sm:$0xff]
    %v141 = vld [vmem:[%s1 + $0x3b0] sm:$0xff]
    %v142 = vld [vmem:[%s1 + $0x3b8] sm:$0xff]
    %v143 = vld [vmem:[%s1 + $0x3c0] sm:$0xff]
    %v144 = vld [vmem:[%s1 + $0x3c8] sm:$0xff]
    %v145 = vld [vmem:[%s1 + $0x3d0] sm:$0xff]
    %v146 = vld [vmem:[%s1 + $0x3d8] sm:$0xff]
    %v147 = vld [vmem:[%s1 + $0x3e0] sm:$0xff]
    %v148 = vld [vmem:[%s1 + $0x3e8] sm:$0xff]
    %v149 = vld [vmem:[%s1 + $0x3f0] sm:$0xff]
    %v150 = vld [vmem:[%s1 + $0x3f8] sm:$0xff]
    %v151 = vld [vmem:[%s2] sm:$0x1]
    %v153 = vlaneseq
    %v154 = vshrl.u32 %v153, 7
    %v155 = vsub.s32 0, %v154
    %v156 = vrot.slane %v151, %v155
    %v160 = vcombine.high %v21, %v21
    %v162 = vunpack.c.l.s4 1983009808
    %v163 = vunpack.c.0.s8 %v162
    %v164 = vlaneseq
    %v165 = vshrl.u32 %v164, 7
    %v166 = vsub.s32 %v163, %v165
    %v167 = vrot.slane %v21, %v166
    %v169 = vunpack.c.l.s4 1983009808
    %v170 = vunpack.c.0.s8 %v169
    %v171 = vlaneseq
    %v172 = vshrl.u32 %v171, 7
    %v173 = vsub.s32 %v170, %v172
    %v174 = vrot.slane %v160, %v173
    %v175 = vcombine.high %v167, %v167
    %v176 = vcombine.high %v174, %v174
    %v177 = vcombine.high %v22, %v22
    %v179 = vunpack.c.l.s4 1983009808
    %v180 = vunpack.c.0.s8 %v179
    %v181 = vlaneseq
    %v182 = vshrl.u32 %v181, 7
    %v183 = vsub.s32 %v180, %v182
    %v184 = vrot.slane %v22, %v183
    %v186 = vunpack.c.l.s4 1983009808
    %v187 = vunpack.c.0.s8 %v186
    %v188 = vlaneseq
    %v189 = vshrl.u32 %v188, 7
    %v190 = vsub.s32 %v187, %v189
    %v191 = vrot.slane %v177, %v190
    %v192 = vcombine.high %v184, %v184
    %v193 = vcombine.high %v191, %v191
    %202 = vmatprep.subr.mxu0 0.0
    %203 = vmatpush1.msra.mxu0 %v23
    %204 = vmatprep.subr.mxu0 0.0
    %205 = vmatpush1.msra.mxu0 %v24
    %206 = vmatprep.subr.mxu0 0.0
    %207 = vmatpush1.msra.mxu0 %v25
    %208 = vmatprep.subr.mxu0 0.0
    %209 = vmatpush1.msra.mxu0 %v26
    %210 = vmatprep.subr.mxu0 0.0
    %211 = vmatpush1.msra.mxu0 %v27
    %212 = vmatprep.subr.mxu0 0.0
    %213 = vmatpush1.msra.mxu0 %v28
    %214 = vmatprep.subr.mxu0 0.0
    %215 = vmatpush1.msra.mxu0 %v29
    %216 = vmatprep.subr.mxu0 0.0
    %217 = vmatpush1.msra.mxu0 %v30
    %218 = vmatprep.subr.mxu0 0.0
    %219 = vmatpush1.msra.mxu0 %v31
    %220 = vmatprep.subr.mxu0 0.0
    %221 = vmatpush1.msra.mxu0 %v32
    %222 = vmatprep.subr.mxu0 0.0
    %223 = vmatpush1.msra.mxu0 %v33
    %224 = vmatprep.subr.mxu0 0.0
    %225 = vmatpush1.msra.mxu0 %v34
    %226 = vmatprep.subr.mxu0 0.0
    %227 = vmatpush1.msra.mxu0 %v35
    %228 = vmatprep.subr.mxu0 0.0
    %229 = vmatpush1.msra.mxu0 %v36
    %230 = vmatprep.subr.mxu0 0.0
    %231 = vmatpush1.msra.mxu0 %v37
    %232 = vmatprep.subr.mxu0 0.0
    %233 = vmatpush1.msra.mxu0 %v38
    %234 = vmatprep.subr.mxu0 0.0
    %235 = vmatpush1.msra.mxu0 %v39
    %236 = vmatprep.subr.mxu0 0.0
    %237 = vmatpush1.msra.mxu0 %v40
    %238 = vmatprep.subr.mxu0 0.0
    %239 = vmatpush1.msra.mxu0 %v41
    %240 = vmatprep.subr.mxu0 0.0
    %241 = vmatpush1.msra.mxu0 %v42
    %242 = vmatprep.subr.mxu0 0.0
    %243 = vmatpush1.msra.mxu0 %v43
    %244 = vmatprep.subr.mxu0 0.0
    %245 = vmatpush1.msra.mxu0 %v44
    %246 = vmatprep.subr.mxu0 0.0
    %247 = vmatpush1.msra.mxu0 %v45
    %248 = vmatprep.subr.mxu0 0.0
    %249 = vmatpush1.msra.mxu0 %v46
    %250 = vmatprep.subr.mxu0 0.0
    %251 = vmatpush1.msra.mxu0 %v47
    %252 = vmatprep.subr.mxu0 0.0
    %253 = vmatpush1.msra.mxu0 %v48
    %254 = vmatprep.subr.mxu0 0.0
    %255 = vmatpush1.msra.mxu0 %v49
    %256 = vmatprep.subr.mxu0 0.0
    %257 = vmatpush1.msra.mxu0 %v50
    %258 = vmatprep.subr.mxu0 0.0
    %259 = vmatpush1.msra.mxu0 %v51
    %260 = vmatprep.subr.mxu0 0.0
    %261 = vmatpush1.msra.mxu0 %v52
    %262 = vmatprep.subr.mxu0 0.0
    %263 = vmatpush1.msra.mxu0 %v53
    %264 = vmatprep.subr.mxu0 0.0
    %265 = vmatpush1.msra.mxu0 %v54
    %266 = vmatprep.mubr.f32.mxu0 %v175
    %267 = vmatmul.mubr.f32.gmra.mrb[0].mxu0 %v167
    %v268 = vpop.f32.mrb[0].mxu0
    %v269 = vadd.f32 %v156, %v268
    %v270 = vpop.f32.mrb[0].mxu0
    %271 = vdwg.mxu0
    %272 = vmatprep.subr.mxu0 0.0
    %273 = vmatpush1.msra.mxu0 %v55
    %274 = vmatprep.subr.mxu0 0.0
    %275 = vmatpush1.msra.mxu0 %v56
    %276 = vmatprep.subr.mxu0 0.0
    %277 = vmatpush1.msra.mxu0 %v57
    %278 = vmatprep.subr.mxu0 0.0
    %279 = vmatpush1.msra.mxu0 %v58
    %280 = vmatprep.subr.mxu0 0.0
    %281 = vmatpush1.msra.mxu0 %v59
    %282 = vmatprep.subr.mxu0 0.0
    %283 = vmatpush1.msra.mxu0 %v60
    %284 = vmatprep.subr.mxu0 0.0
    %285 = vmatpush1.msra.mxu0 %v61
    %286 = vmatprep.subr.mxu0 0.0
    %287 = vmatpush1.msra.mxu0 %v62
    %288 = vmatprep.subr.mxu0 0.0
    %289 = vmatpush1.msra.mxu0 %v63
    %290 = vmatprep.subr.mxu0 0.0
    %291 = vmatpush1.msra.mxu0 %v64
    %292 = vmatprep.subr.mxu0 0.0
    %293 = vmatpush1.msra.mxu0 %v65
    %294 = vmatprep.subr.mxu0 0.0
    %295 = vmatpush1.msra.mxu0 %v66
    %296 = vmatprep.subr.mxu0 0.0
    %297 = vmatpush1.msra.mxu0 %v67
    %298 = vmatprep.subr.mxu0 0.0
    %299 = vmatpush1.msra.mxu0 %v68
    %300 = vmatprep.subr.mxu0 0.0
    %301 = vmatpush1.msra.mxu0 %v69
    %302 = vmatprep.subr.mxu0 0.0
    %303 = vmatpush1.msra.mxu0 %v70
    %304 = vmatprep.subr.mxu0 0.0
    %305 = vmatpush1.msra.mxu0 %v71
    %306 = vmatprep.subr.mxu0 0.0
    %307 = vmatpush1.msra.mxu0 %v72
    %308 = vmatprep.subr.mxu0 0.0
    %309 = vmatpush1.msra.mxu0 %v73
    %310 = vmatprep.subr.mxu0 0.0
    %311 = vmatpush1.msra.mxu0 %v74
    %312 = vmatprep.subr.mxu0 0.0
    %313 = vmatpush1.msra.mxu0 %v75
    %314 = vmatprep.subr.mxu0 0.0
    %315 = vmatpush1.msra.mxu0 %v76
    %316 = vmatprep.subr.mxu0 0.0
    %317 = vmatpush1.msra.mxu0 %v77
    %318 = vmatprep.subr.mxu0 0.0
    %319 = vmatpush1.msra.mxu0 %v78
    %320 = vmatprep.subr.mxu0 0.0
    %321 = vmatpush1.msra.mxu0 %v79
    %322 = vmatprep.subr.mxu0 0.0
    %323 = vmatpush1.msra.mxu0 %v80
    %324 = vmatprep.subr.mxu0 0.0
    %325 = vmatpush1.msra.mxu0 %v81
    %326 = vmatprep.subr.mxu0 0.0
    %327 = vmatpush1.msra.mxu0 %v82
    %328 = vmatprep.subr.mxu0 0.0
    %329 = vmatpush1.msra.mxu0 %v83
    %330 = vmatprep.subr.mxu0 0.0
    %331 = vmatpush1.msra.mxu0 %v84
    %332 = vmatprep.subr.mxu0 0.0
    %333 = vmatpush1.msra.mxu0 %v85
    %334 = vmatprep.subr.mxu0 0.0
    %335 = vmatpush1.msra.mxu0 %v86
    %336 = vmatprep.mubr.f32.mxu0 %v176
    %337 = vmatmul.mubr.f32.gmra.mrb[0].mxu0 %v174
    %v338 = vpop.f32.mrb[0].mxu0
    %v339 = vadd.f32 %v269, %v338
    %v340 = vpop.f32.mrb[0].mxu0
    %341 = vdwg.mxu0
    %342 = vmatprep.subr.mxu0 0.0
    %343 = vmatpush1.msra.mxu0 %v87
    %344 = vmatprep.subr.mxu0 0.0
    %345 = vmatpush1.msra.mxu0 %v88
    %346 = vmatprep.subr.mxu0 0.0
    %347 = vmatpush1.msra.mxu0 %v89
    %348 = vmatprep.subr.mxu0 0.0
    %349 = vmatpush1.msra.mxu0 %v90
    %350 = vmatprep.subr.mxu0 0.0
    %351 = vmatpush1.msra.mxu0 %v91
    %352 = vmatprep.subr.mxu0 0.0
    %353 = vmatpush1.msra.mxu0 %v92
    %354 = vmatprep.subr.mxu0 0.0
    %355 = vmatpush1.msra.mxu0 %v93
    %356 = vmatprep.subr.mxu0 0.0
    %357 = vmatpush1.msra.mxu0 %v94
    %358 = vmatprep.subr.mxu0 0.0
    %359 = vmatpush1.msra.mxu0 %v95
    %360 = vmatprep.subr.mxu0 0.0
    %361 = vmatpush1.msra.mxu0 %v96
    %362 = vmatprep.subr.mxu0 0.0
    %363 = vmatpush1.msra.mxu0 %v97
    %364 = vmatprep.subr.mxu0 0.0
    %365 = vmatpush1.msra.mxu0 %v98
    %366 = vmatprep.subr.mxu0 0.0
    %367 = vmatpush1.msra.mxu0 %v99
    %368 = vmatprep.subr.mxu0 0.0
    %369 = vmatpush1.msra.mxu0 %v100
    %370 = vmatprep.subr.mxu0 0.0
    %371 = vmatpush1.msra.mxu0 %v101
    %372 = vmatprep.subr.mxu0 0.0
    %373 = vmatpush1.msra.mxu0 %v102
    %374 = vmatprep.subr.mxu0 0.0
    %375 = vmatpush1.msra.mxu0 %v103
    %376 = vmatprep.subr.mxu0 0.0
    %377 = vmatpush1.msra.mxu0 %v104
    %378 = vmatprep.subr.mxu0 0.0
    %379 = vmatpush1.msra.mxu0 %v105
    %380 = vmatprep.subr.mxu0 0.0
    %381 = vmatpush1.msra.mxu0 %v106
    %382 = vmatprep.subr.mxu0 0.0
    %383 = vmatpush1.msra.mxu0 %v107
    %384 = vmatprep.subr.mxu0 0.0
    %385 = vmatpush1.msra.mxu0 %v108
    %386 = vmatprep.subr.mxu0 0.0
    %387 = vmatpush1.msra.mxu0 %v109
    %388 = vmatprep.subr.mxu0 0.0
    %389 = vmatpush1.msra.mxu0 %v110
    %390 = vmatprep.subr.mxu0 0.0
    %391 = vmatpush1.msra.mxu0 %v111
    %392 = vmatprep.subr.mxu0 0.0
    %393 = vmatpush1.msra.mxu0 %v112
    %394 = vmatprep.subr.mxu0 0.0
    %395 = vmatpush1.msra.mxu0 %v113
    %396 = vmatprep.subr.mxu0 0.0
    %397 = vmatpush1.msra.mxu0 %v114
    %398 = vmatprep.subr.mxu0 0.0
    %399 = vmatpush1.msra.mxu0 %v115
    %400 = vmatprep.subr.mxu0 0.0
    %401 = vmatpush1.msra.mxu0 %v116
    %402 = vmatprep.subr.mxu0 0.0
    %403 = vmatpush1.msra.mxu0 %v117
    %404 = vmatprep.subr.mxu0 0.0
    %405 = vmatpush1.msra.mxu0 %v118
    %406 = vmatprep.mubr.f32.mxu0 %v192
    %407 = vmatmul.mubr.f32.gmra.mrb[0].mxu0 %v184
    %v408 = vpop.f32.mrb[0].mxu0
    %v409 = vadd.f32 %v339, %v408
    %v410 = vpop.f32.mrb[0].mxu0
    %411 = vdwg.mxu0
    %412 = vmatprep.subr.mxu0 0.0
    %413 = vmatpush1.msra.mxu0 %v119
    %414 = vmatprep.subr.mxu0 0.0
    %415 = vmatpush1.msra.mxu0 %v120
    %416 = vmatprep.subr.mxu0 0.0
    %417 = vmatpush1.msra.mxu0 %v121
    %418 = vmatprep.subr.mxu0 0.0
    %419 = vmatpush1.msra.mxu0 %v122
    %420 = vmatprep.subr.mxu0 0.0
    %421 = vmatpush1.msra.mxu0 %v123
    %422 = vmatprep.subr.mxu0 0.0
    %423 = vmatpush1.msra.mxu0 %v124
    %424 = vmatprep.subr.mxu0 0.0
    %425 = vmatpush1.msra.mxu0 %v125
    %426 = vmatprep.subr.mxu0 0.0
    %427 = vmatpush1.msra.mxu0 %v126
    %428 = vmatprep.subr.mxu0 0.0
    %429 = vmatpush1.msra.mxu0 %v127
    %430 = vmatprep.subr.mxu0 0.0
    %431 = vmatpush1.msra.mxu0 %v128
    %432 = vmatprep.subr.mxu0 0.0
    %433 = vmatpush1.msra.mxu0 %v129
    %434 = vmatprep.subr.mxu0 0.0
    %435 = vmatpush1.msra.mxu0 %v130
    %436 = vmatprep.subr.mxu0 0.0
    %437 = vmatpush1.msra.mxu0 %v131
    %438 = vmatprep.subr.mxu0 0.0
    %439 = vmatpush1.msra.mxu0 %v132
    %440 = vmatprep.subr.mxu0 0.0
    %441 = vmatpush1.msra.mxu0 %v133
    %442 = vmatprep.subr.mxu0 0.0
    %443 = vmatpush1.msra.mxu0 %v134
    %444 = vmatprep.subr.mxu0 0.0
    %445 = vmatpush1.msra.mxu0 %v135
    %446 = vmatprep.subr.mxu0 0.0
    %447 = vmatpush1.msra.mxu0 %v136
    %448 = vmatprep.subr.mxu0 0.0
    %449 = vmatpush1.msra.mxu0 %v137
    %450 = vmatprep.subr.mxu0 0.0
    %451 = vmatpush1.msra.mxu0 %v138
    %452 = vmatprep.subr.mxu0 0.0
    %453 = vmatpush1.msra.mxu0 %v139
    %454 = vmatprep.subr.mxu0 0.0
    %455 = vmatpush1.msra.mxu0 %v140
    %456 = vmatprep.subr.mxu0 0.0
    %457 = vmatpush1.msra.mxu0 %v141
    %458 = vmatprep.subr.mxu0 0.0
    %459 = vmatpush1.msra.mxu0 %v142
    %460 = vmatprep.subr.mxu0 0.0
    %461 = vmatpush1.msra.mxu0 %v143
    %462 = vmatprep.subr.mxu0 0.0
    %463 = vmatpush1.msra.mxu0 %v144
    %464 = vmatprep.subr.mxu0 0.0
    %465 = vmatpush1.msra.mxu0 %v145
    %466 = vmatprep.subr.mxu0 0.0
    %467 = vmatpush1.msra.mxu0 %v146
    %468 = vmatprep.subr.mxu0 0.0
    %469 = vmatpush1.msra.mxu0 %v147
    %470 = vmatprep.subr.mxu0 0.0
    %471 = vmatpush1.msra.mxu0 %v148
    %472 = vmatprep.subr.mxu0 0.0
    %473 = vmatpush1.msra.mxu0 %v149
    %474 = vmatprep.subr.mxu0 0.0
    %475 = vmatpush1.msra.mxu0 %v150
    %476 = vmatprep.mubr.f32.mxu0 %v193
    %477 = vmatmul.mubr.f32.gmra.mrb[0].mxu0 %v191
    %v478 = vpop.f32.mrb[0].mxu0
    %v479 = vadd.f32 %v409, %v478
    %v480 = vpop.f32.mrb[0].mxu0
    %481 = vdwg.mxu0
    %v482 = vld [vmem:[%s3] sm:$0xff]
    %v483 = vld [vmem:[%s3 + $0x8] sm:$0xff]
    %v484 = vld [vmem:[%s3 + $0x10] sm:$0xff]
    %v485 = vld [vmem:[%s3 + $0x18] sm:$0xff]
    %v486 = vld [vmem:[%s3 + $0x20] sm:$0xff]
    %v487 = vld [vmem:[%s3 + $0x28] sm:$0xff]
    %v488 = vld [vmem:[%s3 + $0x30] sm:$0xff]
    %v489 = vld [vmem:[%s3 + $0x38] sm:$0xff]
    %v490 = vld [vmem:[%s4] sm:$0x1]
    %v492 = vlaneseq
    %v493 = vshrl.u32 %v492, 7
    %v494 = vsub.s32 0, %v493
    %v495 = vrot.slane %v490, %v494
    %vm497 = vcmask 523264
    %v499 = vsel %vm497, %v479, 0
    %501 = vmatprep.subr.mxu0 0.0
    %502 = vmatpush1.msra.mxu0 %v482
    %503 = vmatprep.subr.mxu0 0.0
    %504 = vmatpush1.msra.mxu0 %v483
    %505 = vmatprep.subr.mxu0 0.0
    %506 = vmatpush1.msra.mxu0 %v484
    %507 = vmatprep.subr.mxu0 0.0
    %508 = vmatpush1.msra.mxu0 %v485
    %509 = vmatprep.subr.mxu0 0.0
    %510 = vmatpush1.msra.mxu0 %v486
    %511 = vmatprep.subr.mxu0 0.0
    %512 = vmatpush1.msra.mxu0 %v487
    %513 = vmatprep.subr.mxu0 0.0
    %514 = vmatpush1.msra.mxu0 %v488
    %515 = vmatprep.subr.mxu0 0.0
    %516 = vmatpush1.msra.mxu0 %v489
    %517 = vmatprep.subr.mxu0 0.0
    %518 = vmatpush1.msra.mxu0 0.0
    %519 = vmatprep.subr.mxu0 0.0
    %520 = vmatpush1.msra.mxu0 0.0
    %521 = vmatprep.subr.mxu0 0.0
    %522 = vmatpush1.msra.mxu0 0.0
    %523 = vmatprep.subr.mxu0 0.0
    %524 = vmatpush1.msra.mxu0 0.0
    %525 = vmatprep.subr.mxu0 0.0
    %526 = vmatpush1.msra.mxu0 0.0
    %527 = vmatprep.subr.mxu0 0.0
    %528 = vmatpush1.msra.mxu0 0.0
    %529 = vmatprep.subr.mxu0 0.0
    %530 = vmatpush1.msra.mxu0 0.0
    %531 = vmatprep.subr.mxu0 0.0
    %532 = vmatpush1.msra.mxu0 0.0
    %533 = vmatprep.subr.mxu0 0.0
    %534 = vmatpush1.msra.mxu0 0.0
    %535 = vmatprep.subr.mxu0 0.0
    %536 = vmatpush1.msra.mxu0 0.0
    %537 = vmatprep.subr.mxu0 0.0
    %538 = vmatpush1.msra.mxu0 0.0
    %539 = vmatprep.subr.mxu0 0.0
    %540 = vmatpush1.msra.mxu0 0.0
    %541 = vmatprep.subr.mxu0 0.0
    %542 = vmatpush1.msra.mxu0 0.0
    %543 = vmatprep.subr.mxu0 0.0
    %544 = vmatpush1.msra.mxu0 0.0
    %545 = vmatprep.subr.mxu0 0.0
    %546 = vmatpush1.msra.mxu0 0.0
    %547 = vmatprep.subr.mxu0 0.0
    %548 = vmatpush1.msra.mxu0 0.0
    %549 = vmatprep.subr.mxu0 0.0
    %550 = vmatpush1.msra.mxu0 0.0
    %551 = vmatprep.subr.mxu0 0.0
    %552 = vmatpush1.msra.mxu0 0.0
    %553 = vmatprep.subr.mxu0 0.0
    %554 = vmatpush1.msra.mxu0 0.0
    %555 = vmatprep.subr.mxu0 0.0
    %556 = vmatpush1.msra.mxu0 0.0
    %557 = vmatprep.subr.mxu0 0.0
    %558 = vmatpush1.msra.mxu0 0.0
    %559 = vmatprep.subr.mxu0 0.0
    %560 = vmatpush1.msra.mxu0 0.0
    %561 = vmatprep.subr.mxu0 0.0
    %562 = vmatpush1.msra.mxu0 0.0
    %563 = vmatprep.subr.mxu0 0.0
    %564 = vmatpush1.msra.mxu0 0.0
    %565 = vmatprep.mubr.f32.mxu0 0.0
    %566 = vmatmul.mubr.f32.gmra.mrb[0].mxu0 %v499
    %v567 = vpop.f32.mrb[0].mxu0
    %v568 = vadd.f32 %v495, %v567
    %v569 = vpop.f32.mrb[0].mxu0
    %570 = vdwg.mxu0
    %571 = vst [vmem:[#allocation2] sm:$0x3] %v568
    // Predicated region
    $region22: #{tudui_forward.3} parent=1 // pred_check
      _
    $region23: #{tudui_forward.3} parent=1 // pred_check_branch
      %573 = sbr.rel (0) target = $region25
    $region24: #{tudui_forward.3} parent=1 // pred_region
      %s575 = ssub.s32 32, 32
      %576 = vsyncadd [#allocation3], %s575
      %s578 = sshll.u32 [#allocation2], 4
      %s579 = int_to_ptr.vmem [resolvable:$true] %s578
      %581 = dma.vmem_to_hbm [thread:$0]  %s579, 32, %s5, [#allocation3]
    $region25: #{tudui_forward.3} parent=1 // pred_fallthru
      _
    // Predicated region
    $region26: #{tudui_forward.3} parent=1 // pred_check
      _
    $region27: #{tudui_forward.3} parent=1 // pred_check_branch
      %583 = sbr.rel (0) target = $region29
    $region28: #{tudui_forward.3} parent=1 // pred_region
      %584 = dma.done [#allocation3], 32
    $region29: #{tudui_forward.3} parent=1 // pred_fallthru
      _
    %585 = vsyncpa [#allocation3], 1

// kernel: tudui_forward.2
$region0: #{tudui_forward.2}
  #allocation0 [shape = 'u32[]', space=smem, size = 0x4, offset = 0x4, fixed_abs, tag = 'smem constant byte address 0x4 - core index']
  #allocation1 [shape = 'u32[144,128]{1,0:T(1,128)}', space=vmem, size = 0x12000, scoped, tag = 'internal scratch']
  #allocation2 [shape = 'f32[16,32,32]{2,1,0:T(8,128)}', space=vmem, size = 0x40000, scoped, tag = 'scratch operand']
  #allocation3 [shape = 'f32[1,20,26,32]{3,2,1,0:T(8,128)}', space=vmem, size = 0x50000, scoped, tag = 'scratch operand']
  #allocation4 [shape = 'f32[8,16,32]{2,1,0:T(8,128)}', space=vmem, size = 0x10000, scoped, tag = 'scratch operand']
  #allocation5 [shape = 'f32[1,12,18,32]{3,2,1,0:T(8,128)}', space=vmem, size = 0x24000, scoped, tag = 'scratch operand']
  #allocation6 [shape = 'f32[4,8,64]{2,1,0:T(8,128)}', space=vmem, size = 0x4000, scoped, tag = 'scratch operand']
  %s0 = inlined_call_operand.vmem [shape: f32[2,1024,75], index: 0, kind: input, shape index: {}]
  %s1 = inlined_call_operand.vmem [shape: f32[75,32], index: 1, kind: input, shape index: {}]
  %s2 = inlined_call_operand.vmem [shape: f32[1,32], index: 2, kind: input, shape index: {}]
  %s3 = inlined_call_operand.vmem [shape: f32[800,32], index: 3, kind: input, shape index: {}]
  %s4 = inlined_call_operand.vmem [shape: f32[1,32], index: 4, kind: input, shape index: {}]
  %s5 = inlined_call_operand.vmem [shape: f32[800,64], index: 5, kind: input, shape index: {}]
  %s6 = inlined_call_operand.vmem [shape: f32[1,64], index: 6, kind: input, shape index: {}]
  %s7 = inlined_call_operand.vmem [shape: f32[8,4,64], index: 7, kind: output, shape index: {}]
  %s8 = sld [smem:[#allocation0]]
  $region61: #{tudui_forward.2} parent=0
    _
  %s10 = ssub.s32 1, %s8
  %s11 = scalar_select 0, %s10, %s8
  loop: start=0, step=1, limit=4
  $region2: #{tudui_forward.2} parent=0 // loop_pre_header
    _
  $region3: #{tudui_forward.2} parent=0 // loop_header
    %s13 = sphi 0, %s17
    %p14 = scmp.ge.s32.totalorder %s13, 4
    %s23 = sphi 0, %s25
    %s26 = sphi 0, %s23
    %s27 = sphi 0, %s26
    %s43 = sphi 0, %s27
    %s47 = sphi 0, %s47
    %s49 = sphi 0, %s47
    %s50 = sphi 0, %s49
    %s64 = sphi 0, %s50
    %s68 = sphi 0, %s68
    %s70 = sphi 0, %s68
    %s71 = sphi 0, %s70
    %s85 = sphi 0, %s71
    %s89 = sphi 0, %s89
    %s91 = sphi 0, %s89
    %s92 = sphi 0, %s91
    %s106 = sphi 0, %s92
    %s110 = sphi 0, %s110
    %s112 = sphi 0, %s110
    %s113 = sphi 0, %s112
    %s127 = sphi 0, %s113
    %s131 = sphi 0, %s131
    %s133 = sphi 0, %s131
    %s134 = sphi 0, %s133
    %s148 = sphi 0, %s134
    %s152 = sphi 0, %s152
    %s154 = sphi 0, %s152
    %s155 = sphi 0, %s154
    %s169 = sphi 0, %s155
    %s175 = sphi 0, %s177
    %s178 = sphi 0, %s175
    %s179 = sphi 0, %s178
    %s195 = sphi 0, %s179
  $region4: #{tudui_forward.2} parent=0 // loop_header_branch
    %16 = sbr.rel (%p14) target = $region8
  $region5: #{tudui_forward.2} parent=0 // loop_body
    %s18 = ssub.s32 %s13, 1
    %s19 = ssub.s32 %s13, 2
    %s20 = sadd.s32 %s13, 1
    %s21 = ssub.s32 %s13, %s20
    %p22 = scmp.eq.s32.totalorder %s21, 0
    %s24 = sadd.s32 %s23, 1
    %s25 = scalar_select %p22, %s23, %s24
    %p28 = pneg %p22
    %p29 = scmp.eq.s32.totalorder %s13, 1
    %p30 = por %p28, %p29
    %p31 = scmp.ne.s32.totalorder %s23, %s26
    %p32 = scmp.eq.s32.totalorder %s13, 0
    %p33 = por %p31, %p32
    %p34 = scmp.ne.s32.totalorder %s23, %s26
    %p35 = scmp.eq.s32.totalorder %s18, 1
    %p36 = por %p34, %p35
    %p37 = scmp.ne.s32.totalorder %s26, %s27
    %p38 = scmp.eq.s32.totalorder %s18, 0
    %p39 = por %p37, %p38
    %p40 = scmp.ne.s32.totalorder %s26, %s27
    %p41 = scmp.eq.s32.totalorder %s19, 1
    %p42 = por %p40, %p41
    %p44 = scmp.ne.s32.totalorder %s27, %s43
    %p45 = scmp.eq.s32.totalorder %s19, 0
    %p46 = por %p44, %p45
    %s48 = sadd.s32 %s47, 1
    %p51 = scmp.eq.s32.totalorder %s13, 1
    %p52 = scmp.ne.s32.totalorder %s47, %s49
    %p53 = scmp.eq.s32.totalorder %s13, 0
    %p54 = por %p52, %p53
    %p55 = scmp.ne.s32.totalorder %s47, %s49
    %p56 = scmp.eq.s32.totalorder %s18, 1
    %p57 = por %p55, %p56
    %p58 = scmp.ne.s32.totalorder %s49, %s50
    %p59 = scmp.eq.s32.totalorder %s18, 0
    %p60 = por %p58, %p59
    %p61 = scmp.ne.s32.totalorder %s49, %s50
    %p62 = scmp.eq.s32.totalorder %s19, 1
    %p63 = por %p61, %p62
    %p65 = scmp.ne.s32.totalorder %s50, %s64
    %p66 = scmp.eq.s32.totalorder %s19, 0
    %p67 = por %p65, %p66
    %s69 = sadd.s32 %s68, 1
    %p72 = scmp.eq.s32.totalorder %s13, 1
    %p73 = scmp.ne.s32.totalorder %s68, %s70
    %p74 = scmp.eq.s32.totalorder %s13, 0
    %p75 = por %p73, %p74
    %p76 = scmp.ne.s32.totalorder %s68, %s70
    %p77 = scmp.eq.s32.totalorder %s18, 1
    %p78 = por %p76, %p77
    %p79 = scmp.ne.s32.totalorder %s70, %s71
    %p80 = scmp.eq.s32.totalorder %s18, 0
    %p81 = por %p79, %p80
    %p82 = scmp.ne.s32.totalorder %s70, %s71
    %p83 = scmp.eq.s32.totalorder %s19, 1
    %p84 = por %p82, %p83
    %p86 = scmp.ne.s32.totalorder %s71, %s85
    %p87 = scmp.eq.s32.totalorder %s19, 0
    %p88 = por %p86, %p87
    %s90 = sadd.s32 %s89, 1
    %p93 = scmp.eq.s32.totalorder %s13, 1
    %p94 = scmp.ne.s32.totalorder %s89, %s91
    %p95 = scmp.eq.s32.totalorder %s13, 0
    %p96 = por %p94, %p95
    %p97 = scmp.ne.s32.totalorder %s89, %s91
    %p98 = scmp.eq.s32.totalorder %s18, 1
    %p99 = por %p97, %p98
    %p100 = scmp.ne.s32.totalorder %s91, %s92
    %p101 = scmp.eq.s32.totalorder %s18, 0
    %p102 = por %p100, %p101
    %p103 = scmp.ne.s32.totalorder %s91, %s92
    %p104 = scmp.eq.s32.totalorder %s19, 1
    %p105 = por %p103, %p104
    %p107 = scmp.ne.s32.totalorder %s92, %s106
    %p108 = scmp.eq.s32.totalorder %s19, 0
    %p109 = por %p107, %p108
    %s111 = sadd.s32 %s110, 1
    %p114 = scmp.eq.s32.totalorder %s13, 1
    %p115 = scmp.ne.s32.totalorder %s110, %s112
    %p116 = scmp.eq.s32.totalorder %s13, 0
    %p117 = por %p115, %p116
    %p118 = scmp.ne.s32.totalorder %s110, %s112
    %p119 = scmp.eq.s32.totalorder %s18, 1
    %p120 = por %p118, %p119
    %p121 = scmp.ne.s32.totalorder %s112, %s113
    %p122 = scmp.eq.s32.totalorder %s18, 0
    %p123 = por %p121, %p122
    %p124 = scmp.ne.s32.totalorder %s112, %s113
    %p125 = scmp.eq.s32.totalorder %s19, 1
    %p126 = por %p124, %p125
    %p128 = scmp.ne.s32.totalorder %s113, %s127
    %p129 = scmp.eq.s32.totalorder %s19, 0
    %p130 = por %p128, %p129
    %s132 = sadd.s32 %s131, 1
    %p135 = scmp.eq.s32.totalorder %s13, 1
    %p136 = scmp.ne.s32.totalorder %s131, %s133
    %p137 = scmp.eq.s32.totalorder %s13, 0
    %p138 = por %p136, %p137
    %p139 = scmp.ne.s32.totalorder %s131, %s133
    %p140 = scmp.eq.s32.totalorder %s18, 1
    %p141 = por %p139, %p140
    %p142 = scmp.ne.s32.totalorder %s133, %s134
    %p143 = scmp.eq.s32.totalorder %s18, 0
    %p144 = por %p142, %p143
    %p145 = scmp.ne.s32.totalorder %s133, %s134
    %p146 = scmp.eq.s32.totalorder %s19, 1
    %p147 = por %p145, %p146
    %p149 = scmp.ne.s32.totalorder %s134, %s148
    %p150 = scmp.eq.s32.totalorder %s19, 0
    %p151 = por %p149, %p150
    %s153 = sadd.s32 %s152, 1
    %p156 = scmp.eq.s32.totalorder %s13, 1
    %p157 = scmp.ne.s32.totalorder %s152, %s154
    %p158 = scmp.eq.s32.totalorder %s13, 0
    %p159 = por %p157, %p158
    %p160 = scmp.ne.s32.totalorder %s152, %s154
    %p161 = scmp.eq.s32.totalorder %s18, 1
    %p162 = por %p160, %p161
    %p163 = scmp.ne.s32.totalorder %s154, %s155
    %p164 = scmp.eq.s32.totalorder %s18, 0
    %p165 = por %p163, %p164
    %p166 = scmp.ne.s32.totalorder %s154, %s155
    %p167 = scmp.eq.s32.totalorder %s19, 1
    %p168 = por %p166, %p167
    %p170 = scmp.ne.s32.totalorder %s155, %s169
    %p171 = scmp.eq.s32.totalorder %s19, 0
    %p172 = por %p170, %p171
    %s173 = ssub.s32 %s13, %s20
    %p174 = scmp.eq.s32.totalorder %s173, 0
    %s176 = sadd.s32 %s175, 1
    %s177 = scalar_select %p174, %s175, %s176
    %p180 = pneg %p174
    %p181 = scmp.eq.s32.totalorder %s13, 1
    %p182 = por %p180, %p181
    %p183 = scmp.ne.s32.totalorder %s175, %s178
    %p184 = scmp.eq.s32.totalorder %s13, 0
    %p185 = por %p183, %p184
    %p186 = scmp.ne.s32.totalorder %s175, %s178
    %p187 = scmp.eq.s32.totalorder %s18, 1
    %p188 = por %p186, %p187
    %p189 = scmp.ne.s32.totalorder %s178, %s179
    %p190 = scmp.eq.s32.totalorder %s18, 0
    %p191 = por %p189, %p190
    %p192 = scmp.ne.s32.totalorder %s178, %s179
    %p193 = scmp.eq.s32.totalorder %s19, 1
    %p194 = por %p192, %p193
    %p196 = scmp.ne.s32.totalorder %s179, %s195
    %p197 = scmp.eq.s32.totalorder %s19, 0
    %p198 = por %p196, %p197
    %p199 = scmp.le.s32.totalorder 1, %s13
    %p200 = scmp.lt.s32.totalorder %s13, 3
    %p201 = pnand %p199, %p200
    %p202 = pneg %p201
    // Predicated region
    $region9: #{tudui_forward.2} parent=5 // pred_check
      _
    $region10: #{tudui_forward.2} parent=5 // pred_check_branch
      %204 = sbr.rel (%p201) target = $region12
    $region11: #{tudui_forward.2} parent=5 // pred_region
      %s205 = ssub.s32 %s13, 1
      // Predicated region
      $region13: #{tudui_forward.2} parent=11 // pred_check
        %p206 = pneg %p60
      $region14: #{tudui_forward.2} parent=11 // pred_check_branch
        %208 = sbr.rel (%p206) target = $region16
      $region15: #{tudui_forward.2} parent=11 // pred_region
        _
      $region16: #{tudui_forward.2} parent=11 // pred_fallthru
        _
      // Predicated region
      $region17: #{tudui_forward.2} parent=11 // pred_check
        %p209 = pneg %p81
      $region18: #{tudui_forward.2} parent=11 // pred_check_branch
        %211 = sbr.rel (%p209) target = $region20
      $region19: #{tudui_forward.2} parent=11 // pred_region
        _
      $region20: #{tudui_forward.2} parent=11 // pred_fallthru
        _
      // Predicated region
      $region21: #{tudui_forward.2} parent=11 // pred_check
        %p212 = pneg %p102
      $region22: #{tudui_forward.2} parent=11 // pred_check_branch
        %214 = sbr.rel (%p212) target = $region24
      $region23: #{tudui_forward.2} parent=11 // pred_region
        _
      $region24: #{tudui_forward.2} parent=11 // pred_fallthru
        _
      // Predicated region
      $region25: #{tudui_forward.2} parent=11 // pred_check
        %p215 = pneg %p123
      $region26: #{tudui_forward.2} parent=11 // pred_check_branch
        %217 = sbr.rel (%p215) target = $region28
      $region27: #{tudui_forward.2} parent=11 // pred_region
        _
      $region28: #{tudui_forward.2} parent=11 // pred_fallthru
        _
      // Predicated region
      $region29: #{tudui_forward.2} parent=11 // pred_check
        %p218 = pneg %p144
      $region30: #{tudui_forward.2} parent=11 // pred_check_branch
        %220 = sbr.rel (%p218) target = $region32
      $region31: #{tudui_forward.2} parent=11 // pred_region
        _
      $region32: #{tudui_forward.2} parent=11 // pred_fallthru
        _
      // Predicated region
      $region33: #{tudui_forward.2} parent=11 // pred_check
        %p221 = pneg %p165
      $region34: #{tudui_forward.2} parent=11 // pred_check_branch
        %223 = sbr.rel (%p221) target = $region36
      $region35: #{tudui_forward.2} parent=11 // pred_region
        _
      $region36: #{tudui_forward.2} parent=11 // pred_fallthru
        _
    $region12: #{tudui_forward.2} parent=5 // pred_fallthru
      _
    %p224 = scmp.lt.s32.totalorder %s13, 2
    // Predicated region
    $region37: #{tudui_forward.2} parent=5 // pred_check
      %p225 = pneg %p224
    $region38: #{tudui_forward.2} parent=5 // pred_check_branch
      %227 = sbr.rel (%p225) target = $region40
    $region39: #{tudui_forward.2} parent=5 // pred_region
      // Predicated region
      $region41: #{tudui_forward.2} parent=39 // pred_check
        %p228 = pneg %p33
      $region42: #{tudui_forward.2} parent=39 // pred_check_branch
        %230 = sbr.rel (%p228) target = $region44
      $region43: #{tudui_forward.2} parent=39 // pred_region
        %p231 = scmp.lt.s32.totalorder %s13, 1
        %s232 = scalar_select %p231, %s13, 1
        %s233 = smul.addr %s232, 128
        %s234 = smul.addr %s233, 8
        %s235 = scalar_lea.vmem %s0, %s234
      $region44: #{tudui_forward.2} parent=39 // pred_fallthru
        _
    $region40: #{tudui_forward.2} parent=5 // pred_fallthru
      _
    %p236 = scmp.le.s32.totalorder 1, %s13
    %p237 = scmp.lt.s32.totalorder %s13, 3
    %p238 = pnand %p236, %p237
    %p239 = pneg %p238
    // Predicated region
    $region45: #{tudui_forward.2} parent=5 // pred_check
      _
    $region46: #{tudui_forward.2} parent=5 // pred_check_branch
      %241 = sbr.rel (%p238) target = $region48
    $region47: #{tudui_forward.2} parent=5 // pred_region
      %s242 = ssub.s32 %s13, 1
      %p243 = scmp.lt.s32.totalorder %s18, 1
      %s244 = scalar_select %p243, %s18, 1
      %s245 = smul.addr %s244, 128
      %s246 = smul.addr %s245, 8
      %s247 = scalar_lea.vmem %s0, %s246
      %p248 = pneg %p39
      %p249 = pneg %p36
      %p250 = pneg %p60
      %p251 = pneg %p57
      %p252 = pneg %p81
      %p253 = pneg %p78
      %p254 = pneg %p102
      %p255 = pneg %p99
      %p256 = pneg %p123
      %p257 = pneg %p120
      %p258 = pneg %p144
      %p259 = pneg %p141
      %p260 = pneg %p165
      %p261 = pneg %p162
      %p262 = pneg %p191
      %p263 = pneg %p188
      %s264 = smul.u32 4, %s18
      %p265 = scmp.lt.s32.totalorder %s264, 7
      %s266 = scalar_select %p265, %s264, 7
      %s267 = smul.addr %s266, 4
      %s268 = scalar_lea.vmem %s7, %s267
      %p269 = scmp.lt.s32.totalorder %s18, 1
      %s270 = scalar_select %p269, %s18, 1
      %s271 = smul.addr %s270, 128
      %s272 = smul.addr %s271, 8
      %s273 = scalar_lea.vmem %s0, %s272
      %s274 = smul.u32 4, %s18
      %p275 = scmp.lt.s32.totalorder %s274, 7
      %s276 = scalar_select %p275, %s274, 7
      %s277 = smul.addr %s276, 4
      %s278 = scalar_lea.vmem %s7, %s277
      %s279 = smul.u32 4, %s18
      %vm280 = vcmask 261120
      %281 = vst.msk [vmem:[#allocation3] sm:$0xff] %vm280, 0.0
      %282 = vst.msk [vmem:[#allocation3 + $0x8] sm:$0xff] %vm280, 0.0
      %283 = vst.msk [vmem:[#allocation3 + $0x10] sm:$0xff] %vm280, 0.0
      %vm284 = vcmask 254976
      %285 = vst.msk [vmem:[#allocation3 + $0x18] sm:$0x3] %vm284, 0.0
      %286 = vst.msk [vmem:[#allocation3 + $0x20] sm:$0xff] %vm280, 0.0
      %287 = vst.msk [vmem:[#allocation3 + $0x28] sm:$0xff] %vm280, 0.0
      %288 = vst.msk [vmem:[#allocation3 + $0x30] sm:$0xff] %vm280, 0.0
      %289 = vst.msk [vmem:[#allocation3 + $0x38] sm:$0x3] %vm284, 0.0
      %290 = vst.msk [vmem:[#allocation3 + $0x40] sm:$0xff] %vm280, 0.0
      %291 = vst.msk [vmem:[#allocation3 + $0x48] sm:$0xff] %vm280, 0.0
      %292 = vst.msk [vmem:[#allocation3 + $0x50] sm:$0xff] %vm280, 0.0
      %293 = vst.msk [vmem:[#allocation3 + $0x58] sm:$0x3] %vm284, 0.0
      %294 = vst.msk [vmem:[#allocation3 + $0x60] sm:$0xff] %vm280, 0.0
      %295 = vst.msk [vmem:[#allocation3 + $0x68] sm:$0xff] %vm280, 0.0
      %296 = vst.msk [vmem:[#allocation3 + $0x70] sm:$0xff] %vm280, 0.0
      %297 = vst.msk [vmem:[#allocation3 + $0x78] sm:$0x3] %vm284, 0.0
      %298 = vst.msk [vmem:[#allocation3 + $0x80] sm:$0xff] %vm280, 0.0
      %299 = vst.msk [vmem:[#allocation3 + $0x88] sm:$0xff] %vm280, 0.0
      %300 = vst.msk [vmem:[#allocation3 + $0x90] sm:$0xff] %vm280, 0.0
      %301 = vst.msk [vmem:[#allocation3 + $0x98] sm:$0x3] %vm284, 0.0
      %302 = vst.msk [vmem:[#allocation3 + $0xa0] sm:$0xff] %vm280, 0.0
      %303 = vst.msk [vmem:[#allocation3 + $0xa8] sm:$0xff] %vm280, 0.0
      %304 = vst.msk [vmem:[#allocation3 + $0xb0] sm:$0xff] %vm280, 0.0
      %305 = vst.msk [vmem:[#allocation3 + $0xb8] sm:$0x3] %vm284, 0.0
      %306 = vst.msk [vmem:[#allocation3 + $0xc0] sm:$0xff] %vm280, 0.0
      %307 = vst.msk [vmem:[#allocation3 + $0xc8] sm:$0xff] %vm280, 0.0
      %308 = vst.msk [vmem:[#allocation3 + $0xd0] sm:$0xff] %vm280, 0.0
      %309 = vst.msk [vmem:[#allocation3 + $0xd8] sm:$0x3] %vm284, 0.0
      %310 = vst.msk [vmem:[#allocation3 + $0xe0] sm:$0xff] %vm280, 0.0
      %311 = vst.msk [vmem:[#allocation3 + $0xe8] sm:$0xff] %vm280, 0.0
      %312 = vst.msk [vmem:[#allocation3 + $0xf0] sm:$0xff] %vm280, 0.0
      %313 = vst.msk [vmem:[#allocation3 + $0xf8] sm:$0x3] %vm284, 0.0
      %314 = vst.msk [vmem:[#allocation3 + $0x100] sm:$0xff] %vm280, 0.0
      %315 = vst.msk [vmem:[#allocation3 + $0x108] sm:$0xff] %vm280, 0.0
      %316 = vst.msk [vmem:[#allocation3 + $0x110] sm:$0xff] %vm280, 0.0
      %317 = vst.msk [vmem:[#allocation3 + $0x118] sm:$0x3] %vm284, 0.0
      %318 = vst.msk [vmem:[#allocation3 + $0x120] sm:$0xff] %vm280, 0.0
      %319 = vst.msk [vmem:[#allocation3 + $0x128] sm:$0xff] %vm280, 0.0
      %320 = vst.msk [vmem:[#allocation3 + $0x130] sm:$0xff] %vm280, 0.0
      %321 = vst.msk [vmem:[#allocation3 + $0x138] sm:$0x3] %vm284, 0.0
      %322 = vst.msk [vmem:[#allocation3 + $0x140] sm:$0xff] %vm280, 0.0
      %323 = vst.msk [vmem:[#allocation3 + $0x148] sm:$0xff] %vm280, 0.0
      %324 = vst.msk [vmem:[#allocation3 + $0x150] sm:$0xff] %vm280, 0.0
      %325 = vst.msk [vmem:[#allocation3 + $0x158] sm:$0x3] %vm284, 0.0
      %326 = vst.msk [vmem:[#allocation3 + $0x160] sm:$0xff] %vm280, 0.0
      %327 = vst.msk [vmem:[#allocation3 + $0x168] sm:$0xff] %vm280, 0.0
      %328 = vst.msk [vmem:[#allocation3 + $0x170] sm:$0xff] %vm280, 0.0
      %329 = vst.msk [vmem:[#allocation3 + $0x178] sm:$0x3] %vm284, 0.0
      %330 = vst.msk [vmem:[#allocation3 + $0x180] sm:$0xff] %vm280, 0.0
      %331 = vst.msk [vmem:[#allocation3 + $0x188] sm:$0xff] %vm280, 0.0
      %332 = vst.msk [vmem:[#allocation3 + $0x190] sm:$0xff] %vm280, 0.0
      %333 = vst.msk [vmem:[#allocation3 + $0x198] sm:$0x3] %vm284, 0.0
      %334 = vst.msk [vmem:[#allocation3 + $0x1a0] sm:$0xff] %vm280, 0.0
      %335 = vst.msk [vmem:[#allocation3 + $0x1a8] sm:$0xff] %vm280, 0.0
      %336 = vst.msk [vmem:[#allocation3 + $0x1b0] sm:$0xff] %vm280, 0.0
      %337 = vst.msk [vmem:[#allocation3 + $0x1b8] sm:$0x3] %vm284, 0.0
      %338 = vst.msk [vmem:[#allocation3 + $0x1c0] sm:$0xff] %vm280, 0.0
      %339 = vst.msk [vmem:[#allocation3 + $0x1c8] sm:$0xff] %vm280, 0.0
      %340 = vst.msk [vmem:[#allocation3 + $0x1d0] sm:$0xff] %vm280, 0.0
      %341 = vst.msk [vmem:[#allocation3 + $0x1d8] sm:$0x3] %vm284, 0.0
      %342 = vst.msk [vmem:[#allocation3 + $0x1e0] sm:$0xff] %vm280, 0.0
      %343 = vst.msk [vmem:[#allocation3 + $0x1e8] sm:$0xff] %vm280, 0.0
      %344 = vst.msk [vmem:[#allocation3 + $0x1f0] sm:$0xff] %vm280, 0.0
      %345 = vst.msk [vmem:[#allocation3 + $0x1f8] sm:$0x3] %vm284, 0.0
      %346 = vst.msk [vmem:[#allocation3 + $0x200] sm:$0xff] %vm280, 0.0
      %347 = vst.msk [vmem:[#allocation3 + $0x208] sm:$0xff] %vm280, 0.0
      %348 = vst.msk [vmem:[#allocation3 + $0x210] sm:$0xff] %vm280, 0.0
      %349 = vst.msk [vmem:[#allocation3 + $0x218] sm:$0x3] %vm284, 0.0
      %350 = vst.msk [vmem:[#allocation3 + $0x220] sm:$0xff] %vm280, 0.0
      %351 = vst.msk [vmem:[#allocation3 + $0x228] sm:$0xff] %vm280, 0.0
      %352 = vst.msk [vmem:[#allocation3 + $0x230] sm:$0xff] %vm280, 0.0
      %353 = vst.msk [vmem:[#allocation3 + $0x238] sm:$0x3] %vm284, 0.0
      %354 = vst.msk [vmem:[#allocation3 + $0x240] sm:$0xff] %vm280, 0.0
      %355 = vst.msk [vmem:[#allocation3 + $0x248] sm:$0xff] %vm280, 0.0
      %356 = vst.msk [vmem:[#allocation3 + $0x250] sm:$0xff] %vm280, 0.0
      %357 = vst.msk [vmem:[#allocation3 + $0x258] sm:$0x3] %vm284, 0.0
      %358 = vst.msk [vmem:[#allocation3 + $0x260] sm:$0xff] %vm280, 0.0
      %359 = vst.msk [vmem:[#allocation3 + $0x268] sm:$0xff] %vm280, 0.0
      %360 = vst.msk [vmem:[#allocation3 + $0x270] sm:$0xff] %vm280, 0.0
      %361 = vst.msk [vmem:[#allocation3 + $0x278] sm:$0x3] %vm284, 0.0
      %362 = vst.msk [vmem:[#allocation5] sm:$0xff] %vm280, 0.0
      %363 = vst.msk [vmem:[#allocation5 + $0x8] sm:$0xff] %vm280, 0.0
      %364 = vst.msk [vmem:[#allocation5 + $0x10] sm:$0x3] %vm284, 0.0
      %365 = vst.msk [vmem:[#allocation5 + $0x18] sm:$0xff] %vm280, 0.0
      %366 = vst.msk [vmem:[#allocation5 + $0x20] sm:$0xff] %vm280, 0.0
      %367 = vst.msk [vmem:[#allocation5 + $0x28] sm:$0x3] %vm284, 0.0
      %368 = vst.msk [vmem:[#allocation5 + $0x30] sm:$0xff] %vm280, 0.0
      %369 = vst.msk [vmem:[#allocation5 + $0x38] sm:$0xff] %vm280, 0.0
      %370 = vst.msk [vmem:[#allocation5 + $0x40] sm:$0x3] %vm284, 0.0
      %371 = vst.msk [vmem:[#allocation5 + $0x48] sm:$0xff] %vm280, 0.0
      %372 = vst.msk [vmem:[#allocation5 + $0x50] sm:$0xff] %vm280, 0.0
      %373 = vst.msk [vmem:[#allocation5 + $0x58] sm:$0x3] %vm284, 0.0
      %374 = vst.msk [vmem:[#allocation5 + $0x60] sm:$0xff] %vm280, 0.0
      %375 = vst.msk [vmem:[#allocation5 + $0x68] sm:$0xff] %vm280, 0.0
      %376 = vst.msk [vmem:[#allocation5 + $0x70] sm:$0x3] %vm284, 0.0
      %377 = vst.msk [vmem:[#allocation5 + $0x78] sm:$0xff] %vm280, 0.0
      %378 = vst.msk [vmem:[#allocation5 + $0x80] sm:$0xff] %vm280, 0.0
      %379 = vst.msk [vmem:[#allocation5 + $0x88] sm:$0x3] %vm284, 0.0
      %380 = vst.msk [vmem:[#allocation5 + $0x90] sm:$0xff] %vm280, 0.0
      %381 = vst.msk [vmem:[#allocation5 + $0x98] sm:$0xff] %vm280, 0.0
      %382 = vst.msk [vmem:[#allocation5 + $0xa0] sm:$0x3] %vm284, 0.0
      %383 = vst.msk [vmem:[#allocation5 + $0xa8] sm:$0xff] %vm280, 0.0
      %384 = vst.msk [vmem:[#allocation5 + $0xb0] sm:$0xff] %vm280, 0.0
      %385 = vst.msk [vmem:[#allocation5 + $0xb8] sm:$0x3] %vm284, 0.0
      %386 = vst.msk [vmem:[#allocation5 + $0xc0] sm:$0xff] %vm280, 0.0
      %387 = vst.msk [vmem:[#allocation5 + $0xc8] sm:$0xff] %vm280, 0.0
      %388 = vst.msk [vmem:[#allocation5 + $0xd0] sm:$0x3] %vm284, 0.0
      %389 = vst.msk [vmem:[#allocation5 + $0xd8] sm:$0xff] %vm280, 0.0
      %390 = vst.msk [vmem:[#allocation5 + $0xe0] sm:$0xff] %vm280, 0.0
      %391 = vst.msk [vmem:[#allocation5 + $0xe8] sm:$0x3] %vm284, 0.0
      %392 = vst.msk [vmem:[#allocation5 + $0xf0] sm:$0xff] %vm280, 0.0
      %393 = vst.msk [vmem:[#allocation5 + $0xf8] sm:$0xff] %vm280, 0.0
      %394 = vst.msk [vmem:[#allocation5 + $0x100] sm:$0x3] %vm284, 0.0
      %395 = vst.msk [vmem:[#allocation5 + $0x108] sm:$0xff] %vm280, 0.0
      %396 = vst.msk [vmem:[#allocation5 + $0x110] sm:$0xff] %vm280, 0.0
      %397 = vst.msk [vmem:[#allocation5 + $0x118] sm:$0x3] %vm284, 0.0
      %v398 = vld [vmem:[%s273] sm:$0xff]
      %v399 = vld [vmem:[%s273 + $0x8] sm:$0xff]
      %v400 = vld [vmem:[%s273 + $0x10] sm:$0xff]
      %v401 = vld [vmem:[%s273 + $0x18] sm:$0xff]
      %v402 = vld [vmem:[%s273 + $0x20] sm:$0xff]
      %v403 = vld [vmem:[%s273 + $0x28] sm:$0xff]
      %v404 = vld [vmem:[%s273 + $0x30] sm:$0xff]
      %v405 = vld [vmem:[%s273 + $0x38] sm:$0xff]
      %v406 = vld [vmem:[%s273 + $0x40] sm:$0xff]
      %v407 = vld [vmem:[%s273 + $0x48] sm:$0xff]
      %v408 = vld [vmem:[%s273 + $0x50] sm:$0xff]
      %v409 = vld [vmem:[%s273 + $0x58] sm:$0xff]
      %v410 = vld [vmem:[%s273 + $0x60] sm:$0xff]
      %v411 = vld [vmem:[%s273 + $0x68] sm:$0xff]
      %v412 = vld [vmem:[%s273 + $0x70] sm:$0xff]
      %v413 = vld [vmem:[%s273 + $0x78] sm:$0xff]
      %v414 = vld [vmem:[%s273 + $0x80] sm:$0xff]
      %v415 = vld [vmem:[%s273 + $0x88] sm:$0xff]
      %v416 = vld [vmem:[%s273 + $0x90] sm:$0xff]
      %v417 = vld [vmem:[%s273 + $0x98] sm:$0xff]
      %v418 = vld [vmem:[%s273 + $0xa0] sm:$0xff]
      %v419 = vld [vmem:[%s273 + $0xa8] sm:$0xff]
      %v420 = vld [vmem:[%s273 + $0xb0] sm:$0xff]
      %v421 = vld [vmem:[%s273 + $0xb8] sm:$0xff]
      %v422 = vld [vmem:[%s273 + $0xc0] sm:$0xff]
      %v423 = vld [vmem:[%s273 + $0xc8] sm:$0xff]
      %v424 = vld [vmem:[%s273 + $0xd0] sm:$0xff]
      %v425 = vld [vmem:[%s273 + $0xd8] sm:$0xff]
      %v426 = vld [vmem:[%s273 + $0xe0] sm:$0xff]
      %v427 = vld [vmem:[%s273 + $0xe8] sm:$0xff]
      %v428 = vld [vmem:[%s273 + $0xf0] sm:$0xff]
      %v429 = vld [vmem:[%s273 + $0xf8] sm:$0xff]
      %v430 = vld [vmem:[%s273 + $0x100] sm:$0xff]
      %v431 = vld [vmem:[%s273 + $0x108] sm:$0xff]
      %v432 = vld [vmem:[%s273 + $0x110] sm:$0xff]
      %v433 = vld [vmem:[%s273 + $0x118] sm:$0xff]
      %v434 = vld [vmem:[%s273 + $0x120] sm:$0xff]
      %v435 = vld [vmem:[%s273 + $0x128] sm:$0xff]
      %v436 = vld [vmem:[%s273 + $0x130] sm:$0xff]
      %v437 = vld [vmem:[%s273 + $0x138] sm:$0xff]
      %v438 = vld [vmem:[%s273 + $0x140] sm:$0xff]
      %v439 = vld [vmem:[%s273 + $0x148] sm:$0xff]
      %v440 = vld [vmem:[%s273 + $0x150] sm:$0xff]
      %v441 = vld [vmem:[%s273 + $0x158] sm:$0xff]
      %v442 = vld [vmem:[%s273 + $0x160] sm:$0xff]
      %v443 = vld [vmem:[%s273 + $0x168] sm:$0xff]
      %v444 = vld [vmem:[%s273 + $0x170] sm:$0xff]
      %v445 = vld [vmem:[%s273 + $0x178] sm:$0xff]
      %v446 = vld [vmem:[%s273 + $0x180] sm:$0xff]
      %v447 = vld [vmem:[%s273 + $0x188] sm:$0xff]
      %v448 = vld [vmem:[%s273 + $0x190] sm:$0xff]
      %v449 = vld [vmem:[%s273 + $0x198] sm:$0xff]
      %v450 = vld [vmem:[%s273 + $0x1a0] sm:$0xff]
      %v451 = vld [vmem:[%s273 + $0x1a8] sm:$0xff]
      %v452 = vld [vmem:[%s273 + $0x1b0] sm:$0xff]
      %v453 = vld [vmem:[%s273 + $0x1b8] sm:$0xff]
      %v454 = vld [vmem:[%s273 + $0x1c0] sm:$0xff]
      %v455 = vld [vmem:[%s273 + $0x1c8] sm:$0xff]
      %v456 = vld [vmem:[%s273 + $0x1d0] sm:$0xff]
      %v457 = vld [vmem:[%s273 + $0x1d8] sm:$0xff]
      %v458 = vld [vmem:[%s273 + $0x1e0] sm:$0xff]
      %v459 = vld [vmem:[%s273 + $0x1e8] sm:$0xff]
      %v460 = vld [vmem:[%s273 + $0x1f0] sm:$0xff]
      %v461 = vld [vmem:[%s273 + $0x1f8] sm:$0xff]
      %v462 = vld [vmem:[%s273 + $0x200] sm:$0xff]
      %v463 = vld [vmem:[%s273 + $0x208] sm:$0xff]
      %v464 = vld [vmem:[%s273 + $0x210] sm:$0xff]
      %v465 = vld [vmem:[%s273 + $0x218] sm:$0xff]
      %v466 = vld [vmem:[%s273 + $0x220] sm:$0xff]
      %v467 = vld [vmem:[%s273 + $0x228] sm:$0xff]
      %v468 = vld [vmem:[%s273 + $0x230] sm:$0xff]
      %v469 = vld [vmem:[%s273 + $0x238] sm:$0xff]
      %v470 = vld [vmem:[%s273 + $0x240] sm:$0xff]
      %v471 = vld [vmem:[%s273 + $0x248] sm:$0xff]
      %v472 = vld [vmem:[%s273 + $0x250] sm:$0xff]
      %v473 = vld [vmem:[%s273 + $0x258] sm:$0xff]
      %v474 = vld [vmem:[%s273 + $0x260] sm:$0xff]
      %v475 = vld [vmem:[%s273 + $0x268] sm:$0xff]
      %v476 = vld [vmem:[%s273 + $0x270] sm:$0xff]
      %v477 = vld [vmem:[%s273 + $0x278] sm:$0xff]
      %v478 = vld [vmem:[%s273 + $0x280] sm:$0xff]
      %v479 = vld [vmem:[%s273 + $0x288] sm:$0xff]
      %v480 = vld [vmem:[%s273 + $0x290] sm:$0xff]
      %v481 = vld [vmem:[%s273 + $0x298] sm:$0xff]
      %v482 = vld [vmem:[%s273 + $0x2a0] sm:$0xff]
      %v483 = vld [vmem:[%s273 + $0x2a8] sm:$0xff]
      %v484 = vld [vmem:[%s273 + $0x2b0] sm:$0xff]
      %v485 = vld [vmem:[%s273 + $0x2b8] sm:$0xff]
      %v486 = vld [vmem:[%s273 + $0x2c0] sm:$0xff]
      %v487 = vld [vmem:[%s273 + $0x2c8] sm:$0xff]
      %v488 = vld [vmem:[%s273 + $0x2d0] sm:$0xff]
      %v489 = vld [vmem:[%s273 + $0x2d8] sm:$0xff]
      %v490 = vld [vmem:[%s273 + $0x2e0] sm:$0xff]
      %v491 = vld [vmem:[%s273 + $0x2e8] sm:$0xff]
      %v492 = vld [vmem:[%s273 + $0x2f0] sm:$0xff]
      %v493 = vld [vmem:[%s273 + $0x2f8] sm:$0xff]
      %v494 = vld [vmem:[%s273 + $0x300] sm:$0xff]
      %v495 = vld [vmem:[%s273 + $0x308] sm:$0xff]
      %v496 = vld [vmem:[%s273 + $0x310] sm:$0xff]
      %v497 = vld [vmem:[%s273 + $0x318] sm:$0xff]
      %v498 = vld [vmem:[%s273 + $0x320] sm:$0xff]
      %v499 = vld [vmem:[%s273 + $0x328] sm:$0xff]
      %v500 = vld [vmem:[%s273 + $0x330] sm:$0xff]
      %v501 = vld [vmem:[%s273 + $0x338] sm:$0xff]
      %v502 = vld [vmem:[%s273 + $0x340] sm:$0xff]
      %v503 = vld [vmem:[%s273 + $0x348] sm:$0xff]
      %v504 = vld [vmem:[%s273 + $0x350] sm:$0xff]
      %v505 = vld [vmem:[%s273 + $0x358] sm:$0xff]
      %v506 = vld [vmem:[%s273 + $0x360] sm:$0xff]
      %v507 = vld [vmem:[%s273 + $0x368] sm:$0xff]
      %v508 = vld [vmem:[%s273 + $0x370] sm:$0xff]
      %v509 = vld [vmem:[%s273 + $0x378] sm:$0xff]
      %v510 = vld [vmem:[%s273 + $0x380] sm:$0xff]
      %v511 = vld [vmem:[%s273 + $0x388] sm:$0xff]
      %v512 = vld [vmem:[%s273 + $0x390] sm:$0xff]
      %v513 = vld [vmem:[%s273 + $0x398] sm:$0xff]
      %v514 = vld [vmem:[%s273 + $0x3a0] sm:$0xff]
      %v515 = vld [vmem:[%s273 + $0x3a8] sm:$0xff]
      %v516 = vld [vmem:[%s273 + $0x3b0] sm:$0xff]
      %v517 = vld [vmem:[%s273 + $0x3b8] sm:$0xff]
      %v518 = vld [vmem:[%s273 + $0x3c0] sm:$0xff]
      %v519 = vld [vmem:[%s273 + $0x3c8] sm:$0xff]
      %v520 = vld [vmem:[%s273 + $0x3d0] sm:$0xff]
      %v521 = vld [vmem:[%s273 + $0x3d8] sm:$0xff]
      %v522 = vld [vmem:[%s273 + $0x3e0] sm:$0xff]
      %v523 = vld [vmem:[%s273 + $0x3e8] sm:$0xff]
      %v524 = vld [vmem:[%s273 + $0x3f0] sm:$0xff]
      %v525 = vld [vmem:[%s273 + $0x3f8] sm:$0xff]
      %v526 = vld [vmem:[%s1] sm:$0xff]
      %v527 = vld [vmem:[%s1 + $0x8] sm:$0xff]
      %v528 = vld [vmem:[%s1 + $0x10] sm:$0xff]
      %v529 = vld [vmem:[%s1 + $0x18] sm:$0xff]
      %v530 = vld [vmem:[%s1 + $0x20] sm:$0xff]
      %v531 = vld [vmem:[%s1 + $0x28] sm:$0xff]
      %v532 = vld [vmem:[%s1 + $0x30] sm:$0xff]
      %v533 = vld [vmem:[%s1 + $0x38] sm:$0xff]
      %v534 = vld [vmem:[%s1 + $0x40] sm:$0xff]
      %v535 = vld [vmem:[%s1 + $0x48] sm:$0x7]
      %v536 = vld [vmem:[%s2] sm:$0x1]
      %v538 = vlaneseq
      %v539 = vshrl.u32 %v538, 7
      %v540 = vsub.s32 0, %v539
      %v541 = vrot.slane %v536, %v540
      %vm543 = vcmask 613376
      %v545 = vsel %vm543, %v398, 0
      %v548 = vsel %vm543, %v399, 0
      %v551 = vsel %vm543, %v400, 0
      %v554 = vsel %vm543, %v401, 0
      %v557 = vsel %vm543, %v402, 0
      %v560 = vsel %vm543, %v403, 0
      %v563 = vsel %vm543, %v404, 0
      %v566 = vsel %vm543, %v405, 0
      %v569 = vsel %vm543, %v406, 0
      %v572 = vsel %vm543, %v407, 0
      %v575 = vsel %vm543, %v408, 0
      %v578 = vsel %vm543, %v409, 0
      %v581 = vsel %vm543, %v410, 0
      %v584 = vsel %vm543, %v411, 0
      %v587 = vsel %vm543, %v412, 0
      %v590 = vsel %vm543, %v413, 0
      %v593 = vsel %vm543, %v414, 0
      %v596 = vsel %vm543, %v415, 0
      %v599 = vsel %vm543, %v416, 0
      %v602 = vsel %vm543, %v417, 0
      %v605 = vsel %vm543, %v418, 0
      %v608 = vsel %vm543, %v419, 0
      %v611 = vsel %vm543, %v420, 0
      %v614 = vsel %vm543, %v421, 0
      %v617 = vsel %vm543, %v422, 0
      %v620 = vsel %vm543, %v423, 0
      %v623 = vsel %vm543, %v424, 0
      %v626 = vsel %vm543, %v425, 0
      %v629 = vsel %vm543, %v426, 0
      %v632 = vsel %vm543, %v427, 0
      %v635 = vsel %vm543, %v428, 0
      %v638 = vsel %vm543, %v429, 0
      %v641 = vsel %vm543, %v430, 0
      %v644 = vsel %vm543, %v431, 0
      %v647 = vsel %vm543, %v432, 0
      %v650 = vsel %vm543, %v433, 0
      %v653 = vsel %vm543, %v434, 0
      %v656 = vsel %vm543, %v435, 0
      %v659 = vsel %vm543, %v436, 0
      %v662 = vsel %vm543, %v437, 0
      %v665 = vsel %vm543, %v438, 0
      %v668 = vsel %vm543, %v439, 0
      %v671 = vsel %vm543, %v440, 0
      %v674 = vsel %vm543, %v441, 0
      %v677 = vsel %vm543, %v442, 0
      %v680 = vsel %vm543, %v443, 0
      %v683 = vsel %vm543, %v444, 0
      %v686 = vsel %vm543, %v445, 0
      %v689 = vsel %vm543, %v446, 0
      %v692 = vsel %vm543, %v447, 0
      %v695 = vsel %vm543, %v448, 0
      %v698 = vsel %vm543, %v449, 0
      %v701 = vsel %vm543, %v450, 0
      %v704 = vsel %vm543, %v451, 0
      %v707 = vsel %vm543, %v452, 0
      %v710 = vsel %vm543, %v453, 0
      %v713 = vsel %vm543, %v454, 0
      %v716 = vsel %vm543, %v455, 0
      %v719 = vsel %vm543, %v456, 0
      %v722 = vsel %vm543, %v457, 0
      %v725 = vsel %vm543, %v458, 0
      %v728 = vsel %vm543, %v459, 0
      %v731 = vsel %vm543, %v460, 0
      %v734 = vsel %vm543, %v461, 0
      %v737 = vsel %vm543, %v462, 0
      %v740 = vsel %vm543, %v463, 0
      %v743 = vsel %vm543, %v464, 0
      %v746 = vsel %vm543, %v465, 0
      %v749 = vsel %vm543, %v466, 0
      %v752 = vsel %vm543, %v467, 0
      %v755 = vsel %vm543, %v468, 0
      %v758 = vsel %vm543, %v469, 0
      %v761 = vsel %vm543, %v470, 0
      %v764 = vsel %vm543, %v471, 0
      %v767 = vsel %vm543, %v472, 0
      %v770 = vsel %vm543, %v473, 0
      %v773 = vsel %vm543, %v474, 0
      %v776 = vsel %vm543, %v475, 0
      %v779 = vsel %vm543, %v476, 0
      %v782 = vsel %vm543, %v477, 0
      %v785 = vsel %vm543, %v478, 0
      %v788 = vsel %vm543, %v479, 0
      %v791 = vsel %vm543, %v480, 0
      %v794 = vsel %vm543, %v481, 0
      %v797 = vsel %vm543, %v482, 0
      %v800 = vsel %vm543, %v483, 0
      %v803 = vsel %vm543, %v484, 0
      %v806 = vsel %vm543, %v485, 0
      %v809 = vsel %vm543, %v486, 0
      %v812 = vsel %vm543, %v487, 0
      %v815 = vsel %vm543, %v488, 0
      %v818 = vsel %vm543, %v489, 0
      %v821 = vsel %vm543, %v490, 0
      %v824 = vsel %vm543, %v491, 0
      %v827 = vsel %vm543, %v492, 0
      %v830 = vsel %vm543, %v493, 0
      %v833 = vsel %vm543, %v494, 0
      %v836 = vsel %vm543, %v495, 0
      %v839 = vsel %vm543, %v496, 0
      %v842 = vsel %vm543, %v497, 0
      %v845 = vsel %vm543, %v498, 0
      %v848 = vsel %vm543, %v499, 0
      %v851 = vsel %vm543, %v500, 0
      %v854 = vsel %vm543, %v501, 0
      %v857 = vsel %vm543, %v502, 0
      %v860 = vsel %vm543, %v503, 0
      %v863 = vsel %vm543, %v504, 0
      %v866 = vsel %vm543, %v505, 0
      %v869 = vsel %vm543, %v506, 0
      %v872 = vsel %vm543, %v507, 0
      %v875 = vsel %vm543, %v508, 0
      %v878 = vsel %vm543, %v509, 0
      %v881 = vsel %vm543, %v510, 0
      %v884 = vsel %vm543, %v511, 0
      %v887 = vsel %vm543, %v512, 0
      %v890 = vsel %vm543, %v513, 0
      %v893 = vsel %vm543, %v514, 0
      %v896 = vsel %vm543, %v515, 0
      %v899 = vsel %vm543, %v516, 0
      %v902 = vsel %vm543, %v517, 0
      %v905 = vsel %vm543, %v518, 0
      %v908 = vsel %vm543, %v519, 0
      %v911 = vsel %vm543, %v520, 0
      %v914 = vsel %vm543, %v521, 0
      %v917 = vsel %vm543, %v522, 0
      %v920 = vsel %vm543, %v523, 0
      %v923 = vsel %vm543, %v524, 0
      %v926 = vsel %vm543, %v525, 0
      %vm928 = vcmask 1042432
      %v930 = vsel %vm928, %v535, 0
      %932 = vmatprep.subr.mxu0 0.0
      %933 = vmatpush1.msra.mxu0 %v526
      %934 = vmatprep.subr.mxu0 0.0
      %935 = vmatpush1.msra.mxu0 %v527
      %936 = vmatprep.subr.mxu0 0.0
      %937 = vmatpush1.msra.mxu0 %v528
      %938 = vmatprep.subr.mxu0 0.0
      %939 = vmatpush1.msra.mxu0 %v529
      %940 = vmatprep.subr.mxu0 0.0
      %941 = vmatpush1.msra.mxu0 %v530
      %942 = vmatprep.subr.mxu0 0.0
      %943 = vmatpush1.msra.mxu0 %v531
      %944 = vmatprep.subr.mxu0 0.0
      %945 = vmatpush1.msra.mxu0 %v532
      %946 = vmatprep.subr.mxu0 0.0
      %947 = vmatpush1.msra.mxu0 %v533
      %948 = vmatprep.subr.mxu0 0.0
      %949 = vmatpush1.msra.mxu0 %v534
      %950 = vmatprep.subr.mxu0 0.0
      %951 = vmatpush1.msra.mxu0 %v930
      %952 = vmatprep.subr.mxu0 0.0
      %953 = vmatpush1.msra.mxu0 0.0
      %954 = vmatprep.subr.mxu0 0.0
      %955 = vmatpush1.msra.mxu0 0.0
      %956 = vmatprep.subr.mxu0 0.0
      %957 = vmatpush1.msra.mxu0 0.0
      %958 = vmatprep.subr.mxu0 0.0
      %959 = vmatpush1.msra.mxu0 0.0
      %960 = vmatprep.subr.mxu0 0.0
      %961 = vmatpush1.msra.mxu0 0.0
      %962 = vmatprep.subr.mxu0 0.0
      %963 = vmatpush1.msra.mxu0 0.0
      %964 = vmatprep.subr.mxu0 0.0
      %965 = vmatpush1.msra.mxu0 0.0
      %966 = vmatprep.subr.mxu0 0.0
      %967 = vmatpush1.msra.mxu0 0.0
      %968 = vmatprep.subr.mxu0 0.0
      %969 = vmatpush1.msra.mxu0 0.0
      %970 = vmatprep.subr.mxu0 0.0
      %971 = vmatpush1.msra.mxu0 0.0
      %972 = vmatprep.subr.mxu0 0.0
      %973 = vmatpush1.msra.mxu0 0.0
      %974 = vmatprep.subr.mxu0 0.0
      %975 = vmatpush1.msra.mxu0 0.0
      %976 = vmatprep.subr.mxu0 0.0
      %977 = vmatpush1.msra.mxu0 0.0
      %978 = vmatprep.subr.mxu0 0.0
      %979 = vmatpush1.msra.mxu0 0.0
      %980 = vmatprep.subr.mxu0 0.0
      %981 = vmatpush1.msra.mxu0 0.0
      %982 = vmatprep.subr.mxu0 0.0
      %983 = vmatpush1.msra.mxu0 0.0
      %984 = vmatprep.subr.mxu0 0.0
      %985 = vmatpush1.msra.mxu0 0.0
      %986 = vmatprep.subr.mxu0 0.0
      %987 = vmatpush1.msra.mxu0 0.0
      %988 = vmatprep.subr.mxu0 0.0
      %989 = vmatpush1.msra.mxu0 0.0
      %990 = vmatprep.subr.mxu0 0.0
      %991 = vmatpush1.msra.mxu0 0.0
      %992 = vmatprep.subr.mxu0 0.0
      %993 = vmatpush1.msra.mxu0 0.0
      %994 = vmatprep.subr.mxu0 0.0
      %995 = vmatpush1.msra.mxu0 0.0
      %996 = vmatprep.mubr.f32.mxu0 0.0
      %997 = vmatmul.mubr.f32.gmra.mrb[0].mxu0 %v545
      %v998 = vpop.f32.mrb[0].mxu0
      %v999 = vadd.f32 %v541, %v998
      %v1000 = vpop.f32.mrb[0].mxu0
      %1001 = vmatprep.mubr.f32.mxu0 0.0
      %1002 = vmatmul.mubr.f32.gmra.mrb[0].mxu0 %v548
      %v1003 = vpop.f32.mrb[0].mxu0
      %v1004 = vadd.f32 %v541, %v1003
      %v1005 = vpop.f32.mrb[0].mxu0
      %1006 = vmatprep.mubr.f32.mxu0 0.0
      %1007 = vmatmul.mubr.f32.gmra.mrb[0].mxu0 %v551
      %v1008 = vpop.f32.mrb[0].mxu0
      %v1009 = vadd.f32 %v541, %v1008
      %v1010 = vpop.f32.mrb[0].mxu0
      %1011 = vmatprep.mubr.f32.mxu0 0.0
      %1012 = vmatmul.mubr.f32.gmra.mrb[0].mxu0 %v554
      %v1013 = vpop.f32.mrb[0].mxu0
      %v1014 = vadd.f32 %v541, %v1013
      %v1015 = vpop.f32.mrb[0].mxu0
      %1016 = vmatprep.mubr.f32.mxu0 0.0
      %1017 = vmatmul.mubr.f32.gmra.mrb[0].mxu0 %v557
      %v1018 = vpop.f32.mrb[0].mxu0
      %v1019 = vadd.f32 %v541, %v1018
      %v1020 = vpop.f32.mrb[0].mxu0
      %1021 = vmatprep.mubr.f32.mxu0 0.0
      %1022 = vmatmul.mubr.f32.gmra.mrb[0].mxu0 %v560
      %v1023 = vpop.f32.mrb[0].mxu0
      %v1024 = vadd.f32 %v541, %v1023
      %v1025 = vpop.f32.mrb[0].mxu0
      %1026 = vmatprep.mubr.f32.mxu0 0.0
      %1027 = vmatmul.mubr.f32.gmra.mrb[0].mxu0 %v563
      %v1028 = vpop.f32.mrb[0].mxu0
      %v1029 = vadd.f32 %v541, %v1028
      %v1030 = vpop.f32.mrb[0].mxu0
      %1031 = vmatprep.mubr.f32.mxu0 0.0
      %1032 = vmatmul.mubr.f32.gmra.mrb[0].mxu0 %v566
      %v1033 = vpop.f32.mrb[0].mxu0
      %v1034 = vadd.f32 %v541, %v1033
      %v1035 = vpop.f32.mrb[0].mxu0
      %1036 = vmatprep.mubr.f32.mxu0 0.0
      %1037 = vmatmul.mubr.f32.gmra.mrb[0].mxu0 %v569
      %v1038 = vpop.f32.mrb[0].mxu0
      %v1039 = vadd.f32 %v541, %v1038
      %v1040 = vpop.f32.mrb[0].mxu0
      %1041 = vmatprep.mubr.f32.mxu0 0.0
      %1042 = vmatmul.mubr.f32.gmra.mrb[0].mxu0 %v572
      %v1043 = vpop.f32.mrb[0].mxu0
      %v1044 = vadd.f32 %v541, %v1043
      %v1045 = vpop.f32.mrb[0].mxu0
      %1046 = vmatprep.mubr.f32.mxu0 0.0
      %1047 = vmatmul.mubr.f32.gmra.mrb[0].mxu0 %v575
      %v1048 = vpop.f32.mrb[0].mxu0
      %v1049 = vadd.f32 %v541, %v1048
      %v1050 = vpop.f32.mrb[0].mxu0
      %1051 = vmatprep.mubr.f32.mxu0 0.0
      %1052 = vmatmul.mubr.f32.gmra.mrb[0].mxu0 %v578
      %v1053 = vpop.f32.mrb[0].mxu0
      %v1054 = vadd.f32 %v541, %v1053
      %v1055 = vpop.f32.mrb[0].mxu0
      %1056 = vmatprep.mubr.f32.mxu0 0.0
      %1057 = vmatmul.mubr.f32.gmra.mrb[0].mxu0 %v581
      %v1058 = vpop.f32.mrb[0].mxu0
      %v1059 = vadd.f32 %v541, %v1058
      %v1060 = vpop.f32.mrb[0].mxu0
      %1061 = vmatprep.mubr.f32.mxu0 0.0
      %1062 = vmatmul.mubr.f32.gmra.mrb[0].mxu0 %v584
      %v1063 = vpop.f32.mrb[0].mxu0
      %v1064 = vadd.f32 %v541, %v1063
      %v1065 = vpop.f32.mrb[0].mxu0
      %1066 = vmatprep.mubr.f32.mxu0 0.0
      %1067 = vmatmul.mubr.f32.gmra.mrb[0].mxu0 %v587
      %v1068 = vpop.f32.mrb[0].mxu0
      %v1069 = vadd.f32 %v541, %v1068
      %v1070 = vpop.f32.mrb[0].mxu0
      %1071 = vmatprep.mubr.f32.mxu0 0.0
      %1072 = vmatmul.mubr.f32.gmra.mrb[0].mxu0 %v590
      %v1073 = vpop.f32.mrb[0].mxu0
      %v1074 = vadd.f32 %v541, %v1073
      %v1075 = vpop.f32.mrb[0].mxu0
      %1076 = vmatprep.mubr.f32.mxu0 0.0
      %1077 = vmatmul.mubr.f32.gmra.mrb[0].mxu0 %v593
      %v1078 = vpop.f32.mrb[0].mxu0
      %v1079 = vadd.f32 %v541, %v1078
      %v1080 = vpop.f32.mrb[0].mxu0
      %1081 = vmatprep.mubr.f32.mxu0 0.0
      %1082 = vmatmul.mubr.f32.gmra.mrb[0].mxu0 %v596
      %v1083 = vpop.f32.mrb[0].mxu0
      %v1084 = vadd.f32 %v541, %v1083
      %v1085 = vpop.f32.mrb[0].mxu0
      %1086 = vmatprep.mubr.f32.mxu0 0.0
      %1087 = vmatmul.mubr.f32.gmra.mrb[0].mxu0 %v599
      %v1088 = vpop.f32.mrb[0].mxu0
      %v1089 = vadd.f32 %v541, %v1088
      %v1090 = vpop.f32.mrb[0].mxu0
      %1091 = vmatprep.mubr.f32.mxu0 0.0
      %1092 = vmatmul.mubr.f32.gmra.mrb[0].mxu0 %v602
      %v1093 = vpop.f32.mrb[0].mxu0
      %v1094 = vadd.f32 %v541, %v1093
      %v1095 = vpop.f32.mrb[0].mxu0
      %1096 = vmatprep.mubr.f32.mxu0 0.0
      %1097 = vmatmul.mubr.f32.gmra.mrb[0].mxu0 %v605
      %v1098 = vpop.f32.mrb[0].mxu0
      %v1099 = vadd.f32 %v541, %v1098
      %v1100 = vpop.f32.mrb[0].mxu0
      %1101 = vmatprep.mubr.f32.mxu0 0.0
      %1102 = vmatmul.mubr.f32.gmra.mrb[0].mxu0 %v608
      %v1103 = vpop.f32.mrb[0].mxu0
      %v1104 = vadd.f32 %v541, %v1103
      %v1105 = vpop.f32.mrb[0].mxu0
      %1106 = vmatprep.mubr.f32.mxu0 0.0
      %1107 = vmatmul.mubr.f32.gmra.mrb[0].mxu0 %v611
      %v1108 = vpop.f32.mrb[0].mxu0
      %v1109 = vadd.f32 %v541, %v1108
      %v1110 = vpop.f32.mrb[0].mxu0
      %1111 = vmatprep.mubr.f32.mxu0 0.0
      %1112 = vmatmul.mubr.f32.gmra.mrb[0].mxu0 %v614
      %v1113 = vpop.f32.mrb[0].mxu0
      %v1114 = vadd.f32 %v541, %v1113
      %v1115 = vpop.f32.mrb[0].mxu0
      %1116 = vmatprep.mubr.f32.mxu0 0.0
      %1117 = vmatmul.mubr.f32.gmra.mrb[0].mxu0 %v617
      %v1118 = vpop.f32.mrb[0].mxu0
      %v1119 = vadd.f32 %v541, %v1118
      %v1120 = vpop.f32.mrb[0].mxu0
      %1121 = vmatprep.mubr.f32.mxu0 0.0
      %1122 = vmatmul.mubr.f32.gmra.mrb[0].mxu0 %v620
      %v1123 = vpop.f32.mrb[0].mxu0
      %v1124 = vadd.f32 %v541, %v1123
      %v1125 = vpop.f32.mrb[0].mxu0
      %1126 = vmatprep.mubr.f32.mxu0 0.0
      %1127 = vmatmul.mubr.f32.gmra.mrb[0].mxu0 %v623
      %v1128 = vpop.f32.mrb[0].mxu0
      %v1129 = vadd.f32 %v541, %v1128
      %v1130 = vpop.f32.mrb[0].mxu0
      %1131 = vmatprep.mubr.f32.mxu0 0.0
      %1132 = vmatmul.mubr.f32.gmra.mrb[0].mxu0 %v626
      %v1133 = vpop.f32.mrb[0].mxu0
      %v1134 = vadd.f32 %v541, %v1133
      %v1135 = vpop.f32.mrb[0].mxu0
      %1136 = vmatprep.mubr.f32.mxu0 0.0
      %1137 = vmatmul.mubr.f32.gmra.mrb[0].mxu0 %v629
      %v1138 = vpop.f32.mrb[0].mxu0
      %v1139 = vadd.f32 %v541, %v1138
      %v1140 = vpop.f32.mrb[0].mxu0
      %1141 = vmatprep.mubr.f32.mxu0 0.0
      %1142 = vmatmul.mubr.f32.gmra.mrb[0].mxu0 %v632
      %v1143 = vpop.f32.mrb[0].mxu0
      %v1144 = vadd.f32 %v541, %v1143
      %v1145 = vpop.f32.mrb[0].mxu0
      %1146 = vmatprep.mubr.f32.mxu0 0.0
      %1147 = vmatmul.mubr.f32.gmra.mrb[0].mxu0 %v635
      %v1148 = vpop.f32.mrb[0].mxu0
      %v1149 = vadd.f32 %v541, %v1148
      %v1150 = vpop.f32.mrb[0].mxu0
      %1151 = vmatprep.mubr.f32.mxu0 0.0
      %1152 = vmatmul.mubr.f32.gmra.mrb[0].mxu0 %v638
      %v1153 = vpop.f32.mrb[0].mxu0
      %v1154 = vadd.f32 %v541, %v1153
      %v1155 = vpop.f32.mrb[0].mxu0
      %1156 = vmatprep.mubr.f32.mxu0 0.0
      %1157 = vmatmul.mubr.f32.gmra.mrb[0].mxu0 %v641
      %v1158 = vpop.f32.mrb[0].mxu0
      %v1159 = vadd.f32 %v541, %v1158
      %v1160 = vpop.f32.mrb[0].mxu0
      %1161 = vmatprep.mubr.f32.mxu0 0.0
      %1162 = vmatmul.mubr.f32.gmra.mrb[0].mxu0 %v644
      %v1163 = vpop.f32.mrb[0].mxu0
      %v1164 = vadd.f32 %v541, %v1163
      %v1165 = vpop.f32.mrb[0].mxu0
      %1166 = vmatprep.mubr.f32.mxu0 0.0
      %1167 = vmatmul.mubr.f32.gmra.mrb[0].mxu0 %v647
      %v1168 = vpop.f32.mrb[0].mxu0
      %v1169 = vadd.f32 %v541, %v1168
      %v1170 = vpop.f32.mrb[0].mxu0
      %1171 = vmatprep.mubr.f32.mxu0 0.0
      %1172 = vmatmul.mubr.f32.gmra.mrb[0].mxu0 %v650
      %v1173 = vpop.f32.mrb[0].mxu0
      %v1174 = vadd.f32 %v541, %v1173
      %v1175 = vpop.f32.mrb[0].mxu0
      %1176 = vmatprep.mubr.f32.mxu0 0.0
      %1177 = vmatmul.mubr.f32.gmra.mrb[0].mxu0 %v653
      %v1178 = vpop.f32.mrb[0].mxu0
      %v1179 = vadd.f32 %v541, %v1178
      %v1180 = vpop.f32.mrb[0].mxu0
      %1181 = vmatprep.mubr.f32.mxu0 0.0
      %1182 = vmatmul.mubr.f32.gmra.mrb[0].mxu0 %v656
      %v1183 = vpop.f32.mrb[0].mxu0
      %v1184 = vadd.f32 %v541, %v1183
      %v1185 = vpop.f32.mrb[0].mxu0
      %1186 = vmatprep.mubr.f32.mxu0 0.0
      %1187 = vmatmul.mubr.f32.gmra.mrb[0].mxu0 %v659
      %v1188 = vpop.f32.mrb[0].mxu0
      %v1189 = vadd.f32 %v541, %v1188
      %v1190 = vpop.f32.mrb[0].mxu0
      %1191 = vmatprep.mubr.f32.mxu0 0.0
      %1192 = vmatmul.mubr.f32.gmra.mrb[0].mxu0 %v662
      %v1193 = vpop.f32.mrb[0].mxu0
      %v1194 = vadd.f32 %v541, %v1193
      %v1195 = vpop.f32.mrb[0].mxu0
      %1196 = vmatprep.mubr.f32.mxu0 0.0
      %1197 = vmatmul.mubr.f32.gmra.mrb[0].mxu0 %v665
      %v1198 = vpop.f32.mrb[0].mxu0
      %v1199 = vadd.f32 %v541, %v1198
      %v1200 = vpop.f32.mrb[0].mxu0
      %1201 = vmatprep.mubr.f32.mxu0 0.0
      %1202 = vmatmul.mubr.f32.gmra.mrb[0].mxu0 %v668
      %v1203 = vpop.f32.mrb[0].mxu0
      %v1204 = vadd.f32 %v541, %v1203
      %v1205 = vpop.f32.mrb[0].mxu0
      %1206 = vmatprep.mubr.f32.mxu0 0.0
      %1207 = vmatmul.mubr.f32.gmra.mrb[0].mxu0 %v671
      %v1208 = vpop.f32.mrb[0].mxu0
      %v1209 = vadd.f32 %v541, %v1208
      %v1210 = vpop.f32.mrb[0].mxu0
      %1211 = vmatprep.mubr.f32.mxu0 0.0
      %1212 = vmatmul.mubr.f32.gmra.mrb[0].mxu0 %v674
      %v1213 = vpop.f32.mrb[0].mxu0
      %v1214 = vadd.f32 %v541, %v1213
      %v1215 = vpop.f32.mrb[0].mxu0
      %1216 = vmatprep.mubr.f32.mxu0 0.0
      %1217 = vmatmul.mubr.f32.gmra.mrb[0].mxu0 %v677
      %v1218 = vpop.f32.mrb[0].mxu0
      %v1219 = vadd.f32 %v541, %v1218
      %v1220 = vpop.f32.mrb[0].mxu0
      %1221 = vmatprep.mubr.f32.mxu0 0.0
      %1222 = vmatmul.mubr.f32.gmra.mrb[0].mxu0 %v680
      %v1223 = vpop.f32.mrb[0].mxu0
      %v1224 = vadd.f32 %v541, %v1223
      %v1225 = vpop.f32.mrb[0].mxu0
      %1226 = vmatprep.mubr.f32.mxu0 0.0
      %1227 = vmatmul.mubr.f32.gmra.mrb[0].mxu0 %v683
      %v1228 = vpop.f32.mrb[0].mxu0
      %v1229 = vadd.f32 %v541, %v1228
      %v1230 = vpop.f32.mrb[0].mxu0
      %1231 = vmatprep.mubr.f32.mxu0 0.0
      %1232 = vmatmul.mubr.f32.gmra.mrb[0].mxu0 %v686
      %v1233 = vpop.f32.mrb[0].mxu0
      %v1234 = vadd.f32 %v541, %v1233
      %v1235 = vpop.f32.mrb[0].mxu0
      %1236 = vmatprep.mubr.f32.mxu0 0.0
      %1237 = vmatmul.mubr.f32.gmra.mrb[0].mxu0 %v689
      %v1238 = vpop.f32.mrb[0].mxu0
      %v1239 = vadd.f32 %v541, %v1238
      %v1240 = vpop.f32.mrb[0].mxu0
      %1241 = vmatprep.mubr.f32.mxu0 0.0
      %1242 = vmatmul.mubr.f32.gmra.mrb[0].mxu0 %v692
      %v1243 = vpop.f32.mrb[0].mxu0
      %v1244 = vadd.f32 %v541, %v1243
      %v1245 = vpop.f32.mrb[0].mxu0
      %1246 = vmatprep.mubr.f32.mxu0 0.0
      %1247 = vmatmul.mubr.f32.gmra.mrb[0].mxu0 %v695
      %v1248 = vpop.f32.mrb[0].mxu0
      %v1249 = vadd.f32 %v541, %v1248
      %v1250 = vpop.f32.mrb[0].mxu0
      %1251 = vmatprep.mubr.f32.mxu0 0.0
      %1252 = vmatmul.mubr.f32.gmra.mrb[0].mxu0 %v698
      %v1253 = vpop.f32.mrb[0].mxu0
      %v1254 = vadd.f32 %v541, %v1253
      %v1255 = vpop.f32.mrb[0].mxu0
      %1256 = vmatprep.mubr.f32.mxu0 0.0
      %1257 = vmatmul.mubr.f32.gmra.mrb[0].mxu0 %v701
      %v1258 = vpop.f32.mrb[0].mxu0
      %v1259 = vadd.f32 %v541, %v1258
      %v1260 = vpop.f32.mrb[0].mxu0
      %1261 = vmatprep.mubr.f32.mxu0 0.0
      %1262 = vmatmul.mubr.f32.gmra.mrb[0].mxu0 %v704
      %v1263 = vpop.f32.mrb[0].mxu0
      %v1264 = vadd.f32 %v541, %v1263
      %v1265 = vpop.f32.mrb[0].mxu0
      %1266 = vmatprep.mubr.f32.mxu0 0.0
      %1267 = vmatmul.mubr.f32.gmra.mrb[0].mxu0 %v707
      %v1268 = vpop.f32.mrb[0].mxu0
      %v1269 = vadd.f32 %v541, %v1268
      %v1270 = vpop.f32.mrb[0].mxu0
      %1271 = vmatprep.mubr.f32.mxu0 0.0
      %1272 = vmatmul.mubr.f32.gmra.mrb[0].mxu0 %v710
      %v1273 = vpop.f32.mrb[0].mxu0
      %v1274 = vadd.f32 %v541, %v1273
      %v1275 = vpop.f32.mrb[0].mxu0
      %1276 = vmatprep.mubr.f32.mxu0 0.0
      %1277 = vmatmul.mubr.f32.gmra.mrb[0].mxu0 %v713
      %v1278 = vpop.f32.mrb[0].mxu0
      %v1279 = vadd.f32 %v541, %v1278
      %v1280 = vpop.f32.mrb[0].mxu0
      %1281 = vmatprep.mubr.f32.mxu0 0.0
      %1282 = vmatmul.mubr.f32.gmra.mrb[0].mxu0 %v716
      %v1283 = vpop.f32.mrb[0].mxu0
      %v1284 = vadd.f32 %v541, %v1283
      %v1285 = vpop.f32.mrb[0].mxu0
      %1286 = vmatprep.mubr.f32.mxu0 0.0
      %1287 = vmatmul.mubr.f32.gmra.mrb[0].mxu0 %v719
      %v1288 = vpop.f32.mrb[0].mxu0
      %v1289 = vadd.f32 %v541, %v1288
      %v1290 = vpop.f32.mrb[0].mxu0
      %1291 = vmatprep.mubr.f32.mxu0 0.0
      %1292 = vmatmul.mubr.f32.gmra.mrb[0].mxu0 %v722
      %v1293 = vpop.f32.mrb[0].mxu0
      %v1294 = vadd.f32 %v541, %v1293
      %v1295 = vpop.f32.mrb[0].mxu0
      %1296 = vmatprep.mubr.f32.mxu0 0.0
      %1297 = vmatmul.mubr.f32.gmra.mrb[0].mxu0 %v725
      %v1298 = vpop.f32.mrb[0].mxu0
      %v1299 = vadd.f32 %v541, %v1298
      %v1300 = vpop.f32.mrb[0].mxu0
      %1301 = vmatprep.mubr.f32.mxu0 0.0
      %1302 = vmatmul.mubr.f32.gmra.mrb[0].mxu0 %v728
      %v1303 = vpop.f32.mrb[0].mxu0
      %v1304 = vadd.f32 %v541, %v1303
      %v1305 = vpop.f32.mrb[0].mxu0
      %1306 = vmatprep.mubr.f32.mxu0 0.0
      %1307 = vmatmul.mubr.f32.gmra.mrb[0].mxu0 %v731
      %v1308 = vpop.f32.mrb[0].mxu0
      %v1309 = vadd.f32 %v541, %v1308
      %v1310 = vpop.f32.mrb[0].mxu0
      %1311 = vmatprep.mubr.f32.mxu0 0.0
      %1312 = vmatmul.mubr.f32.gmra.mrb[0].mxu0 %v734
      %v1313 = vpop.f32.mrb[0].mxu0
      %v1314 = vadd.f32 %v541, %v1313
      %v1315 = vpop.f32.mrb[0].mxu0
      %1316 = vmatprep.mubr.f32.mxu0 0.0
      %1317 = vmatmul.mubr.f32.gmra.mrb[0].mxu0 %v737
      %v1318 = vpop.f32.mrb[0].mxu0
      %v1319 = vadd.f32 %v541, %v1318
      %v1320 = vpop.f32.mrb[0].mxu0
      %1321 = vmatprep.mubr.f32.mxu0 0.0
      %1322 = vmatmul.mubr.f32.gmra.mrb[0].mxu0 %v740
      %v1323 = vpop.f32.mrb[0].mxu0
      %v1324 = vadd.f32 %v541, %v1323
      %v1325 = vpop.f32.mrb[0].mxu0
      %1326 = vmatprep.mubr.f32.mxu0 0.0
      %1327 = vmatmul.mubr.f32.gmra.mrb[0].mxu0 %v743
      %v1328 = vpop.f32.mrb[0].mxu0
      %v1329 = vadd.f32 %v541, %v1328
      %v1330 = vpop.f32.mrb[0].mxu0
      %1331 = vmatprep.mubr.f32.mxu0 0.0
      %1332 = vmatmul.mubr.f32.gmra.mrb[0].mxu0 %v746
      %v1333 = vpop.f32.mrb[0].mxu0
      %v1334 = vadd.f32 %v541, %v1333
      %v1335 = vpop.f32.mrb[0].mxu0
      %1336 = vmatprep.mubr.f32.mxu0 0.0
      %1337 = vmatmul.mubr.f32.gmra.mrb[0].mxu0 %v749
      %v1338 = vpop.f32.mrb[0].mxu0
      %v1339 = vadd.f32 %v541, %v1338
      %v1340 = vpop.f32.mrb[0].mxu0
      %1341 = vmatprep.mubr.f32.mxu0 0.0
      %1342 = vmatmul.mubr.f32.gmra.mrb[0].mxu0 %v752
      %v1343 = vpop.f32.mrb[0].mxu0
      %v1344 = vadd.f32 %v541, %v1343
      %v1345 = vpop.f32.mrb[0].mxu0
      %1346 = vmatprep.mubr.f32.mxu0 0.0
      %1347 = vmatmul.mubr.f32.gmra.mrb[0].mxu0 %v755
      %v1348 = vpop.f32.mrb[0].mxu0
      %v1349 = vadd.f32 %v541, %v1348
      %v1350 = vpop.f32.mrb[0].mxu0
      %1351 = vmatprep.mubr.f32.mxu0 0.0
      %1352 = vmatmul.mubr.f32.gmra.mrb[0].mxu0 %v758
      %v1353 = vpop.f32.mrb[0].mxu0
      %v1354 = vadd.f32 %v541, %v1353
      %v1355 = vpop.f32.mrb[0].mxu0
      %1356 = vmatprep.mubr.f32.mxu0 0.0
      %1357 = vmatmul.mubr.f32.gmra.mrb[0].mxu0 %v761
      %v1358 = vpop.f32.mrb[0].mxu0
      %v1359 = vadd.f32 %v541, %v1358
      %v1360 = vpop.f32.mrb[0].mxu0
      %1361 = vmatprep.mubr.f32.mxu0 0.0
      %1362 = vmatmul.mubr.f32.gmra.mrb[0].mxu0 %v764
      %v1363 = vpop.f32.mrb[0].mxu0
      %v1364 = vadd.f32 %v541, %v1363
      %v1365 = vpop.f32.mrb[0].mxu0
      %1366 = vmatprep.mubr.f32.mxu0 0.0
      %1367 = vmatmul.mubr.f32.gmra.mrb[0].mxu0 %v767
      %v1368 = vpop.f32.mrb[0].mxu0
      %v1369 = vadd.f32 %v541, %v1368
      %v1370 = vpop.f32.mrb[0].mxu0
      %1371 = vmatprep.mubr.f32.mxu0 0.0
      %1372 = vmatmul.mubr.f32.gmra.mrb[0].mxu0 %v770
      %v1373 = vpop.f32.mrb[0].mxu0
      %v1374 = vadd.f32 %v541, %v1373
      %v1375 = vpop.f32.mrb[0].mxu0
      %1376 = vmatprep.mubr.f32.mxu0 0.0
      %1377 = vmatmul.mubr.f32.gmra.mrb[0].mxu0 %v773
      %v1378 = vpop.f32.mrb[0].mxu0
      %v1379 = vadd.f32 %v541, %v1378
      %v1380 = vpop.f32.mrb[0].mxu0
      %1381 = vmatprep.mubr.f32.mxu0 0.0
      %1382 = vmatmul.mubr.f32.gmra.mrb[0].mxu0 %v776
      %v1383 = vpop.f32.mrb[0].mxu0
      %v1384 = vadd.f32 %v541, %v1383
      %v1385 = vpop.f32.mrb[0].mxu0
      %1386 = vmatprep.mubr.f32.mxu0 0.0
      %1387 = vmatmul.mubr.f32.gmra.mrb[0].mxu0 %v779
      %v1388 = vpop.f32.mrb[0].mxu0
      %v1389 = vadd.f32 %v541, %v1388
      %v1390 = vpop.f32.mrb[0].mxu0
      %1391 = vmatprep.mubr.f32.mxu0 0.0
      %1392 = vmatmul.mubr.f32.gmra.mrb[0].mxu0 %v782
      %v1393 = vpop.f32.mrb[0].mxu0
      %v1394 = vadd.f32 %v541, %v1393
      %v1395 = vpop.f32.mrb[0].mxu0
      %1396 = vmatprep.mubr.f32.mxu0 0.0
      %1397 = vmatmul.mubr.f32.gmra.mrb[0].mxu0 %v785
      %v1398 = vpop.f32.mrb[0].mxu0
      %v1399 = vadd.f32 %v541, %v1398
      %v1400 = vpop.f32.mrb[0].mxu0
      %1401 = vmatprep.mubr.f32.mxu0 0.0
      %1402 = vmatmul.mubr.f32.gmra.mrb[0].mxu0 %v788
      %v1403 = vpop.f32.mrb[0].mxu0
      %v1404 = vadd.f32 %v541, %v1403
      %v1405 = vpop.f32.mrb[0].mxu0
      %1406 = vmatprep.mubr.f32.mxu0 0.0
      %1407 = vmatmul.mubr.f32.gmra.mrb[0].mxu0 %v791
      %v1408 = vpop.f32.mrb[0].mxu0
      %v1409 = vadd.f32 %v541, %v1408
      %v1410 = vpop.f32.mrb[0].mxu0
      %1411 = vmatprep.mubr.f32.mxu0 0.0
      %1412 = vmatmul.mubr.f32.gmra.mrb[0].mxu0 %v794
      %v1413 = vpop.f32.mrb[0].mxu0
      %v1414 = vadd.f32 %v541, %v1413
      %v1415 = vpop.f32.mrb[0].mxu0
      %1416 = vmatprep.mubr.f32.mxu0 0.0
      %1417 = vmatmul.mubr.f32.gmra.mrb[0].mxu0 %v797
      %v1418 = vpop.f32.mrb[0].mxu0
      %v1419 = vadd.f32 %v541, %v1418
      %v1420 = vpop.f32.mrb[0].mxu0
      %1421 = vmatprep.mubr.f32.mxu0 0.0
      %1422 = vmatmul.mubr.f32.gmra.mrb[0].mxu0 %v800
      %v1423 = vpop.f32.mrb[0].mxu0
      %v1424 = vadd.f32 %v541, %v1423
      %v1425 = vpop.f32.mrb[0].mxu0
      %1426 = vmatprep.mubr.f32.mxu0 0.0
      %1427 = vmatmul.mubr.f32.gmra.mrb[0].mxu0 %v803
      %v1428 = vpop.f32.mrb[0].mxu0
      %v1429 = vadd.f32 %v541, %v1428
      %v1430 = vpop.f32.mrb[0].mxu0
      %1431 = vmatprep.mubr.f32.mxu0 0.0
      %1432 = vmatmul.mubr.f32.gmra.mrb[0].mxu0 %v806
      %v1433 = vpop.f32.mrb[0].mxu0
      %v1434 = vadd.f32 %v541, %v1433
      %v1435 = vpop.f32.mrb[0].mxu0
      %1436 = vmatprep.mubr.f32.mxu0 0.0
      %1437 = vmatmul.mubr.f32.gmra.mrb[0].mxu0 %v809
      %v1438 = vpop.f32.mrb[0].mxu0
      %v1439 = vadd.f32 %v541, %v1438
      %v1440 = vpop.f32.mrb[0].mxu0
      %1441 = vmatprep.mubr.f32.mxu0 0.0
      %1442 = vmatmul.mubr.f32.gmra.mrb[0].mxu0 %v812
      %v1443 = vpop.f32.mrb[0].mxu0
      %v1444 = vadd.f32 %v541, %v1443
      %v1445 = vpop.f32.mrb[0].mxu0
      %1446 = vmatprep.mubr.f32.mxu0 0.0
      %1447 = vmatmul.mubr.f32.gmra.mrb[0].mxu0 %v815
      %v1448 = vpop.f32.mrb[0].mxu0
      %v1449 = vadd.f32 %v541, %v1448
      %v1450 = vpop.f32.mrb[0].mxu0
      %1451 = vmatprep.mubr.f32.mxu0 0.0
      %1452 = vmatmul.mubr.f32.gmra.mrb[0].mxu0 %v818
      %v1453 = vpop.f32.mrb[0].mxu0
      %v1454 = vadd.f32 %v541, %v1453
      %v1455 = vpop.f32.mrb[0].mxu0
      %1456 = vmatprep.mubr.f32.mxu0 0.0
      %1457 = vmatmul.mubr.f32.gmra.mrb[0].mxu0 %v821
      %v1458 = vpop.f32.mrb[0].mxu0
      %v1459 = vadd.f32 %v541, %v1458
      %v1460 = vpop.f32.mrb[0].mxu0
      %1461 = vmatprep.mubr.f32.mxu0 0.0
      %1462 = vmatmul.mubr.f32.gmra.mrb[0].mxu0 %v824
      %v1463 = vpop.f32.mrb[0].mxu0
      %v1464 = vadd.f32 %v541, %v1463
      %v1465 = vpop.f32.mrb[0].mxu0
      %1466 = vmatprep.mubr.f32.mxu0 0.0
      %1467 = vmatmul.mubr.f32.gmra.mrb[0].mxu0 %v827
      %v1468 = vpop.f32.mrb[0].mxu0
      %v1469 = vadd.f32 %v541, %v1468
      %v1470 = vpop.f32.mrb[0].mxu0
      %1471 = vmatprep.mubr.f32.mxu0 0.0
      %1472 = vmatmul.mubr.f32.gmra.mrb[0].mxu0 %v830
      %v1473 = vpop.f32.mrb[0].mxu0
      %v1474 = vadd.f32 %v541, %v1473
      %v1475 = vpop.f32.mrb[0].mxu0
      %1476 = vmatprep.mubr.f32.mxu0 0.0
      %1477 = vmatmul.mubr.f32.gmra.mrb[0].mxu0 %v833
      %v1478 = vpop.f32.mrb[0].mxu0
      %v1479 = vadd.f32 %v541, %v1478
      %v1480 = vpop.f32.mrb[0].mxu0
      %1481 = vmatprep.mubr.f32.mxu0 0.0
      %1482 = vmatmul.mubr.f32.gmra.mrb[0].mxu0 %v836
      %v1483 = vpop.f32.mrb[0].mxu0
      %v1484 = vadd.f32 %v541, %v1483
      %v1485 = vpop.f32.mrb[0].mxu0
      %1486 = vmatprep.mubr.f32.mxu0 0.0
      %1487 = vmatmul.mubr.f32.gmra.mrb[0].mxu0 %v839
      %v1488 = vpop.f32.mrb[0].mxu0
      %v1489 = vadd.f32 %v541, %v1488
      %v1490 = vpop.f32.mrb[0].mxu0
      %1491 = vmatprep.mubr.f32.mxu0 0.0
      %1492 = vmatmul.mubr.f32.gmra.mrb[0].mxu0 %v842
      %v1493 = vpop.f32.mrb[0].mxu0
      %v1494 = vadd.f32 %v541, %v1493
      %v1495 = vpop.f32.mrb[0].mxu0
      %1496 = vmatprep.mubr.f32.mxu0 0.0
      %1497 = vmatmul.mubr.f32.gmra.mrb[0].mxu0 %v845
      %v1498 = vpop.f32.mrb[0].mxu0
      %v1499 = vadd.f32 %v541, %v1498
      %v1500 = vpop.f32.mrb[0].mxu0
      %1501 = vmatprep.mubr.f32.mxu0 0.0
      %1502 = vmatmul.mubr.f32.gmra.mrb[0].mxu0 %v848
      %v1503 = vpop.f32.mrb[0].mxu0
      %v1504 = vadd.f32 %v541, %v1503
      %v1505 = vpop.f32.mrb[0].mxu0
      %1506 = vmatprep.mubr.f32.mxu0 0.0
      %1507 = vmatmul.mubr.f32.gmra.mrb[0].mxu0 %v851
      %v1508 = vpop.f32.mrb[0].mxu0
      %v1509 = vadd.f32 %v541, %v1508
      %v1510 = vpop.f32.mrb[0].mxu0
      %1511 = vmatprep.mubr.f32.mxu0 0.0
      %1512 = vmatmul.mubr.f32.gmra.mrb[0].mxu0 %v854
      %v1513 = vpop.f32.mrb[0].mxu0
      %v1514 = vadd.f32 %v541, %v1513
      %v1515 = vpop.f32.mrb[0].mxu0
      %1516 = vmatprep.mubr.f32.mxu0 0.0
      %1517 = vmatmul.mubr.f32.gmra.mrb[0].mxu0 %v857
      %v1518 = vpop.f32.mrb[0].mxu0
      %v1519 = vadd.f32 %v541, %v1518
      %v1520 = vpop.f32.mrb[0].mxu0
      %1521 = vmatprep.mubr.f32.mxu0 0.0
      %1522 = vmatmul.mubr.f32.gmra.mrb[0].mxu0 %v860
      %v1523 = vpop.f32.mrb[0].mxu0
      %v1524 = vadd.f32 %v541, %v1523
      %v1525 = vpop.f32.mrb[0].mxu0
      %1526 = vmatprep.mubr.f32.mxu0 0.0
      %1527 = vmatmul.mubr.f32.gmra.mrb[0].mxu0 %v863
      %v1528 = vpop.f32.mrb[0].mxu0
      %v1529 = vadd.f32 %v541, %v1528
      %v1530 = vpop.f32.mrb[0].mxu0
      %1531 = vmatprep.mubr.f32.mxu0 0.0
      %1532 = vmatmul.mubr.f32.gmra.mrb[0].mxu0 %v866
      %v1533 = vpop.f32.mrb[0].mxu0
      %v1534 = vadd.f32 %v541, %v1533
      %v1535 = vpop.f32.mrb[0].mxu0
      %1536 = vmatprep.mubr.f32.mxu0 0.0
      %1537 = vmatmul.mubr.f32.gmra.mrb[0].mxu0 %v869
      %v1538 = vpop.f32.mrb[0].mxu0
      %v1539 = vadd.f32 %v541, %v1538
      %v1540 = vpop.f32.mrb[0].mxu0
      %1541 = vmatprep.mubr.f32.mxu0 0.0
      %1542 = vmatmul.mubr.f32.gmra.mrb[0].mxu0 %v872
      %v1543 = vpop.f32.mrb[0].mxu0
      %v1544 = vadd.f32 %v541, %v1543
      %v1545 = vpop.f32.mrb[0].mxu0
      %1546 = vmatprep.mubr.f32.mxu0 0.0
      %1547 = vmatmul.mubr.f32.gmra.mrb[0].mxu0 %v875
      %v1548 = vpop.f32.mrb[0].mxu0
      %v1549 = vadd.f32 %v541, %v1548
      %v1550 = vpop.f32.mrb[0].mxu0
      %1551 = vmatprep.mubr.f32.mxu0 0.0
      %1552 = vmatmul.mubr.f32.gmra.mrb[0].mxu0 %v878
      %v1553 = vpop.f32.mrb[0].mxu0
      %v1554 = vadd.f32 %v541, %v1553
      %v1555 = vpop.f32.mrb[0].mxu0
      %1556 = vmatprep.mubr.f32.mxu0 0.0
      %1557 = vmatmul.mubr.f32.gmra.mrb[0].mxu0 %v881
      %v1558 = vpop.f32.mrb[0].mxu0
      %v1559 = vadd.f32 %v541, %v1558
      %v1560 = vpop.f32.mrb[0].mxu0
      %1561 = vmatprep.mubr.f32.mxu0 0.0
      %1562 = vmatmul.mubr.f32.gmra.mrb[0].mxu0 %v884
      %v1563 = vpop.f32.mrb[0].mxu0
      %v1564 = vadd.f32 %v541, %v1563
      %v1565 = vpop.f32.mrb[0].mxu0
      %1566 = vmatprep.mubr.f32.mxu0 0.0
      %1567 = vmatmul.mubr.f32.gmra.mrb[0].mxu0 %v887
      %v1568 = vpop.f32.mrb[0].mxu0
      %v1569 = vadd.f32 %v541, %v1568
      %v1570 = vpop.f32.mrb[0].mxu0
      %1571 = vmatprep.mubr.f32.mxu0 0.0
      %1572 = vmatmul.mubr.f32.gmra.mrb[0].mxu0 %v890
      %v1573 = vpop.f32.mrb[0].mxu0
      %v1574 = vadd.f32 %v541, %v1573
      %v1575 = vpop.f32.mrb[0].mxu0
      %1576 = vmatprep.mubr.f32.mxu0 0.0
      %1577 = vmatmul.mubr.f32.gmra.mrb[0].mxu0 %v893
      %v1578 = vpop.f32.mrb[0].mxu0
      %v1579 = vadd.f32 %v541, %v1578
      %v1580 = vpop.f32.mrb[0].mxu0
      %1581 = vmatprep.mubr.f32.mxu0 0.0
      %1582 = vmatmul.mubr.f32.gmra.mrb[0].mxu0 %v896
      %v1583 = vpop.f32.mrb[0].mxu0
      %v1584 = vadd.f32 %v541, %v1583
      %v1585 = vpop.f32.mrb[0].mxu0
      %1586 = vmatprep.mubr.f32.mxu0 0.0
      %1587 = vmatmul.mubr.f32.gmra.mrb[0].mxu0 %v899
      %v1588 = vpop.f32.mrb[0].mxu0
      %v1589 = vadd.f32 %v541, %v1588
      %v1590 = vpop.f32.mrb[0].mxu0
      %1591 = vmatprep.mubr.f32.mxu0 0.0
      %1592 = vmatmul.mubr.f32.gmra.mrb[0].mxu0 %v902
      %v1593 = vpop.f32.mrb[0].mxu0
      %v1594 = vadd.f32 %v541, %v1593
      %v1595 = vpop.f32.mrb[0].mxu0
      %1596 = vmatprep.mubr.f32.mxu0 0.0
      %1597 = vmatmul.mubr.f32.gmra.mrb[0].mxu0 %v905
      %v1598 = vpop.f32.mrb[0].mxu0
      %v1599 = vadd.f32 %v541, %v1598
      %v1600 = vpop.f32.mrb[0].mxu0
      %1601 = vmatprep.mubr.f32.mxu0 0.0
      %1602 = vmatmul.mubr.f32.gmra.mrb[0].mxu0 %v908
      %v1603 = vpop.f32.mrb[0].mxu0
      %v1604 = vadd.f32 %v541, %v1603
      %v1605 = vpop.f32.mrb[0].mxu0
      %1606 = vmatprep.mubr.f32.mxu0 0.0
      %1607 = vmatmul.mubr.f32.gmra.mrb[0].mxu0 %v911
      %v1608 = vpop.f32.mrb[0].mxu0
      %v1609 = vadd.f32 %v541, %v1608
      %v1610 = vpop.f32.mrb[0].mxu0
      %1611 = vmatprep.mubr.f32.mxu0 0.0
      %1612 = vmatmul.mubr.f32.gmra.mrb[0].mxu0 %v914
      %v1613 = vpop.f32.mrb[0].mxu0
      %v1614 = vadd.f32 %v541, %v1613
      %v1615 = vpop.f32.mrb[0].mxu0
      %1616 = vmatprep.mubr.f32.mxu0 0.0
      %1617 = vmatmul.mubr.f32.gmra.mrb[0].mxu0 %v917
      %v1618 = vpop.f32.mrb[0].mxu0
      %v1619 = vadd.f32 %v541, %v1618
      %v1620 = vpop.f32.mrb[0].mxu0
      %1621 = vmatprep.mubr.f32.mxu0 0.0
      %1622 = vmatmul.mubr.f32.gmra.mrb[0].mxu0 %v920
      %v1623 = vpop.f32.mrb[0].mxu0
      %v1624 = vadd.f32 %v541, %v1623
      %v1625 = vpop.f32.mrb[0].mxu0
      %1626 = vmatprep.mubr.f32.mxu0 0.0
      %1627 = vmatmul.mubr.f32.gmra.mrb[0].mxu0 %v923
      %v1628 = vpop.f32.mrb[0].mxu0
      %v1629 = vadd.f32 %v541, %v1628
      %v1630 = vpop.f32.mrb[0].mxu0
      %1631 = vmatprep.mubr.f32.mxu0 0.0
      %1632 = vmatmul.mubr.f32.gmra.mrb[0].mxu0 %v926
      %v1633 = vpop.f32.mrb[0].mxu0
      %v1634 = vadd.f32 %v541, %v1633
      %v1635 = vpop.f32.mrb[0].mxu0
      %1636 = vdwg.mxu0
      %v1637 = vmax.f32 %v999, %v1019
      %v1638 = vmax.f32 %v1004, %v1024
      %v1639 = vmax.f32 %v1009, %v1029
      %v1640 = vmax.f32 %v1014, %v1034
      %v1641 = vmax.f32 %v1039, %v1059
      %v1642 = vmax.f32 %v1044, %v1064
      %v1643 = vmax.f32 %v1049, %v1069
      %v1644 = vmax.f32 %v1054, %v1074
      %v1645 = vmax.f32 %v1079, %v1099
      %v1646 = vmax.f32 %v1084, %v1104
      %v1647 = vmax.f32 %v1089, %v1109
      %v1648 = vmax.f32 %v1094, %v1114
      %v1649 = vmax.f32 %v1119, %v1139
      %v1650 = vmax.f32 %v1124, %v1144
      %v1651 = vmax.f32 %v1129, %v1149
      %v1652 = vmax.f32 %v1134, %v1154
      %v1653 = vmax.f32 %v1159, %v1179
      %v1654 = vmax.f32 %v1164, %v1184
      %v1655 = vmax.f32 %v1169, %v1189
      %v1656 = vmax.f32 %v1174, %v1194
      %v1657 = vmax.f32 %v1199, %v1219
      %v1658 = vmax.f32 %v1204, %v1224
      %v1659 = vmax.f32 %v1209, %v1229
      %v1660 = vmax.f32 %v1214, %v1234
      %v1661 = vmax.f32 %v1239, %v1259
      %v1662 = vmax.f32 %v1244, %v1264
      %v1663 = vmax.f32 %v1249, %v1269
      %v1664 = vmax.f32 %v1254, %v1274
      %v1665 = vmax.f32 %v1279, %v1299
      %v1666 = vmax.f32 %v1284, %v1304
      %v1667 = vmax.f32 %v1289, %v1309
      %v1668 = vmax.f32 %v1294, %v1314
      %v1669 = vmax.f32 %v1319, %v1339
      %v1670 = vmax.f32 %v1324, %v1344
      %v1671 = vmax.f32 %v1329, %v1349
      %v1672 = vmax.f32 %v1334, %v1354
      %v1673 = vmax.f32 %v1359, %v1379
      %v1674 = vmax.f32 %v1364, %v1384
      %v1675 = vmax.f32 %v1369, %v1389
      %v1676 = vmax.f32 %v1374, %v1394
      %v1677 = vmax.f32 %v1399, %v1419
      %v1678 = vmax.f32 %v1404, %v1424
      %v1679 = vmax.f32 %v1409, %v1429
      %v1680 = vmax.f32 %v1414, %v1434
      %v1681 = vmax.f32 %v1439, %v1459
      %v1682 = vmax.f32 %v1444, %v1464
      %v1683 = vmax.f32 %v1449, %v1469
      %v1684 = vmax.f32 %v1454, %v1474
      %v1685 = vmax.f32 %v1479, %v1499
      %v1686 = vmax.f32 %v1484, %v1504
      %v1687 = vmax.f32 %v1489, %v1509
      %v1688 = vmax.f32 %v1494, %v1514
      %v1689 = vmax.f32 %v1519, %v1539
      %v1690 = vmax.f32 %v1524, %v1544
      %v1691 = vmax.f32 %v1529, %v1549
      %v1692 = vmax.f32 %v1534, %v1554
      %v1693 = vmax.f32 %v1559, %v1579
      %v1694 = vmax.f32 %v1564, %v1584
      %v1695 = vmax.f32 %v1569, %v1589
      %v1696 = vmax.f32 %v1574, %v1594
      %v1697 = vmax.f32 %v1599, %v1619
      %v1698 = vmax.f32 %v1604, %v1624
      %v1699 = vmax.f32 %v1609, %v1629
      %v1700 = vmax.f32 %v1614, %v1634
      %1701 = vst.msk [vmem:[#allocation2] sm:$0xff] %vm280, %v1637
      %1702 = vst.msk [vmem:[#allocation2 + $0x8] sm:$0xff] %vm280, %v1638
      %1703 = vst.msk [vmem:[#allocation2 + $0x10] sm:$0xff] %vm280, %v1639
      %1704 = vst.msk [vmem:[#allocation2 + $0x18] sm:$0xff] %vm280, %v1640
      %1705 = vst.msk [vmem:[#allocation2 + $0x20] sm:$0xff] %vm280, %v1641
      %1706 = vst.msk [vmem:[#allocation2 + $0x28] sm:$0xff] %vm280, %v1642
      %1707 = vst.msk [vmem:[#allocation2 + $0x30] sm:$0xff] %vm280, %v1643
      %1708 = vst.msk [vmem:[#allocation2 + $0x38] sm:$0xff] %vm280, %v1644
      %1709 = vst.msk [vmem:[#allocation2 + $0x40] sm:$0xff] %vm280, %v1645
      %1710 = vst.msk [vmem:[#allocation2 + $0x48] sm:$0xff] %vm280, %v1646
      %1711 = vst.msk [vmem:[#allocation2 + $0x50] sm:$0xff] %vm280, %v1647
      %1712 = vst.msk [vmem:[#allocation2 + $0x58] sm:$0xff] %vm280, %v1648
      %1713 = vst.msk [vmem:[#allocation2 + $0x60] sm:$0xff] %vm280, %v1649
      %1714 = vst.msk [vmem:[#allocation2 + $0x68] sm:$0xff] %vm280, %v1650
      %1715 = vst.msk [vmem:[#allocation2 + $0x70] sm:$0xff] %vm280, %v1651
      %1716 = vst.msk [vmem:[#allocation2 + $0x78] sm:$0xff] %vm280, %v1652
      %1717 = vst.msk [vmem:[#allocation2 + $0x80] sm:$0xff] %vm280, %v1653
      %1718 = vst.msk [vmem:[#allocation2 + $0x88] sm:$0xff] %vm280, %v1654
      %1719 = vst.msk [vmem:[#allocation2 + $0x90] sm:$0xff] %vm280, %v1655
      %1720 = vst.msk [vmem:[#allocation2 + $0x98] sm:$0xff] %vm280, %v1656
      %1721 = vst.msk [vmem:[#allocation2 + $0xa0] sm:$0xff] %vm280, %v1657
      %1722 = vst.msk [vmem:[#allocation2 + $0xa8] sm:$0xff] %vm280, %v1658
      %1723 = vst.msk [vmem:[#allocation2 + $0xb0] sm:$0xff] %vm280, %v1659
      %1724 = vst.msk [vmem:[#allocation2 + $0xb8] sm:$0xff] %vm280, %v1660
      %1725 = vst.msk [vmem:[#allocation2 + $0xc0] sm:$0xff] %vm280, %v1661
      %1726 = vst.msk [vmem:[#allocation2 + $0xc8] sm:$0xff] %vm280, %v1662
      %1727 = vst.msk [vmem:[#allocation2 + $0xd0] sm:$0xff] %vm280, %v1663
      %1728 = vst.msk [vmem:[#allocation2 + $0xd8] sm:$0xff] %vm280, %v1664
      %1729 = vst.msk [vmem:[#allocation2 + $0xe0] sm:$0xff] %vm280, %v1665
      %1730 = vst.msk [vmem:[#allocation2 + $0xe8] sm:$0xff] %vm280, %v1666
      %1731 = vst.msk [vmem:[#allocation2 + $0xf0] sm:$0xff] %vm280, %v1667
      %1732 = vst.msk [vmem:[#allocation2 + $0xf8] sm:$0xff] %vm280, %v1668
      %1733 = vst.msk [vmem:[#allocation2 + $0x100] sm:$0xff] %vm280, %v1669
      %1734 = vst.msk [vmem:[#allocation2 + $0x108] sm:$0xff] %vm280, %v1670
      %1735 = vst.msk [vmem:[#allocation2 + $0x110] sm:$0xff] %vm280, %v1671
      %1736 = vst.msk [vmem:[#allocation2 + $0x118] sm:$0xff] %vm280, %v1672
      %1737 = vst.msk [vmem:[#allocation2 + $0x120] sm:$0xff] %vm280, %v1673
      %1738 = vst.msk [vmem:[#allocation2 + $0x128] sm:$0xff] %vm280, %v1674
      %1739 = vst.msk [vmem:[#allocation2 + $0x130] sm:$0xff] %vm280, %v1675
      %1740 = vst.msk [vmem:[#allocation2 + $0x138] sm:$0xff] %vm280, %v1676
      %1741 = vst.msk [vmem:[#allocation2 + $0x140] sm:$0xff] %vm280, %v1677
      %1742 = vst.msk [vmem:[#allocation2 + $0x148] sm:$0xff] %vm280, %v1678
      %1743 = vst.msk [vmem:[#allocation2 + $0x150] sm:$0xff] %vm280, %v1679
      %1744 = vst.msk [vmem:[#allocation2 + $0x158] sm:$0xff] %vm280, %v1680
      %1745 = vst.msk [vmem:[#allocation2 + $0x160] sm:$0xff] %vm280, %v1681
      %1746 = vst.msk [vmem:[#allocation2 + $0x168] sm:$0xff] %vm280, %v1682
      %1747 = vst.msk [vmem:[#allocation2 + $0x170] sm:$0xff] %vm280, %v1683
      %1748 = vst.msk [vmem:[#allocation2 + $0x178] sm:$0xff] %vm280, %v1684
      %1749 = vst.msk [vmem:[#allocation2 + $0x180] sm:$0xff] %vm280, %v1685
      %1750 = vst.msk [vmem:[#allocation2 + $0x188] sm:$0xff] %vm280, %v1686
      %1751 = vst.msk [vmem:[#allocation2 + $0x190] sm:$0xff] %vm280, %v1687
      %1752 = vst.msk [vmem:[#allocation2 + $0x198] sm:$0xff] %vm280, %v1688
      %1753 = vst.msk [vmem:[#allocation2 + $0x1a0] sm:$0xff] %vm280, %v1689
      %1754 = vst.msk [vmem:[#allocation2 + $0x1a8] sm:$0xff] %vm280, %v1690
      %1755 = vst.msk [vmem:[#allocation2 + $0x1b0] sm:$0xff] %vm280, %v1691
      %1756 = vst.msk [vmem:[#allocation2 + $0x1b8] sm:$0xff] %vm280, %v1692
      %1757 = vst.msk [vmem:[#allocation2 + $0x1c0] sm:$0xff] %vm280, %v1693
      %1758 = vst.msk [vmem:[#allocation2 + $0x1c8] sm:$0xff] %vm280, %v1694
      %1759 = vst.msk [vmem:[#allocation2 + $0x1d0] sm:$0xff] %vm280, %v1695
      %1760 = vst.msk [vmem:[#allocation2 + $0x1d8] sm:$0xff] %vm280, %v1696
      %1761 = vst.msk [vmem:[#allocation2 + $0x1e0] sm:$0xff] %vm280, %v1697
      %1762 = vst.msk [vmem:[#allocation2 + $0x1e8] sm:$0xff] %vm280, %v1698
      %1763 = vst.msk [vmem:[#allocation2 + $0x1f0] sm:$0xff] %vm280, %v1699
      %1764 = vst.msk [vmem:[#allocation2 + $0x1f8] sm:$0xff] %vm280, %v1700
      %v1765 = vld [vmem:[#allocation2] ss:$2 sm:$0xff]
      %s1766 = scalar_lea.vmem [#allocation2], 16
      %v1767 = vld [vmem:[%s1766] ss:$2 sm:$0xff]
      %s1768 = scalar_lea.vmem [#allocation2], 32
      %v1769 = vld [vmem:[%s1768] ss:$2 sm:$0xff]
      %s1770 = scalar_lea.vmem [#allocation2], 48
      %v1771 = vld [vmem:[%s1770] ss:$2 sm:$0xff]
      %s1772 = scalar_lea.vmem [#allocation2], 64
      %v1773 = vld [vmem:[%s1772] ss:$2 sm:$0xff]
      %s1774 = scalar_lea.vmem [#allocation2], 80
      %v1775 = vld [vmem:[%s1774] ss:$2 sm:$0xff]
      %s1776 = scalar_lea.vmem [#allocation2], 96
      %v1777 = vld [vmem:[%s1776] ss:$2 sm:$0xff]
      %s1778 = scalar_lea.vmem [#allocation2], 112
      %v1779 = vld [vmem:[%s1778] ss:$2 sm:$0xff]
      %s1780 = scalar_lea.vmem [#allocation2], 128
      %v1781 = vld [vmem:[%s1780] ss:$2 sm:$0xff]
      %s1782 = scalar_lea.vmem [#allocation2], 144
      %v1783 = vld [vmem:[%s1782] ss:$2 sm:$0xff]
      %s1784 = scalar_lea.vmem [#allocation2], 160
      %v1785 = vld [vmem:[%s1784] ss:$2 sm:$0xff]
      %s1786 = scalar_lea.vmem [#allocation2], 176
      %v1787 = vld [vmem:[%s1786] ss:$2 sm:$0xff]
      %s1788 = scalar_lea.vmem [#allocation2], 192
      %v1789 = vld [vmem:[%s1788] ss:$2 sm:$0xff]
      %s1790 = scalar_lea.vmem [#allocation2], 208
      %v1791 = vld [vmem:[%s1790] ss:$2 sm:$0xff]
      %s1792 = scalar_lea.vmem [#allocation2], 224
      %v1793 = vld [vmem:[%s1792] ss:$2 sm:$0xff]
      %s1794 = scalar_lea.vmem [#allocation2], 240
      %v1795 = vld [vmem:[%s1794] ss:$2 sm:$0xff]
      %s1796 = scalar_lea.vmem [#allocation2], 256
      %v1797 = vld [vmem:[%s1796] ss:$2 sm:$0xff]
      %s1798 = scalar_lea.vmem [#allocation2], 272
      %v1799 = vld [vmem:[%s1798] ss:$2 sm:$0xff]
      %s1800 = scalar_lea.vmem [#allocation2], 288
      %v1801 = vld [vmem:[%s1800] ss:$2 sm:$0xff]
      %s1802 = scalar_lea.vmem [#allocation2], 304
      %v1803 = vld [vmem:[%s1802] ss:$2 sm:$0xff]
      %s1804 = scalar_lea.vmem [#allocation2], 320
      %v1805 = vld [vmem:[%s1804] ss:$2 sm:$0xff]
      %s1806 = scalar_lea.vmem [#allocation2], 336
      %v1807 = vld [vmem:[%s1806] ss:$2 sm:$0xff]
      %s1808 = scalar_lea.vmem [#allocation2], 352
      %v1809 = vld [vmem:[%s1808] ss:$2 sm:$0xff]
      %s1810 = scalar_lea.vmem [#allocation2], 368
      %v1811 = vld [vmem:[%s1810] ss:$2 sm:$0xff]
      %s1812 = scalar_lea.vmem [#allocation2], 384
      %v1813 = vld [vmem:[%s1812] ss:$2 sm:$0xff]
      %s1814 = scalar_lea.vmem [#allocation2], 400
      %v1815 = vld [vmem:[%s1814] ss:$2 sm:$0xff]
      %s1816 = scalar_lea.vmem [#allocation2], 416
      %v1817 = vld [vmem:[%s1816] ss:$2 sm:$0xff]
      %s1818 = scalar_lea.vmem [#allocation2], 432
      %v1819 = vld [vmem:[%s1818] ss:$2 sm:$0xff]
      %s1820 = scalar_lea.vmem [#allocation2], 448
      %v1821 = vld [vmem:[%s1820] ss:$2 sm:$0xff]
      %s1822 = scalar_lea.vmem [#allocation2], 464
      %v1823 = vld [vmem:[%s1822] ss:$2 sm:$0xff]
      %s1824 = scalar_lea.vmem [#allocation2], 480
      %v1825 = vld [vmem:[%s1824] ss:$2 sm:$0xff]
      %s1826 = scalar_lea.vmem [#allocation2], 496
      %v1827 = vld [vmem:[%s1826] ss:$2 sm:$0xff]
      %s1828 = scalar_lea.vmem [#allocation2], 1
      %v1829 = vld [vmem:[%s1828] ss:$2 sm:$0xff]
      %s1830 = scalar_lea.vmem [#allocation2], 17
      %v1831 = vld [vmem:[%s1830] ss:$2 sm:$0xff]
      %s1832 = scalar_lea.vmem [#allocation2], 33
      %v1833 = vld [vmem:[%s1832] ss:$2 sm:$0xff]
      %s1834 = scalar_lea.vmem [#allocation2], 49
      %v1835 = vld [vmem:[%s1834] ss:$2 sm:$0xff]
      %s1836 = scalar_lea.vmem [#allocation2], 65
      %v1837 = vld [vmem:[%s1836] ss:$2 sm:$0xff]
      %s1838 = scalar_lea.vmem [#allocation2], 81
      %v1839 = vld [vmem:[%s1838] ss:$2 sm:$0xff]
      %s1840 = scalar_lea.vmem [#allocation2], 97
      %v1841 = vld [vmem:[%s1840] ss:$2 sm:$0xff]
      %s1842 = scalar_lea.vmem [#allocation2], 113
      %v1843 = vld [vmem:[%s1842] ss:$2 sm:$0xff]
      %s1844 = scalar_lea.vmem [#allocation2], 129
      %v1845 = vld [vmem:[%s1844] ss:$2 sm:$0xff]
      %s1846 = scalar_lea.vmem [#allocation2], 145
      %v1847 = vld [vmem:[%s1846] ss:$2 sm:$0xff]
      %s1848 = scalar_lea.vmem [#allocation2], 161
      %v1849 = vld [vmem:[%s1848] ss:$2 sm:$0xff]
      %s1850 = scalar_lea.vmem [#allocation2], 177
      %v1851 = vld [vmem:[%s1850] ss:$2 sm:$0xff]
      %s1852 = scalar_lea.vmem [#allocation2], 193
      %v1853 = vld [vmem:[%s1852] ss:$2 sm:$0xff]
      %s1854 = scalar_lea.vmem [#allocation2], 209
      %v1855 = vld [vmem:[%s1854] ss:$2 sm:$0xff]
      %s1856 = scalar_lea.vmem [#allocation2], 225
      %v1857 = vld [vmem:[%s1856] ss:$2 sm:$0xff]
      %s1858 = scalar_lea.vmem [#allocation2], 241
      %v1859 = vld [vmem:[%s1858] ss:$2 sm:$0xff]
      %s1860 = scalar_lea.vmem [#allocation2], 257
      %v1861 = vld [vmem:[%s1860] ss:$2 sm:$0xff]
      %s1862 = scalar_lea.vmem [#allocation2], 273
      %v1863 = vld [vmem:[%s1862] ss:$2 sm:$0xff]
      %s1864 = scalar_lea.vmem [#allocation2], 289
      %v1865 = vld [vmem:[%s1864] ss:$2 sm:$0xff]
      %s1866 = scalar_lea.vmem [#allocation2], 305
      %v1867 = vld [vmem:[%s1866] ss:$2 sm:$0xff]
      %s1868 = scalar_lea.vmem [#allocation2], 321
      %v1869 = vld [vmem:[%s1868] ss:$2 sm:$0xff]
      %s1870 = scalar_lea.vmem [#allocation2], 337
      %v1871 = vld [vmem:[%s1870] ss:$2 sm:$0xff]
      %s1872 = scalar_lea.vmem [#allocation2], 353
      %v1873 = vld [vmem:[%s1872] ss:$2 sm:$0xff]
      %s1874 = scalar_lea.vmem [#allocation2], 369
      %v1875 = vld [vmem:[%s1874] ss:$2 sm:$0xff]
      %s1876 = scalar_lea.vmem [#allocation2], 385
      %v1877 = vld [vmem:[%s1876] ss:$2 sm:$0xff]
      %s1878 = scalar_lea.vmem [#allocation2], 401
      %v1879 = vld [vmem:[%s1878] ss:$2 sm:$0xff]
      %s1880 = scalar_lea.vmem [#allocation2], 417
      %v1881 = vld [vmem:[%s1880] ss:$2 sm:$0xff]
      %s1882 = scalar_lea.vmem [#allocation2], 433
      %v1883 = vld [vmem:[%s1882] ss:$2 sm:$0xff]
      %s1884 = scalar_lea.vmem [#allocation2], 449
      %v1885 = vld [vmem:[%s1884] ss:$2 sm:$0xff]
      %s1886 = scalar_lea.vmem [#allocation2], 465
      %v1887 = vld [vmem:[%s1886] ss:$2 sm:$0xff]
      %s1888 = scalar_lea.vmem [#allocation2], 481
      %v1889 = vld [vmem:[%s1888] ss:$2 sm:$0xff]
      %s1890 = scalar_lea.vmem [#allocation2], 497
      %v1891 = vld [vmem:[%s1890] ss:$2 sm:$0xff]
      %v1892 = vmax.f32 %v1765, %v1829
      %v1893 = vmax.f32 %v1767, %v1831
      %v1894 = vmax.f32 %v1769, %v1833
      %v1895 = vmax.f32 %v1771, %v1835
      %v1896 = vmax.f32 %v1773, %v1837
      %v1897 = vmax.f32 %v1775, %v1839
      %v1898 = vmax.f32 %v1777, %v1841
      %v1899 = vmax.f32 %v1779, %v1843
      %v1900 = vmax.f32 %v1781, %v1845
      %v1901 = vmax.f32 %v1783, %v1847
      %v1902 = vmax.f32 %v1785, %v1849
      %v1903 = vmax.f32 %v1787, %v1851
      %v1904 = vmax.f32 %v1789, %v1853
      %v1905 = vmax.f32 %v1791, %v1855
      %v1906 = vmax.f32 %v1793, %v1857
      %v1907 = vmax.f32 %v1795, %v1859
      %v1908 = vmax.f32 %v1797, %v1861
      %v1909 = vmax.f32 %v1799, %v1863
      %v1910 = vmax.f32 %v1801, %v1865
      %v1911 = vmax.f32 %v1803, %v1867
      %v1912 = vmax.f32 %v1805, %v1869
      %v1913 = vmax.f32 %v1807, %v1871
      %v1914 = vmax.f32 %v1809, %v1873
      %v1915 = vmax.f32 %v1811, %v1875
      %v1916 = vmax.f32 %v1813, %v1877
      %v1917 = vmax.f32 %v1815, %v1879
      %v1918 = vmax.f32 %v1817, %v1881
      %v1919 = vmax.f32 %v1819, %v1883
      %v1920 = vmax.f32 %v1821, %v1885
      %v1921 = vmax.f32 %v1823, %v1887
      %v1922 = vmax.f32 %v1825, %v1889
      %v1923 = vmax.f32 %v1827, %v1891
      %s1924 = scalar_lea.vmem [#allocation3], 64
      %1925 = vst.msk [vmem:[%s1924 + $0x8] sm:$0xff] %vm280, %v1892
      %1926 = vst.msk [vmem:[%s1924 + $0x10] sm:$0xff] %vm280, %v1893
      %1927 = vst.msk [vmem:[%s1924 + $0x28] sm:$0xff] %vm280, %v1894
      %1928 = vst.msk [vmem:[%s1924 + $0x30] sm:$0xff] %vm280, %v1895
      %1929 = vst.msk [vmem:[%s1924 + $0x48] sm:$0xff] %vm280, %v1896
      %1930 = vst.msk [vmem:[%s1924 + $0x50] sm:$0xff] %vm280, %v1897
      %1931 = vst.msk [vmem:[%s1924 + $0x68] sm:$0xff] %vm280, %v1898
      %1932 = vst.msk [vmem:[%s1924 + $0x70] sm:$0xff] %vm280, %v1899
      %1933 = vst.msk [vmem:[%s1924 + $0x88] sm:$0xff] %vm280, %v1900
      %1934 = vst.msk [vmem:[%s1924 + $0x90] sm:$0xff] %vm280, %v1901
      %1935 = vst.msk [vmem:[%s1924 + $0xa8] sm:$0xff] %vm280, %v1902
      %1936 = vst.msk [vmem:[%s1924 + $0xb0] sm:$0xff] %vm280, %v1903
      %1937 = vst.msk [vmem:[%s1924 + $0xc8] sm:$0xff] %vm280, %v1904
      %1938 = vst.msk [vmem:[%s1924 + $0xd0] sm:$0xff] %vm280, %v1905
      %1939 = vst.msk [vmem:[%s1924 + $0xe8] sm:$0xff] %vm280, %v1906
      %1940 = vst.msk [vmem:[%s1924 + $0xf0] sm:$0xff] %vm280, %v1907
      %1941 = vst.msk [vmem:[%s1924 + $0x108] sm:$0xff] %vm280, %v1908
      %1942 = vst.msk [vmem:[%s1924 + $0x110] sm:$0xff] %vm280, %v1909
      %1943 = vst.msk [vmem:[%s1924 + $0x128] sm:$0xff] %vm280, %v1910
      %1944 = vst.msk [vmem:[%s1924 + $0x130] sm:$0xff] %vm280, %v1911
      %1945 = vst.msk [vmem:[%s1924 + $0x148] sm:$0xff] %vm280, %v1912
      %1946 = vst.msk [vmem:[%s1924 + $0x150] sm:$0xff] %vm280, %v1913
      %1947 = vst.msk [vmem:[%s1924 + $0x168] sm:$0xff] %vm280, %v1914
      %1948 = vst.msk [vmem:[%s1924 + $0x170] sm:$0xff] %vm280, %v1915
      %1949 = vst.msk [vmem:[%s1924 + $0x188] sm:$0xff] %vm280, %v1916
      %1950 = vst.msk [vmem:[%s1924 + $0x190] sm:$0xff] %vm280, %v1917
      %1951 = vst.msk [vmem:[%s1924 + $0x1a8] sm:$0xff] %vm280, %v1918
      %1952 = vst.msk [vmem:[%s1924 + $0x1b0] sm:$0xff] %vm280, %v1919
      %1953 = vst.msk [vmem:[%s1924 + $0x1c8] sm:$0xff] %vm280, %v1920
      %1954 = vst.msk [vmem:[%s1924 + $0x1d0] sm:$0xff] %vm280, %v1921
      %1955 = vst.msk [vmem:[%s1924 + $0x1e8] sm:$0xff] %vm280, %v1922
      %1956 = vst.msk [vmem:[%s1924 + $0x1f0] sm:$0xff] %vm280, %v1923
      %v1957 = vld [vmem:[#allocation3 + $0x6] sm:$0xff]
      %v1958 = vld [vmem:[#allocation3 + $0xe] sm:$0xff]
      %v1959 = vld [vmem:[#allocation3 + $0x26] sm:$0xff]
      %v1960 = vld [vmem:[#allocation3 + $0x2e] sm:$0xff]
      %v1961 = vld [vmem:[#allocation3 + $0x46] sm:$0xff]
      %v1962 = vld [vmem:[#allocation3 + $0x4e] sm:$0xff]
      %v1963 = vld [vmem:[#allocation3 + $0x66] sm:$0xff]
      %v1964 = vld [vmem:[#allocation3 + $0x6e] sm:$0xff]
      %v1965 = vld [vmem:[#allocation3 + $0x86] sm:$0xff]
      %v1966 = vld [vmem:[#allocation3 + $0x8e] sm:$0xff]
      %v1967 = vld [vmem:[#allocation3 + $0xa6] sm:$0xff]
      %v1968 = vld [vmem:[#allocation3 + $0xae] sm:$0xff]
      %v1969 = vld [vmem:[#allocation3 + $0xc6] sm:$0xff]
      %v1970 = vld [vmem:[#allocation3 + $0xce] sm:$0xff]
      %v1971 = vld [vmem:[#allocation3 + $0xe6] sm:$0xff]
      %v1972 = vld [vmem:[#allocation3 + $0xee] sm:$0xff]
      %v1973 = vld [vmem:[#allocation3 + $0x106] sm:$0xff]
      %v1974 = vld [vmem:[#allocation3 + $0x10e] sm:$0xff]
      %v1975 = vld [vmem:[#allocation3 + $0x126] sm:$0xff]
      %v1976 = vld [vmem:[#allocation3 + $0x12e] sm:$0xff]
      %v1977 = vld [vmem:[#allocation3 + $0x146] sm:$0xff]
      %v1978 = vld [vmem:[#allocation3 + $0x14e] sm:$0xff]
      %v1979 = vld [vmem:[#allocation3 + $0x166] sm:$0xff]
      %v1980 = vld [vmem:[#allocation3 + $0x16e] sm:$0xff]
      %v1981 = vld [vmem:[#allocation3 + $0x186] sm:$0xff]
      %v1982 = vld [vmem:[#allocation3 + $0x18e] sm:$0xff]
      %v1983 = vld [vmem:[#allocation3 + $0x1a6] sm:$0xff]
      %v1984 = vld [vmem:[#allocation3 + $0x1ae] sm:$0xff]
      %v1985 = vld [vmem:[#allocation3 + $0x1c6] sm:$0xff]
      %v1986 = vld [vmem:[#allocation3 + $0x1ce] sm:$0xff]
      %v1987 = vld [vmem:[#allocation3 + $0x1e6] sm:$0xff]
      %v1988 = vld [vmem:[#allocation3 + $0x1ee] sm:$0xff]
      %v1989 = vld [vmem:[#allocation3 + $0x206] sm:$0xff]
      %v1990 = vld [vmem:[#allocation3 + $0x20e] sm:$0xff]
      %v1991 = vld [vmem:[#allocation3 + $0x226] sm:$0xff]
      %v1992 = vld [vmem:[#allocation3 + $0x22e] sm:$0xff]
      %v1993 = vld [vmem:[#allocation3 + $0x246] sm:$0xff]
      %v1994 = vld [vmem:[#allocation3 + $0x24e] sm:$0xff]
      %v1995 = vld [vmem:[#allocation3 + $0x266] sm:$0xff]
      %v1996 = vld [vmem:[#allocation3 + $0x26e] sm:$0xff]
      %v1997 = vld [vmem:[#allocation3 + $0x7] sm:$0xff]
      %v1998 = vld [vmem:[#allocation3 + $0xf] sm:$0xff]
      %v1999 = vld [vmem:[#allocation3 + $0x27] sm:$0xff]
      %v2000 = vld [vmem:[#allocation3 + $0x2f] sm:$0xff]
      %v2001 = vld [vmem:[#allocation3 + $0x47] sm:$0xff]
      %v2002 = vld [vmem:[#allocation3 + $0x4f] sm:$0xff]
      %v2003 = vld [vmem:[#allocation3 + $0x67] sm:$0xff]
      %v2004 = vld [vmem:[#allocation3 + $0x6f] sm:$0xff]
      %v2005 = vld [vmem:[#allocation3 + $0x87] sm:$0xff]
      %v2006 = vld [vmem:[#allocation3 + $0x8f] sm:$0xff]
      %v2007 = vld [vmem:[#allocation3 + $0xa7] sm:$0xff]
      %v2008 = vld [vmem:[#allocation3 + $0xaf] sm:$0xff]
      %v2009 = vld [vmem:[#allocation3 + $0xc7] sm:$0xff]
      %v2010 = vld [vmem:[#allocation3 + $0xcf] sm:$0xff]
      %v2011 = vld [vmem:[#allocation3 + $0xe7] sm:$0xff]
      %v2012 = vld [vmem:[#allocation3 + $0xef] sm:$0xff]
      %v2013 = vld [vmem:[#allocation3 + $0x107] sm:$0xff]
      %v2014 = vld [vmem:[#allocation3 + $0x10f] sm:$0xff]
      %v2015 = vld [vmem:[#allocation3 + $0x127] sm:$0xff]
      %v2016 = vld [vmem:[#allocation3 + $0x12f] sm:$0xff]
      %v2017 = vld [vmem:[#allocation3 + $0x147] sm:$0xff]
      %v2018 = vld [vmem:[#allocation3 + $0x14f] sm:$0xff]
      %v2019 = vld [vmem:[#allocation3 + $0x167] sm:$0xff]
      %v2020 = vld [vmem:[#allocation3 + $0x16f] sm:$0xff]
      %v2021 = vld [vmem:[#allocation3 + $0x187] sm:$0xff]
      %v2022 = vld [vmem:[#allocation3 + $0x18f] sm:$0xff]
      %v2023 = vld [vmem:[#allocation3 + $0x1a7] sm:$0xff]
      %v2024 = vld [vmem:[#allocation3 + $0x1af] sm:$0xff]
      %v2025 = vld [vmem:[#allocation3 + $0x1c7] sm:$0xff]
      %v2026 = vld [vmem:[#allocation3 + $0x1cf] sm:$0xff]
      %v2027 = vld [vmem:[#allocation3 + $0x1e7] sm:$0xff]
      %v2028 = vld [vmem:[#allocation3 + $0x1ef] sm:$0xff]
      %v2029 = vld [vmem:[#allocation3 + $0x207] sm:$0xff]
      %v2030 = vld [vmem:[#allocation3 + $0x20f] sm:$0xff]
      %v2031 = vld [vmem:[#allocation3 + $0x227] sm:$0xff]
      %v2032 = vld [vmem:[#allocation3 + $0x22f] sm:$0xff]
      %v2033 = vld [vmem:[#allocation3 + $0x247] sm:$0xff]
      %v2034 = vld [vmem:[#allocation3 + $0x24f] sm:$0xff]
      %v2035 = vld [vmem:[#allocation3 + $0x267] sm:$0xff]
      %v2036 = vld [vmem:[#allocation3 + $0x26f] sm:$0xff]
      %v2037 = vld [vmem:[#allocation3 + $0x8] sm:$0xff]
      %v2038 = vld [vmem:[#allocation3 + $0x10] sm:$0xff]
      %v2039 = vld [vmem:[#allocation3 + $0x28] sm:$0xff]
      %v2040 = vld [vmem:[#allocation3 + $0x30] sm:$0xff]
      %v2041 = vld [vmem:[#allocation3 + $0x48] sm:$0xff]
      %v2042 = vld [vmem:[#allocation3 + $0x50] sm:$0xff]
      %v2043 = vld [vmem:[#allocation3 + $0x68] sm:$0xff]
      %v2044 = vld [vmem:[#allocation3 + $0x70] sm:$0xff]
      %v2045 = vld [vmem:[#allocation3 + $0x88] sm:$0xff]
      %v2046 = vld [vmem:[#allocation3 + $0x90] sm:$0xff]
      %v2047 = vld [vmem:[#allocation3 + $0xa8] sm:$0xff]
      %v2048 = vld [vmem:[#allocation3 + $0xb0] sm:$0xff]
      %v2049 = vld [vmem:[#allocation3 + $0xc8] sm:$0xff]
      %v2050 = vld [vmem:[#allocation3 + $0xd0] sm:$0xff]
      %v2051 = vld [vmem:[#allocation3 + $0xe8] sm:$0xff]
      %v2052 = vld [vmem:[#allocation3 + $0xf0] sm:$0xff]
      %v2053 = vld [vmem:[#allocation3 + $0x108] sm:$0xff]
      %v2054 = vld [vmem:[#allocation3 + $0x110] sm:$0xff]
      %v2055 = vld [vmem:[#allocation3 + $0x128] sm:$0xff]
      %v2056 = vld [vmem:[#allocation3 + $0x130] sm:$0xff]
      %v2057 = vld [vmem:[#allocation3 + $0x148] sm:$0xff]
      %v2058 = vld [vmem:[#allocation3 + $0x150] sm:$0xff]
      %v2059 = vld [vmem:[#allocation3 + $0x168] sm:$0xff]
      %v2060 = vld [vmem:[#allocation3 + $0x170] sm:$0xff]
      %v2061 = vld [vmem:[#allocation3 + $0x188] sm:$0xff]
      %v2062 = vld [vmem:[#allocation3 + $0x190] sm:$0xff]
      %v2063 = vld [vmem:[#allocation3 + $0x1a8] sm:$0xff]
      %v2064 = vld [vmem:[#allocation3 + $0x1b0] sm:$0xff]
      %v2065 = vld [vmem:[#allocation3 + $0x1c8] sm:$0xff]
      %v2066 = vld [vmem:[#allocation3 + $0x1d0] sm:$0xff]
      %v2067 = vld [vmem:[#allocation3 + $0x1e8] sm:$0xff]
      %v2068 = vld [vmem:[#allocation3 + $0x1f0] sm:$0xff]
      %v2069 = vld [vmem:[#allocation3 + $0x208] sm:$0xff]
      %v2070 = vld [vmem:[#allocation3 + $0x210] sm:$0xff]
      %v2071 = vld [vmem:[#allocation3 + $0x228] sm:$0xff]
      %v2072 = vld [vmem:[#allocation3 + $0x230] sm:$0xff]
      %v2073 = vld [vmem:[#allocation3 + $0x248] sm:$0xff]
      %v2074 = vld [vmem:[#allocation3 + $0x250] sm:$0xff]
      %v2075 = vld [vmem:[#allocation3 + $0x268] sm:$0xff]
      %v2076 = vld [vmem:[#allocation3 + $0x270] sm:$0xff]
      %v2077 = vld [vmem:[#allocation3 + $0x9] sm:$0xff]
      %v2078 = vld [vmem:[#allocation3 + $0x11] sm:$0xff]
      %v2079 = vld [vmem:[#allocation3 + $0x29] sm:$0xff]
      %v2080 = vld [vmem:[#allocation3 + $0x31] sm:$0xff]
      %v2081 = vld [vmem:[#allocation3 + $0x49] sm:$0xff]
      %v2082 = vld [vmem:[#allocation3 + $0x51] sm:$0xff]
      %v2083 = vld [vmem:[#allocation3 + $0x69] sm:$0xff]
      %v2084 = vld [vmem:[#allocation3 + $0x71] sm:$0xff]
      %v2085 = vld [vmem:[#allocation3 + $0x89] sm:$0xff]
      %v2086 = vld [vmem:[#allocation3 + $0x91] sm:$0xff]
      %v2087 = vld [vmem:[#allocation3 + $0xa9] sm:$0xff]
      %v2088 = vld [vmem:[#allocation3 + $0xb1] sm:$0xff]
      %v2089 = vld [vmem:[#allocation3 + $0xc9] sm:$0xff]
      %v2090 = vld [vmem:[#allocation3 + $0xd1] sm:$0xff]
      %v2091 = vld [vmem:[#allocation3 + $0xe9] sm:$0xff]
      %v2092 = vld [vmem:[#allocation3 + $0xf1] sm:$0xff]
      %v2093 = vld [vmem:[#allocation3 + $0x109] sm:$0xff]
      %v2094 = vld [vmem:[#allocation3 + $0x111] sm:$0xff]
      %v2095 = vld [vmem:[#allocation3 + $0x129] sm:$0xff]
      %v2096 = vld [vmem:[#allocation3 + $0x131] sm:$0xff]
      %v2097 = vld [vmem:[#allocation3 + $0x149] sm:$0xff]
      %v2098 = vld [vmem:[#allocation3 + $0x151] sm:$0xff]
      %v2099 = vld [vmem:[#allocation3 + $0x169] sm:$0xff]
      %v2100 = vld [vmem:[#allocation3 + $0x171] sm:$0xff]
      %v2101 = vld [vmem:[#allocation3 + $0x189] sm:$0xff]
      %v2102 = vld [vmem:[#allocation3 + $0x191] sm:$0xff]
      %v2103 = vld [vmem:[#allocation3 + $0x1a9] sm:$0xff]
      %v2104 = vld [vmem:[#allocation3 + $0x1b1] sm:$0xff]
      %v2105 = vld [vmem:[#allocation3 + $0x1c9] sm:$0xff]
      %v2106 = vld [vmem:[#allocation3 + $0x1d1] sm:$0xff]
      %v2107 = vld [vmem:[#allocation3 + $0x1e9] sm:$0xff]
      %v2108 = vld [vmem:[#allocation3 + $0x1f1] sm:$0xff]
      %v2109 = vld [vmem:[#allocation3 + $0x209] sm:$0xff]
      %v2110 = vld [vmem:[#allocation3 + $0x211] sm:$0xff]
      %v2111 = vld [vmem:[#allocation3 + $0x229] sm:$0xff]
      %v2112 = vld [vmem:[#allocation3 + $0x231] sm:$0xff]
      %v2113 = vld [vmem:[#allocation3 + $0x249] sm:$0xff]
      %v2114 = vld [vmem:[#allocation3 + $0x251] sm:$0xff]
      %v2115 = vld [vmem:[#allocation3 + $0x269] sm:$0xff]
      %v2116 = vld [vmem:[#allocation3 + $0x271] sm:$0xff]
      %v2117 = vld [vmem:[#allocation3 + $0xa] sm:$0xff]
      %v2118 = vld [vmem:[#allocation3 + $0x12] sm:$0xff]
      %v2119 = vld [vmem:[#allocation3 + $0x2a] sm:$0xff]
      %v2120 = vld [vmem:[#allocation3 + $0x32] sm:$0xff]
      %v2121 = vld [vmem:[#allocation3 + $0x4a] sm:$0xff]
      %v2122 = vld [vmem:[#allocation3 + $0x52] sm:$0xff]
      %v2123 = vld [vmem:[#allocation3 + $0x6a] sm:$0xff]
      %v2124 = vld [vmem:[#allocation3 + $0x72] sm:$0xff]
      %v2125 = vld [vmem:[#allocation3 + $0x8a] sm:$0xff]
      %v2126 = vld [vmem:[#allocation3 + $0x92] sm:$0xff]
      %v2127 = vld [vmem:[#allocation3 + $0xaa] sm:$0xff]
      %v2128 = vld [vmem:[#allocation3 + $0xb2] sm:$0xff]
      %v2129 = vld [vmem:[#allocation3 + $0xca] sm:$0xff]
      %v2130 = vld [vmem:[#allocation3 + $0xd2] sm:$0xff]
      %v2131 = vld [vmem:[#allocation3 + $0xea] sm:$0xff]
      %v2132 = vld [vmem:[#allocation3 + $0xf2] sm:$0xff]
      %v2133 = vld [vmem:[#allocation3 + $0x10a] sm:$0xff]
      %v2134 = vld [vmem:[#allocation3 + $0x112] sm:$0xff]
      %v2135 = vld [vmem:[#allocation3 + $0x12a] sm:$0xff]
      %v2136 = vld [vmem:[#allocation3 + $0x132] sm:$0xff]
      %v2137 = vld [vmem:[#allocation3 + $0x14a] sm:$0xff]
      %v2138 = vld [vmem:[#allocation3 + $0x152] sm:$0xff]
      %v2139 = vld [vmem:[#allocation3 + $0x16a] sm:$0xff]
      %v2140 = vld [vmem:[#allocation3 + $0x172] sm:$0xff]
      %v2141 = vld [vmem:[#allocation3 + $0x18a] sm:$0xff]
      %v2142 = vld [vmem:[#allocation3 + $0x192] sm:$0xff]
      %v2143 = vld [vmem:[#allocation3 + $0x1aa] sm:$0xff]
      %v2144 = vld [vmem:[#allocation3 + $0x1b2] sm:$0xff]
      %v2145 = vld [vmem:[#allocation3 + $0x1ca] sm:$0xff]
      %v2146 = vld [vmem:[#allocation3 + $0x1d2] sm:$0xff]
      %v2147 = vld [vmem:[#allocation3 + $0x1ea] sm:$0xff]
      %v2148 = vld [vmem:[#allocation3 + $0x1f2] sm:$0xff]
      %v2149 = vld [vmem:[#allocation3 + $0x20a] sm:$0xff]
      %v2150 = vld [vmem:[#allocation3 + $0x212] sm:$0xff]
      %v2151 = vld [vmem:[#allocation3 + $0x22a] sm:$0xff]
      %v2152 = vld [vmem:[#allocation3 + $0x232] sm:$0xff]
      %v2153 = vld [vmem:[#allocation3 + $0x24a] sm:$0xff]
      %v2154 = vld [vmem:[#allocation3 + $0x252] sm:$0xff]
      %v2155 = vld [vmem:[#allocation3 + $0x26a] sm:$0xff]
      %v2156 = vld [vmem:[#allocation3 + $0x272] sm:$0xff]
      %2197 = vrot.lane.b32.xlu0 %v1997, 32
      %v2198 = vpop.permute.xlu0 %2197
      %2199 = vrot.lane.b32.xlu0 %v1998, 32
      %v2200 = vpop.permute.xlu0 %2199
      %2201 = vrot.lane.b32.xlu0 %v1999, 32
      %v2202 = vpop.permute.xlu0 %2201
      %2203 = vrot.lane.b32.xlu0 %v2000, 32
      %v2204 = vpop.permute.xlu0 %2203
      %2205 = vrot.lane.b32.xlu0 %v2001, 32
      %v2206 = vpop.permute.xlu0 %2205
      %2207 = vrot.lane.b32.xlu0 %v2002, 32
      %v2208 = vpop.permute.xlu0 %2207
      %2209 = vrot.lane.b32.xlu0 %v2003, 32
      %v2210 = vpop.permute.xlu0 %2209
      %2211 = vrot.lane.b32.xlu0 %v2004, 32
      %v2212 = vpop.permute.xlu0 %2211
      %2213 = vrot.lane.b32.xlu0 %v2005, 32
      %v2214 = vpop.permute.xlu0 %2213
      %2215 = vrot.lane.b32.xlu0 %v2006, 32
      %v2216 = vpop.permute.xlu0 %2215
      %2217 = vrot.lane.b32.xlu0 %v2007, 32
      %v2218 = vpop.permute.xlu0 %2217
      %2219 = vrot.lane.b32.xlu0 %v2008, 32
      %v2220 = vpop.permute.xlu0 %2219
      %2221 = vrot.lane.b32.xlu0 %v2009, 32
      %v2222 = vpop.permute.xlu0 %2221
      %2223 = vrot.lane.b32.xlu0 %v2010, 32
      %v2224 = vpop.permute.xlu0 %2223
      %2225 = vrot.lane.b32.xlu0 %v2011, 32
      %v2226 = vpop.permute.xlu0 %2225
      %2227 = vrot.lane.b32.xlu0 %v2012, 32
      %v2228 = vpop.permute.xlu0 %2227
      %2229 = vrot.lane.b32.xlu0 %v2013, 32
      %v2230 = vpop.permute.xlu0 %2229
      %2231 = vrot.lane.b32.xlu0 %v2014, 32
      %v2232 = vpop.permute.xlu0 %2231
      %2233 = vrot.lane.b32.xlu0 %v2015, 32
      %v2234 = vpop.permute.xlu0 %2233
      %2235 = vrot.lane.b32.xlu0 %v2016, 32
      %v2236 = vpop.permute.xlu0 %2235
      %2237 = vrot.lane.b32.xlu0 %v2017, 32
      %v2238 = vpop.permute.xlu0 %2237
      %2239 = vrot.lane.b32.xlu0 %v2018, 32
      %v2240 = vpop.permute.xlu0 %2239
      %2241 = vrot.lane.b32.xlu0 %v2019, 32
      %v2242 = vpop.permute.xlu0 %2241
      %2243 = vrot.lane.b32.xlu0 %v2020, 32
      %v2244 = vpop.permute.xlu0 %2243
      %2245 = vrot.lane.b32.xlu0 %v2021, 32
      %v2246 = vpop.permute.xlu0 %2245
      %2247 = vrot.lane.b32.xlu0 %v2022, 32
      %v2248 = vpop.permute.xlu0 %2247
      %2249 = vrot.lane.b32.xlu0 %v2023, 32
      %v2250 = vpop.permute.xlu0 %2249
      %2251 = vrot.lane.b32.xlu0 %v2024, 32
      %v2252 = vpop.permute.xlu0 %2251
      %2253 = vrot.lane.b32.xlu0 %v2025, 32
      %v2254 = vpop.permute.xlu0 %2253
      %2255 = vrot.lane.b32.xlu0 %v2026, 32
      %v2256 = vpop.permute.xlu0 %2255
      %2257 = vrot.lane.b32.xlu0 %v2027, 32
      %v2258 = vpop.permute.xlu0 %2257
      %2259 = vrot.lane.b32.xlu0 %v2028, 32
      %v2260 = vpop.permute.xlu0 %2259
      %2261 = vrot.lane.b32.xlu0 %v2029, 32
      %v2262 = vpop.permute.xlu0 %2261
      %2263 = vrot.lane.b32.xlu0 %v2030, 32
      %v2264 = vpop.permute.xlu0 %2263
      %2265 = vrot.lane.b32.xlu0 %v2031, 32
      %v2266 = vpop.permute.xlu0 %2265
      %2267 = vrot.lane.b32.xlu0 %v2032, 32
      %v2268 = vpop.permute.xlu0 %2267
      %2269 = vrot.lane.b32.xlu0 %v2033, 32
      %v2270 = vpop.permute.xlu0 %2269
      %2271 = vrot.lane.b32.xlu0 %v2034, 32
      %v2272 = vpop.permute.xlu0 %2271
      %2273 = vrot.lane.b32.xlu0 %v2035, 32
      %v2274 = vpop.permute.xlu0 %2273
      %2275 = vrot.lane.b32.xlu0 %v2036, 32
      %v2276 = vpop.permute.xlu0 %2275
      %2357 = vrot.lane.b32.xlu0 %v2037, 64
      %v2358 = vpop.permute.xlu0 %2357
      %2359 = vrot.lane.b32.xlu0 %v2038, 64
      %v2360 = vpop.permute.xlu0 %2359
      %2361 = vrot.lane.b32.xlu0 %v2039, 64
      %v2362 = vpop.permute.xlu0 %2361
      %2363 = vrot.lane.b32.xlu0 %v2040, 64
      %v2364 = vpop.permute.xlu0 %2363
      %2365 = vrot.lane.b32.xlu0 %v2041, 64
      %v2366 = vpop.permute.xlu0 %2365
      %2367 = vrot.lane.b32.xlu0 %v2042, 64
      %v2368 = vpop.permute.xlu0 %2367
      %2369 = vrot.lane.b32.xlu0 %v2043, 64
      %v2370 = vpop.permute.xlu0 %2369
      %2371 = vrot.lane.b32.xlu0 %v2044, 64
      %v2372 = vpop.permute.xlu0 %2371
      %2373 = vrot.lane.b32.xlu0 %v2045, 64
      %v2374 = vpop.permute.xlu0 %2373
      %2375 = vrot.lane.b32.xlu0 %v2046, 64
      %v2376 = vpop.permute.xlu0 %2375
      %2377 = vrot.lane.b32.xlu0 %v2047, 64
      %v2378 = vpop.permute.xlu0 %2377
      %2379 = vrot.lane.b32.xlu0 %v2048, 64
      %v2380 = vpop.permute.xlu0 %2379
      %2381 = vrot.lane.b32.xlu0 %v2049, 64
      %v2382 = vpop.permute.xlu0 %2381
      %2383 = vrot.lane.b32.xlu0 %v2050, 64
      %v2384 = vpop.permute.xlu0 %2383
      %2385 = vrot.lane.b32.xlu0 %v2051, 64
      %v2386 = vpop.permute.xlu0 %2385
      %2387 = vrot.lane.b32.xlu0 %v2052, 64
      %v2388 = vpop.permute.xlu0 %2387
      %2389 = vrot.lane.b32.xlu0 %v2053, 64
      %v2390 = vpop.permute.xlu0 %2389
      %2391 = vrot.lane.b32.xlu0 %v2054, 64
      %v2392 = vpop.permute.xlu0 %2391
      %2393 = vrot.lane.b32.xlu0 %v2055, 64
      %v2394 = vpop.permute.xlu0 %2393
      %2395 = vrot.lane.b32.xlu0 %v2056, 64
      %v2396 = vpop.permute.xlu0 %2395
      %2397 = vrot.lane.b32.xlu0 %v2057, 64
      %v2398 = vpop.permute.xlu0 %2397
      %2399 = vrot.lane.b32.xlu0 %v2058, 64
      %v2400 = vpop.permute.xlu0 %2399
      %2401 = vrot.lane.b32.xlu0 %v2059, 64
      %v2402 = vpop.permute.xlu0 %2401
      %2403 = vrot.lane.b32.xlu0 %v2060, 64
      %v2404 = vpop.permute.xlu0 %2403
      %2405 = vrot.lane.b32.xlu0 %v2061, 64
      %v2406 = vpop.permute.xlu0 %2405
      %2407 = vrot.lane.b32.xlu0 %v2062, 64
      %v2408 = vpop.permute.xlu0 %2407
      %2409 = vrot.lane.b32.xlu0 %v2063, 64
      %v2410 = vpop.permute.xlu0 %2409
      %2411 = vrot.lane.b32.xlu0 %v2064, 64
      %v2412 = vpop.permute.xlu0 %2411
      %2413 = vrot.lane.b32.xlu0 %v2065, 64
      %v2414 = vpop.permute.xlu0 %2413
      %2415 = vrot.lane.b32.xlu0 %v2066, 64
      %v2416 = vpop.permute.xlu0 %2415
      %2417 = vrot.lane.b32.xlu0 %v2067, 64
      %v2418 = vpop.permute.xlu0 %2417
      %2419 = vrot.lane.b32.xlu0 %v2068, 64
      %v2420 = vpop.permute.xlu0 %2419
      %2421 = vrot.lane.b32.xlu0 %v2069, 64
      %v2422 = vpop.permute.xlu0 %2421
      %2423 = vrot.lane.b32.xlu0 %v2070, 64
      %v2424 = vpop.permute.xlu0 %2423
      %2425 = vrot.lane.b32.xlu0 %v2071, 64
      %v2426 = vpop.permute.xlu0 %2425
      %2427 = vrot.lane.b32.xlu0 %v2072, 64
      %v2428 = vpop.permute.xlu0 %2427
      %2429 = vrot.lane.b32.xlu0 %v2073, 64
      %v2430 = vpop.permute.xlu0 %2429
      %2431 = vrot.lane.b32.xlu0 %v2074, 64
      %v2432 = vpop.permute.xlu0 %2431
      %2433 = vrot.lane.b32.xlu0 %v2075, 64
      %v2434 = vpop.permute.xlu0 %2433
      %2435 = vrot.lane.b32.xlu0 %v2076, 64
      %v2436 = vpop.permute.xlu0 %2435
      %2517 = vrot.lane.b32.xlu0 %v2077, 96
      %v2518 = vpop.permute.xlu0 %2517
      %2519 = vrot.lane.b32.xlu0 %v2078, 96
      %v2520 = vpop.permute.xlu0 %2519
      %2521 = vrot.lane.b32.xlu0 %v2079, 96
      %v2522 = vpop.permute.xlu0 %2521
      %2523 = vrot.lane.b32.xlu0 %v2080, 96
      %v2524 = vpop.permute.xlu0 %2523
      %2525 = vrot.lane.b32.xlu0 %v2081, 96
      %v2526 = vpop.permute.xlu0 %2525
      %2527 = vrot.lane.b32.xlu0 %v2082, 96
      %v2528 = vpop.permute.xlu0 %2527
      %2529 = vrot.lane.b32.xlu0 %v2083, 96
      %v2530 = vpop.permute.xlu0 %2529
      %2531 = vrot.lane.b32.xlu0 %v2084, 96
      %v2532 = vpop.permute.xlu0 %2531
      %2533 = vrot.lane.b32.xlu0 %v2085, 96
      %v2534 = vpop.permute.xlu0 %2533
      %2535 = vrot.lane.b32.xlu0 %v2086, 96
      %v2536 = vpop.permute.xlu0 %2535
      %2537 = vrot.lane.b32.xlu0 %v2087, 96
      %v2538 = vpop.permute.xlu0 %2537
      %2539 = vrot.lane.b32.xlu0 %v2088, 96
      %v2540 = vpop.permute.xlu0 %2539
      %2541 = vrot.lane.b32.xlu0 %v2089, 96
      %v2542 = vpop.permute.xlu0 %2541
      %2543 = vrot.lane.b32.xlu0 %v2090, 96
      %v2544 = vpop.permute.xlu0 %2543
      %2545 = vrot.lane.b32.xlu0 %v2091, 96
      %v2546 = vpop.permute.xlu0 %2545
      %2547 = vrot.lane.b32.xlu0 %v2092, 96
      %v2548 = vpop.permute.xlu0 %2547
      %2549 = vrot.lane.b32.xlu0 %v2093, 96
      %v2550 = vpop.permute.xlu0 %2549
      %2551 = vrot.lane.b32.xlu0 %v2094, 96
      %v2552 = vpop.permute.xlu0 %2551
      %2553 = vrot.lane.b32.xlu0 %v2095, 96
      %v2554 = vpop.permute.xlu0 %2553
      %2555 = vrot.lane.b32.xlu0 %v2096, 96
      %v2556 = vpop.permute.xlu0 %2555
      %2557 = vrot.lane.b32.xlu0 %v2097, 96
      %v2558 = vpop.permute.xlu0 %2557
      %2559 = vrot.lane.b32.xlu0 %v2098, 96
      %v2560 = vpop.permute.xlu0 %2559
      %2561 = vrot.lane.b32.xlu0 %v2099, 96
      %v2562 = vpop.permute.xlu0 %2561
      %2563 = vrot.lane.b32.xlu0 %v2100, 96
      %v2564 = vpop.permute.xlu0 %2563
      %2565 = vrot.lane.b32.xlu0 %v2101, 96
      %v2566 = vpop.permute.xlu0 %2565
      %2567 = vrot.lane.b32.xlu0 %v2102, 96
      %v2568 = vpop.permute.xlu0 %2567
      %2569 = vrot.lane.b32.xlu0 %v2103, 96
      %v2570 = vpop.permute.xlu0 %2569
      %2571 = vrot.lane.b32.xlu0 %v2104, 96
      %v2572 = vpop.permute.xlu0 %2571
      %2573 = vrot.lane.b32.xlu0 %v2105, 96
      %v2574 = vpop.permute.xlu0 %2573
      %2575 = vrot.lane.b32.xlu0 %v2106, 96
      %v2576 = vpop.permute.xlu0 %2575
      %2577 = vrot.lane.b32.xlu0 %v2107, 96
      %v2578 = vpop.permute.xlu0 %2577
      %2579 = vrot.lane.b32.xlu0 %v2108, 96
      %v2580 = vpop.permute.xlu0 %2579
      %2581 = vrot.lane.b32.xlu0 %v2109, 96
      %v2582 = vpop.permute.xlu0 %2581
      %2583 = vrot.lane.b32.xlu0 %v2110, 96
      %v2584 = vpop.permute.xlu0 %2583
      %2585 = vrot.lane.b32.xlu0 %v2111, 96
      %v2586 = vpop.permute.xlu0 %2585
      %2587 = vrot.lane.b32.xlu0 %v2112, 96
      %v2588 = vpop.permute.xlu0 %2587
      %2589 = vrot.lane.b32.xlu0 %v2113, 96
      %v2590 = vpop.permute.xlu0 %2589
      %2591 = vrot.lane.b32.xlu0 %v2114, 96
      %v2592 = vpop.permute.xlu0 %2591
      %2593 = vrot.lane.b32.xlu0 %v2115, 96
      %v2594 = vpop.permute.xlu0 %2593
      %2595 = vrot.lane.b32.xlu0 %v2116, 96
      %v2596 = vpop.permute.xlu0 %2595
      %v2637 = vsel %vm280, %v1957, %v2198
      %v2638 = vsel %vm280, %v1958, %v2200
      %v2639 = vsel %vm280, %v1959, %v2202
      %v2640 = vsel %vm280, %v1960, %v2204
      %v2641 = vsel %vm280, %v1961, %v2206
      %v2642 = vsel %vm280, %v1962, %v2208
      %v2643 = vsel %vm280, %v1963, %v2210
      %v2644 = vsel %vm280, %v1964, %v2212
      %v2645 = vsel %vm280, %v1965, %v2214
      %v2646 = vsel %vm280, %v1966, %v2216
      %v2647 = vsel %vm280, %v1967, %v2218
      %v2648 = vsel %vm280, %v1968, %v2220
      %v2649 = vsel %vm280, %v1969, %v2222
      %v2650 = vsel %vm280, %v1970, %v2224
      %v2651 = vsel %vm280, %v1971, %v2226
      %v2652 = vsel %vm280, %v1972, %v2228
      %v2653 = vsel %vm280, %v1973, %v2230
      %v2654 = vsel %vm280, %v1974, %v2232
      %v2655 = vsel %vm280, %v1975, %v2234
      %v2656 = vsel %vm280, %v1976, %v2236
      %v2657 = vsel %vm280, %v1977, %v2238
      %v2658 = vsel %vm280, %v1978, %v2240
      %v2659 = vsel %vm280, %v1979, %v2242
      %v2660 = vsel %vm280, %v1980, %v2244
      %v2661 = vsel %vm280, %v1981, %v2246
      %v2662 = vsel %vm280, %v1982, %v2248
      %v2663 = vsel %vm280, %v1983, %v2250
      %v2664 = vsel %vm280, %v1984, %v2252
      %v2665 = vsel %vm280, %v1985, %v2254
      %v2666 = vsel %vm280, %v1986, %v2256
      %v2667 = vsel %vm280, %v1987, %v2258
      %v2668 = vsel %vm280, %v1988, %v2260
      %v2669 = vsel %vm280, %v1989, %v2262
      %v2670 = vsel %vm280, %v1990, %v2264
      %v2671 = vsel %vm280, %v1991, %v2266
      %v2672 = vsel %vm280, %v1992, %v2268
      %v2673 = vsel %vm280, %v1993, %v2270
      %v2674 = vsel %vm280, %v1994, %v2272
      %v2675 = vsel %vm280, %v1995, %v2274
      %v2676 = vsel %vm280, %v1996, %v2276
      %vm2677 = vcmask 523264
      %v2678 = vsel %vm2677, %v2637, %v2358
      %v2679 = vsel %vm2677, %v2638, %v2360
      %v2680 = vsel %vm2677, %v2639, %v2362
      %v2681 = vsel %vm2677, %v2640, %v2364
      %v2682 = vsel %vm2677, %v2641, %v2366
      %v2683 = vsel %vm2677, %v2642, %v2368
      %v2684 = vsel %vm2677, %v2643, %v2370
      %v2685 = vsel %vm2677, %v2644, %v2372
      %v2686 = vsel %vm2677, %v2645, %v2374
      %v2687 = vsel %vm2677, %v2646, %v2376
      %v2688 = vsel %vm2677, %v2647, %v2378
      %v2689 = vsel %vm2677, %v2648, %v2380
      %v2690 = vsel %vm2677, %v2649, %v2382
      %v2691 = vsel %vm2677, %v2650, %v2384
      %v2692 = vsel %vm2677, %v2651, %v2386
      %v2693 = vsel %vm2677, %v2652, %v2388
      %v2694 = vsel %vm2677, %v2653, %v2390
      %v2695 = vsel %vm2677, %v2654, %v2392
      %v2696 = vsel %vm2677, %v2655, %v2394
      %v2697 = vsel %vm2677, %v2656, %v2396
      %v2698 = vsel %vm2677, %v2657, %v2398
      %v2699 = vsel %vm2677, %v2658, %v2400
      %v2700 = vsel %vm2677, %v2659, %v2402
      %v2701 = vsel %vm2677, %v2660, %v2404
      %v2702 = vsel %vm2677, %v2661, %v2406
      %v2703 = vsel %vm2677, %v2662, %v2408
      %v2704 = vsel %vm2677, %v2663, %v2410
      %v2705 = vsel %vm2677, %v2664, %v2412
      %v2706 = vsel %vm2677, %v2665, %v2414
      %v2707 = vsel %vm2677, %v2666, %v2416
      %v2708 = vsel %vm2677, %v2667, %v2418
      %v2709 = vsel %vm2677, %v2668, %v2420
      %v2710 = vsel %vm2677, %v2669, %v2422
      %v2711 = vsel %vm2677, %v2670, %v2424
      %v2712 = vsel %vm2677, %v2671, %v2426
      %v2713 = vsel %vm2677, %v2672, %v2428
      %v2714 = vsel %vm2677, %v2673, %v2430
      %v2715 = vsel %vm2677, %v2674, %v2432
      %v2716 = vsel %vm2677, %v2675, %v2434
      %v2717 = vsel %vm2677, %v2676, %v2436
      %vm2718 = vcmask 785408
      %v2719 = vsel %vm2718, %v2678, %v2518
      %v2720 = vsel %vm2718, %v2679, %v2520
      %v2721 = vsel %vm2718, %v2680, %v2522
      %v2722 = vsel %vm2718, %v2681, %v2524
      %v2723 = vsel %vm2718, %v2682, %v2526
      %v2724 = vsel %vm2718, %v2683, %v2528
      %v2725 = vsel %vm2718, %v2684, %v2530
      %v2726 = vsel %vm2718, %v2685, %v2532
      %v2727 = vsel %vm2718, %v2686, %v2534
      %v2728 = vsel %vm2718, %v2687, %v2536
      %v2729 = vsel %vm2718, %v2688, %v2538
      %v2730 = vsel %vm2718, %v2689, %v2540
      %v2731 = vsel %vm2718, %v2690, %v2542
      %v2732 = vsel %vm2718, %v2691, %v2544
      %v2733 = vsel %vm2718, %v2692, %v2546
      %v2734 = vsel %vm2718, %v2693, %v2548
      %v2735 = vsel %vm2718, %v2694, %v2550
      %v2736 = vsel %vm2718, %v2695, %v2552
      %v2737 = vsel %vm2718, %v2696, %v2554
      %v2738 = vsel %vm2718, %v2697, %v2556
      %v2739 = vsel %vm2718, %v2698, %v2558
      %v2740 = vsel %vm2718, %v2699, %v2560
      %v2741 = vsel %vm2718, %v2700, %v2562
      %v2742 = vsel %vm2718, %v2701, %v2564
      %v2743 = vsel %vm2718, %v2702, %v2566
      %v2744 = vsel %vm2718, %v2703, %v2568
      %v2745 = vsel %vm2718, %v2704, %v2570
      %v2746 = vsel %vm2718, %v2705, %v2572
      %v2747 = vsel %vm2718, %v2706, %v2574
      %v2748 = vsel %vm2718, %v2707, %v2576
      %v2749 = vsel %vm2718, %v2708, %v2578
      %v2750 = vsel %vm2718, %v2709, %v2580
      %v2751 = vsel %vm2718, %v2710, %v2582
      %v2752 = vsel %vm2718, %v2711, %v2584
      %v2753 = vsel %vm2718, %v2712, %v2586
      %v2754 = vsel %vm2718, %v2713, %v2588
      %v2755 = vsel %vm2718, %v2714, %v2590
      %v2756 = vsel %vm2718, %v2715, %v2592
      %v2757 = vsel %vm2718, %v2716, %v2594
      %v2758 = vsel %vm2718, %v2717, %v2596
      %2823 = vrot.lane.b32.xlu0 %v2721, 32
      %v2824 = vpop.permute.xlu0 %2823
      %2825 = vrot.lane.b32.xlu0 %v2119, 32
      %v2826 = vpop.permute.xlu0 %2825
      %2827 = vrot.lane.b32.xlu0 %v2722, 32
      %v2828 = vpop.permute.xlu0 %2827
      %2829 = vrot.lane.b32.xlu0 %v2120, 32
      %v2830 = vpop.permute.xlu0 %2829
      %2831 = vrot.lane.b32.xlu0 %v2723, 32
      %v2832 = vpop.permute.xlu0 %2831
      %2833 = vrot.lane.b32.xlu0 %v2121, 32
      %v2834 = vpop.permute.xlu0 %2833
      %2835 = vrot.lane.b32.xlu0 %v2724, 32
      %v2836 = vpop.permute.xlu0 %2835
      %2837 = vrot.lane.b32.xlu0 %v2122, 32
      %v2838 = vpop.permute.xlu0 %2837
      %2839 = vrot.lane.b32.xlu0 %v2725, 32
      %v2840 = vpop.permute.xlu0 %2839
      %2841 = vrot.lane.b32.xlu0 %v2123, 32
      %v2842 = vpop.permute.xlu0 %2841
      %2843 = vrot.lane.b32.xlu0 %v2726, 32
      %v2844 = vpop.permute.xlu0 %2843
      %2845 = vrot.lane.b32.xlu0 %v2124, 32
      %v2846 = vpop.permute.xlu0 %2845
      %2847 = vrot.lane.b32.xlu0 %v2727, 32
      %v2848 = vpop.permute.xlu0 %2847
      %2849 = vrot.lane.b32.xlu0 %v2125, 32
      %v2850 = vpop.permute.xlu0 %2849
      %2851 = vrot.lane.b32.xlu0 %v2728, 32
      %v2852 = vpop.permute.xlu0 %2851
      %2853 = vrot.lane.b32.xlu0 %v2126, 32
      %v2854 = vpop.permute.xlu0 %2853
      %2855 = vrot.lane.b32.xlu0 %v2729, 32
      %v2856 = vpop.permute.xlu0 %2855
      %2857 = vrot.lane.b32.xlu0 %v2127, 32
      %v2858 = vpop.permute.xlu0 %2857
      %2859 = vrot.lane.b32.xlu0 %v2730, 32
      %v2860 = vpop.permute.xlu0 %2859
      %2861 = vrot.lane.b32.xlu0 %v2128, 32
      %v2862 = vpop.permute.xlu0 %2861
      %2863 = vrot.lane.b32.xlu0 %v2731, 32
      %v2864 = vpop.permute.xlu0 %2863
      %2865 = vrot.lane.b32.xlu0 %v2129, 32
      %v2866 = vpop.permute.xlu0 %2865
      %2867 = vrot.lane.b32.xlu0 %v2732, 32
      %v2868 = vpop.permute.xlu0 %2867
      %2869 = vrot.lane.b32.xlu0 %v2130, 32
      %v2870 = vpop.permute.xlu0 %2869
      %2871 = vrot.lane.b32.xlu0 %v2733, 32
      %v2872 = vpop.permute.xlu0 %2871
      %2873 = vrot.lane.b32.xlu0 %v2131, 32
      %v2874 = vpop.permute.xlu0 %2873
      %2875 = vrot.lane.b32.xlu0 %v2734, 32
      %v2876 = vpop.permute.xlu0 %2875
      %2877 = vrot.lane.b32.xlu0 %v2132, 32
      %v2878 = vpop.permute.xlu0 %2877
      %2879 = vrot.lane.b32.xlu0 %v2735, 32
      %v2880 = vpop.permute.xlu0 %2879
      %2881 = vrot.lane.b32.xlu0 %v2133, 32
      %v2882 = vpop.permute.xlu0 %2881
      %2883 = vrot.lane.b32.xlu0 %v2736, 32
      %v2884 = vpop.permute.xlu0 %2883
      %2885 = vrot.lane.b32.xlu0 %v2134, 32
      %v2886 = vpop.permute.xlu0 %2885
      %2887 = vrot.lane.b32.xlu0 %v2737, 32
      %v2888 = vpop.permute.xlu0 %2887
      %2889 = vrot.lane.b32.xlu0 %v2135, 32
      %v2890 = vpop.permute.xlu0 %2889
      %2891 = vrot.lane.b32.xlu0 %v2738, 32
      %v2892 = vpop.permute.xlu0 %2891
      %2893 = vrot.lane.b32.xlu0 %v2136, 32
      %v2894 = vpop.permute.xlu0 %2893
      %2895 = vrot.lane.b32.xlu0 %v2739, 32
      %v2896 = vpop.permute.xlu0 %2895
      %2897 = vrot.lane.b32.xlu0 %v2137, 32
      %v2898 = vpop.permute.xlu0 %2897
      %2899 = vrot.lane.b32.xlu0 %v2740, 32
      %v2900 = vpop.permute.xlu0 %2899
      %2901 = vrot.lane.b32.xlu0 %v2138, 32
      %v2902 = vpop.permute.xlu0 %2901
      %2903 = vrot.lane.b32.xlu0 %v2741, 32
      %v2904 = vpop.permute.xlu0 %2903
      %2905 = vrot.lane.b32.xlu0 %v2139, 32
      %v2906 = vpop.permute.xlu0 %2905
      %2907 = vrot.lane.b32.xlu0 %v2742, 32
      %v2908 = vpop.permute.xlu0 %2907
      %2909 = vrot.lane.b32.xlu0 %v2140, 32
      %v2910 = vpop.permute.xlu0 %2909
      %2911 = vrot.lane.b32.xlu0 %v2743, 32
      %v2912 = vpop.permute.xlu0 %2911
      %2913 = vrot.lane.b32.xlu0 %v2141, 32
      %v2914 = vpop.permute.xlu0 %2913
      %2915 = vrot.lane.b32.xlu0 %v2744, 32
      %v2916 = vpop.permute.xlu0 %2915
      %2917 = vrot.lane.b32.xlu0 %v2142, 32
      %v2918 = vpop.permute.xlu0 %2917
      %2919 = vrot.lane.b32.xlu0 %v2745, 32
      %v2920 = vpop.permute.xlu0 %2919
      %2921 = vrot.lane.b32.xlu0 %v2143, 32
      %v2922 = vpop.permute.xlu0 %2921
      %2923 = vrot.lane.b32.xlu0 %v2746, 32
      %v2924 = vpop.permute.xlu0 %2923
      %2925 = vrot.lane.b32.xlu0 %v2144, 32
      %v2926 = vpop.permute.xlu0 %2925
      %2927 = vrot.lane.b32.xlu0 %v2747, 32
      %v2928 = vpop.permute.xlu0 %2927
      %2929 = vrot.lane.b32.xlu0 %v2145, 32
      %v2930 = vpop.permute.xlu0 %2929
      %2931 = vrot.lane.b32.xlu0 %v2748, 32
      %v2932 = vpop.permute.xlu0 %2931
      %2933 = vrot.lane.b32.xlu0 %v2146, 32
      %v2934 = vpop.permute.xlu0 %2933
      %2935 = vrot.lane.b32.xlu0 %v2749, 32
      %v2936 = vpop.permute.xlu0 %2935
      %2937 = vrot.lane.b32.xlu0 %v2147, 32
      %v2938 = vpop.permute.xlu0 %2937
      %2939 = vrot.lane.b32.xlu0 %v2750, 32
      %v2940 = vpop.permute.xlu0 %2939
      %2941 = vrot.lane.b32.xlu0 %v2148, 32
      %v2942 = vpop.permute.xlu0 %2941
      %2943 = vrot.lane.b32.xlu0 %v2751, 32
      %v2944 = vpop.permute.xlu0 %2943
      %2945 = vrot.lane.b32.xlu0 %v2149, 32
      %v2946 = vpop.permute.xlu0 %2945
      %2947 = vrot.lane.b32.xlu0 %v2752, 32
      %v2948 = vpop.permute.xlu0 %2947
      %2949 = vrot.lane.b32.xlu0 %v2150, 32
      %v2950 = vpop.permute.xlu0 %2949
      %v2951 = vsel %vm280, %v2824, %v2826
      %v2952 = vsel %vm280, %v2828, %v2830
      %v2953 = vsel %vm280, %v2832, %v2834
      %v2954 = vsel %vm280, %v2836, %v2838
      %v2955 = vsel %vm280, %v2840, %v2842
      %v2956 = vsel %vm280, %v2844, %v2846
      %v2957 = vsel %vm280, %v2848, %v2850
      %v2958 = vsel %vm280, %v2852, %v2854
      %v2959 = vsel %vm280, %v2856, %v2858
      %v2960 = vsel %vm280, %v2860, %v2862
      %v2961 = vsel %vm280, %v2864, %v2866
      %v2962 = vsel %vm280, %v2868, %v2870
      %v2963 = vsel %vm280, %v2872, %v2874
      %v2964 = vsel %vm280, %v2876, %v2878
      %v2965 = vsel %vm280, %v2880, %v2882
      %v2966 = vsel %vm280, %v2884, %v2886
      %v2967 = vsel %vm280, %v2888, %v2890
      %v2968 = vsel %vm280, %v2892, %v2894
      %v2969 = vsel %vm280, %v2896, %v2898
      %v2970 = vsel %vm280, %v2900, %v2902
      %v2971 = vsel %vm280, %v2904, %v2906
      %v2972 = vsel %vm280, %v2908, %v2910
      %v2973 = vsel %vm280, %v2912, %v2914
      %v2974 = vsel %vm280, %v2916, %v2918
      %v2975 = vsel %vm280, %v2920, %v2922
      %v2976 = vsel %vm280, %v2924, %v2926
      %v2977 = vsel %vm280, %v2928, %v2930
      %v2978 = vsel %vm280, %v2932, %v2934
      %v2979 = vsel %vm280, %v2936, %v2938
      %v2980 = vsel %vm280, %v2940, %v2942
      %v2981 = vsel %vm280, %v2944, %v2946
      %v2982 = vsel %vm280, %v2948, %v2950
      %3051 = vrot.lane.b32.xlu0 %v2723, 64
      %v3052 = vpop.permute.xlu0 %3051
      %3053 = vrot.lane.b32.xlu0 %v2121, 64
      %v3054 = vpop.permute.xlu0 %3053
      %3055 = vrot.lane.b32.xlu0 %v2724, 64
      %v3056 = vpop.permute.xlu0 %3055
      %3057 = vrot.lane.b32.xlu0 %v2122, 64
      %v3058 = vpop.permute.xlu0 %3057
      %3059 = vrot.lane.b32.xlu0 %v2725, 64
      %v3060 = vpop.permute.xlu0 %3059
      %3061 = vrot.lane.b32.xlu0 %v2123, 64
      %v3062 = vpop.permute.xlu0 %3061
      %3063 = vrot.lane.b32.xlu0 %v2726, 64
      %v3064 = vpop.permute.xlu0 %3063
      %3065 = vrot.lane.b32.xlu0 %v2124, 64
      %v3066 = vpop.permute.xlu0 %3065
      %3067 = vrot.lane.b32.xlu0 %v2727, 64
      %v3068 = vpop.permute.xlu0 %3067
      %3069 = vrot.lane.b32.xlu0 %v2125, 64
      %v3070 = vpop.permute.xlu0 %3069
      %3071 = vrot.lane.b32.xlu0 %v2728, 64
      %v3072 = vpop.permute.xlu0 %3071
      %3073 = vrot.lane.b32.xlu0 %v2126, 64
      %v3074 = vpop.permute.xlu0 %3073
      %3075 = vrot.lane.b32.xlu0 %v2729, 64
      %v3076 = vpop.permute.xlu0 %3075
      %3077 = vrot.lane.b32.xlu0 %v2127, 64
      %v3078 = vpop.permute.xlu0 %3077
      %3079 = vrot.lane.b32.xlu0 %v2730, 64
      %v3080 = vpop.permute.xlu0 %3079
      %3081 = vrot.lane.b32.xlu0 %v2128, 64
      %v3082 = vpop.permute.xlu0 %3081
      %3083 = vrot.lane.b32.xlu0 %v2731, 64
      %v3084 = vpop.permute.xlu0 %3083
      %3085 = vrot.lane.b32.xlu0 %v2129, 64
      %v3086 = vpop.permute.xlu0 %3085
      %3087 = vrot.lane.b32.xlu0 %v2732, 64
      %v3088 = vpop.permute.xlu0 %3087
      %3089 = vrot.lane.b32.xlu0 %v2130, 64
      %v3090 = vpop.permute.xlu0 %3089
      %3091 = vrot.lane.b32.xlu0 %v2733, 64
      %v3092 = vpop.permute.xlu0 %3091
      %3093 = vrot.lane.b32.xlu0 %v2131, 64
      %v3094 = vpop.permute.xlu0 %3093
      %3095 = vrot.lane.b32.xlu0 %v2734, 64
      %v3096 = vpop.permute.xlu0 %3095
      %3097 = vrot.lane.b32.xlu0 %v2132, 64
      %v3098 = vpop.permute.xlu0 %3097
      %3099 = vrot.lane.b32.xlu0 %v2735, 64
      %v3100 = vpop.permute.xlu0 %3099
      %3101 = vrot.lane.b32.xlu0 %v2133, 64
      %v3102 = vpop.permute.xlu0 %3101
      %3103 = vrot.lane.b32.xlu0 %v2736, 64
      %v3104 = vpop.permute.xlu0 %3103
      %3105 = vrot.lane.b32.xlu0 %v2134, 64
      %v3106 = vpop.permute.xlu0 %3105
      %3107 = vrot.lane.b32.xlu0 %v2737, 64
      %v3108 = vpop.permute.xlu0 %3107
      %3109 = vrot.lane.b32.xlu0 %v2135, 64
      %v3110 = vpop.permute.xlu0 %3109
      %3111 = vrot.lane.b32.xlu0 %v2738, 64
      %v3112 = vpop.permute.xlu0 %3111
      %3113 = vrot.lane.b32.xlu0 %v2136, 64
      %v3114 = vpop.permute.xlu0 %3113
      %3115 = vrot.lane.b32.xlu0 %v2739, 64
      %v3116 = vpop.permute.xlu0 %3115
      %3117 = vrot.lane.b32.xlu0 %v2137, 64
      %v3118 = vpop.permute.xlu0 %3117
      %3119 = vrot.lane.b32.xlu0 %v2740, 64
      %v3120 = vpop.permute.xlu0 %3119
      %3121 = vrot.lane.b32.xlu0 %v2138, 64
      %v3122 = vpop.permute.xlu0 %3121
      %3123 = vrot.lane.b32.xlu0 %v2741, 64
      %v3124 = vpop.permute.xlu0 %3123
      %3125 = vrot.lane.b32.xlu0 %v2139, 64
      %v3126 = vpop.permute.xlu0 %3125
      %3127 = vrot.lane.b32.xlu0 %v2742, 64
      %v3128 = vpop.permute.xlu0 %3127
      %3129 = vrot.lane.b32.xlu0 %v2140, 64
      %v3130 = vpop.permute.xlu0 %3129
      %3131 = vrot.lane.b32.xlu0 %v2743, 64
      %v3132 = vpop.permute.xlu0 %3131
      %3133 = vrot.lane.b32.xlu0 %v2141, 64
      %v3134 = vpop.permute.xlu0 %3133
      %3135 = vrot.lane.b32.xlu0 %v2744, 64
      %v3136 = vpop.permute.xlu0 %3135
      %3137 = vrot.lane.b32.xlu0 %v2142, 64
      %v3138 = vpop.permute.xlu0 %3137
      %3139 = vrot.lane.b32.xlu0 %v2745, 64
      %v3140 = vpop.permute.xlu0 %3139
      %3141 = vrot.lane.b32.xlu0 %v2143, 64
      %v3142 = vpop.permute.xlu0 %3141
      %3143 = vrot.lane.b32.xlu0 %v2746, 64
      %v3144 = vpop.permute.xlu0 %3143
      %3145 = vrot.lane.b32.xlu0 %v2144, 64
      %v3146 = vpop.permute.xlu0 %3145
      %3147 = vrot.lane.b32.xlu0 %v2747, 64
      %v3148 = vpop.permute.xlu0 %3147
      %3149 = vrot.lane.b32.xlu0 %v2145, 64
      %v3150 = vpop.permute.xlu0 %3149
      %3151 = vrot.lane.b32.xlu0 %v2748, 64
      %v3152 = vpop.permute.xlu0 %3151
      %3153 = vrot.lane.b32.xlu0 %v2146, 64
      %v3154 = vpop.permute.xlu0 %3153
      %3155 = vrot.lane.b32.xlu0 %v2749, 64
      %v3156 = vpop.permute.xlu0 %3155
      %3157 = vrot.lane.b32.xlu0 %v2147, 64
      %v3158 = vpop.permute.xlu0 %3157
      %3159 = vrot.lane.b32.xlu0 %v2750, 64
      %v3160 = vpop.permute.xlu0 %3159
      %3161 = vrot.lane.b32.xlu0 %v2148, 64
      %v3162 = vpop.permute.xlu0 %3161
      %3163 = vrot.lane.b32.xlu0 %v2751, 64
      %v3164 = vpop.permute.xlu0 %3163
      %3165 = vrot.lane.b32.xlu0 %v2149, 64
      %v3166 = vpop.permute.xlu0 %3165
      %3167 = vrot.lane.b32.xlu0 %v2752, 64
      %v3168 = vpop.permute.xlu0 %3167
      %3169 = vrot.lane.b32.xlu0 %v2150, 64
      %v3170 = vpop.permute.xlu0 %3169
      %3171 = vrot.lane.b32.xlu0 %v2753, 64
      %v3172 = vpop.permute.xlu0 %3171
      %3173 = vrot.lane.b32.xlu0 %v2151, 64
      %v3174 = vpop.permute.xlu0 %3173
      %3175 = vrot.lane.b32.xlu0 %v2754, 64
      %v3176 = vpop.permute.xlu0 %3175
      %3177 = vrot.lane.b32.xlu0 %v2152, 64
      %v3178 = vpop.permute.xlu0 %3177
      %v3179 = vsel %vm2677, %v3052, %v3054
      %v3180 = vsel %vm2677, %v3056, %v3058
      %v3181 = vsel %vm2677, %v3060, %v3062
      %v3182 = vsel %vm2677, %v3064, %v3066
      %v3183 = vsel %vm2677, %v3068, %v3070
      %v3184 = vsel %vm2677, %v3072, %v3074
      %v3185 = vsel %vm2677, %v3076, %v3078
      %v3186 = vsel %vm2677, %v3080, %v3082
      %v3187 = vsel %vm2677, %v3084, %v3086
      %v3188 = vsel %vm2677, %v3088, %v3090
      %v3189 = vsel %vm2677, %v3092, %v3094
      %v3190 = vsel %vm2677, %v3096, %v3098
      %v3191 = vsel %vm2677, %v3100, %v3102
      %v3192 = vsel %vm2677, %v3104, %v3106
      %v3193 = vsel %vm2677, %v3108, %v3110
      %v3194 = vsel %vm2677, %v3112, %v3114
      %v3195 = vsel %vm2677, %v3116, %v3118
      %v3196 = vsel %vm2677, %v3120, %v3122
      %v3197 = vsel %vm2677, %v3124, %v3126
      %v3198 = vsel %vm2677, %v3128, %v3130
      %v3199 = vsel %vm2677, %v3132, %v3134
      %v3200 = vsel %vm2677, %v3136, %v3138
      %v3201 = vsel %vm2677, %v3140, %v3142
      %v3202 = vsel %vm2677, %v3144, %v3146
      %v3203 = vsel %vm2677, %v3148, %v3150
      %v3204 = vsel %vm2677, %v3152, %v3154
      %v3205 = vsel %vm2677, %v3156, %v3158
      %v3206 = vsel %vm2677, %v3160, %v3162
      %v3207 = vsel %vm2677, %v3164, %v3166
      %v3208 = vsel %vm2677, %v3168, %v3170
      %v3209 = vsel %vm2677, %v3172, %v3174
      %v3210 = vsel %vm2677, %v3176, %v3178
      %3279 = vrot.lane.b32.xlu0 %v2725, 96
      %v3280 = vpop.permute.xlu0 %3279
      %3281 = vrot.lane.b32.xlu0 %v2123, 96
      %v3282 = vpop.permute.xlu0 %3281
      %3283 = vrot.lane.b32.xlu0 %v2726, 96
      %v3284 = vpop.permute.xlu0 %3283
      %3285 = vrot.lane.b32.xlu0 %v2124, 96
      %v3286 = vpop.permute.xlu0 %3285
      %3287 = vrot.lane.b32.xlu0 %v2727, 96
      %v3288 = vpop.permute.xlu0 %3287
      %3289 = vrot.lane.b32.xlu0 %v2125, 96
      %v3290 = vpop.permute.xlu0 %3289
      %3291 = vrot.lane.b32.xlu0 %v2728, 96
      %v3292 = vpop.permute.xlu0 %3291
      %3293 = vrot.lane.b32.xlu0 %v2126, 96
      %v3294 = vpop.permute.xlu0 %3293
      %3295 = vrot.lane.b32.xlu0 %v2729, 96
      %v3296 = vpop.permute.xlu0 %3295
      %3297 = vrot.lane.b32.xlu0 %v2127, 96
      %v3298 = vpop.permute.xlu0 %3297
      %3299 = vrot.lane.b32.xlu0 %v2730, 96
      %v3300 = vpop.permute.xlu0 %3299
      %3301 = vrot.lane.b32.xlu0 %v2128, 96
      %v3302 = vpop.permute.xlu0 %3301
      %3303 = vrot.lane.b32.xlu0 %v2731, 96
      %v3304 = vpop.permute.xlu0 %3303
      %3305 = vrot.lane.b32.xlu0 %v2129, 96
      %v3306 = vpop.permute.xlu0 %3305
      %3307 = vrot.lane.b32.xlu0 %v2732, 96
      %v3308 = vpop.permute.xlu0 %3307
      %3309 = vrot.lane.b32.xlu0 %v2130, 96
      %v3310 = vpop.permute.xlu0 %3309
      %3311 = vrot.lane.b32.xlu0 %v2733, 96
      %v3312 = vpop.permute.xlu0 %3311
      %3313 = vrot.lane.b32.xlu0 %v2131, 96
      %v3314 = vpop.permute.xlu0 %3313
      %3315 = vrot.lane.b32.xlu0 %v2734, 96
      %v3316 = vpop.permute.xlu0 %3315
      %3317 = vrot.lane.b32.xlu0 %v2132, 96
      %v3318 = vpop.permute.xlu0 %3317
      %3319 = vrot.lane.b32.xlu0 %v2735, 96
      %v3320 = vpop.permute.xlu0 %3319
      %3321 = vrot.lane.b32.xlu0 %v2133, 96
      %v3322 = vpop.permute.xlu0 %3321
      %3323 = vrot.lane.b32.xlu0 %v2736, 96
      %v3324 = vpop.permute.xlu0 %3323
      %3325 = vrot.lane.b32.xlu0 %v2134, 96
      %v3326 = vpop.permute.xlu0 %3325
      %3327 = vrot.lane.b32.xlu0 %v2737, 96
      %v3328 = vpop.permute.xlu0 %3327
      %3329 = vrot.lane.b32.xlu0 %v2135, 96
      %v3330 = vpop.permute.xlu0 %3329
      %3331 = vrot.lane.b32.xlu0 %v2738, 96
      %v3332 = vpop.permute.xlu0 %3331
      %3333 = vrot.lane.b32.xlu0 %v2136, 96
      %v3334 = vpop.permute.xlu0 %3333
      %3335 = vrot.lane.b32.xlu0 %v2739, 96
      %v3336 = vpop.permute.xlu0 %3335
      %3337 = vrot.lane.b32.xlu0 %v2137, 96
      %v3338 = vpop.permute.xlu0 %3337
      %3339 = vrot.lane.b32.xlu0 %v2740, 96
      %v3340 = vpop.permute.xlu0 %3339
      %3341 = vrot.lane.b32.xlu0 %v2138, 96
      %v3342 = vpop.permute.xlu0 %3341
      %3343 = vrot.lane.b32.xlu0 %v2741, 96
      %v3344 = vpop.permute.xlu0 %3343
      %3345 = vrot.lane.b32.xlu0 %v2139, 96
      %v3346 = vpop.permute.xlu0 %3345
      %3347 = vrot.lane.b32.xlu0 %v2742, 96
      %v3348 = vpop.permute.xlu0 %3347
      %3349 = vrot.lane.b32.xlu0 %v2140, 96
      %v3350 = vpop.permute.xlu0 %3349
      %3351 = vrot.lane.b32.xlu0 %v2743, 96
      %v3352 = vpop.permute.xlu0 %3351
      %3353 = vrot.lane.b32.xlu0 %v2141, 96
      %v3354 = vpop.permute.xlu0 %3353
      %3355 = vrot.lane.b32.xlu0 %v2744, 96
      %v3356 = vpop.permute.xlu0 %3355
      %3357 = vrot.lane.b32.xlu0 %v2142, 96
      %v3358 = vpop.permute.xlu0 %3357
      %3359 = vrot.lane.b32.xlu0 %v2745, 96
      %v3360 = vpop.permute.xlu0 %3359
      %3361 = vrot.lane.b32.xlu0 %v2143, 96
      %v3362 = vpop.permute.xlu0 %3361
      %3363 = vrot.lane.b32.xlu0 %v2746, 96
      %v3364 = vpop.permute.xlu0 %3363
      %3365 = vrot.lane.b32.xlu0 %v2144, 96
      %v3366 = vpop.permute.xlu0 %3365
      %3367 = vrot.lane.b32.xlu0 %v2747, 96
      %v3368 = vpop.permute.xlu0 %3367
      %3369 = vrot.lane.b32.xlu0 %v2145, 96
      %v3370 = vpop.permute.xlu0 %3369
      %3371 = vrot.lane.b32.xlu0 %v2748, 96
      %v3372 = vpop.permute.xlu0 %3371
      %3373 = vrot.lane.b32.xlu0 %v2146, 96
      %v3374 = vpop.permute.xlu0 %3373
      %3375 = vrot.lane.b32.xlu0 %v2749, 96
      %v3376 = vpop.permute.xlu0 %3375
      %3377 = vrot.lane.b32.xlu0 %v2147, 96
      %v3378 = vpop.permute.xlu0 %3377
      %3379 = vrot.lane.b32.xlu0 %v2750, 96
      %v3380 = vpop.permute.xlu0 %3379
      %3381 = vrot.lane.b32.xlu0 %v2148, 96
      %v3382 = vpop.permute.xlu0 %3381
      %3383 = vrot.lane.b32.xlu0 %v2751, 96
      %v3384 = vpop.permute.xlu0 %3383
      %3385 = vrot.lane.b32.xlu0 %v2149, 96
      %v3386 = vpop.permute.xlu0 %3385
      %3387 = vrot.lane.b32.xlu0 %v2752, 96
      %v3388 = vpop.permute.xlu0 %3387
      %3389 = vrot.lane.b32.xlu0 %v2150, 96
      %v3390 = vpop.permute.xlu0 %3389
      %3391 = vrot.lane.b32.xlu0 %v2753, 96
      %v3392 = vpop.permute.xlu0 %3391
      %3393 = vrot.lane.b32.xlu0 %v2151, 96
      %v3394 = vpop.permute.xlu0 %3393
      %3395 = vrot.lane.b32.xlu0 %v2754, 96
      %v3396 = vpop.permute.xlu0 %3395
      %3397 = vrot.lane.b32.xlu0 %v2152, 96
      %v3398 = vpop.permute.xlu0 %3397
      %3399 = vrot.lane.b32.xlu0 %v2755, 96
      %v3400 = vpop.permute.xlu0 %3399
      %3401 = vrot.lane.b32.xlu0 %v2153, 96
      %v3402 = vpop.permute.xlu0 %3401
      %3403 = vrot.lane.b32.xlu0 %v2756, 96
      %v3404 = vpop.permute.xlu0 %3403
      %3405 = vrot.lane.b32.xlu0 %v2154, 96
      %v3406 = vpop.permute.xlu0 %3405
      %v3407 = vsel %vm2718, %v3280, %v3282
      %v3408 = vsel %vm2718, %v3284, %v3286
      %v3409 = vsel %vm2718, %v3288, %v3290
      %v3410 = vsel %vm2718, %v3292, %v3294
      %v3411 = vsel %vm2718, %v3296, %v3298
      %v3412 = vsel %vm2718, %v3300, %v3302
      %v3413 = vsel %vm2718, %v3304, %v3306
      %v3414 = vsel %vm2718, %v3308, %v3310
      %v3415 = vsel %vm2718, %v3312, %v3314
      %v3416 = vsel %vm2718, %v3316, %v3318
      %v3417 = vsel %vm2718, %v3320, %v3322
      %v3418 = vsel %vm2718, %v3324, %v3326
      %v3419 = vsel %vm2718, %v3328, %v3330
      %v3420 = vsel %vm2718, %v3332, %v3334
      %v3421 = vsel %vm2718, %v3336, %v3338
      %v3422 = vsel %vm2718, %v3340, %v3342
      %v3423 = vsel %vm2718, %v3344, %v3346
      %v3424 = vsel %vm2718, %v3348, %v3350
      %v3425 = vsel %vm2718, %v3352, %v3354
      %v3426 = vsel %vm2718, %v3356, %v3358
      %v3427 = vsel %vm2718, %v3360, %v3362
      %v3428 = vsel %vm2718, %v3364, %v3366
      %v3429 = vsel %vm2718, %v3368, %v3370
      %v3430 = vsel %vm2718, %v3372, %v3374
      %v3431 = vsel %vm2718, %v3376, %v3378
      %v3432 = vsel %vm2718, %v3380, %v3382
      %v3433 = vsel %vm2718, %v3384, %v3386
      %v3434 = vsel %vm2718, %v3388, %v3390
      %v3435 = vsel %vm2718, %v3392, %v3394
      %v3436 = vsel %vm2718, %v3396, %v3398
      %v3437 = vsel %vm2718, %v3400, %v3402
      %v3438 = vsel %vm2718, %v3404, %v3406
      %v3503 = vsel %vm280, %v2117, %v2824
      %v3504 = vsel %vm280, %v2118, %v2828
      %v3505 = vsel %vm280, %v2119, %v2832
      %v3506 = vsel %vm280, %v2120, %v2836
      %v3507 = vsel %vm280, %v2121, %v2840
      %v3508 = vsel %vm280, %v2122, %v2844
      %v3509 = vsel %vm280, %v2123, %v2848
      %v3510 = vsel %vm280, %v2124, %v2852
      %v3511 = vsel %vm280, %v2125, %v2856
      %v3512 = vsel %vm280, %v2126, %v2860
      %v3513 = vsel %vm280, %v2127, %v2864
      %v3514 = vsel %vm280, %v2128, %v2868
      %v3515 = vsel %vm280, %v2129, %v2872
      %v3516 = vsel %vm280, %v2130, %v2876
      %v3517 = vsel %vm280, %v2131, %v2880
      %v3518 = vsel %vm280, %v2132, %v2884
      %v3519 = vsel %vm280, %v2133, %v2888
      %v3520 = vsel %vm280, %v2134, %v2892
      %v3521 = vsel %vm280, %v2135, %v2896
      %v3522 = vsel %vm280, %v2136, %v2900
      %v3523 = vsel %vm280, %v2137, %v2904
      %v3524 = vsel %vm280, %v2138, %v2908
      %v3525 = vsel %vm280, %v2139, %v2912
      %v3526 = vsel %vm280, %v2140, %v2916
      %v3527 = vsel %vm280, %v2141, %v2920
      %v3528 = vsel %vm280, %v2142, %v2924
      %v3529 = vsel %vm280, %v2143, %v2928
      %v3530 = vsel %vm280, %v2144, %v2932
      %v3531 = vsel %vm280, %v2145, %v2936
      %v3532 = vsel %vm280, %v2146, %v2940
      %v3533 = vsel %vm280, %v2147, %v2944
      %v3534 = vsel %vm280, %v2148, %v2948
      %v3535 = vsel %vm2677, %v2951, %v3052
      %v3536 = vsel %vm2677, %v2952, %v3056
      %v3537 = vsel %vm2677, %v2953, %v3060
      %v3538 = vsel %vm2677, %v2954, %v3064
      %v3539 = vsel %vm2677, %v2955, %v3068
      %v3540 = vsel %vm2677, %v2956, %v3072
      %v3541 = vsel %vm2677, %v2957, %v3076
      %v3542 = vsel %vm2677, %v2958, %v3080
      %v3543 = vsel %vm2677, %v2959, %v3084
      %v3544 = vsel %vm2677, %v2960, %v3088
      %v3545 = vsel %vm2677, %v2961, %v3092
      %v3546 = vsel %vm2677, %v2962, %v3096
      %v3547 = vsel %vm2677, %v2963, %v3100
      %v3548 = vsel %vm2677, %v2964, %v3104
      %v3549 = vsel %vm2677, %v2965, %v3108
      %v3550 = vsel %vm2677, %v2966, %v3112
      %v3551 = vsel %vm2677, %v2967, %v3116
      %v3552 = vsel %vm2677, %v2968, %v3120
      %v3553 = vsel %vm2677, %v2969, %v3124
      %v3554 = vsel %vm2677, %v2970, %v3128
      %v3555 = vsel %vm2677, %v2971, %v3132
      %v3556 = vsel %vm2677, %v2972, %v3136
      %v3557 = vsel %vm2677, %v2973, %v3140
      %v3558 = vsel %vm2677, %v2974, %v3144
      %v3559 = vsel %vm2677, %v2975, %v3148
      %v3560 = vsel %vm2677, %v2976, %v3152
      %v3561 = vsel %vm2677, %v2977, %v3156
      %v3562 = vsel %vm2677, %v2978, %v3160
      %v3563 = vsel %vm2677, %v2979, %v3164
      %v3564 = vsel %vm2677, %v2980, %v3168
      %v3565 = vsel %vm2677, %v2981, %v3172
      %v3566 = vsel %vm2677, %v2982, %v3176
      %v3567 = vsel %vm2718, %v3179, %v3280
      %v3568 = vsel %vm2718, %v3180, %v3284
      %v3569 = vsel %vm2718, %v3181, %v3288
      %v3570 = vsel %vm2718, %v3182, %v3292
      %v3571 = vsel %vm2718, %v3183, %v3296
      %v3572 = vsel %vm2718, %v3184, %v3300
      %v3573 = vsel %vm2718, %v3185, %v3304
      %v3574 = vsel %vm2718, %v3186, %v3308
      %v3575 = vsel %vm2718, %v3187, %v3312
      %v3576 = vsel %vm2718, %v3188, %v3316
      %v3577 = vsel %vm2718, %v3189, %v3320
      %v3578 = vsel %vm2718, %v3190, %v3324
      %v3579 = vsel %vm2718, %v3191, %v3328
      %v3580 = vsel %vm2718, %v3192, %v3332
      %v3581 = vsel %vm2718, %v3193, %v3336
      %v3582 = vsel %vm2718, %v3194, %v3340
      %v3583 = vsel %vm2718, %v3195, %v3344
      %v3584 = vsel %vm2718, %v3196, %v3348
      %v3585 = vsel %vm2718, %v3197, %v3352
      %v3586 = vsel %vm2718, %v3198, %v3356
      %v3587 = vsel %vm2718, %v3199, %v3360
      %v3588 = vsel %vm2718, %v3200, %v3364
      %v3589 = vsel %vm2718, %v3201, %v3368
      %v3590 = vsel %vm2718, %v3202, %v3372
      %v3591 = vsel %vm2718, %v3203, %v3376
      %v3592 = vsel %vm2718, %v3204, %v3380
      %v3593 = vsel %vm2718, %v3205, %v3384
      %v3594 = vsel %vm2718, %v3206, %v3388
      %v3595 = vsel %vm2718, %v3207, %v3392
      %v3596 = vsel %vm2718, %v3208, %v3396
      %v3597 = vsel %vm2718, %v3209, %v3400
      %v3598 = vsel %vm2718, %v3210, %v3404
      %v3599 = vld [vmem:[%s3] sm:$0xff]
      %v3600 = vld [vmem:[%s3 + $0x8] sm:$0xff]
      %v3601 = vld [vmem:[%s3 + $0x10] sm:$0xff]
      %v3602 = vld [vmem:[%s3 + $0x18] sm:$0xff]
      %v3603 = vld [vmem:[%s3 + $0x20] sm:$0xff]
      %v3604 = vld [vmem:[%s3 + $0x28] sm:$0xff]
      %v3605 = vld [vmem:[%s3 + $0x30] sm:$0xff]
      %v3606 = vld [vmem:[%s3 + $0x38] sm:$0xff]
      %v3607 = vld [vmem:[%s3 + $0x40] sm:$0xff]
      %v3608 = vld [vmem:[%s3 + $0x48] sm:$0xff]
      %v3609 = vld [vmem:[%s3 + $0x50] sm:$0xff]
      %v3610 = vld [vmem:[%s3 + $0x58] sm:$0xff]
      %v3611 = vld [vmem:[%s3 + $0x60] sm:$0xff]
      %v3612 = vld [vmem:[%s3 + $0x68] sm:$0xff]
      %v3613 = vld [vmem:[%s3 + $0x70] sm:$0xff]
      %v3614 = vld [vmem:[%s3 + $0x78] sm:$0xff]
      %v3615 = vld [vmem:[%s3 + $0x80] sm:$0xff]
      %v3616 = vld [vmem:[%s3 + $0x88] sm:$0xff]
      %v3617 = vld [vmem:[%s3 + $0x90] sm:$0xff]
      %v3618 = vld [vmem:[%s3 + $0x98] sm:$0xff]
      %v3619 = vld [vmem:[%s3 + $0xa0] sm:$0xff]
      %v3620 = vld [vmem:[%s3 + $0xa8] sm:$0xff]
      %v3621 = vld [vmem:[%s3 + $0xb0] sm:$0xff]
      %v3622 = vld [vmem:[%s3 + $0xb8] sm:$0xff]
      %v3623 = vld [vmem:[%s3 + $0xc0] sm:$0xff]
      %v3624 = vld [vmem:[%s3 + $0xc8] sm:$0xff]
      %v3625 = vld [vmem:[%s3 + $0xd0] sm:$0xff]
      %v3626 = vld [vmem:[%s3 + $0xd8] sm:$0xff]
      %v3627 = vld [vmem:[%s3 + $0xe0] sm:$0xff]
      %v3628 = vld [vmem:[%s3 + $0xe8] sm:$0xff]
      %v3629 = vld [vmem:[%s3 + $0xf0] sm:$0xff]
      %v3630 = vld [vmem:[%s3 + $0xf8] sm:$0xff]
      %v3631 = vld [vmem:[%s3 + $0x100] sm:$0xff]
      %v3632 = vld [vmem:[%s3 + $0x108] sm:$0xff]
      %v3633 = vld [vmem:[%s3 + $0x110] sm:$0xff]
      %v3634 = vld [vmem:[%s3 + $0x118] sm:$0xff]
      %v3635 = vld [vmem:[%s3 + $0x120] sm:$0xff]
      %v3636 = vld [vmem:[%s3 + $0x128] sm:$0xff]
      %v3637 = vld [vmem:[%s3 + $0x130] sm:$0xff]
      %v3638 = vld [vmem:[%s3 + $0x138] sm:$0xff]
      %v3639 = vld [vmem:[%s3 + $0x140] sm:$0xff]
      %v3640 = vld [vmem:[%s3 + $0x148] sm:$0xff]
      %v3641 = vld [vmem:[%s3 + $0x150] sm:$0xff]
      %v3642 = vld [vmem:[%s3 + $0x158] sm:$0xff]
      %v3643 = vld [vmem:[%s3 + $0x160] sm:$0xff]
      %v3644 = vld [vmem:[%s3 + $0x168] sm:$0xff]
      %v3645 = vld [vmem:[%s3 + $0x170] sm:$0xff]
      %v3646 = vld [vmem:[%s3 + $0x178] sm:$0xff]
      %v3647 = vld [vmem:[%s3 + $0x180] sm:$0xff]
      %v3648 = vld [vmem:[%s3 + $0x188] sm:$0xff]
      %v3649 = vld [vmem:[%s3 + $0x190] sm:$0xff]
      %v3650 = vld [vmem:[%s3 + $0x198] sm:$0xff]
      %v3651 = vld [vmem:[%s3 + $0x1a0] sm:$0xff]
      %v3652 = vld [vmem:[%s3 + $0x1a8] sm:$0xff]
      %v3653 = vld [vmem:[%s3 + $0x1b0] sm:$0xff]
      %v3654 = vld [vmem:[%s3 + $0x1b8] sm:$0xff]
      %v3655 = vld [vmem:[%s3 + $0x1c0] sm:$0xff]
      %v3656 = vld [vmem:[%s3 + $0x1c8] sm:$0xff]
      %v3657 = vld [vmem:[%s3 + $0x1d0] sm:$0xff]
      %v3658 = vld [vmem:[%s3 + $0x1d8] sm:$0xff]
      %v3659 = vld [vmem:[%s3 + $0x1e0] sm:$0xff]
      %v3660 = vld [vmem:[%s3 + $0x1e8] sm:$0xff]
      %v3661 = vld [vmem:[%s3 + $0x1f0] sm:$0xff]
      %v3662 = vld [vmem:[%s3 + $0x1f8] sm:$0xff]
      %v3663 = vld [vmem:[%s3 + $0x200] sm:$0xff]
      %v3664 = vld [vmem:[%s3 + $0x208] sm:$0xff]
      %v3665 = vld [vmem:[%s3 + $0x210] sm:$0xff]
      %v3666 = vld [vmem:[%s3 + $0x218] sm:$0xff]
      %v3667 = vld [vmem:[%s3 + $0x220] sm:$0xff]
      %v3668 = vld [vmem:[%s3 + $0x228] sm:$0xff]
      %v3669 = vld [vmem:[%s3 + $0x230] sm:$0xff]
      %v3670 = vld [vmem:[%s3 + $0x238] sm:$0xff]
      %v3671 = vld [vmem:[%s3 + $0x240] sm:$0xff]
      %v3672 = vld [vmem:[%s3 + $0x248] sm:$0xff]
      %v3673 = vld [vmem:[%s3 + $0x250] sm:$0xff]
      %v3674 = vld [vmem:[%s3 + $0x258] sm:$0xff]
      %v3675 = vld [vmem:[%s3 + $0x260] sm:$0xff]
      %v3676 = vld [vmem:[%s3 + $0x268] sm:$0xff]
      %v3677 = vld [vmem:[%s3 + $0x270] sm:$0xff]
      %v3678 = vld [vmem:[%s3 + $0x278] sm:$0xff]
      %v3679 = vld [vmem:[%s3 + $0x280] sm:$0xff]
      %v3680 = vld [vmem:[%s3 + $0x288] sm:$0xff]
      %v3681 = vld [vmem:[%s3 + $0x290] sm:$0xff]
      %v3682 = vld [vmem:[%s3 + $0x298] sm:$0xff]
      %v3683 = vld [vmem:[%s3 + $0x2a0] sm:$0xff]
      %v3684 = vld [vmem:[%s3 + $0x2a8] sm:$0xff]
      %v3685 = vld [vmem:[%s3 + $0x2b0] sm:$0xff]
      %v3686 = vld [vmem:[%s3 + $0x2b8] sm:$0xff]
      %v3687 = vld [vmem:[%s3 + $0x2c0] sm:$0xff]
      %v3688 = vld [vmem:[%s3 + $0x2c8] sm:$0xff]
      %v3689 = vld [vmem:[%s3 + $0x2d0] sm:$0xff]
      %v3690 = vld [vmem:[%s3 + $0x2d8] sm:$0xff]
      %v3691 = vld [vmem:[%s3 + $0x2e0] sm:$0xff]
      %v3692 = vld [vmem:[%s3 + $0x2e8] sm:$0xff]
      %v3693 = vld [vmem:[%s3 + $0x2f0] sm:$0xff]
      %v3694 = vld [vmem:[%s3 + $0x2f8] sm:$0xff]
      %v3695 = vld [vmem:[%s3 + $0x300] sm:$0xff]
      %v3696 = vld [vmem:[%s3 + $0x308] sm:$0xff]
      %v3697 = vld [vmem:[%s3 + $0x310] sm:$0xff]
      %v3698 = vld [vmem:[%s3 + $0x318] sm:$0xff]
      %v3699 = vld [vmem:[%s4] sm:$0x1]
      %v3701 = vlaneseq
      %v3702 = vshrl.u32 %v3701, 7
      %v3703 = vsub.s32 0, %v3702
      %v3704 = vrot.slane %v3699, %v3703
      %v3706 = vsel %vm280, %v2125, 0
      %v3708 = vsel %vm280, %v2126, 0
      %v3710 = vsel %vm280, %v2127, 0
      %v3712 = vsel %vm280, %v2128, 0
      %v3714 = vsel %vm280, %v2129, 0
      %v3716 = vsel %vm280, %v2130, 0
      %v3718 = vsel %vm280, %v2131, 0
      %v3720 = vsel %vm280, %v2132, 0
      %v3722 = vsel %vm280, %v2133, 0
      %v3724 = vsel %vm280, %v2134, 0
      %v3726 = vsel %vm280, %v2135, 0
      %v3728 = vsel %vm280, %v2136, 0
      %v3730 = vsel %vm280, %v2137, 0
      %v3732 = vsel %vm280, %v2138, 0
      %v3734 = vsel %vm280, %v2139, 0
      %v3736 = vsel %vm280, %v2140, 0
      %v3738 = vsel %vm280, %v2141, 0
      %v3740 = vsel %vm280, %v2142, 0
      %v3742 = vsel %vm280, %v2143, 0
      %v3744 = vsel %vm280, %v2144, 0
      %v3746 = vsel %vm280, %v2145, 0
      %v3748 = vsel %vm280, %v2146, 0
      %v3750 = vsel %vm280, %v2147, 0
      %v3752 = vsel %vm280, %v2148, 0
      %v3754 = vsel %vm280, %v2149, 0
      %v3756 = vsel %vm280, %v2150, 0
      %v3758 = vsel %vm280, %v2151, 0
      %v3760 = vsel %vm280, %v2152, 0
      %v3762 = vsel %vm280, %v2153, 0
      %v3764 = vsel %vm280, %v2154, 0
      %v3767 = vsel %vm280, %v2155, 0
      %v3770 = vsel %vm280, %v2156, 0
      %3772 = vmatprep.subr.mxu0 0.0
      %3773 = vmatpush1.msra.mxu0 %v3599
      %3774 = vmatprep.subr.mxu0 0.0
      %3775 = vmatpush1.msra.mxu0 %v3600
      %3776 = vmatprep.subr.mxu0 0.0
      %3777 = vmatpush1.msra.mxu0 %v3601
      %3778 = vmatprep.subr.mxu0 0.0
      %3779 = vmatpush1.msra.mxu0 %v3602
      %3780 = vmatprep.subr.mxu0 0.0
      %3781 = vmatpush1.msra.mxu0 %v3603
      %3782 = vmatprep.subr.mxu0 0.0
      %3783 = vmatpush1.msra.mxu0 %v3604
      %3784 = vmatprep.subr.mxu0 0.0
      %3785 = vmatpush1.msra.mxu0 %v3605
      %3786 = vmatprep.subr.mxu0 0.0
      %3787 = vmatpush1.msra.mxu0 %v3606
      %3788 = vmatprep.subr.mxu0 0.0
      %3789 = vmatpush1.msra.mxu0 %v3607
      %3790 = vmatprep.subr.mxu0 0.0
      %3791 = vmatpush1.msra.mxu0 %v3608
      %3792 = vmatprep.subr.mxu0 0.0
      %3793 = vmatpush1.msra.mxu0 %v3609
      %3794 = vmatprep.subr.mxu0 0.0
      %3795 = vmatpush1.msra.mxu0 %v3610
      %3796 = vmatprep.subr.mxu0 0.0
      %3797 = vmatpush1.msra.mxu0 %v3611
      %3798 = vmatprep.subr.mxu0 0.0
      %3799 = vmatpush1.msra.mxu0 %v3612
      %3800 = vmatprep.subr.mxu0 0.0
      %3801 = vmatpush1.msra.mxu0 %v3613
      %3802 = vmatprep.subr.mxu0 0.0
      %3803 = vmatpush1.msra.mxu0 %v3614
      %3804 = vmatprep.subr.mxu0 0.0
      %3805 = vmatpush1.msra.mxu0 %v3615
      %3806 = vmatprep.subr.mxu0 0.0
      %3807 = vmatpush1.msra.mxu0 %v3616
      %3808 = vmatprep.subr.mxu0 0.0
      %3809 = vmatpush1.msra.mxu0 %v3617
      %3810 = vmatprep.subr.mxu0 0.0
      %3811 = vmatpush1.msra.mxu0 %v3618
      %3812 = vmatprep.subr.mxu0 0.0
      %3813 = vmatpush1.msra.mxu0 %v3619
      %3814 = vmatprep.subr.mxu0 0.0
      %3815 = vmatpush1.msra.mxu0 %v3620
      %3816 = vmatprep.subr.mxu0 0.0
      %3817 = vmatpush1.msra.mxu0 %v3621
      %3818 = vmatprep.subr.mxu0 0.0
      %3819 = vmatpush1.msra.mxu0 %v3622
      %3820 = vmatprep.subr.mxu0 0.0
      %3821 = vmatpush1.msra.mxu0 %v3623
      %3822 = vmatprep.subr.mxu0 0.0
      %3823 = vmatpush1.msra.mxu0 %v3624
      %3824 = vmatprep.subr.mxu0 0.0
      %3825 = vmatpush1.msra.mxu0 %v3625
      %3826 = vmatprep.subr.mxu0 0.0
      %3827 = vmatpush1.msra.mxu0 %v3626
      %3828 = vmatprep.subr.mxu0 0.0
      %3829 = vmatpush1.msra.mxu0 %v3627
      %3830 = vmatprep.subr.mxu0 0.0
      %3831 = vmatpush1.msra.mxu0 %v3628
      %3832 = vmatprep.subr.mxu0 0.0
      %3833 = vmatpush1.msra.mxu0 %v3629
      %3834 = vmatprep.subr.mxu0 0.0
      %3835 = vmatpush1.msra.mxu0 %v3630
      %3836 = vmatprep.mubr.f32.mxu0 %v3503
      %3837 = vmatmul.mubr.f32.gmra.mrb[0].mxu0 %v2719
      %v3838 = vpop.f32.mrb[0].mxu0
      %v3839 = vadd.f32 %v3704, %v3838
      %v3840 = vpop.f32.mrb[0].mxu0
      %3841 = vmatprep.mubr.f32.mxu0 %v3504
      %3842 = vmatmul.mubr.f32.gmra.mrb[0].mxu0 %v2720
      %v3843 = vpop.f32.mrb[0].mxu0
      %v3844 = vadd.f32 %v3704, %v3843
      %v3845 = vpop.f32.mrb[0].mxu0
      %3846 = vmatprep.mubr.f32.mxu0 %v3505
      %3847 = vmatmul.mubr.f32.gmra.mrb[0].mxu0 %v2721
      %v3848 = vpop.f32.mrb[0].mxu0
      %v3849 = vadd.f32 %v3704, %v3848
      %v3850 = vpop.f32.mrb[0].mxu0
      %3851 = vmatprep.mubr.f32.mxu0 %v3506
      %3852 = vmatmul.mubr.f32.gmra.mrb[0].mxu0 %v2722
      %v3853 = vpop.f32.mrb[0].mxu0
      %v3854 = vadd.f32 %v3704, %v3853
      %v3855 = vpop.f32.mrb[0].mxu0
      %3856 = vmatprep.mubr.f32.mxu0 %v3507
      %3857 = vmatmul.mubr.f32.gmra.mrb[0].mxu0 %v2723
      %v3858 = vpop.f32.mrb[0].mxu0
      %v3859 = vadd.f32 %v3704, %v3858
      %v3860 = vpop.f32.mrb[0].mxu0
      %3861 = vmatprep.mubr.f32.mxu0 %v3508
      %3862 = vmatmul.mubr.f32.gmra.mrb[0].mxu0 %v2724
      %v3863 = vpop.f32.mrb[0].mxu0
      %v3864 = vadd.f32 %v3704, %v3863
      %v3865 = vpop.f32.mrb[0].mxu0
      %3866 = vmatprep.mubr.f32.mxu0 %v3509
      %3867 = vmatmul.mubr.f32.gmra.mrb[0].mxu0 %v2725
      %v3868 = vpop.f32.mrb[0].mxu0
      %v3869 = vadd.f32 %v3704, %v3868
      %v3870 = vpop.f32.mrb[0].mxu0
      %3871 = vmatprep.mubr.f32.mxu0 %v3510
      %3872 = vmatmul.mubr.f32.gmra.mrb[0].mxu0 %v2726
      %v3873 = vpop.f32.mrb[0].mxu0
      %v3874 = vadd.f32 %v3704, %v3873
      %v3875 = vpop.f32.mrb[0].mxu0
      %3876 = vmatprep.mubr.f32.mxu0 %v3511
      %3877 = vmatmul.mubr.f32.gmra.mrb[0].mxu0 %v2727
      %v3878 = vpop.f32.mrb[0].mxu0
      %v3879 = vadd.f32 %v3704, %v3878
      %v3880 = vpop.f32.mrb[0].mxu0
      %3881 = vmatprep.mubr.f32.mxu0 %v3512
      %3882 = vmatmul.mubr.f32.gmra.mrb[0].mxu0 %v2728
      %v3883 = vpop.f32.mrb[0].mxu0
      %v3884 = vadd.f32 %v3704, %v3883
      %v3885 = vpop.f32.mrb[0].mxu0
      %3886 = vmatprep.mubr.f32.mxu0 %v3513
      %3887 = vmatmul.mubr.f32.gmra.mrb[0].mxu0 %v2729
      %v3888 = vpop.f32.mrb[0].mxu0
      %v3889 = vadd.f32 %v3704, %v3888
      %v3890 = vpop.f32.mrb[0].mxu0
      %3891 = vmatprep.mubr.f32.mxu0 %v3514
      %3892 = vmatmul.mubr.f32.gmra.mrb[0].mxu0 %v2730
      %v3893 = vpop.f32.mrb[0].mxu0
      %v3894 = vadd.f32 %v3704, %v3893
      %v3895 = vpop.f32.mrb[0].mxu0
      %3896 = vmatprep.mubr.f32.mxu0 %v3515
      %3897 = vmatmul.mubr.f32.gmra.mrb[0].mxu0 %v2731
      %v3898 = vpop.f32.mrb[0].mxu0
      %v3899 = vadd.f32 %v3704, %v3898
      %v3900 = vpop.f32.mrb[0].mxu0
      %3901 = vmatprep.mubr.f32.mxu0 %v3516
      %3902 = vmatmul.mubr.f32.gmra.mrb[0].mxu0 %v2732
      %v3903 = vpop.f32.mrb[0].mxu0
      %v3904 = vadd.f32 %v3704, %v3903
      %v3905 = vpop.f32.mrb[0].mxu0
      %3906 = vmatprep.mubr.f32.mxu0 %v3517
      %3907 = vmatmul.mubr.f32.gmra.mrb[0].mxu0 %v2733
      %v3908 = vpop.f32.mrb[0].mxu0
      %v3909 = vadd.f32 %v3704, %v3908
      %v3910 = vpop.f32.mrb[0].mxu0
      %3911 = vmatprep.mubr.f32.mxu0 %v3518
      %3912 = vmatmul.mubr.f32.gmra.mrb[0].mxu0 %v2734
      %v3913 = vpop.f32.mrb[0].mxu0
      %v3914 = vadd.f32 %v3704, %v3913
      %v3915 = vpop.f32.mrb[0].mxu0
      %3916 = vmatprep.mubr.f32.mxu0 %v3519
      %3917 = vmatmul.mubr.f32.gmra.mrb[0].mxu0 %v2735
      %v3918 = vpop.f32.mrb[0].mxu0
      %v3919 = vadd.f32 %v3704, %v3918
      %v3920 = vpop.f32.mrb[0].mxu0
      %3921 = vmatprep.mubr.f32.mxu0 %v3520
      %3922 = vmatmul.mubr.f32.gmra.mrb[0].mxu0 %v2736
      %v3923 = vpop.f32.mrb[0].mxu0
      %v3924 = vadd.f32 %v3704, %v3923
      %v3925 = vpop.f32.mrb[0].mxu0
      %3926 = vmatprep.mubr.f32.mxu0 %v3521
      %3927 = vmatmul.mubr.f32.gmra.mrb[0].mxu0 %v2737
      %v3928 = vpop.f32.mrb[0].mxu0
      %v3929 = vadd.f32 %v3704, %v3928
      %v3930 = vpop.f32.mrb[0].mxu0
      %3931 = vmatprep.mubr.f32.mxu0 %v3522
      %3932 = vmatmul.mubr.f32.gmra.mrb[0].mxu0 %v2738
      %v3933 = vpop.f32.mrb[0].mxu0
      %v3934 = vadd.f32 %v3704, %v3933
      %v3935 = vpop.f32.mrb[0].mxu0
      %3936 = vmatprep.mubr.f32.mxu0 %v3523
      %3937 = vmatmul.mubr.f32.gmra.mrb[0].mxu0 %v2739
      %v3938 = vpop.f32.mrb[0].mxu0
      %v3939 = vadd.f32 %v3704, %v3938
      %v3940 = vpop.f32.mrb[0].mxu0
      %3941 = vmatprep.mubr.f32.mxu0 %v3524
      %3942 = vmatmul.mubr.f32.gmra.mrb[0].mxu0 %v2740
      %v3943 = vpop.f32.mrb[0].mxu0
      %v3944 = vadd.f32 %v3704, %v3943
      %v3945 = vpop.f32.mrb[0].mxu0
      %3946 = vmatprep.mubr.f32.mxu0 %v3525
      %3947 = vmatmul.mubr.f32.gmra.mrb[0].mxu0 %v2741
      %v3948 = vpop.f32.mrb[0].mxu0
      %v3949 = vadd.f32 %v3704, %v3948
      %v3950 = vpop.f32.mrb[0].mxu0
      %3951 = vmatprep.mubr.f32.mxu0 %v3526
      %3952 = vmatmul.mubr.f32.gmra.mrb[0].mxu0 %v2742
      %v3953 = vpop.f32.mrb[0].mxu0
      %v3954 = vadd.f32 %v3704, %v3953
      %v3955 = vpop.f32.mrb[0].mxu0
      %3956 = vmatprep.mubr.f32.mxu0 %v3527
      %3957 = vmatmul.mubr.f32.gmra.mrb[0].mxu0 %v2743
      %v3958 = vpop.f32.mrb[0].mxu0
      %v3959 = vadd.f32 %v3704, %v3958
      %v3960 = vpop.f32.mrb[0].mxu0
      %3961 = vmatprep.mubr.f32.mxu0 %v3528
      %3962 = vmatmul.mubr.f32.gmra.mrb[0].mxu0 %v2744
      %v3963 = vpop.f32.mrb[0].mxu0
      %v3964 = vadd.f32 %v3704, %v3963
      %v3965 = vpop.f32.mrb[0].mxu0
      %3966 = vmatprep.mubr.f32.mxu0 %v3529
      %3967 = vmatmul.mubr.f32.gmra.mrb[0].mxu0 %v2745
      %v3968 = vpop.f32.mrb[0].mxu0
      %v3969 = vadd.f32 %v3704, %v3968
      %v3970 = vpop.f32.mrb[0].mxu0
      %3971 = vmatprep.mubr.f32.mxu0 %v3530
      %3972 = vmatmul.mubr.f32.gmra.mrb[0].mxu0 %v2746
      %v3973 = vpop.f32.mrb[0].mxu0
      %v3974 = vadd.f32 %v3704, %v3973
      %v3975 = vpop.f32.mrb[0].mxu0
      %3976 = vmatprep.mubr.f32.mxu0 %v3531
      %3977 = vmatmul.mubr.f32.gmra.mrb[0].mxu0 %v2747
      %v3978 = vpop.f32.mrb[0].mxu0
      %v3979 = vadd.f32 %v3704, %v3978
      %v3980 = vpop.f32.mrb[0].mxu0
      %3981 = vmatprep.mubr.f32.mxu0 %v3532
      %3982 = vmatmul.mubr.f32.gmra.mrb[0].mxu0 %v2748
      %v3983 = vpop.f32.mrb[0].mxu0
      %v3984 = vadd.f32 %v3704, %v3983
      %v3985 = vpop.f32.mrb[0].mxu0
      %3986 = vmatprep.mubr.f32.mxu0 %v3533
      %3987 = vmatmul.mubr.f32.gmra.mrb[0].mxu0 %v2749
      %v3988 = vpop.f32.mrb[0].mxu0
      %v3989 = vadd.f32 %v3704, %v3988
      %v3990 = vpop.f32.mrb[0].mxu0
      %3991 = vmatprep.mubr.f32.mxu0 %v3534
      %3992 = vmatmul.mubr.f32.gmra.mrb[0].mxu0 %v2750
      %v3993 = vpop.f32.mrb[0].mxu0
      %v3994 = vadd.f32 %v3704, %v3993
      %v3995 = vpop.f32.mrb[0].mxu0
      %3996 = vdwg.mxu0
      %3997 = vmatprep.subr.mxu0 0.0
      %3998 = vmatpush1.msra.mxu0 %v3631
      %3999 = vmatprep.subr.mxu0 0.0
      %4000 = vmatpush1.msra.mxu0 %v3632
      %4001 = vmatprep.subr.mxu0 0.0
      %4002 = vmatpush1.msra.mxu0 %v3633
      %4003 = vmatprep.subr.mxu0 0.0
      %4004 = vmatpush1.msra.mxu0 %v3634
      %4005 = vmatprep.subr.mxu0 0.0
      %4006 = vmatpush1.msra.mxu0 %v3635
      %4007 = vmatprep.subr.mxu0 0.0
      %4008 = vmatpush1.msra.mxu0 %v3636
      %4009 = vmatprep.subr.mxu0 0.0
      %4010 = vmatpush1.msra.mxu0 %v3637
      %4011 = vmatprep.subr.mxu0 0.0
      %4012 = vmatpush1.msra.mxu0 %v3638
      %4013 = vmatprep.subr.mxu0 0.0
      %4014 = vmatpush1.msra.mxu0 %v3639
      %4015 = vmatprep.subr.mxu0 0.0
      %4016 = vmatpush1.msra.mxu0 %v3640
      %4017 = vmatprep.subr.mxu0 0.0
      %4018 = vmatpush1.msra.mxu0 %v3641
      %4019 = vmatprep.subr.mxu0 0.0
      %4020 = vmatpush1.msra.mxu0 %v3642
      %4021 = vmatprep.subr.mxu0 0.0
      %4022 = vmatpush1.msra.mxu0 %v3643
      %4023 = vmatprep.subr.mxu0 0.0
      %4024 = vmatpush1.msra.mxu0 %v3644
      %4025 = vmatprep.subr.mxu0 0.0
      %4026 = vmatpush1.msra.mxu0 %v3645
      %4027 = vmatprep.subr.mxu0 0.0
      %4028 = vmatpush1.msra.mxu0 %v3646
      %4029 = vmatprep.subr.mxu0 0.0
      %4030 = vmatpush1.msra.mxu0 %v3647
      %4031 = vmatprep.subr.mxu0 0.0
      %4032 = vmatpush1.msra.mxu0 %v3648
      %4033 = vmatprep.subr.mxu0 0.0
      %4034 = vmatpush1.msra.mxu0 %v3649
      %4035 = vmatprep.subr.mxu0 0.0
      %4036 = vmatpush1.msra.mxu0 %v3650
      %4037 = vmatprep.subr.mxu0 0.0
      %4038 = vmatpush1.msra.mxu0 %v3651
      %4039 = vmatprep.subr.mxu0 0.0
      %4040 = vmatpush1.msra.mxu0 %v3652
      %4041 = vmatprep.subr.mxu0 0.0
      %4042 = vmatpush1.msra.mxu0 %v3653
      %4043 = vmatprep.subr.mxu0 0.0
      %4044 = vmatpush1.msra.mxu0 %v3654
      %4045 = vmatprep.subr.mxu0 0.0
      %4046 = vmatpush1.msra.mxu0 %v3655
      %4047 = vmatprep.subr.mxu0 0.0
      %4048 = vmatpush1.msra.mxu0 %v3656
      %4049 = vmatprep.subr.mxu0 0.0
      %4050 = vmatpush1.msra.mxu0 %v3657
      %4051 = vmatprep.subr.mxu0 0.0
      %4052 = vmatpush1.msra.mxu0 %v3658
      %4053 = vmatprep.subr.mxu0 0.0
      %4054 = vmatpush1.msra.mxu0 %v3659
      %4055 = vmatprep.subr.mxu0 0.0
      %4056 = vmatpush1.msra.mxu0 %v3660
      %4057 = vmatprep.subr.mxu0 0.0
      %4058 = vmatpush1.msra.mxu0 %v3661
      %4059 = vmatprep.subr.mxu0 0.0
      %4060 = vmatpush1.msra.mxu0 %v3662
      %4061 = vmatprep.mubr.f32.mxu0 %v3567
      %4062 = vmatmul.mubr.f32.gmra.mrb[0].mxu0 %v3535
      %v4063 = vpop.f32.mrb[0].mxu0
      %v4064 = vadd.f32 %v3839, %v4063
      %v4065 = vpop.f32.mrb[0].mxu0
      %4066 = vmatprep.mubr.f32.mxu0 %v3568
      %4067 = vmatmul.mubr.f32.gmra.mrb[0].mxu0 %v3536
      %v4068 = vpop.f32.mrb[0].mxu0
      %v4069 = vadd.f32 %v3844, %v4068
      %v4070 = vpop.f32.mrb[0].mxu0
      %4071 = vmatprep.mubr.f32.mxu0 %v3569
      %4072 = vmatmul.mubr.f32.gmra.mrb[0].mxu0 %v3537
      %v4073 = vpop.f32.mrb[0].mxu0
      %v4074 = vadd.f32 %v3849, %v4073
      %v4075 = vpop.f32.mrb[0].mxu0
      %4076 = vmatprep.mubr.f32.mxu0 %v3570
      %4077 = vmatmul.mubr.f32.gmra.mrb[0].mxu0 %v3538
      %v4078 = vpop.f32.mrb[0].mxu0
      %v4079 = vadd.f32 %v3854, %v4078
      %v4080 = vpop.f32.mrb[0].mxu0
      %4081 = vmatprep.mubr.f32.mxu0 %v3571
      %4082 = vmatmul.mubr.f32.gmra.mrb[0].mxu0 %v3539
      %v4083 = vpop.f32.mrb[0].mxu0
      %v4084 = vadd.f32 %v3859, %v4083
      %v4085 = vpop.f32.mrb[0].mxu0
      %4086 = vmatprep.mubr.f32.mxu0 %v3572
      %4087 = vmatmul.mubr.f32.gmra.mrb[0].mxu0 %v3540
      %v4088 = vpop.f32.mrb[0].mxu0
      %v4089 = vadd.f32 %v3864, %v4088
      %v4090 = vpop.f32.mrb[0].mxu0
      %4091 = vmatprep.mubr.f32.mxu0 %v3573
      %4092 = vmatmul.mubr.f32.gmra.mrb[0].mxu0 %v3541
      %v4093 = vpop.f32.mrb[0].mxu0
      %v4094 = vadd.f32 %v3869, %v4093
      %v4095 = vpop.f32.mrb[0].mxu0
      %4096 = vmatprep.mubr.f32.mxu0 %v3574
      %4097 = vmatmul.mubr.f32.gmra.mrb[0].mxu0 %v3542
      %v4098 = vpop.f32.mrb[0].mxu0
      %v4099 = vadd.f32 %v3874, %v4098
      %v4100 = vpop.f32.mrb[0].mxu0
      %4101 = vmatprep.mubr.f32.mxu0 %v3575
      %4102 = vmatmul.mubr.f32.gmra.mrb[0].mxu0 %v3543
      %v4103 = vpop.f32.mrb[0].mxu0
      %v4104 = vadd.f32 %v3879, %v4103
      %v4105 = vpop.f32.mrb[0].mxu0
      %4106 = vmatprep.mubr.f32.mxu0 %v3576
      %4107 = vmatmul.mubr.f32.gmra.mrb[0].mxu0 %v3544
      %v4108 = vpop.f32.mrb[0].mxu0
      %v4109 = vadd.f32 %v3884, %v4108
      %v4110 = vpop.f32.mrb[0].mxu0
      %4111 = vmatprep.mubr.f32.mxu0 %v3577
      %4112 = vmatmul.mubr.f32.gmra.mrb[0].mxu0 %v3545
      %v4113 = vpop.f32.mrb[0].mxu0
      %v4114 = vadd.f32 %v3889, %v4113
      %v4115 = vpop.f32.mrb[0].mxu0
      %4116 = vmatprep.mubr.f32.mxu0 %v3578
      %4117 = vmatmul.mubr.f32.gmra.mrb[0].mxu0 %v3546
      %v4118 = vpop.f32.mrb[0].mxu0
      %v4119 = vadd.f32 %v3894, %v4118
      %v4120 = vpop.f32.mrb[0].mxu0
      %4121 = vmatprep.mubr.f32.mxu0 %v3579
      %4122 = vmatmul.mubr.f32.gmra.mrb[0].mxu0 %v3547
      %v4123 = vpop.f32.mrb[0].mxu0
      %v4124 = vadd.f32 %v3899, %v4123
      %v4125 = vpop.f32.mrb[0].mxu0
      %4126 = vmatprep.mubr.f32.mxu0 %v3580
      %4127 = vmatmul.mubr.f32.gmra.mrb[0].mxu0 %v3548
      %v4128 = vpop.f32.mrb[0].mxu0
      %v4129 = vadd.f32 %v3904, %v4128
      %v4130 = vpop.f32.mrb[0].mxu0
      %4131 = vmatprep.mubr.f32.mxu0 %v3581
      %4132 = vmatmul.mubr.f32.gmra.mrb[0].mxu0 %v3549
      %v4133 = vpop.f32.mrb[0].mxu0
      %v4134 = vadd.f32 %v3909, %v4133
      %v4135 = vpop.f32.mrb[0].mxu0
      %4136 = vmatprep.mubr.f32.mxu0 %v3582
      %4137 = vmatmul.mubr.f32.gmra.mrb[0].mxu0 %v3550
      %v4138 = vpop.f32.mrb[0].mxu0
      %v4139 = vadd.f32 %v3914, %v4138
      %v4140 = vpop.f32.mrb[0].mxu0
      %4141 = vmatprep.mubr.f32.mxu0 %v3583
      %4142 = vmatmul.mubr.f32.gmra.mrb[0].mxu0 %v3551
      %v4143 = vpop.f32.mrb[0].mxu0
      %v4144 = vadd.f32 %v3919, %v4143
      %v4145 = vpop.f32.mrb[0].mxu0
      %4146 = vmatprep.mubr.f32.mxu0 %v3584
      %4147 = vmatmul.mubr.f32.gmra.mrb[0].mxu0 %v3552
      %v4148 = vpop.f32.mrb[0].mxu0
      %v4149 = vadd.f32 %v3924, %v4148
      %v4150 = vpop.f32.mrb[0].mxu0
      %4151 = vmatprep.mubr.f32.mxu0 %v3585
      %4152 = vmatmul.mubr.f32.gmra.mrb[0].mxu0 %v3553
      %v4153 = vpop.f32.mrb[0].mxu0
      %v4154 = vadd.f32 %v3929, %v4153
      %v4155 = vpop.f32.mrb[0].mxu0
      %4156 = vmatprep.mubr.f32.mxu0 %v3586
      %4157 = vmatmul.mubr.f32.gmra.mrb[0].mxu0 %v3554
      %v4158 = vpop.f32.mrb[0].mxu0
      %v4159 = vadd.f32 %v3934, %v4158
      %v4160 = vpop.f32.mrb[0].mxu0
      %4161 = vmatprep.mubr.f32.mxu0 %v3587
      %4162 = vmatmul.mubr.f32.gmra.mrb[0].mxu0 %v3555
      %v4163 = vpop.f32.mrb[0].mxu0
      %v4164 = vadd.f32 %v3939, %v4163
      %v4165 = vpop.f32.mrb[0].mxu0
      %4166 = vmatprep.mubr.f32.mxu0 %v3588
      %4167 = vmatmul.mubr.f32.gmra.mrb[0].mxu0 %v3556
      %v4168 = vpop.f32.mrb[0].mxu0
      %v4169 = vadd.f32 %v3944, %v4168
      %v4170 = vpop.f32.mrb[0].mxu0
      %4171 = vmatprep.mubr.f32.mxu0 %v3589
      %4172 = vmatmul.mubr.f32.gmra.mrb[0].mxu0 %v3557
      %v4173 = vpop.f32.mrb[0].mxu0
      %v4174 = vadd.f32 %v3949, %v4173
      %v4175 = vpop.f32.mrb[0].mxu0
      %4176 = vmatprep.mubr.f32.mxu0 %v3590
      %4177 = vmatmul.mubr.f32.gmra.mrb[0].mxu0 %v3558
      %v4178 = vpop.f32.mrb[0].mxu0
      %v4179 = vadd.f32 %v3954, %v4178
      %v4180 = vpop.f32.mrb[0].mxu0
      %4181 = vmatprep.mubr.f32.mxu0 %v3591
      %4182 = vmatmul.mubr.f32.gmra.mrb[0].mxu0 %v3559
      %v4183 = vpop.f32.mrb[0].mxu0
      %v4184 = vadd.f32 %v3959, %v4183
      %v4185 = vpop.f32.mrb[0].mxu0
      %4186 = vmatprep.mubr.f32.mxu0 %v3592
      %4187 = vmatmul.mubr.f32.gmra.mrb[0].mxu0 %v3560
      %v4188 = vpop.f32.mrb[0].mxu0
      %v4189 = vadd.f32 %v3964, %v4188
      %v4190 = vpop.f32.mrb[0].mxu0
      %4191 = vmatprep.mubr.f32.mxu0 %v3593
      %4192 = vmatmul.mubr.f32.gmra.mrb[0].mxu0 %v3561
      %v4193 = vpop.f32.mrb[0].mxu0
      %v4194 = vadd.f32 %v3969, %v4193
      %v4195 = vpop.f32.mrb[0].mxu0
      %4196 = vmatprep.mubr.f32.mxu0 %v3594
      %4197 = vmatmul.mubr.f32.gmra.mrb[0].mxu0 %v3562
      %v4198 = vpop.f32.mrb[0].mxu0
      %v4199 = vadd.f32 %v3974, %v4198
      %v4200 = vpop.f32.mrb[0].mxu0
      %4201 = vmatprep.mubr.f32.mxu0 %v3595
      %4202 = vmatmul.mubr.f32.gmra.mrb[0].mxu0 %v3563
      %v4203 = vpop.f32.mrb[0].mxu0
      %v4204 = vadd.f32 %v3979, %v4203
      %v4205 = vpop.f32.mrb[0].mxu0
      %4206 = vmatprep.mubr.f32.mxu0 %v3596
      %4207 = vmatmul.mubr.f32.gmra.mrb[0].mxu0 %v3564
      %v4208 = vpop.f32.mrb[0].mxu0
      %v4209 = vadd.f32 %v3984, %v4208
      %v4210 = vpop.f32.mrb[0].mxu0
      %4211 = vmatprep.mubr.f32.mxu0 %v3597
      %4212 = vmatmul.mubr.f32.gmra.mrb[0].mxu0 %v3565
      %v4213 = vpop.f32.mrb[0].mxu0
      %v4214 = vadd.f32 %v3989, %v4213
      %v4215 = vpop.f32.mrb[0].mxu0
      %4216 = vmatprep.mubr.f32.mxu0 %v3598
      %4217 = vmatmul.mubr.f32.gmra.mrb[0].mxu0 %v3566
      %v4218 = vpop.f32.mrb[0].mxu0
      %v4219 = vadd.f32 %v3994, %v4218
      %v4220 = vpop.f32.mrb[0].mxu0
      %4221 = vdwg.mxu0
      %4222 = vmatprep.subr.mxu0 0.0
      %4223 = vmatpush1.msra.mxu0 %v3663
      %4224 = vmatprep.subr.mxu0 0.0
      %4225 = vmatpush1.msra.mxu0 %v3664
      %4226 = vmatprep.subr.mxu0 0.0
      %4227 = vmatpush1.msra.mxu0 %v3665
      %4228 = vmatprep.subr.mxu0 0.0
      %4229 = vmatpush1.msra.mxu0 %v3666
      %4230 = vmatprep.subr.mxu0 0.0
      %4231 = vmatpush1.msra.mxu0 %v3667
      %4232 = vmatprep.subr.mxu0 0.0
      %4233 = vmatpush1.msra.mxu0 %v3668
      %4234 = vmatprep.subr.mxu0 0.0
      %4235 = vmatpush1.msra.mxu0 %v3669
      %4236 = vmatprep.subr.mxu0 0.0
      %4237 = vmatpush1.msra.mxu0 %v3670
      %4238 = vmatprep.subr.mxu0 0.0
      %4239 = vmatpush1.msra.mxu0 %v3671
      %4240 = vmatprep.subr.mxu0 0.0
      %4241 = vmatpush1.msra.mxu0 %v3672
      %4242 = vmatprep.subr.mxu0 0.0
      %4243 = vmatpush1.msra.mxu0 %v3673
      %4244 = vmatprep.subr.mxu0 0.0
      %4245 = vmatpush1.msra.mxu0 %v3674
      %4246 = vmatprep.subr.mxu0 0.0
      %4247 = vmatpush1.msra.mxu0 %v3675
      %4248 = vmatprep.subr.mxu0 0.0
      %4249 = vmatpush1.msra.mxu0 %v3676
      %4250 = vmatprep.subr.mxu0 0.0
      %4251 = vmatpush1.msra.mxu0 %v3677
      %4252 = vmatprep.subr.mxu0 0.0
      %4253 = vmatpush1.msra.mxu0 %v3678
      %4254 = vmatprep.subr.mxu0 0.0
      %4255 = vmatpush1.msra.mxu0 %v3679
      %4256 = vmatprep.subr.mxu0 0.0
      %4257 = vmatpush1.msra.mxu0 %v3680
      %4258 = vmatprep.subr.mxu0 0.0
      %4259 = vmatpush1.msra.mxu0 %v3681
      %4260 = vmatprep.subr.mxu0 0.0
      %4261 = vmatpush1.msra.mxu0 %v3682
      %4262 = vmatprep.subr.mxu0 0.0
      %4263 = vmatpush1.msra.mxu0 %v3683
      %4264 = vmatprep.subr.mxu0 0.0
      %4265 = vmatpush1.msra.mxu0 %v3684
      %4266 = vmatprep.subr.mxu0 0.0
      %4267 = vmatpush1.msra.mxu0 %v3685
      %4268 = vmatprep.subr.mxu0 0.0
      %4269 = vmatpush1.msra.mxu0 %v3686
      %4270 = vmatprep.subr.mxu0 0.0
      %4271 = vmatpush1.msra.mxu0 %v3687
      %4272 = vmatprep.subr.mxu0 0.0
      %4273 = vmatpush1.msra.mxu0 %v3688
      %4274 = vmatprep.subr.mxu0 0.0
      %4275 = vmatpush1.msra.mxu0 %v3689
      %4276 = vmatprep.subr.mxu0 0.0
      %4277 = vmatpush1.msra.mxu0 %v3690
      %4278 = vmatprep.subr.mxu0 0.0
      %4279 = vmatpush1.msra.mxu0 %v3691
      %4280 = vmatprep.subr.mxu0 0.0
      %4281 = vmatpush1.msra.mxu0 %v3692
      %4282 = vmatprep.subr.mxu0 0.0
      %4283 = vmatpush1.msra.mxu0 %v3693
      %4284 = vmatprep.subr.mxu0 0.0
      %4285 = vmatpush1.msra.mxu0 %v3694
      %4286 = vmatprep.mubr.f32.mxu0 %v2727
      %4287 = vmatmul.mubr.f32.gmra.mrb[0].mxu0 %v3407
      %v4288 = vpop.f32.mrb[0].mxu0
      %v4289 = vadd.f32 %v4064, %v4288
      %v4290 = vpop.f32.mrb[0].mxu0
      %4291 = vmatprep.mubr.f32.mxu0 %v2728
      %4292 = vmatmul.mubr.f32.gmra.mrb[0].mxu0 %v3408
      %v4293 = vpop.f32.mrb[0].mxu0
      %v4294 = vadd.f32 %v4069, %v4293
      %v4295 = vpop.f32.mrb[0].mxu0
      %4296 = vmatprep.mubr.f32.mxu0 %v2729
      %4297 = vmatmul.mubr.f32.gmra.mrb[0].mxu0 %v3409
      %v4298 = vpop.f32.mrb[0].mxu0
      %v4299 = vadd.f32 %v4074, %v4298
      %v4300 = vpop.f32.mrb[0].mxu0
      %4301 = vmatprep.mubr.f32.mxu0 %v2730
      %4302 = vmatmul.mubr.f32.gmra.mrb[0].mxu0 %v3410
      %v4303 = vpop.f32.mrb[0].mxu0
      %v4304 = vadd.f32 %v4079, %v4303
      %v4305 = vpop.f32.mrb[0].mxu0
      %4306 = vmatprep.mubr.f32.mxu0 %v2731
      %4307 = vmatmul.mubr.f32.gmra.mrb[0].mxu0 %v3411
      %v4308 = vpop.f32.mrb[0].mxu0
      %v4309 = vadd.f32 %v4084, %v4308
      %v4310 = vpop.f32.mrb[0].mxu0
      %4311 = vmatprep.mubr.f32.mxu0 %v2732
      %4312 = vmatmul.mubr.f32.gmra.mrb[0].mxu0 %v3412
      %v4313 = vpop.f32.mrb[0].mxu0
      %v4314 = vadd.f32 %v4089, %v4313
      %v4315 = vpop.f32.mrb[0].mxu0
      %4316 = vmatprep.mubr.f32.mxu0 %v2733
      %4317 = vmatmul.mubr.f32.gmra.mrb[0].mxu0 %v3413
      %v4318 = vpop.f32.mrb[0].mxu0
      %v4319 = vadd.f32 %v4094, %v4318
      %v4320 = vpop.f32.mrb[0].mxu0
      %4321 = vmatprep.mubr.f32.mxu0 %v2734
      %4322 = vmatmul.mubr.f32.gmra.mrb[0].mxu0 %v3414
      %v4323 = vpop.f32.mrb[0].mxu0
      %v4324 = vadd.f32 %v4099, %v4323
      %v4325 = vpop.f32.mrb[0].mxu0
      %4326 = vmatprep.mubr.f32.mxu0 %v2735
      %4327 = vmatmul.mubr.f32.gmra.mrb[0].mxu0 %v3415
      %v4328 = vpop.f32.mrb[0].mxu0
      %v4329 = vadd.f32 %v4104, %v4328
      %v4330 = vpop.f32.mrb[0].mxu0
      %4331 = vmatprep.mubr.f32.mxu0 %v2736
      %4332 = vmatmul.mubr.f32.gmra.mrb[0].mxu0 %v3416
      %v4333 = vpop.f32.mrb[0].mxu0
      %v4334 = vadd.f32 %v4109, %v4333
      %v4335 = vpop.f32.mrb[0].mxu0
      %4336 = vmatprep.mubr.f32.mxu0 %v2737
      %4337 = vmatmul.mubr.f32.gmra.mrb[0].mxu0 %v3417
      %v4338 = vpop.f32.mrb[0].mxu0
      %v4339 = vadd.f32 %v4114, %v4338
      %v4340 = vpop.f32.mrb[0].mxu0
      %4341 = vmatprep.mubr.f32.mxu0 %v2738
      %4342 = vmatmul.mubr.f32.gmra.mrb[0].mxu0 %v3418
      %v4343 = vpop.f32.mrb[0].mxu0
      %v4344 = vadd.f32 %v4119, %v4343
      %v4345 = vpop.f32.mrb[0].mxu0
      %4346 = vmatprep.mubr.f32.mxu0 %v2739
      %4347 = vmatmul.mubr.f32.gmra.mrb[0].mxu0 %v3419
      %v4348 = vpop.f32.mrb[0].mxu0
      %v4349 = vadd.f32 %v4124, %v4348
      %v4350 = vpop.f32.mrb[0].mxu0
      %4351 = vmatprep.mubr.f32.mxu0 %v2740
      %4352 = vmatmul.mubr.f32.gmra.mrb[0].mxu0 %v3420
      %v4353 = vpop.f32.mrb[0].mxu0
      %v4354 = vadd.f32 %v4129, %v4353
      %v4355 = vpop.f32.mrb[0].mxu0
      %4356 = vmatprep.mubr.f32.mxu0 %v2741
      %4357 = vmatmul.mubr.f32.gmra.mrb[0].mxu0 %v3421
      %v4358 = vpop.f32.mrb[0].mxu0
      %v4359 = vadd.f32 %v4134, %v4358
      %v4360 = vpop.f32.mrb[0].mxu0
      %4361 = vmatprep.mubr.f32.mxu0 %v2742
      %4362 = vmatmul.mubr.f32.gmra.mrb[0].mxu0 %v3422
      %v4363 = vpop.f32.mrb[0].mxu0
      %v4364 = vadd.f32 %v4139, %v4363
      %v4365 = vpop.f32.mrb[0].mxu0
      %4366 = vmatprep.mubr.f32.mxu0 %v2743
      %4367 = vmatmul.mubr.f32.gmra.mrb[0].mxu0 %v3423
      %v4368 = vpop.f32.mrb[0].mxu0
      %v4369 = vadd.f32 %v4144, %v4368
      %v4370 = vpop.f32.mrb[0].mxu0
      %4371 = vmatprep.mubr.f32.mxu0 %v2744
      %4372 = vmatmul.mubr.f32.gmra.mrb[0].mxu0 %v3424
      %v4373 = vpop.f32.mrb[0].mxu0
      %v4374 = vadd.f32 %v4149, %v4373
      %v4375 = vpop.f32.mrb[0].mxu0
      %4376 = vmatprep.mubr.f32.mxu0 %v2745
      %4377 = vmatmul.mubr.f32.gmra.mrb[0].mxu0 %v3425
      %v4378 = vpop.f32.mrb[0].mxu0
      %v4379 = vadd.f32 %v4154, %v4378
      %v4380 = vpop.f32.mrb[0].mxu0
      %4381 = vmatprep.mubr.f32.mxu0 %v2746
      %4382 = vmatmul.mubr.f32.gmra.mrb[0].mxu0 %v3426
      %v4383 = vpop.f32.mrb[0].mxu0
      %v4384 = vadd.f32 %v4159, %v4383
      %v4385 = vpop.f32.mrb[0].mxu0
      %4386 = vmatprep.mubr.f32.mxu0 %v2747
      %4387 = vmatmul.mubr.f32.gmra.mrb[0].mxu0 %v3427
      %v4388 = vpop.f32.mrb[0].mxu0
      %v4389 = vadd.f32 %v4164, %v4388
      %v4390 = vpop.f32.mrb[0].mxu0
      %4391 = vmatprep.mubr.f32.mxu0 %v2748
      %4392 = vmatmul.mubr.f32.gmra.mrb[0].mxu0 %v3428
      %v4393 = vpop.f32.mrb[0].mxu0
      %v4394 = vadd.f32 %v4169, %v4393
      %v4395 = vpop.f32.mrb[0].mxu0
      %4396 = vmatprep.mubr.f32.mxu0 %v2749
      %4397 = vmatmul.mubr.f32.gmra.mrb[0].mxu0 %v3429
      %v4398 = vpop.f32.mrb[0].mxu0
      %v4399 = vadd.f32 %v4174, %v4398
      %v4400 = vpop.f32.mrb[0].mxu0
      %4401 = vmatprep.mubr.f32.mxu0 %v2750
      %4402 = vmatmul.mubr.f32.gmra.mrb[0].mxu0 %v3430
      %v4403 = vpop.f32.mrb[0].mxu0
      %v4404 = vadd.f32 %v4179, %v4403
      %v4405 = vpop.f32.mrb[0].mxu0
      %4406 = vmatprep.mubr.f32.mxu0 %v2751
      %4407 = vmatmul.mubr.f32.gmra.mrb[0].mxu0 %v3431
      %v4408 = vpop.f32.mrb[0].mxu0
      %v4409 = vadd.f32 %v4184, %v4408
      %v4410 = vpop.f32.mrb[0].mxu0
      %4411 = vmatprep.mubr.f32.mxu0 %v2752
      %4412 = vmatmul.mubr.f32.gmra.mrb[0].mxu0 %v3432
      %v4413 = vpop.f32.mrb[0].mxu0
      %v4414 = vadd.f32 %v4189, %v4413
      %v4415 = vpop.f32.mrb[0].mxu0
      %4416 = vmatprep.mubr.f32.mxu0 %v2753
      %4417 = vmatmul.mubr.f32.gmra.mrb[0].mxu0 %v3433
      %v4418 = vpop.f32.mrb[0].mxu0
      %v4419 = vadd.f32 %v4194, %v4418
      %v4420 = vpop.f32.mrb[0].mxu0
      %4421 = vmatprep.mubr.f32.mxu0 %v2754
      %4422 = vmatmul.mubr.f32.gmra.mrb[0].mxu0 %v3434
      %v4423 = vpop.f32.mrb[0].mxu0
      %v4424 = vadd.f32 %v4199, %v4423
      %v4425 = vpop.f32.mrb[0].mxu0
      %4426 = vmatprep.mubr.f32.mxu0 %v2755
      %4427 = vmatmul.mubr.f32.gmra.mrb[0].mxu0 %v3435
      %v4428 = vpop.f32.mrb[0].mxu0
      %v4429 = vadd.f32 %v4204, %v4428
      %v4430 = vpop.f32.mrb[0].mxu0
      %4431 = vmatprep.mubr.f32.mxu0 %v2756
      %4432 = vmatmul.mubr.f32.gmra.mrb[0].mxu0 %v3436
      %v4433 = vpop.f32.mrb[0].mxu0
      %v4434 = vadd.f32 %v4209, %v4433
      %v4435 = vpop.f32.mrb[0].mxu0
      %4436 = vmatprep.mubr.f32.mxu0 %v2757
      %4437 = vmatmul.mubr.f32.gmra.mrb[0].mxu0 %v3437
      %v4438 = vpop.f32.mrb[0].mxu0
      %v4439 = vadd.f32 %v4214, %v4438
      %v4440 = vpop.f32.mrb[0].mxu0
      %4441 = vmatprep.mubr.f32.mxu0 %v2758
      %4442 = vmatmul.mubr.f32.gmra.mrb[0].mxu0 %v3438
      %v4443 = vpop.f32.mrb[0].mxu0
      %v4444 = vadd.f32 %v4219, %v4443
      %v4445 = vpop.f32.mrb[0].mxu0
      %4446 = vdwg.mxu0
      %4447 = vmatprep.subr.mxu0 0.0
      %4448 = vmatpush1.msra.mxu0 %v3695
      %4449 = vmatprep.subr.mxu0 0.0
      %4450 = vmatpush1.msra.mxu0 %v3696
      %4451 = vmatprep.subr.mxu0 0.0
      %4452 = vmatpush1.msra.mxu0 %v3697
      %4453 = vmatprep.subr.mxu0 0.0
      %4454 = vmatpush1.msra.mxu0 %v3698
      %4455 = vmatprep.subr.mxu0 0.0
      %4456 = vmatpush1.msra.mxu0 0.0
      %4457 = vmatprep.subr.mxu0 0.0
      %4458 = vmatpush1.msra.mxu0 0.0
      %4459 = vmatprep.subr.mxu0 0.0
      %4460 = vmatpush1.msra.mxu0 0.0
      %4461 = vmatprep.subr.mxu0 0.0
      %4462 = vmatpush1.msra.mxu0 0.0
      %4463 = vmatprep.subr.mxu0 0.0
      %4464 = vmatpush1.msra.mxu0 0.0
      %4465 = vmatprep.subr.mxu0 0.0
      %4466 = vmatpush1.msra.mxu0 0.0
      %4467 = vmatprep.subr.mxu0 0.0
      %4468 = vmatpush1.msra.mxu0 0.0
      %4469 = vmatprep.subr.mxu0 0.0
      %4470 = vmatpush1.msra.mxu0 0.0
      %4471 = vmatprep.subr.mxu0 0.0
      %4472 = vmatpush1.msra.mxu0 0.0
      %4473 = vmatprep.subr.mxu0 0.0
      %4474 = vmatpush1.msra.mxu0 0.0
      %4475 = vmatprep.subr.mxu0 0.0
      %4476 = vmatpush1.msra.mxu0 0.0
      %4477 = vmatprep.subr.mxu0 0.0
      %4478 = vmatpush1.msra.mxu0 0.0
      %4479 = vmatprep.subr.mxu0 0.0
      %4480 = vmatpush1.msra.mxu0 0.0
      %4481 = vmatprep.subr.mxu0 0.0
      %4482 = vmatpush1.msra.mxu0 0.0
      %4483 = vmatprep.subr.mxu0 0.0
      %4484 = vmatpush1.msra.mxu0 0.0
      %4485 = vmatprep.subr.mxu0 0.0
      %4486 = vmatpush1.msra.mxu0 0.0
      %4487 = vmatprep.subr.mxu0 0.0
      %4488 = vmatpush1.msra.mxu0 0.0
      %4489 = vmatprep.subr.mxu0 0.0
      %4490 = vmatpush1.msra.mxu0 0.0
      %4491 = vmatprep.subr.mxu0 0.0
      %4492 = vmatpush1.msra.mxu0 0.0
      %4493 = vmatprep.subr.mxu0 0.0
      %4494 = vmatpush1.msra.mxu0 0.0
      %4495 = vmatprep.subr.mxu0 0.0
      %4496 = vmatpush1.msra.mxu0 0.0
      %4497 = vmatprep.subr.mxu0 0.0
      %4498 = vmatpush1.msra.mxu0 0.0
      %4499 = vmatprep.subr.mxu0 0.0
      %4500 = vmatpush1.msra.mxu0 0.0
      %4501 = vmatprep.subr.mxu0 0.0
      %4502 = vmatpush1.msra.mxu0 0.0
      %4503 = vmatprep.subr.mxu0 0.0
      %4504 = vmatpush1.msra.mxu0 0.0
      %4505 = vmatprep.subr.mxu0 0.0
      %4506 = vmatpush1.msra.mxu0 0.0
      %4507 = vmatprep.subr.mxu0 0.0
      %4508 = vmatpush1.msra.mxu0 0.0
      %4509 = vmatprep.subr.mxu0 0.0
      %4510 = vmatpush1.msra.mxu0 0.0
      %4511 = vmatprep.mubr.f32.mxu0 0.0
      %4512 = vmatmul.mubr.f32.gmra.mrb[0].mxu0 %v3706
      %v4513 = vpop.f32.mrb[0].mxu0
      %v4514 = vadd.f32 %v4289, %v4513
      %v4515 = vpop.f32.mrb[0].mxu0
      %4516 = vmatprep.mubr.f32.mxu0 0.0
      %4517 = vmatmul.mubr.f32.gmra.mrb[0].mxu0 %v3708
      %v4518 = vpop.f32.mrb[0].mxu0
      %v4519 = vadd.f32 %v4294, %v4518
      %v4520 = vpop.f32.mrb[0].mxu0
      %4521 = vmatprep.mubr.f32.mxu0 0.0
      %4522 = vmatmul.mubr.f32.gmra.mrb[0].mxu0 %v3710
      %v4523 = vpop.f32.mrb[0].mxu0
      %v4524 = vadd.f32 %v4299, %v4523
      %v4525 = vpop.f32.mrb[0].mxu0
      %4526 = vmatprep.mubr.f32.mxu0 0.0
      %4527 = vmatmul.mubr.f32.gmra.mrb[0].mxu0 %v3712
      %v4528 = vpop.f32.mrb[0].mxu0
      %v4529 = vadd.f32 %v4304, %v4528
      %v4530 = vpop.f32.mrb[0].mxu0
      %4531 = vmatprep.mubr.f32.mxu0 0.0
      %4532 = vmatmul.mubr.f32.gmra.mrb[0].mxu0 %v3714
      %v4533 = vpop.f32.mrb[0].mxu0
      %v4534 = vadd.f32 %v4309, %v4533
      %v4535 = vpop.f32.mrb[0].mxu0
      %4536 = vmatprep.mubr.f32.mxu0 0.0
      %4537 = vmatmul.mubr.f32.gmra.mrb[0].mxu0 %v3716
      %v4538 = vpop.f32.mrb[0].mxu0
      %v4539 = vadd.f32 %v4314, %v4538
      %v4540 = vpop.f32.mrb[0].mxu0
      %4541 = vmatprep.mubr.f32.mxu0 0.0
      %4542 = vmatmul.mubr.f32.gmra.mrb[0].mxu0 %v3718
      %v4543 = vpop.f32.mrb[0].mxu0
      %v4544 = vadd.f32 %v4319, %v4543
      %v4545 = vpop.f32.mrb[0].mxu0
      %4546 = vmatprep.mubr.f32.mxu0 0.0
      %4547 = vmatmul.mubr.f32.gmra.mrb[0].mxu0 %v3720
      %v4548 = vpop.f32.mrb[0].mxu0
      %v4549 = vadd.f32 %v4324, %v4548
      %v4550 = vpop.f32.mrb[0].mxu0
      %4551 = vmatprep.mubr.f32.mxu0 0.0
      %4552 = vmatmul.mubr.f32.gmra.mrb[0].mxu0 %v3722
      %v4553 = vpop.f32.mrb[0].mxu0
      %v4554 = vadd.f32 %v4329, %v4553
      %v4555 = vpop.f32.mrb[0].mxu0
      %4556 = vmatprep.mubr.f32.mxu0 0.0
      %4557 = vmatmul.mubr.f32.gmra.mrb[0].mxu0 %v3724
      %v4558 = vpop.f32.mrb[0].mxu0
      %v4559 = vadd.f32 %v4334, %v4558
      %v4560 = vpop.f32.mrb[0].mxu0
      %4561 = vmatprep.mubr.f32.mxu0 0.0
      %4562 = vmatmul.mubr.f32.gmra.mrb[0].mxu0 %v3726
      %v4563 = vpop.f32.mrb[0].mxu0
      %v4564 = vadd.f32 %v4339, %v4563
      %v4565 = vpop.f32.mrb[0].mxu0
      %4566 = vmatprep.mubr.f32.mxu0 0.0
      %4567 = vmatmul.mubr.f32.gmra.mrb[0].mxu0 %v3728
      %v4568 = vpop.f32.mrb[0].mxu0
      %v4569 = vadd.f32 %v4344, %v4568
      %v4570 = vpop.f32.mrb[0].mxu0
      %4571 = vmatprep.mubr.f32.mxu0 0.0
      %4572 = vmatmul.mubr.f32.gmra.mrb[0].mxu0 %v3730
      %v4573 = vpop.f32.mrb[0].mxu0
      %v4574 = vadd.f32 %v4349, %v4573
      %v4575 = vpop.f32.mrb[0].mxu0
      %4576 = vmatprep.mubr.f32.mxu0 0.0
      %4577 = vmatmul.mubr.f32.gmra.mrb[0].mxu0 %v3732
      %v4578 = vpop.f32.mrb[0].mxu0
      %v4579 = vadd.f32 %v4354, %v4578
      %v4580 = vpop.f32.mrb[0].mxu0
      %4581 = vmatprep.mubr.f32.mxu0 0.0
      %4582 = vmatmul.mubr.f32.gmra.mrb[0].mxu0 %v3734
      %v4583 = vpop.f32.mrb[0].mxu0
      %v4584 = vadd.f32 %v4359, %v4583
      %v4585 = vpop.f32.mrb[0].mxu0
      %4586 = vmatprep.mubr.f32.mxu0 0.0
      %4587 = vmatmul.mubr.f32.gmra.mrb[0].mxu0 %v3736
      %v4588 = vpop.f32.mrb[0].mxu0
      %v4589 = vadd.f32 %v4364, %v4588
      %v4590 = vpop.f32.mrb[0].mxu0
      %4591 = vmatprep.mubr.f32.mxu0 0.0
      %4592 = vmatmul.mubr.f32.gmra.mrb[0].mxu0 %v3738
      %v4593 = vpop.f32.mrb[0].mxu0
      %v4594 = vadd.f32 %v4369, %v4593
      %v4595 = vpop.f32.mrb[0].mxu0
      %4596 = vmatprep.mubr.f32.mxu0 0.0
      %4597 = vmatmul.mubr.f32.gmra.mrb[0].mxu0 %v3740
      %v4598 = vpop.f32.mrb[0].mxu0
      %v4599 = vadd.f32 %v4374, %v4598
      %v4600 = vpop.f32.mrb[0].mxu0
      %4601 = vmatprep.mubr.f32.mxu0 0.0
      %4602 = vmatmul.mubr.f32.gmra.mrb[0].mxu0 %v3742
      %v4603 = vpop.f32.mrb[0].mxu0
      %v4604 = vadd.f32 %v4379, %v4603
      %v4605 = vpop.f32.mrb[0].mxu0
      %4606 = vmatprep.mubr.f32.mxu0 0.0
      %4607 = vmatmul.mubr.f32.gmra.mrb[0].mxu0 %v3744
      %v4608 = vpop.f32.mrb[0].mxu0
      %v4609 = vadd.f32 %v4384, %v4608
      %v4610 = vpop.f32.mrb[0].mxu0
      %4611 = vmatprep.mubr.f32.mxu0 0.0
      %4612 = vmatmul.mubr.f32.gmra.mrb[0].mxu0 %v3746
      %v4613 = vpop.f32.mrb[0].mxu0
      %v4614 = vadd.f32 %v4389, %v4613
      %v4615 = vpop.f32.mrb[0].mxu0
      %4616 = vmatprep.mubr.f32.mxu0 0.0
      %4617 = vmatmul.mubr.f32.gmra.mrb[0].mxu0 %v3748
      %v4618 = vpop.f32.mrb[0].mxu0
      %v4619 = vadd.f32 %v4394, %v4618
      %v4620 = vpop.f32.mrb[0].mxu0
      %4621 = vmatprep.mubr.f32.mxu0 0.0
      %4622 = vmatmul.mubr.f32.gmra.mrb[0].mxu0 %v3750
      %v4623 = vpop.f32.mrb[0].mxu0
      %v4624 = vadd.f32 %v4399, %v4623
      %v4625 = vpop.f32.mrb[0].mxu0
      %4626 = vmatprep.mubr.f32.mxu0 0.0
      %4627 = vmatmul.mubr.f32.gmra.mrb[0].mxu0 %v3752
      %v4628 = vpop.f32.mrb[0].mxu0
      %v4629 = vadd.f32 %v4404, %v4628
      %v4630 = vpop.f32.mrb[0].mxu0
      %4631 = vmatprep.mubr.f32.mxu0 0.0
      %4632 = vmatmul.mubr.f32.gmra.mrb[0].mxu0 %v3754
      %v4633 = vpop.f32.mrb[0].mxu0
      %v4634 = vadd.f32 %v4409, %v4633
      %v4635 = vpop.f32.mrb[0].mxu0
      %4636 = vmatprep.mubr.f32.mxu0 0.0
      %4637 = vmatmul.mubr.f32.gmra.mrb[0].mxu0 %v3756
      %v4638 = vpop.f32.mrb[0].mxu0
      %v4639 = vadd.f32 %v4414, %v4638
      %v4640 = vpop.f32.mrb[0].mxu0
      %4641 = vmatprep.mubr.f32.mxu0 0.0
      %4642 = vmatmul.mubr.f32.gmra.mrb[0].mxu0 %v3758
      %v4643 = vpop.f32.mrb[0].mxu0
      %v4644 = vadd.f32 %v4419, %v4643
      %v4645 = vpop.f32.mrb[0].mxu0
      %4646 = vmatprep.mubr.f32.mxu0 0.0
      %4647 = vmatmul.mubr.f32.gmra.mrb[0].mxu0 %v3760
      %v4648 = vpop.f32.mrb[0].mxu0
      %v4649 = vadd.f32 %v4424, %v4648
      %v4650 = vpop.f32.mrb[0].mxu0
      %4651 = vmatprep.mubr.f32.mxu0 0.0
      %4652 = vmatmul.mubr.f32.gmra.mrb[0].mxu0 %v3762
      %v4653 = vpop.f32.mrb[0].mxu0
      %v4654 = vadd.f32 %v4429, %v4653
      %v4655 = vpop.f32.mrb[0].mxu0
      %4656 = vmatprep.mubr.f32.mxu0 0.0
      %4657 = vmatmul.mubr.f32.gmra.mrb[0].mxu0 %v3764
      %v4658 = vpop.f32.mrb[0].mxu0
      %v4659 = vadd.f32 %v4434, %v4658
      %v4660 = vpop.f32.mrb[0].mxu0
      %4661 = vmatprep.mubr.f32.mxu0 0.0
      %4662 = vmatmul.mubr.f32.gmra.mrb[0].mxu0 %v3767
      %v4663 = vpop.f32.mrb[0].mxu0
      %v4664 = vadd.f32 %v4439, %v4663
      %v4665 = vpop.f32.mrb[0].mxu0
      %4666 = vmatprep.mubr.f32.mxu0 0.0
      %4667 = vmatmul.mubr.f32.gmra.mrb[0].mxu0 %v3770
      %v4668 = vpop.f32.mrb[0].mxu0
      %v4669 = vadd.f32 %v4444, %v4668
      %v4670 = vpop.f32.mrb[0].mxu0
      %4671 = vdwg.mxu0
      %v4672 = vmax.f32 %v4514, %v4524
      %v4673 = vmax.f32 %v4519, %v4529
      %v4674 = vmax.f32 %v4534, %v4544
      %v4675 = vmax.f32 %v4539, %v4549
      %v4676 = vmax.f32 %v4554, %v4564
      %v4677 = vmax.f32 %v4559, %v4569
      %v4678 = vmax.f32 %v4574, %v4584
      %v4679 = vmax.f32 %v4579, %v4589
      %v4680 = vmax.f32 %v4594, %v4604
      %v4681 = vmax.f32 %v4599, %v4609
      %v4682 = vmax.f32 %v4614, %v4624
      %v4683 = vmax.f32 %v4619, %v4629
      %v4684 = vmax.f32 %v4634, %v4644
      %v4685 = vmax.f32 %v4639, %v4649
      %v4686 = vmax.f32 %v4654, %v4664
      %v4687 = vmax.f32 %v4659, %v4669
      %4688 = vst.msk [vmem:[#allocation4] sm:$0xff] %vm280, %v4672
      %4689 = vst.msk [vmem:[#allocation4 + $0x8] sm:$0xff] %vm280, %v4673
      %4690 = vst.msk [vmem:[#allocation4 + $0x10] sm:$0xff] %vm280, %v4674
      %4691 = vst.msk [vmem:[#allocation4 + $0x18] sm:$0xff] %vm280, %v4675
      %4692 = vst.msk [vmem:[#allocation4 + $0x20] sm:$0xff] %vm280, %v4676
      %4693 = vst.msk [vmem:[#allocation4 + $0x28] sm:$0xff] %vm280, %v4677
      %4694 = vst.msk [vmem:[#allocation4 + $0x30] sm:$0xff] %vm280, %v4678
      %4695 = vst.msk [vmem:[#allocation4 + $0x38] sm:$0xff] %vm280, %v4679
      %4696 = vst.msk [vmem:[#allocation4 + $0x40] sm:$0xff] %vm280, %v4680
      %4697 = vst.msk [vmem:[#allocation4 + $0x48] sm:$0xff] %vm280, %v4681
      %4698 = vst.msk [vmem:[#allocation4 + $0x50] sm:$0xff] %vm280, %v4682
      %4699 = vst.msk [vmem:[#allocation4 + $0x58] sm:$0xff] %vm280, %v4683
      %4700 = vst.msk [vmem:[#allocation4 + $0x60] sm:$0xff] %vm280, %v4684
      %4701 = vst.msk [vmem:[#allocation4 + $0x68] sm:$0xff] %vm280, %v4685
      %4702 = vst.msk [vmem:[#allocation4 + $0x70] sm:$0xff] %vm280, %v4686
      %4703 = vst.msk [vmem:[#allocation4 + $0x78] sm:$0xff] %vm280, %v4687
      %v4704 = vld [vmem:[#allocation4] ss:$2 sm:$0xff]
      %s4705 = scalar_lea.vmem [#allocation4], 16
      %v4706 = vld [vmem:[%s4705] ss:$2 sm:$0xff]
      %s4707 = scalar_lea.vmem [#allocation4], 32
      %v4708 = vld [vmem:[%s4707] ss:$2 sm:$0xff]
      %s4709 = scalar_lea.vmem [#allocation4], 48
      %v4710 = vld [vmem:[%s4709] ss:$2 sm:$0xff]
      %s4711 = scalar_lea.vmem [#allocation4], 64
      %v4712 = vld [vmem:[%s4711] ss:$2 sm:$0xff]
      %s4713 = scalar_lea.vmem [#allocation4], 80
      %v4714 = vld [vmem:[%s4713] ss:$2 sm:$0xff]
      %s4715 = scalar_lea.vmem [#allocation4], 96
      %v4716 = vld [vmem:[%s4715] ss:$2 sm:$0xff]
      %s4717 = scalar_lea.vmem [#allocation4], 112
      %v4718 = vld [vmem:[%s4717] ss:$2 sm:$0xff]
      %s4719 = scalar_lea.vmem [#allocation4], 1
      %v4720 = vld [vmem:[%s4719] ss:$2 sm:$0xff]
      %s4721 = scalar_lea.vmem [#allocation4], 17
      %v4722 = vld [vmem:[%s4721] ss:$2 sm:$0xff]
      %s4723 = scalar_lea.vmem [#allocation4], 33
      %v4724 = vld [vmem:[%s4723] ss:$2 sm:$0xff]
      %s4725 = scalar_lea.vmem [#allocation4], 49
      %v4726 = vld [vmem:[%s4725] ss:$2 sm:$0xff]
      %s4727 = scalar_lea.vmem [#allocation4], 65
      %v4728 = vld [vmem:[%s4727] ss:$2 sm:$0xff]
      %s4729 = scalar_lea.vmem [#allocation4], 81
      %v4730 = vld [vmem:[%s4729] ss:$2 sm:$0xff]
      %s4731 = scalar_lea.vmem [#allocation4], 97
      %v4732 = vld [vmem:[%s4731] ss:$2 sm:$0xff]
      %s4733 = scalar_lea.vmem [#allocation4], 113
      %v4734 = vld [vmem:[%s4733] ss:$2 sm:$0xff]
      %v4735 = vmax.f32 %v4704, %v4720
      %v4736 = vmax.f32 %v4706, %v4722
      %v4737 = vmax.f32 %v4708, %v4724
      %v4738 = vmax.f32 %v4710, %v4726
      %v4739 = vmax.f32 %v4712, %v4728
      %v4740 = vmax.f32 %v4714, %v4730
      %v4741 = vmax.f32 %v4716, %v4732
      %v4742 = vmax.f32 %v4718, %v4734
      %s4743 = scalar_lea.vmem [#allocation5], 48
      %4744 = vst.msk [vmem:[%s4743 + $0x8] sm:$0xff] %vm280, %v4735
      %4745 = vst.msk [vmem:[%s4743 + $0x20] sm:$0xff] %vm280, %v4736
      %4746 = vst.msk [vmem:[%s4743 + $0x38] sm:$0xff] %vm280, %v4737
      %4747 = vst.msk [vmem:[%s4743 + $0x50] sm:$0xff] %vm280, %v4738
      %4748 = vst.msk [vmem:[%s4743 + $0x68] sm:$0xff] %vm280, %v4739
      %4749 = vst.msk [vmem:[%s4743 + $0x80] sm:$0xff] %vm280, %v4740
      %4750 = vst.msk [vmem:[%s4743 + $0x98] sm:$0xff] %vm280, %v4741
      %4751 = vst.msk [vmem:[%s4743 + $0xb0] sm:$0xff] %vm280, %v4742
      %v4752 = vld [vmem:[#allocation5 + $0x6] sm:$0xff]
      %v4753 = vld [vmem:[#allocation5 + $0x1e] sm:$0xff]
      %v4754 = vld [vmem:[#allocation5 + $0x36] sm:$0xff]
      %v4755 = vld [vmem:[#allocation5 + $0x4e] sm:$0xff]
      %v4756 = vld [vmem:[#allocation5 + $0x66] sm:$0xff]
      %v4757 = vld [vmem:[#allocation5 + $0x7e] sm:$0xff]
      %v4758 = vld [vmem:[#allocation5 + $0x96] sm:$0xff]
      %v4759 = vld [vmem:[#allocation5 + $0xae] sm:$0xff]
      %v4760 = vld [vmem:[#allocation5 + $0xc6] sm:$0xff]
      %v4761 = vld [vmem:[#allocation5 + $0xde] sm:$0xff]
      %v4762 = vld [vmem:[#allocation5 + $0xf6] sm:$0xff]
      %v4763 = vld [vmem:[#allocation5 + $0x10e] sm:$0xff]
      %v4764 = vld [vmem:[#allocation5 + $0x7] sm:$0xff]
      %v4765 = vld [vmem:[#allocation5 + $0x1f] sm:$0xff]
      %v4766 = vld [vmem:[#allocation5 + $0x37] sm:$0xff]
      %v4767 = vld [vmem:[#allocation5 + $0x4f] sm:$0xff]
      %v4768 = vld [vmem:[#allocation5 + $0x67] sm:$0xff]
      %v4769 = vld [vmem:[#allocation5 + $0x7f] sm:$0xff]
      %v4770 = vld [vmem:[#allocation5 + $0x97] sm:$0xff]
      %v4771 = vld [vmem:[#allocation5 + $0xaf] sm:$0xff]
      %v4772 = vld [vmem:[#allocation5 + $0xc7] sm:$0xff]
      %v4773 = vld [vmem:[#allocation5 + $0xdf] sm:$0xff]
      %v4774 = vld [vmem:[#allocation5 + $0xf7] sm:$0xff]
      %v4775 = vld [vmem:[#allocation5 + $0x10f] sm:$0xff]
      %v4776 = vld [vmem:[#allocation5 + $0x8] sm:$0xff]
      %v4777 = vld [vmem:[#allocation5 + $0x20] sm:$0xff]
      %v4778 = vld [vmem:[#allocation5 + $0x38] sm:$0xff]
      %v4779 = vld [vmem:[#allocation5 + $0x50] sm:$0xff]
      %v4780 = vld [vmem:[#allocation5 + $0x68] sm:$0xff]
      %v4781 = vld [vmem:[#allocation5 + $0x80] sm:$0xff]
      %v4782 = vld [vmem:[#allocation5 + $0x98] sm:$0xff]
      %v4783 = vld [vmem:[#allocation5 + $0xb0] sm:$0xff]
      %v4784 = vld [vmem:[#allocation5 + $0xc8] sm:$0xff]
      %v4785 = vld [vmem:[#allocation5 + $0xe0] sm:$0xff]
      %v4786 = vld [vmem:[#allocation5 + $0xf8] sm:$0xff]
      %v4787 = vld [vmem:[#allocation5 + $0x110] sm:$0xff]
      %v4788 = vld [vmem:[#allocation5 + $0x9] sm:$0xff]
      %v4789 = vld [vmem:[#allocation5 + $0x21] sm:$0xff]
      %v4790 = vld [vmem:[#allocation5 + $0x39] sm:$0xff]
      %v4791 = vld [vmem:[#allocation5 + $0x51] sm:$0xff]
      %v4792 = vld [vmem:[#allocation5 + $0x69] sm:$0xff]
      %v4793 = vld [vmem:[#allocation5 + $0x81] sm:$0xff]
      %v4794 = vld [vmem:[#allocation5 + $0x99] sm:$0xff]
      %v4795 = vld [vmem:[#allocation5 + $0xb1] sm:$0xff]
      %v4796 = vld [vmem:[#allocation5 + $0xc9] sm:$0xff]
      %v4797 = vld [vmem:[#allocation5 + $0xe1] sm:$0xff]
      %v4798 = vld [vmem:[#allocation5 + $0xf9] sm:$0xff]
      %v4799 = vld [vmem:[#allocation5 + $0x111] sm:$0xff]
      %v4800 = vld [vmem:[#allocation5 + $0xa] sm:$0xff]
      %v4801 = vld [vmem:[#allocation5 + $0x22] sm:$0xff]
      %v4802 = vld [vmem:[#allocation5 + $0x3a] sm:$0xff]
      %v4803 = vld [vmem:[#allocation5 + $0x52] sm:$0xff]
      %v4804 = vld [vmem:[#allocation5 + $0x6a] sm:$0xff]
      %v4805 = vld [vmem:[#allocation5 + $0x82] sm:$0xff]
      %v4806 = vld [vmem:[#allocation5 + $0x9a] sm:$0xff]
      %v4807 = vld [vmem:[#allocation5 + $0xb2] sm:$0xff]
      %v4808 = vld [vmem:[#allocation5 + $0xca] sm:$0xff]
      %v4809 = vld [vmem:[#allocation5 + $0xe2] sm:$0xff]
      %v4810 = vld [vmem:[#allocation5 + $0xfa] sm:$0xff]
      %v4811 = vld [vmem:[#allocation5 + $0x112] sm:$0xff]
      %4824 = vrot.lane.b32.xlu0 %v4764, 32
      %v4825 = vpop.permute.xlu0 %4824
      %4826 = vrot.lane.b32.xlu0 %v4765, 32
      %v4827 = vpop.permute.xlu0 %4826
      %4828 = vrot.lane.b32.xlu0 %v4766, 32
      %v4829 = vpop.permute.xlu0 %4828
      %4830 = vrot.lane.b32.xlu0 %v4767, 32
      %v4831 = vpop.permute.xlu0 %4830
      %4832 = vrot.lane.b32.xlu0 %v4768, 32
      %v4833 = vpop.permute.xlu0 %4832
      %4834 = vrot.lane.b32.xlu0 %v4769, 32
      %v4835 = vpop.permute.xlu0 %4834
      %4836 = vrot.lane.b32.xlu0 %v4770, 32
      %v4837 = vpop.permute.xlu0 %4836
      %4838 = vrot.lane.b32.xlu0 %v4771, 32
      %v4839 = vpop.permute.xlu0 %4838
      %4840 = vrot.lane.b32.xlu0 %v4772, 32
      %v4841 = vpop.permute.xlu0 %4840
      %4842 = vrot.lane.b32.xlu0 %v4773, 32
      %v4843 = vpop.permute.xlu0 %4842
      %4844 = vrot.lane.b32.xlu0 %v4774, 32
      %v4845 = vpop.permute.xlu0 %4844
      %4846 = vrot.lane.b32.xlu0 %v4775, 32
      %v4847 = vpop.permute.xlu0 %4846
      %4872 = vrot.lane.b32.xlu0 %v4776, 64
      %v4873 = vpop.permute.xlu0 %4872
      %4874 = vrot.lane.b32.xlu0 %v4777, 64
      %v4875 = vpop.permute.xlu0 %4874
      %4876 = vrot.lane.b32.xlu0 %v4778, 64
      %v4877 = vpop.permute.xlu0 %4876
      %4878 = vrot.lane.b32.xlu0 %v4779, 64
      %v4879 = vpop.permute.xlu0 %4878
      %4880 = vrot.lane.b32.xlu0 %v4780, 64
      %v4881 = vpop.permute.xlu0 %4880
      %4882 = vrot.lane.b32.xlu0 %v4781, 64
      %v4883 = vpop.permute.xlu0 %4882
      %4884 = vrot.lane.b32.xlu0 %v4782, 64
      %v4885 = vpop.permute.xlu0 %4884
      %4886 = vrot.lane.b32.xlu0 %v4783, 64
      %v4887 = vpop.permute.xlu0 %4886
      %4888 = vrot.lane.b32.xlu0 %v4784, 64
      %v4889 = vpop.permute.xlu0 %4888
      %4890 = vrot.lane.b32.xlu0 %v4785, 64
      %v4891 = vpop.permute.xlu0 %4890
      %4892 = vrot.lane.b32.xlu0 %v4786, 64
      %v4893 = vpop.permute.xlu0 %4892
      %4894 = vrot.lane.b32.xlu0 %v4787, 64
      %v4895 = vpop.permute.xlu0 %4894
      %4920 = vrot.lane.b32.xlu0 %v4788, 96
      %v4921 = vpop.permute.xlu0 %4920
      %4922 = vrot.lane.b32.xlu0 %v4789, 96
      %v4923 = vpop.permute.xlu0 %4922
      %4924 = vrot.lane.b32.xlu0 %v4790, 96
      %v4925 = vpop.permute.xlu0 %4924
      %4926 = vrot.lane.b32.xlu0 %v4791, 96
      %v4927 = vpop.permute.xlu0 %4926
      %4928 = vrot.lane.b32.xlu0 %v4792, 96
      %v4929 = vpop.permute.xlu0 %4928
      %4930 = vrot.lane.b32.xlu0 %v4793, 96
      %v4931 = vpop.permute.xlu0 %4930
      %4932 = vrot.lane.b32.xlu0 %v4794, 96
      %v4933 = vpop.permute.xlu0 %4932
      %4934 = vrot.lane.b32.xlu0 %v4795, 96
      %v4935 = vpop.permute.xlu0 %4934
      %4936 = vrot.lane.b32.xlu0 %v4796, 96
      %v4937 = vpop.permute.xlu0 %4936
      %4938 = vrot.lane.b32.xlu0 %v4797, 96
      %v4939 = vpop.permute.xlu0 %4938
      %4940 = vrot.lane.b32.xlu0 %v4798, 96
      %v4941 = vpop.permute.xlu0 %4940
      %4942 = vrot.lane.b32.xlu0 %v4799, 96
      %v4943 = vpop.permute.xlu0 %4942
      %v4956 = vsel %vm280, %v4752, %v4825
      %v4957 = vsel %vm280, %v4753, %v4827
      %v4958 = vsel %vm280, %v4754, %v4829
      %v4959 = vsel %vm280, %v4755, %v4831
      %v4960 = vsel %vm280, %v4756, %v4833
      %v4961 = vsel %vm280, %v4757, %v4835
      %v4962 = vsel %vm280, %v4758, %v4837
      %v4963 = vsel %vm280, %v4759, %v4839
      %v4964 = vsel %vm280, %v4760, %v4841
      %v4965 = vsel %vm280, %v4761, %v4843
      %v4966 = vsel %vm280, %v4762, %v4845
      %v4967 = vsel %vm280, %v4763, %v4847
      %v4968 = vsel %vm2677, %v4956, %v4873
      %v4969 = vsel %vm2677, %v4957, %v4875
      %v4970 = vsel %vm2677, %v4958, %v4877
      %v4971 = vsel %vm2677, %v4959, %v4879
      %v4972 = vsel %vm2677, %v4960, %v4881
      %v4973 = vsel %vm2677, %v4961, %v4883
      %v4974 = vsel %vm2677, %v4962, %v4885
      %v4975 = vsel %vm2677, %v4963, %v4887
      %v4976 = vsel %vm2677, %v4964, %v4889
      %v4977 = vsel %vm2677, %v4965, %v4891
      %v4978 = vsel %vm2677, %v4966, %v4893
      %v4979 = vsel %vm2677, %v4967, %v4895
      %v4980 = vsel %vm2718, %v4968, %v4921
      %v4981 = vsel %vm2718, %v4969, %v4923
      %v4982 = vsel %vm2718, %v4970, %v4925
      %v4983 = vsel %vm2718, %v4971, %v4927
      %v4984 = vsel %vm2718, %v4972, %v4929
      %v4985 = vsel %vm2718, %v4973, %v4931
      %v4986 = vsel %vm2718, %v4974, %v4933
      %v4987 = vsel %vm2718, %v4975, %v4935
      %v4988 = vsel %vm2718, %v4976, %v4937
      %v4989 = vsel %vm2718, %v4977, %v4939
      %v4990 = vsel %vm2718, %v4978, %v4941
      %v4991 = vsel %vm2718, %v4979, %v4943
      %5008 = vrot.lane.b32.xlu0 %v4981, 32
      %v5009 = vpop.permute.xlu0 %5008
      %5010 = vrot.lane.b32.xlu0 %v4801, 32
      %v5011 = vpop.permute.xlu0 %5010
      %5012 = vrot.lane.b32.xlu0 %v4982, 32
      %v5013 = vpop.permute.xlu0 %5012
      %5014 = vrot.lane.b32.xlu0 %v4802, 32
      %v5015 = vpop.permute.xlu0 %5014
      %5016 = vrot.lane.b32.xlu0 %v4983, 32
      %v5017 = vpop.permute.xlu0 %5016
      %5018 = vrot.lane.b32.xlu0 %v4803, 32
      %v5019 = vpop.permute.xlu0 %5018
      %5020 = vrot.lane.b32.xlu0 %v4984, 32
      %v5021 = vpop.permute.xlu0 %5020
      %5022 = vrot.lane.b32.xlu0 %v4804, 32
      %v5023 = vpop.permute.xlu0 %5022
      %5024 = vrot.lane.b32.xlu0 %v4985, 32
      %v5025 = vpop.permute.xlu0 %5024
      %5026 = vrot.lane.b32.xlu0 %v4805, 32
      %v5027 = vpop.permute.xlu0 %5026
      %5028 = vrot.lane.b32.xlu0 %v4986, 32
      %v5029 = vpop.permute.xlu0 %5028
      %5030 = vrot.lane.b32.xlu0 %v4806, 32
      %v5031 = vpop.permute.xlu0 %5030
      %5032 = vrot.lane.b32.xlu0 %v4987, 32
      %v5033 = vpop.permute.xlu0 %5032
      %5034 = vrot.lane.b32.xlu0 %v4807, 32
      %v5035 = vpop.permute.xlu0 %5034
      %5036 = vrot.lane.b32.xlu0 %v4988, 32
      %v5037 = vpop.permute.xlu0 %5036
      %5038 = vrot.lane.b32.xlu0 %v4808, 32
      %v5039 = vpop.permute.xlu0 %5038
      %v5040 = vsel %vm280, %v5009, %v5011
      %v5041 = vsel %vm280, %v5013, %v5015
      %v5042 = vsel %vm280, %v5017, %v5019
      %v5043 = vsel %vm280, %v5021, %v5023
      %v5044 = vsel %vm280, %v5025, %v5027
      %v5045 = vsel %vm280, %v5029, %v5031
      %v5046 = vsel %vm280, %v5033, %v5035
      %v5047 = vsel %vm280, %v5037, %v5039
      %5066 = vrot.lane.b32.xlu0 %v4982, 64
      %v5067 = vpop.permute.xlu0 %5066
      %5068 = vrot.lane.b32.xlu0 %v4802, 64
      %v5069 = vpop.permute.xlu0 %5068
      %5070 = vrot.lane.b32.xlu0 %v4983, 64
      %v5071 = vpop.permute.xlu0 %5070
      %5072 = vrot.lane.b32.xlu0 %v4803, 64
      %v5073 = vpop.permute.xlu0 %5072
      %5074 = vrot.lane.b32.xlu0 %v4984, 64
      %v5075 = vpop.permute.xlu0 %5074
      %5076 = vrot.lane.b32.xlu0 %v4804, 64
      %v5077 = vpop.permute.xlu0 %5076
      %5078 = vrot.lane.b32.xlu0 %v4985, 64
      %v5079 = vpop.permute.xlu0 %5078
      %5080 = vrot.lane.b32.xlu0 %v4805, 64
      %v5081 = vpop.permute.xlu0 %5080
      %5082 = vrot.lane.b32.xlu0 %v4986, 64
      %v5083 = vpop.permute.xlu0 %5082
      %5084 = vrot.lane.b32.xlu0 %v4806, 64
      %v5085 = vpop.permute.xlu0 %5084
      %5086 = vrot.lane.b32.xlu0 %v4987, 64
      %v5087 = vpop.permute.xlu0 %5086
      %5088 = vrot.lane.b32.xlu0 %v4807, 64
      %v5089 = vpop.permute.xlu0 %5088
      %5090 = vrot.lane.b32.xlu0 %v4988, 64
      %v5091 = vpop.permute.xlu0 %5090
      %5092 = vrot.lane.b32.xlu0 %v4808, 64
      %v5093 = vpop.permute.xlu0 %5092
      %5094 = vrot.lane.b32.xlu0 %v4989, 64
      %v5095 = vpop.permute.xlu0 %5094
      %5096 = vrot.lane.b32.xlu0 %v4809, 64
      %v5097 = vpop.permute.xlu0 %5096
      %v5098 = vsel %vm2677, %v5067, %v5069
      %v5099 = vsel %vm2677, %v5071, %v5073
      %v5100 = vsel %vm2677, %v5075, %v5077
      %v5101 = vsel %vm2677, %v5079, %v5081
      %v5102 = vsel %vm2677, %v5083, %v5085
      %v5103 = vsel %vm2677, %v5087, %v5089
      %v5104 = vsel %vm2677, %v5091, %v5093
      %v5105 = vsel %vm2677, %v5095, %v5097
      %5124 = vrot.lane.b32.xlu0 %v4983, 96
      %v5125 = vpop.permute.xlu0 %5124
      %5126 = vrot.lane.b32.xlu0 %v4803, 96
      %v5127 = vpop.permute.xlu0 %5126
      %5128 = vrot.lane.b32.xlu0 %v4984, 96
      %v5129 = vpop.permute.xlu0 %5128
      %5130 = vrot.lane.b32.xlu0 %v4804, 96
      %v5131 = vpop.permute.xlu0 %5130
      %5132 = vrot.lane.b32.xlu0 %v4985, 96
      %v5133 = vpop.permute.xlu0 %5132
      %5134 = vrot.lane.b32.xlu0 %v4805, 96
      %v5135 = vpop.permute.xlu0 %5134
      %5136 = vrot.lane.b32.xlu0 %v4986, 96
      %v5137 = vpop.permute.xlu0 %5136
      %5138 = vrot.lane.b32.xlu0 %v4806, 96
      %v5139 = vpop.permute.xlu0 %5138
      %5140 = vrot.lane.b32.xlu0 %v4987, 96
      %v5141 = vpop.permute.xlu0 %5140
      %5142 = vrot.lane.b32.xlu0 %v4807, 96
      %v5143 = vpop.permute.xlu0 %5142
      %5144 = vrot.lane.b32.xlu0 %v4988, 96
      %v5145 = vpop.permute.xlu0 %5144
      %5146 = vrot.lane.b32.xlu0 %v4808, 96
      %v5147 = vpop.permute.xlu0 %5146
      %5148 = vrot.lane.b32.xlu0 %v4989, 96
      %v5149 = vpop.permute.xlu0 %5148
      %5150 = vrot.lane.b32.xlu0 %v4809, 96
      %v5151 = vpop.permute.xlu0 %5150
      %5152 = vrot.lane.b32.xlu0 %v4990, 96
      %v5153 = vpop.permute.xlu0 %5152
      %5154 = vrot.lane.b32.xlu0 %v4810, 96
      %v5155 = vpop.permute.xlu0 %5154
      %v5156 = vsel %vm2718, %v5125, %v5127
      %v5157 = vsel %vm2718, %v5129, %v5131
      %v5158 = vsel %vm2718, %v5133, %v5135
      %v5159 = vsel %vm2718, %v5137, %v5139
      %v5160 = vsel %vm2718, %v5141, %v5143
      %v5161 = vsel %vm2718, %v5145, %v5147
      %v5162 = vsel %vm2718, %v5149, %v5151
      %v5163 = vsel %vm2718, %v5153, %v5155
      %v5180 = vsel %vm280, %v4800, %v5009
      %v5181 = vsel %vm280, %v4801, %v5013
      %v5182 = vsel %vm280, %v4802, %v5017
      %v5183 = vsel %vm280, %v4803, %v5021
      %v5184 = vsel %vm280, %v4804, %v5025
      %v5185 = vsel %vm280, %v4805, %v5029
      %v5186 = vsel %vm280, %v4806, %v5033
      %v5187 = vsel %vm280, %v4807, %v5037
      %v5188 = vsel %vm2677, %v5040, %v5067
      %v5189 = vsel %vm2677, %v5041, %v5071
      %v5190 = vsel %vm2677, %v5042, %v5075
      %v5191 = vsel %vm2677, %v5043, %v5079
      %v5192 = vsel %vm2677, %v5044, %v5083
      %v5193 = vsel %vm2677, %v5045, %v5087
      %v5194 = vsel %vm2677, %v5046, %v5091
      %v5195 = vsel %vm2677, %v5047, %v5095
      %v5196 = vsel %vm2718, %v5098, %v5125
      %v5197 = vsel %vm2718, %v5099, %v5129
      %v5198 = vsel %vm2718, %v5100, %v5133
      %v5199 = vsel %vm2718, %v5101, %v5137
      %v5200 = vsel %vm2718, %v5102, %v5141
      %v5201 = vsel %vm2718, %v5103, %v5145
      %v5202 = vsel %vm2718, %v5104, %v5149
      %v5203 = vsel %vm2718, %v5105, %v5153
      %v5204 = vld [vmem:[%s5] sm:$0xff]
      %v5205 = vld [vmem:[%s5 + $0x8] sm:$0xff]
      %v5206 = vld [vmem:[%s5 + $0x10] sm:$0xff]
      %v5207 = vld [vmem:[%s5 + $0x18] sm:$0xff]
      %v5208 = vld [vmem:[%s5 + $0x20] sm:$0xff]
      %v5209 = vld [vmem:[%s5 + $0x28] sm:$0xff]
      %v5210 = vld [vmem:[%s5 + $0x30] sm:$0xff]
      %v5211 = vld [vmem:[%s5 + $0x38] sm:$0xff]
      %v5212 = vld [vmem:[%s5 + $0x40] sm:$0xff]
      %v5213 = vld [vmem:[%s5 + $0x48] sm:$0xff]
      %v5214 = vld [vmem:[%s5 + $0x50] sm:$0xff]
      %v5215 = vld [vmem:[%s5 + $0x58] sm:$0xff]
      %v5216 = vld [vmem:[%s5 + $0x60] sm:$0xff]
      %v5217 = vld [vmem:[%s5 + $0x68] sm:$0xff]
      %v5218 = vld [vmem:[%s5 + $0x70] sm:$0xff]
      %v5219 = vld [vmem:[%s5 + $0x78] sm:$0xff]
      %v5220 = vld [vmem:[%s5 + $0x80] sm:$0xff]
      %v5221 = vld [vmem:[%s5 + $0x88] sm:$0xff]
      %v5222 = vld [vmem:[%s5 + $0x90] sm:$0xff]
      %v5223 = vld [vmem:[%s5 + $0x98] sm:$0xff]
      %v5224 = vld [vmem:[%s5 + $0xa0] sm:$0xff]
      %v5225 = vld [vmem:[%s5 + $0xa8] sm:$0xff]
      %v5226 = vld [vmem:[%s5 + $0xb0] sm:$0xff]
      %v5227 = vld [vmem:[%s5 + $0xb8] sm:$0xff]
      %v5228 = vld [vmem:[%s5 + $0xc0] sm:$0xff]
      %v5229 = vld [vmem:[%s5 + $0xc8] sm:$0xff]
      %v5230 = vld [vmem:[%s5 + $0xd0] sm:$0xff]
      %v5231 = vld [vmem:[%s5 + $0xd8] sm:$0xff]
      %v5232 = vld [vmem:[%s5 + $0xe0] sm:$0xff]
      %v5233 = vld [vmem:[%s5 + $0xe8] sm:$0xff]
      %v5234 = vld [vmem:[%s5 + $0xf0] sm:$0xff]
      %v5235 = vld [vmem:[%s5 + $0xf8] sm:$0xff]
      %v5236 = vld [vmem:[%s5 + $0x100] sm:$0xff]
      %v5237 = vld [vmem:[%s5 + $0x108] sm:$0xff]
      %v5238 = vld [vmem:[%s5 + $0x110] sm:$0xff]
      %v5239 = vld [vmem:[%s5 + $0x118] sm:$0xff]
      %v5240 = vld [vmem:[%s5 + $0x120] sm:$0xff]
      %v5241 = vld [vmem:[%s5 + $0x128] sm:$0xff]
      %v5242 = vld [vmem:[%s5 + $0x130] sm:$0xff]
      %v5243 = vld [vmem:[%s5 + $0x138] sm:$0xff]
      %v5244 = vld [vmem:[%s5 + $0x140] sm:$0xff]
      %v5245 = vld [vmem:[%s5 + $0x148] sm:$0xff]
      %v5246 = vld [vmem:[%s5 + $0x150] sm:$0xff]
      %v5247 = vld [vmem:[%s5 + $0x158] sm:$0xff]
      %v5248 = vld [vmem:[%s5 + $0x160] sm:$0xff]
      %v5249 = vld [vmem:[%s5 + $0x168] sm:$0xff]
      %v5250 = vld [vmem:[%s5 + $0x170] sm:$0xff]
      %v5251 = vld [vmem:[%s5 + $0x178] sm:$0xff]
      %v5252 = vld [vmem:[%s5 + $0x180] sm:$0xff]
      %v5253 = vld [vmem:[%s5 + $0x188] sm:$0xff]
      %v5254 = vld [vmem:[%s5 + $0x190] sm:$0xff]
      %v5255 = vld [vmem:[%s5 + $0x198] sm:$0xff]
      %v5256 = vld [vmem:[%s5 + $0x1a0] sm:$0xff]
      %v5257 = vld [vmem:[%s5 + $0x1a8] sm:$0xff]
      %v5258 = vld [vmem:[%s5 + $0x1b0] sm:$0xff]
      %v5259 = vld [vmem:[%s5 + $0x1b8] sm:$0xff]
      %v5260 = vld [vmem:[%s5 + $0x1c0] sm:$0xff]
      %v5261 = vld [vmem:[%s5 + $0x1c8] sm:$0xff]
      %v5262 = vld [vmem:[%s5 + $0x1d0] sm:$0xff]
      %v5263 = vld [vmem:[%s5 + $0x1d8] sm:$0xff]
      %v5264 = vld [vmem:[%s5 + $0x1e0] sm:$0xff]
      %v5265 = vld [vmem:[%s5 + $0x1e8] sm:$0xff]
      %v5266 = vld [vmem:[%s5 + $0x1f0] sm:$0xff]
      %v5267 = vld [vmem:[%s5 + $0x1f8] sm:$0xff]
      %v5268 = vld [vmem:[%s5 + $0x200] sm:$0xff]
      %v5269 = vld [vmem:[%s5 + $0x208] sm:$0xff]
      %v5270 = vld [vmem:[%s5 + $0x210] sm:$0xff]
      %v5271 = vld [vmem:[%s5 + $0x218] sm:$0xff]
      %v5272 = vld [vmem:[%s5 + $0x220] sm:$0xff]
      %v5273 = vld [vmem:[%s5 + $0x228] sm:$0xff]
      %v5274 = vld [vmem:[%s5 + $0x230] sm:$0xff]
      %v5275 = vld [vmem:[%s5 + $0x238] sm:$0xff]
      %v5276 = vld [vmem:[%s5 + $0x240] sm:$0xff]
      %v5277 = vld [vmem:[%s5 + $0x248] sm:$0xff]
      %v5278 = vld [vmem:[%s5 + $0x250] sm:$0xff]
      %v5279 = vld [vmem:[%s5 + $0x258] sm:$0xff]
      %v5280 = vld [vmem:[%s5 + $0x260] sm:$0xff]
      %v5281 = vld [vmem:[%s5 + $0x268] sm:$0xff]
      %v5282 = vld [vmem:[%s5 + $0x270] sm:$0xff]
      %v5283 = vld [vmem:[%s5 + $0x278] sm:$0xff]
      %v5284 = vld [vmem:[%s5 + $0x280] sm:$0xff]
      %v5285 = vld [vmem:[%s5 + $0x288] sm:$0xff]
      %v5286 = vld [vmem:[%s5 + $0x290] sm:$0xff]
      %v5287 = vld [vmem:[%s5 + $0x298] sm:$0xff]
      %v5288 = vld [vmem:[%s5 + $0x2a0] sm:$0xff]
      %v5289 = vld [vmem:[%s5 + $0x2a8] sm:$0xff]
      %v5290 = vld [vmem:[%s5 + $0x2b0] sm:$0xff]
      %v5291 = vld [vmem:[%s5 + $0x2b8] sm:$0xff]
      %v5292 = vld [vmem:[%s5 + $0x2c0] sm:$0xff]
      %v5293 = vld [vmem:[%s5 + $0x2c8] sm:$0xff]
      %v5294 = vld [vmem:[%s5 + $0x2d0] sm:$0xff]
      %v5295 = vld [vmem:[%s5 + $0x2d8] sm:$0xff]
      %v5296 = vld [vmem:[%s5 + $0x2e0] sm:$0xff]
      %v5297 = vld [vmem:[%s5 + $0x2e8] sm:$0xff]
      %v5298 = vld [vmem:[%s5 + $0x2f0] sm:$0xff]
      %v5299 = vld [vmem:[%s5 + $0x2f8] sm:$0xff]
      %v5300 = vld [vmem:[%s5 + $0x300] sm:$0xff]
      %v5301 = vld [vmem:[%s5 + $0x308] sm:$0xff]
      %v5302 = vld [vmem:[%s5 + $0x310] sm:$0xff]
      %v5303 = vld [vmem:[%s5 + $0x318] sm:$0xff]
      %v5304 = vld [vmem:[%s6] sm:$0x1]
      %v5306 = vlaneseq
      %v5307 = vshrl.u32 %v5306, 7
      %v5308 = vsub.s32 0, %v5307
      %v5309 = vrot.slane %v5304, %v5308
      %v5311 = vsel %vm280, %v4804, 0
      %v5313 = vsel %vm280, %v4805, 0
      %v5315 = vsel %vm280, %v4806, 0
      %v5317 = vsel %vm280, %v4807, 0
      %v5319 = vsel %vm280, %v4808, 0
      %v5321 = vsel %vm280, %v4809, 0
      %v5323 = vsel %vm280, %v4810, 0
      %v5326 = vsel %vm280, %v4811, 0
      %5328 = vmatprep.subr.mxu0 0.0
      %5329 = vmatpush1.msra.mxu0 %v5204
      %5330 = vmatprep.subr.mxu0 0.0
      %5331 = vmatpush1.msra.mxu0 %v5205
      %5332 = vmatprep.subr.mxu0 0.0
      %5333 = vmatpush1.msra.mxu0 %v5206
      %5334 = vmatprep.subr.mxu0 0.0
      %5335 = vmatpush1.msra.mxu0 %v5207
      %5336 = vmatprep.subr.mxu0 0.0
      %5337 = vmatpush1.msra.mxu0 %v5208
      %5338 = vmatprep.subr.mxu0 0.0
      %5339 = vmatpush1.msra.mxu0 %v5209
      %5340 = vmatprep.subr.mxu0 0.0
      %5341 = vmatpush1.msra.mxu0 %v5210
      %5342 = vmatprep.subr.mxu0 0.0
      %5343 = vmatpush1.msra.mxu0 %v5211
      %5344 = vmatprep.subr.mxu0 0.0
      %5345 = vmatpush1.msra.mxu0 %v5212
      %5346 = vmatprep.subr.mxu0 0.0
      %5347 = vmatpush1.msra.mxu0 %v5213
      %5348 = vmatprep.subr.mxu0 0.0
      %5349 = vmatpush1.msra.mxu0 %v5214
      %5350 = vmatprep.subr.mxu0 0.0
      %5351 = vmatpush1.msra.mxu0 %v5215
      %5352 = vmatprep.subr.mxu0 0.0
      %5353 = vmatpush1.msra.mxu0 %v5216
      %5354 = vmatprep.subr.mxu0 0.0
      %5355 = vmatpush1.msra.mxu0 %v5217
      %5356 = vmatprep.subr.mxu0 0.0
      %5357 = vmatpush1.msra.mxu0 %v5218
      %5358 = vmatprep.subr.mxu0 0.0
      %5359 = vmatpush1.msra.mxu0 %v5219
      %5360 = vmatprep.subr.mxu0 0.0
      %5361 = vmatpush1.msra.mxu0 %v5220
      %5362 = vmatprep.subr.mxu0 0.0
      %5363 = vmatpush1.msra.mxu0 %v5221
      %5364 = vmatprep.subr.mxu0 0.0
      %5365 = vmatpush1.msra.mxu0 %v5222
      %5366 = vmatprep.subr.mxu0 0.0
      %5367 = vmatpush1.msra.mxu0 %v5223
      %5368 = vmatprep.subr.mxu0 0.0
      %5369 = vmatpush1.msra.mxu0 %v5224
      %5370 = vmatprep.subr.mxu0 0.0
      %5371 = vmatpush1.msra.mxu0 %v5225
      %5372 = vmatprep.subr.mxu0 0.0
      %5373 = vmatpush1.msra.mxu0 %v5226
      %5374 = vmatprep.subr.mxu0 0.0
      %5375 = vmatpush1.msra.mxu0 %v5227
      %5376 = vmatprep.subr.mxu0 0.0
      %5377 = vmatpush1.msra.mxu0 %v5228
      %5378 = vmatprep.subr.mxu0 0.0
      %5379 = vmatpush1.msra.mxu0 %v5229
      %5380 = vmatprep.subr.mxu0 0.0
      %5381 = vmatpush1.msra.mxu0 %v5230
      %5382 = vmatprep.subr.mxu0 0.0
      %5383 = vmatpush1.msra.mxu0 %v5231
      %5384 = vmatprep.subr.mxu0 0.0
      %5385 = vmatpush1.msra.mxu0 %v5232
      %5386 = vmatprep.subr.mxu0 0.0
      %5387 = vmatpush1.msra.mxu0 %v5233
      %5388 = vmatprep.subr.mxu0 0.0
      %5389 = vmatpush1.msra.mxu0 %v5234
      %5390 = vmatprep.subr.mxu0 0.0
      %5391 = vmatpush1.msra.mxu0 %v5235
      %5392 = vmatprep.mubr.f32.mxu0 %v5180
      %5393 = vmatmul.mubr.f32.gmra.mrb[0].mxu0 %v4980
      %v5394 = vpop.f32.mrb[0].mxu0
      %v5395 = vadd.f32 %v5309, %v5394
      %v5396 = vpop.f32.mrb[0].mxu0
      %5397 = vmatprep.mubr.f32.mxu0 %v5181
      %5398 = vmatmul.mubr.f32.gmra.mrb[0].mxu0 %v4981
      %v5399 = vpop.f32.mrb[0].mxu0
      %v5400 = vadd.f32 %v5309, %v5399
      %v5401 = vpop.f32.mrb[0].mxu0
      %5402 = vmatprep.mubr.f32.mxu0 %v5182
      %5403 = vmatmul.mubr.f32.gmra.mrb[0].mxu0 %v4982
      %v5404 = vpop.f32.mrb[0].mxu0
      %v5405 = vadd.f32 %v5309, %v5404
      %v5406 = vpop.f32.mrb[0].mxu0
      %5407 = vmatprep.mubr.f32.mxu0 %v5183
      %5408 = vmatmul.mubr.f32.gmra.mrb[0].mxu0 %v4983
      %v5409 = vpop.f32.mrb[0].mxu0
      %v5410 = vadd.f32 %v5309, %v5409
      %v5411 = vpop.f32.mrb[0].mxu0
      %5412 = vmatprep.mubr.f32.mxu0 %v5184
      %5413 = vmatmul.mubr.f32.gmra.mrb[0].mxu0 %v4984
      %v5414 = vpop.f32.mrb[0].mxu0
      %v5415 = vadd.f32 %v5309, %v5414
      %v5416 = vpop.f32.mrb[0].mxu0
      %5417 = vmatprep.mubr.f32.mxu0 %v5185
      %5418 = vmatmul.mubr.f32.gmra.mrb[0].mxu0 %v4985
      %v5419 = vpop.f32.mrb[0].mxu0
      %v5420 = vadd.f32 %v5309, %v5419
      %v5421 = vpop.f32.mrb[0].mxu0
      %5422 = vmatprep.mubr.f32.mxu0 %v5186
      %5423 = vmatmul.mubr.f32.gmra.mrb[0].mxu0 %v4986
      %v5424 = vpop.f32.mrb[0].mxu0
      %v5425 = vadd.f32 %v5309, %v5424
      %v5426 = vpop.f32.mrb[0].mxu0
      %5427 = vmatprep.mubr.f32.mxu0 %v5187
      %5428 = vmatmul.mubr.f32.gmra.mrb[0].mxu0 %v4987
      %v5429 = vpop.f32.mrb[0].mxu0
      %v5430 = vadd.f32 %v5309, %v5429
      %v5431 = vpop.f32.mrb[0].mxu0
      %5432 = vdwg.mxu0
      %5433 = vmatprep.subr.mxu0 0.0
      %5434 = vmatpush1.msra.mxu0 %v5236
      %5435 = vmatprep.subr.mxu0 0.0
      %5436 = vmatpush1.msra.mxu0 %v5237
      %5437 = vmatprep.subr.mxu0 0.0
      %5438 = vmatpush1.msra.mxu0 %v5238
      %5439 = vmatprep.subr.mxu0 0.0
      %5440 = vmatpush1.msra.mxu0 %v5239
      %5441 = vmatprep.subr.mxu0 0.0
      %5442 = vmatpush1.msra.mxu0 %v5240
      %5443 = vmatprep.subr.mxu0 0.0
      %5444 = vmatpush1.msra.mxu0 %v5241
      %5445 = vmatprep.subr.mxu0 0.0
      %5446 = vmatpush1.msra.mxu0 %v5242
      %5447 = vmatprep.subr.mxu0 0.0
      %5448 = vmatpush1.msra.mxu0 %v5243
      %5449 = vmatprep.subr.mxu0 0.0
      %5450 = vmatpush1.msra.mxu0 %v5244
      %5451 = vmatprep.subr.mxu0 0.0
      %5452 = vmatpush1.msra.mxu0 %v5245
      %5453 = vmatprep.subr.mxu0 0.0
      %5454 = vmatpush1.msra.mxu0 %v5246
      %5455 = vmatprep.subr.mxu0 0.0
      %5456 = vmatpush1.msra.mxu0 %v5247
      %5457 = vmatprep.subr.mxu0 0.0
      %5458 = vmatpush1.msra.mxu0 %v5248
      %5459 = vmatprep.subr.mxu0 0.0
      %5460 = vmatpush1.msra.mxu0 %v5249
      %5461 = vmatprep.subr.mxu0 0.0
      %5462 = vmatpush1.msra.mxu0 %v5250
      %5463 = vmatprep.subr.mxu0 0.0
      %5464 = vmatpush1.msra.mxu0 %v5251
      %5465 = vmatprep.subr.mxu0 0.0
      %5466 = vmatpush1.msra.mxu0 %v5252
      %5467 = vmatprep.subr.mxu0 0.0
      %5468 = vmatpush1.msra.mxu0 %v5253
      %5469 = vmatprep.subr.mxu0 0.0
      %5470 = vmatpush1.msra.mxu0 %v5254
      %5471 = vmatprep.subr.mxu0 0.0
      %5472 = vmatpush1.msra.mxu0 %v5255
      %5473 = vmatprep.subr.mxu0 0.0
      %5474 = vmatpush1.msra.mxu0 %v5256
      %5475 = vmatprep.subr.mxu0 0.0
      %5476 = vmatpush1.msra.mxu0 %v5257
      %5477 = vmatprep.subr.mxu0 0.0
      %5478 = vmatpush1.msra.mxu0 %v5258
      %5479 = vmatprep.subr.mxu0 0.0
      %5480 = vmatpush1.msra.mxu0 %v5259
      %5481 = vmatprep.subr.mxu0 0.0
      %5482 = vmatpush1.msra.mxu0 %v5260
      %5483 = vmatprep.subr.mxu0 0.0
      %5484 = vmatpush1.msra.mxu0 %v5261
      %5485 = vmatprep.subr.mxu0 0.0
      %5486 = vmatpush1.msra.mxu0 %v5262
      %5487 = vmatprep.subr.mxu0 0.0
      %5488 = vmatpush1.msra.mxu0 %v5263
      %5489 = vmatprep.subr.mxu0 0.0
      %5490 = vmatpush1.msra.mxu0 %v5264
      %5491 = vmatprep.subr.mxu0 0.0
      %5492 = vmatpush1.msra.mxu0 %v5265
      %5493 = vmatprep.subr.mxu0 0.0
      %5494 = vmatpush1.msra.mxu0 %v5266
      %5495 = vmatprep.subr.mxu0 0.0
      %5496 = vmatpush1.msra.mxu0 %v5267
      %5497 = vmatprep.mubr.f32.mxu0 %v5196
      %5498 = vmatmul.mubr.f32.gmra.mrb[0].mxu0 %v5188
      %v5499 = vpop.f32.mrb[0].mxu0
      %v5500 = vadd.f32 %v5395, %v5499
      %v5501 = vpop.f32.mrb[0].mxu0
      %5502 = vmatprep.mubr.f32.mxu0 %v5197
      %5503 = vmatmul.mubr.f32.gmra.mrb[0].mxu0 %v5189
      %v5504 = vpop.f32.mrb[0].mxu0
      %v5505 = vadd.f32 %v5400, %v5504
      %v5506 = vpop.f32.mrb[0].mxu0
      %5507 = vmatprep.mubr.f32.mxu0 %v5198
      %5508 = vmatmul.mubr.f32.gmra.mrb[0].mxu0 %v5190
      %v5509 = vpop.f32.mrb[0].mxu0
      %v5510 = vadd.f32 %v5405, %v5509
      %v5511 = vpop.f32.mrb[0].mxu0
      %5512 = vmatprep.mubr.f32.mxu0 %v5199
      %5513 = vmatmul.mubr.f32.gmra.mrb[0].mxu0 %v5191
      %v5514 = vpop.f32.mrb[0].mxu0
      %v5515 = vadd.f32 %v5410, %v5514
      %v5516 = vpop.f32.mrb[0].mxu0
      %5517 = vmatprep.mubr.f32.mxu0 %v5200
      %5518 = vmatmul.mubr.f32.gmra.mrb[0].mxu0 %v5192
      %v5519 = vpop.f32.mrb[0].mxu0
      %v5520 = vadd.f32 %v5415, %v5519
      %v5521 = vpop.f32.mrb[0].mxu0
      %5522 = vmatprep.mubr.f32.mxu0 %v5201
      %5523 = vmatmul.mubr.f32.gmra.mrb[0].mxu0 %v5193
      %v5524 = vpop.f32.mrb[0].mxu0
      %v5525 = vadd.f32 %v5420, %v5524
      %v5526 = vpop.f32.mrb[0].mxu0
      %5527 = vmatprep.mubr.f32.mxu0 %v5202
      %5528 = vmatmul.mubr.f32.gmra.mrb[0].mxu0 %v5194
      %v5529 = vpop.f32.mrb[0].mxu0
      %v5530 = vadd.f32 %v5425, %v5529
      %v5531 = vpop.f32.mrb[0].mxu0
      %5532 = vmatprep.mubr.f32.mxu0 %v5203
      %5533 = vmatmul.mubr.f32.gmra.mrb[0].mxu0 %v5195
      %v5534 = vpop.f32.mrb[0].mxu0
      %v5535 = vadd.f32 %v5430, %v5534
      %v5536 = vpop.f32.mrb[0].mxu0
      %5537 = vdwg.mxu0
      %5538 = vmatprep.subr.mxu0 0.0
      %5539 = vmatpush1.msra.mxu0 %v5268
      %5540 = vmatprep.subr.mxu0 0.0
      %5541 = vmatpush1.msra.mxu0 %v5269
      %5542 = vmatprep.subr.mxu0 0.0
      %5543 = vmatpush1.msra.mxu0 %v5270
      %5544 = vmatprep.subr.mxu0 0.0
      %5545 = vmatpush1.msra.mxu0 %v5271
      %5546 = vmatprep.subr.mxu0 0.0
      %5547 = vmatpush1.msra.mxu0 %v5272
      %5548 = vmatprep.subr.mxu0 0.0
      %5549 = vmatpush1.msra.mxu0 %v5273
      %5550 = vmatprep.subr.mxu0 0.0
      %5551 = vmatpush1.msra.mxu0 %v5274
      %5552 = vmatprep.subr.mxu0 0.0
      %5553 = vmatpush1.msra.mxu0 %v5275
      %5554 = vmatprep.subr.mxu0 0.0
      %5555 = vmatpush1.msra.mxu0 %v5276
      %5556 = vmatprep.subr.mxu0 0.0
      %5557 = vmatpush1.msra.mxu0 %v5277
      %5558 = vmatprep.subr.mxu0 0.0
      %5559 = vmatpush1.msra.mxu0 %v5278
      %5560 = vmatprep.subr.mxu0 0.0
      %5561 = vmatpush1.msra.mxu0 %v5279
      %5562 = vmatprep.subr.mxu0 0.0
      %5563 = vmatpush1.msra.mxu0 %v5280
      %5564 = vmatprep.subr.mxu0 0.0
      %5565 = vmatpush1.msra.mxu0 %v5281
      %5566 = vmatprep.subr.mxu0 0.0
      %5567 = vmatpush1.msra.mxu0 %v5282
      %5568 = vmatprep.subr.mxu0 0.0
      %5569 = vmatpush1.msra.mxu0 %v5283
      %5570 = vmatprep.subr.mxu0 0.0
      %5571 = vmatpush1.msra.mxu0 %v5284
      %5572 = vmatprep.subr.mxu0 0.0
      %5573 = vmatpush1.msra.mxu0 %v5285
      %5574 = vmatprep.subr.mxu0 0.0
      %5575 = vmatpush1.msra.mxu0 %v5286
      %5576 = vmatprep.subr.mxu0 0.0
      %5577 = vmatpush1.msra.mxu0 %v5287
      %5578 = vmatprep.subr.mxu0 0.0
      %5579 = vmatpush1.msra.mxu0 %v5288
      %5580 = vmatprep.subr.mxu0 0.0
      %5581 = vmatpush1.msra.mxu0 %v5289
      %5582 = vmatprep.subr.mxu0 0.0
      %5583 = vmatpush1.msra.mxu0 %v5290
      %5584 = vmatprep.subr.mxu0 0.0
      %5585 = vmatpush1.msra.mxu0 %v5291
      %5586 = vmatprep.subr.mxu0 0.0
      %5587 = vmatpush1.msra.mxu0 %v5292
      %5588 = vmatprep.subr.mxu0 0.0
      %5589 = vmatpush1.msra.mxu0 %v5293
      %5590 = vmatprep.subr.mxu0 0.0
      %5591 = vmatpush1.msra.mxu0 %v5294
      %5592 = vmatprep.subr.mxu0 0.0
      %5593 = vmatpush1.msra.mxu0 %v5295
      %5594 = vmatprep.subr.mxu0 0.0
      %5595 = vmatpush1.msra.mxu0 %v5296
      %5596 = vmatprep.subr.mxu0 0.0
      %5597 = vmatpush1.msra.mxu0 %v5297
      %5598 = vmatprep.subr.mxu0 0.0
      %5599 = vmatpush1.msra.mxu0 %v5298
      %5600 = vmatprep.subr.mxu0 0.0
      %5601 = vmatpush1.msra.mxu0 %v5299
      %5602 = vmatprep.mubr.f32.mxu0 %v4984
      %5603 = vmatmul.mubr.f32.gmra.mrb[0].mxu0 %v5156
      %v5604 = vpop.f32.mrb[0].mxu0
      %v5605 = vadd.f32 %v5500, %v5604
      %v5606 = vpop.f32.mrb[0].mxu0
      %5607 = vmatprep.mubr.f32.mxu0 %v4985
      %5608 = vmatmul.mubr.f32.gmra.mrb[0].mxu0 %v5157
      %v5609 = vpop.f32.mrb[0].mxu0
      %v5610 = vadd.f32 %v5505, %v5609
      %v5611 = vpop.f32.mrb[0].mxu0
      %5612 = vmatprep.mubr.f32.mxu0 %v4986
      %5613 = vmatmul.mubr.f32.gmra.mrb[0].mxu0 %v5158
      %v5614 = vpop.f32.mrb[0].mxu0
      %v5615 = vadd.f32 %v5510, %v5614
      %v5616 = vpop.f32.mrb[0].mxu0
      %5617 = vmatprep.mubr.f32.mxu0 %v4987
      %5618 = vmatmul.mubr.f32.gmra.mrb[0].mxu0 %v5159
      %v5619 = vpop.f32.mrb[0].mxu0
      %v5620 = vadd.f32 %v5515, %v5619
      %v5621 = vpop.f32.mrb[0].mxu0
      %5622 = vmatprep.mubr.f32.mxu0 %v4988
      %5623 = vmatmul.mubr.f32.gmra.mrb[0].mxu0 %v5160
      %v5624 = vpop.f32.mrb[0].mxu0
      %v5625 = vadd.f32 %v5520, %v5624
      %v5626 = vpop.f32.mrb[0].mxu0
      %5627 = vmatprep.mubr.f32.mxu0 %v4989
      %5628 = vmatmul.mubr.f32.gmra.mrb[0].mxu0 %v5161
      %v5629 = vpop.f32.mrb[0].mxu0
      %v5630 = vadd.f32 %v5525, %v5629
      %v5631 = vpop.f32.mrb[0].mxu0
      %5632 = vmatprep.mubr.f32.mxu0 %v4990
      %5633 = vmatmul.mubr.f32.gmra.mrb[0].mxu0 %v5162
      %v5634 = vpop.f32.mrb[0].mxu0
      %v5635 = vadd.f32 %v5530, %v5634
      %v5636 = vpop.f32.mrb[0].mxu0
      %5637 = vmatprep.mubr.f32.mxu0 %v4991
      %5638 = vmatmul.mubr.f32.gmra.mrb[0].mxu0 %v5163
      %v5639 = vpop.f32.mrb[0].mxu0
      %v5640 = vadd.f32 %v5535, %v5639
      %v5641 = vpop.f32.mrb[0].mxu0
      %5642 = vdwg.mxu0
      %5643 = vmatprep.subr.mxu0 0.0
      %5644 = vmatpush1.msra.mxu0 %v5300
      %5645 = vmatprep.subr.mxu0 0.0
      %5646 = vmatpush1.msra.mxu0 %v5301
      %5647 = vmatprep.subr.mxu0 0.0
      %5648 = vmatpush1.msra.mxu0 %v5302
      %5649 = vmatprep.subr.mxu0 0.0
      %5650 = vmatpush1.msra.mxu0 %v5303
      %5651 = vmatprep.subr.mxu0 0.0
      %5652 = vmatpush1.msra.mxu0 0.0
      %5653 = vmatprep.subr.mxu0 0.0
      %5654 = vmatpush1.msra.mxu0 0.0
      %5655 = vmatprep.subr.mxu0 0.0
      %5656 = vmatpush1.msra.mxu0 0.0
      %5657 = vmatprep.subr.mxu0 0.0
      %5658 = vmatpush1.msra.mxu0 0.0
      %5659 = vmatprep.subr.mxu0 0.0
      %5660 = vmatpush1.msra.mxu0 0.0
      %5661 = vmatprep.subr.mxu0 0.0
      %5662 = vmatpush1.msra.mxu0 0.0
      %5663 = vmatprep.subr.mxu0 0.0
      %5664 = vmatpush1.msra.mxu0 0.0
      %5665 = vmatprep.subr.mxu0 0.0
      %5666 = vmatpush1.msra.mxu0 0.0
      %5667 = vmatprep.subr.mxu0 0.0
      %5668 = vmatpush1.msra.mxu0 0.0
      %5669 = vmatprep.subr.mxu0 0.0
      %5670 = vmatpush1.msra.mxu0 0.0
      %5671 = vmatprep.subr.mxu0 0.0
      %5672 = vmatpush1.msra.mxu0 0.0
      %5673 = vmatprep.subr.mxu0 0.0
      %5674 = vmatpush1.msra.mxu0 0.0
      %5675 = vmatprep.subr.mxu0 0.0
      %5676 = vmatpush1.msra.mxu0 0.0
      %5677 = vmatprep.subr.mxu0 0.0
      %5678 = vmatpush1.msra.mxu0 0.0
      %5679 = vmatprep.subr.mxu0 0.0
      %5680 = vmatpush1.msra.mxu0 0.0
      %5681 = vmatprep.subr.mxu0 0.0
      %5682 = vmatpush1.msra.mxu0 0.0
      %5683 = vmatprep.subr.mxu0 0.0
      %5684 = vmatpush1.msra.mxu0 0.0
      %5685 = vmatprep.subr.mxu0 0.0
      %5686 = vmatpush1.msra.mxu0 0.0
      %5687 = vmatprep.subr.mxu0 0.0
      %5688 = vmatpush1.msra.mxu0 0.0
      %5689 = vmatprep.subr.mxu0 0.0
      %5690 = vmatpush1.msra.mxu0 0.0
      %5691 = vmatprep.subr.mxu0 0.0
      %5692 = vmatpush1.msra.mxu0 0.0
      %5693 = vmatprep.subr.mxu0 0.0
      %5694 = vmatpush1.msra.mxu0 0.0
      %5695 = vmatprep.subr.mxu0 0.0
      %5696 = vmatpush1.msra.mxu0 0.0
      %5697 = vmatprep.subr.mxu0 0.0
      %5698 = vmatpush1.msra.mxu0 0.0
      %5699 = vmatprep.subr.mxu0 0.0
      %5700 = vmatpush1.msra.mxu0 0.0
      %5701 = vmatprep.subr.mxu0 0.0
      %5702 = vmatpush1.msra.mxu0 0.0
      %5703 = vmatprep.subr.mxu0 0.0
      %5704 = vmatpush1.msra.mxu0 0.0
      %5705 = vmatprep.subr.mxu0 0.0
      %5706 = vmatpush1.msra.mxu0 0.0
      %5707 = vmatprep.mubr.f32.mxu0 0.0
      %5708 = vmatmul.mubr.f32.gmra.mrb[0].mxu0 %v5311
      %v5709 = vpop.f32.mrb[0].mxu0
      %v5710 = vadd.f32 %v5605, %v5709
      %v5711 = vpop.f32.mrb[0].mxu0
      %5712 = vmatprep.mubr.f32.mxu0 0.0
      %5713 = vmatmul.mubr.f32.gmra.mrb[0].mxu0 %v5313
      %v5714 = vpop.f32.mrb[0].mxu0
      %v5715 = vadd.f32 %v5610, %v5714
      %v5716 = vpop.f32.mrb[0].mxu0
      %5717 = vmatprep.mubr.f32.mxu0 0.0
      %5718 = vmatmul.mubr.f32.gmra.mrb[0].mxu0 %v5315
      %v5719 = vpop.f32.mrb[0].mxu0
      %v5720 = vadd.f32 %v5615, %v5719
      %v5721 = vpop.f32.mrb[0].mxu0
      %5722 = vmatprep.mubr.f32.mxu0 0.0
      %5723 = vmatmul.mubr.f32.gmra.mrb[0].mxu0 %v5317
      %v5724 = vpop.f32.mrb[0].mxu0
      %v5725 = vadd.f32 %v5620, %v5724
      %v5726 = vpop.f32.mrb[0].mxu0
      %5727 = vmatprep.mubr.f32.mxu0 0.0
      %5728 = vmatmul.mubr.f32.gmra.mrb[0].mxu0 %v5319
      %v5729 = vpop.f32.mrb[0].mxu0
      %v5730 = vadd.f32 %v5625, %v5729
      %v5731 = vpop.f32.mrb[0].mxu0
      %5732 = vmatprep.mubr.f32.mxu0 0.0
      %5733 = vmatmul.mubr.f32.gmra.mrb[0].mxu0 %v5321
      %v5734 = vpop.f32.mrb[0].mxu0
      %v5735 = vadd.f32 %v5630, %v5734
      %v5736 = vpop.f32.mrb[0].mxu0
      %5737 = vmatprep.mubr.f32.mxu0 0.0
      %5738 = vmatmul.mubr.f32.gmra.mrb[0].mxu0 %v5323
      %v5739 = vpop.f32.mrb[0].mxu0
      %v5740 = vadd.f32 %v5635, %v5739
      %v5741 = vpop.f32.mrb[0].mxu0
      %5742 = vmatprep.mubr.f32.mxu0 0.0
      %5743 = vmatmul.mubr.f32.gmra.mrb[0].mxu0 %v5326
      %v5744 = vpop.f32.mrb[0].mxu0
      %v5745 = vadd.f32 %v5640, %v5744
      %v5746 = vpop.f32.mrb[0].mxu0
      %5747 = vdwg.mxu0
      %v5748 = vmax.f32 %v5710, %v5715
      %v5749 = vmax.f32 %v5720, %v5725
      %v5750 = vmax.f32 %v5730, %v5735
      %v5751 = vmax.f32 %v5740, %v5745
      %5752 = vst.msk [vmem:[#allocation6] sm:$0xff] %vm2677, %v5748
      %5753 = vst.msk [vmem:[#allocation6 + $0x8] sm:$0xff] %vm2677, %v5749
      %5754 = vst.msk [vmem:[#allocation6 + $0x10] sm:$0xff] %vm2677, %v5750
      %5755 = vst.msk [vmem:[#allocation6 + $0x18] sm:$0xff] %vm2677, %v5751
      %v5756 = vld [vmem:[#allocation6] ss:$2 sm:$0xf]
      %s5757 = scalar_lea.vmem [#allocation6], 8
      %v5758 = vld [vmem:[%s5757] ss:$2 sm:$0xf]
      %s5759 = scalar_lea.vmem [#allocation6], 16
      %v5760 = vld [vmem:[%s5759] ss:$2 sm:$0xf]
      %s5761 = scalar_lea.vmem [#allocation6], 24
      %v5762 = vld [vmem:[%s5761] ss:$2 sm:$0xf]
      %s5763 = scalar_lea.vmem [#allocation6], 1
      %v5764 = vld [vmem:[%s5763] ss:$2 sm:$0xf]
      %s5765 = scalar_lea.vmem [#allocation6], 9
      %v5766 = vld [vmem:[%s5765] ss:$2 sm:$0xf]
      %s5767 = scalar_lea.vmem [#allocation6], 17
      %v5768 = vld [vmem:[%s5767] ss:$2 sm:$0xf]
      %s5769 = scalar_lea.vmem [#allocation6], 25
      %v5770 = vld [vmem:[%s5769] ss:$2 sm:$0xf]
      %v5771 = vmax.f32 %v5756, %v5764
      %v5772 = vmax.f32 %v5758, %v5766
      %v5773 = vmax.f32 %v5760, %v5768
      %v5774 = vmax.f32 %v5762, %v5770
      %vm5775 = vcmask 519168
      %5776 = vst.msk [vmem:[%s278] sm:$0xf] %vm5775, %v5771
      %5777 = vst.msk [vmem:[%s278 + $0x4] sm:$0xf] %vm5775, %v5772
      %5778 = vst.msk [vmem:[%s278 + $0x8] sm:$0xf] %vm5775, %v5773
      %5779 = vst.msk [vmem:[%s278 + $0xc] sm:$0xf] %vm5775, %v5774
      %s5780 = smul.u32 4, %s18
      %p5781 = scmp.lt.s32.totalorder %s5780, 7
      %s5782 = scalar_select %p5781, %s5780, 7
      %s5783 = smul.addr %s5782, 4
      %s5784 = scalar_lea.vmem %s7, %s5783
      // Predicated region
      $region49: #{tudui_forward.2} parent=47 // pred_check
        %p5785 = pneg %p188
      $region50: #{tudui_forward.2} parent=47 // pred_check_branch
        %5787 = sbr.rel (%p5785) target = $region52
      $region51: #{tudui_forward.2} parent=47 // pred_region
        %s5788 = smul.u32 4, %s18
      $region52: #{tudui_forward.2} parent=47 // pred_fallthru
        _
    $region48: #{tudui_forward.2} parent=5 // pred_fallthru
      _
    %p5789 = scmp.le.s32.totalorder 2, %s13
    // Predicated region
    $region53: #{tudui_forward.2} parent=5 // pred_check
      %p5790 = pneg %p5789
    $region54: #{tudui_forward.2} parent=5 // pred_check_branch
      %5792 = sbr.rel (%p5790) target = $region56
    $region55: #{tudui_forward.2} parent=5 // pred_region
      %s5793 = ssub.s32 %s13, 2
      // Predicated region
      $region57: #{tudui_forward.2} parent=55 // pred_check
        %p5794 = pneg %p194
      $region58: #{tudui_forward.2} parent=55 // pred_check_branch
        %5796 = sbr.rel (%p5794) target = $region60
      $region59: #{tudui_forward.2} parent=55 // pred_region
        %s5797 = smul.u32 4, %s19
        %p5798 = scmp.lt.s32.totalorder %s5797, 7
        %s5799 = scalar_select %p5798, %s5797, 7
        %s5800 = smul.addr %s5799, 4
        %s5801 = scalar_lea.vmem %s7, %s5800
      $region60: #{tudui_forward.2} parent=55 // pred_fallthru
        _
    $region56: #{tudui_forward.2} parent=5 // pred_fallthru
      _
  $region6: #{tudui_forward.2} parent=0 // loop_footer
    %s17 = sadd.s32 1, %s13
  $region7: #{tudui_forward.2} parent=0 // loop_footer_branch
    %12 = sbr.rel target = $region3
  $region8: #{tudui_forward.2} parent=0 // loop_exit
    _

</llo_original>
